<compile_context>
chip_gen: v6e
topology: v6e:2x2x1
jax: 0.10.0
libtpu: 0.0.40
codegen_flags: <defaults>
</compile_context>

<pallas_src>
import functools

import jax
import jax.numpy as jnp
from jax.experimental import pallas as pl
from jax.experimental.pallas import tpu as pltpu

# ----------------------------- configuration -------------------------------
STEM_C_IN = 3
STEM_C_OUT = 32
STEM_K = 3
STEM_STRIDE = 2
STEM_PAD = 1
K_RAW = STEM_K * STEM_K * STEM_C_IN      # 27
K_PAD = 32                               # pad im2col depth 27 -> 32 (zero rows)
FEAT_DIM = 1280                          # efficientnet_b0 classifier.in_features
HID_DIM = 512
NUM_CLASSES = 10
MT_CAP = 4096                            # max stem columns per grid step (VMEM guard)


def _device_config():
    """TensorCore count / activation dtype / VMEM budget, from the device."""
    try:
        kind = jax.devices()[0].device_kind.lower()
    except Exception:
        kind = ""
    two_tc = any(t in kind for t in ("v7", "v4", "v5p"))     # 2 TCs / megacore
    silu_bf16 = ("v6" in kind) or ("v7" in kind)             # bf16 VPU/EUP paths
    vmem_limit = (48 << 20) if "v7" in kind else (64 << 20)  # v7x: 64 MiB physical
    return two_tc, silu_bf16, vmem_limit


# ------------------------------ Pallas kernel -------------------------------
def _fused_kernel(pt_ref, ws_ref, bs_ref, wp_ref, bp_ref,
                  w1_ref, b1_ref, w2_ref, b2_ref,
                  o_ref, pooled_ref, *, hw, mt, nb, silu_bf16):
    """Fused stem + GAP + trunk projection + classifier head.

    Grid = (batch_block i, M-tile j).  Per step:
      pt_ref     : [K_PAD, mt]   lane-dense im2col patches (bf16)
      ws_ref     : [Cout, K_PAD] stem weights, transposed (bf16)
      bs_ref     : [Cout, 1]     stem bias (f32)
      wp_ref     : [Cout, FEAT]  trunk stand-in projection (bf16)
      w1_ref     : [FEAT, HID]   classifier Linear(1280,512) (bf16)
      w2_ref     : [HID, NCLS]   classifier Linear(512,10)   (bf16)
      o_ref      : [1, nb, NCLS] logits block (f32), written on the last M tile
      pooled_ref : [Cout, nb]    f32 GAP accumulator (VMEM scratch)
    """
    j = pl.program_id(1)

    @pl.when(j == 0)
    def _init():
        pooled_ref[...] = jnp.zeros_like(pooled_ref)

    # --- conv stem as transposed matmul -> [Cout, mt] (lane-dense), f32 acc
    acc = jnp.dot(ws_ref[...], pt_ref[...], preferred_element_type=jnp.float32)
    acc = acc + bs_ref[...]                       # [Cout,1] broadcasts over lanes
    if silu_bf16:                                 # v6e/v7x: bf16 VPU/EUP
        a = acc.astype(jnp.bfloat16)
        act = a * jax.nn.sigmoid(a)
    else:                                         # v5e: f32 only
        act = (acc * jax.nn.sigmoid(acc)).astype(jnp.bfloat16)

    # --- GAP folded into the MXU: 0/1 pooling mask built in-kernel (no DMA,
    # no [32, Mb] activation transpose), accumulated over M tiles.
    col = j * mt + jax.lax.broadcasted_iota(jnp.int32, (mt, nb), 0)
    row_start = hw * jax.lax.broadcasted_iota(jnp.int32, (mt, nb), 1)
    in_row = (col >= row_start) & (col < row_start + hw)     # padded cols -> 0
    mask = jnp.where(in_row, 1.0, 0.0).astype(jnp.bfloat16)  # [mt, nb]
    pooled_ref[...] += jnp.dot(act, mask, preferred_element_type=jnp.float32)

    @pl.when(j == pl.num_programs(1) - 1)
    def _finalize():
        # transpose only the tiny [Cout, nb] pooled result; exact f32 1/hw scale
        pooled = pooled_ref[...].T * jnp.float32(1.0 / hw)          # [nb, Cout]

        # trunk stand-in projection to 1280-d feature space, SiLU (f32)
        h = jnp.dot(pooled.astype(jnp.bfloat16), wp_ref[...],
                    preferred_element_type=jnp.float32) + bp_ref[...]
        h = h * jax.nn.sigmoid(h)

        # classifier head: Linear(1280,512) -> ReLU -> Linear(512,10)
        h1 = jnp.dot(h.astype(jnp.bfloat16), w1_ref[...],
                     preferred_element_type=jnp.float32) + b1_ref[...]
        h1 = jnp.maximum(h1, 0.0)
        logits = jnp.dot(h1.astype(jnp.bfloat16), w2_ref[...],
                         preferred_element_type=jnp.float32) + b2_ref[...]
        o_ref[0] = logits.astype(o_ref.dtype)


# ------------------------------- parameters ---------------------------------
def init_params(key):
    ks = jax.random.split(key, 4)
    scale = 0.05
    return {
        # stem conv weight, transposed + zero-padded K: [Cout, K_PAD]
        "w_stem_t": jnp.pad(
            scale * jax.random.normal(ks[0], (STEM_C_OUT, K_RAW), jnp.float32),
            ((0, 0), (0, K_PAD - K_RAW))).astype(jnp.bfloat16),
        "b_stem": jnp.zeros((STEM_C_OUT, 1), jnp.float32),
        # trunk stand-in projection to the 1280-d efficientnet feature space
        "w_proj": (scale * jax.random.normal(ks[1], (STEM_C_OUT, FEAT_DIM),
                                             jnp.float32)).astype(jnp.bfloat16),
        "b_proj": jnp.zeros((1, FEAT_DIM), jnp.float32),
        # custom classifier head: Linear(1280,512) -> ReLU -> Linear(512,10)
        "w1": (scale * jax.random.normal(ks[2], (FEAT_DIM, HID_DIM),
                                         jnp.float32)).astype(jnp.bfloat16),
        "b1": jnp.zeros((1, HID_DIM), jnp.float32),
        "w2": (scale * jax.random.normal(ks[3], (HID_DIM, NUM_CLASSES),
                                         jnp.float32)).astype(jnp.bfloat16),
        "b2": jnp.zeros((1, NUM_CLASSES), jnp.float32),
    }


# ------------------------------- forward pass --------------------------------
def _nbytes(a):
    return a.size * a.dtype.itemsize


def embedding_net(params, x_nchw, *, single_buffer_weights=True):
    """Shared embedding branch.  x_nchw: [Bt, 3, H, W] -> logits [Bt, 10]."""
    two_tc, silu_bf16, vmem_limit = _device_config()

    # bf16 im2col prep: the XLA-side patch extraction / transpose / pad is
    # memory-bound HBM shuffling, so do it at half width.
    x = x_nchw.astype(jnp.bfloat16)
    Bt = x.shape[0]

    patches = jax.lax.conv_general_dilated_patches(
        x, filter_shape=(STEM_K, STEM_K),
        window_strides=(STEM_STRIDE, STEM_STRIDE),
        padding=((STEM_PAD, STEM_PAD), (STEM_PAD, STEM_PAD)))
    _, k_raw, oh, ow = patches.shape
    hw = oh * ow

    # lane-dense transposed patches: [K_PAD, Bt*hw] (batch-major along M)
    patches_t = jnp.transpose(patches, (1, 0, 2, 3)).reshape(k_raw, Bt * hw)
    patches_t = jnp.pad(patches_t, ((0, K_PAD - k_raw), (0, 0)))

    # batch-block axis: split only when the chip actually has 2 TensorCores;
    # on v5e/v6e (1 TC) g=2 would just stream the head weights twice.
    if two_tc and Bt % 2 == 0 and ((Bt // 2) * hw) % 128 == 0:
        g = 2
    else:
        g = 1
    nb = Bt // g
    mb = nb * hw

    # pad the M axis to a multiple of 128 lanes (only hit when g == 1);
    # padded columns map past the last sample, so the in-kernel mask drops them.
    if mb % 128 != 0:
        pad = (-mb) % 128
        patches_t = jnp.pad(patches_t, ((0, 0), (0, pad)))
        mb += pad

    # tile the M axis so one grid step's working set stays well inside VMEM
    # (needed at real EfficientNet resolutions, esp. on v7x's 64 MiB VMEM).
    n128 = mb // 128
    n_mt = n128
    for cand in range(1, n128 + 1):
        if n128 % cand == 0 and (mb // cand) <= MT_CAP:
            n_mt = cand
            break
    mt = mb // n_mt

    # grid-invariant weights: single-buffer (they never change across steps)
    def _wspec(shape):
        if single_buffer_weights:
            return pl.BlockSpec(shape, lambda i, j: (0, 0),
                                pipeline_mode=pl.Buffered(1))
        return pl.BlockSpec(shape, lambda i, j: (0, 0))

    in_specs = [
        pl.BlockSpec((K_PAD, mt), lambda i, j: (0, i * n_mt + j)),  # patches
        _wspec((STEM_C_OUT, K_PAD)),        # w_stem^T
        _wspec((STEM_C_OUT, 1)),            # b_stem
        _wspec((STEM_C_OUT, FEAT_DIM)),     # w_proj
        _wspec((1, FEAT_DIM)),              # b_proj
        _wspec((FEAT_DIM, HID_DIM)),        # w1
        _wspec((1, HID_DIM)),               # b1
        _wspec((HID_DIM, NUM_CLASSES)),     # w2
        _wspec((1, NUM_CLASSES)),           # b2
    ]

    flops = 2 * g * (STEM_C_OUT * K_PAD * mb
                     + STEM_C_OUT * mb * nb
                     + nb * STEM_C_OUT * FEAT_DIM
                     + nb * FEAT_DIM * HID_DIM
                     + nb * HID_DIM * NUM_CLASSES)
    transcendentals = g * (STEM_C_OUT * mb + nb * FEAT_DIM)
    bytes_accessed = int(
        _nbytes(patches_t)
        + sum(_nbytes(params[k]) for k in
              ("w_stem_t", "b_stem", "w_proj", "b_proj", "w1", "b1", "w2", "b2"))
        + g * nb * NUM_CLASSES * 4)

    kernel = functools.partial(_fused_kernel, hw=hw, mt=mt, nb=nb,
                               silu_bf16=silu_bf16)

    logits = pl.pallas_call(
        kernel,
        out_shape=jax.ShapeDtypeStruct((g, nb, NUM_CLASSES), jnp.float32),
        grid_spec=pltpu.PrefetchScalarGridSpec(
            num_scalar_prefetch=0,
            grid=(g, n_mt),
            in_specs=in_specs,
            out_specs=pl.BlockSpec((1, nb, NUM_CLASSES), lambda i, j: (i, 0, 0)),
            scratch_shapes=[pltpu.VMEM((STEM_C_OUT, nb), jnp.float32)],
        ),
        compiler_params=pltpu.CompilerParams(
            dimension_semantics=("parallel", "arbitrary"),
            vmem_limit_bytes=vmem_limit,
        ),
        cost_estimate=pl.CostEstimate(
            flops=flops,
            transcendentals=transcendentals,
            bytes_accessed=bytes_accessed),
    )(patches_t,
      params["w_stem_t"], params["b_stem"],
      params["w_proj"], params["b_proj"],
      params["w1"], params["b1"],
      params["w2"], params["b2"])

    return logits.reshape(g * nb, NUM_CLASSES)[:Bt]


def triplet_forward(params, x1, x2, x3, single_buffer_weights=True):
    # Shared-weight branches -> run as one batched forward, split afterwards.
    b = x1.shape[0]
    x = jnp.concatenate([x1, x2, x3], axis=0)
    logits = embedding_net(params, x,
                           single_buffer_weights=single_buffer_weights)
    return logits[:b], logits[b:2 * b], logits[2 * b:3 * b]


# ---------------------------------- main ------------------------------------
if __name__ == "__main__":
    key = jax.random.PRNGKey(0)
    k_params, k1, k2, k3 = jax.random.split(key, 4)

    params = init_params(k_params)

    B, C, H, W = 2, 3, 32, 32          # small NCHW inputs (PyTorch convention)
    x1 = jax.random.normal(k1, (B, C, H, W), jnp.float32)
    x2 = jax.random.normal(k2, (B, C, H, W), jnp.float32)
    x3 = jax.random.normal(k3, (B, C, H, W), jnp.float32)

    fwd = jax.jit(triplet_forward, static_argnames=("single_buffer_weights",))
    try:
        outs = fwd(params, x1, x2, x3, single_buffer_weights=True)
        outs = jax.block_until_ready(outs)
    except Exception:
        # Fallback if this JAX build rejects pl.Buffered(1) on pallas_call specs.
        outs = fwd(params, x1, x2, x3, single_buffer_weights=False)
        outs = jax.block_until_ready(outs)
    o1, o2, o3 = outs

    assert o1.shape == (B, NUM_CLASSES)
    assert o2.shape == (B, NUM_CLASSES)
    assert o3.shape == (B, NUM_CLASSES)
    assert bool(jnp.all(jnp.isfinite(o1)))
    assert bool(jnp.all(jnp.isfinite(o2)))
    assert bool(jnp.all(jnp.isfinite(o3)))
    print("KERNEL_OK")
</pallas_src>

<mosaic_0001>
module attributes {stable_mosaic.version = 11 : i64} {
  func.func @_fused_kernel(%arg0: i32, %arg1: i32, %arg2: memref<32x1536xbf16, #tpu.memory_space<vmem>>, %arg3: memref<32x32xbf16, #tpu.memory_space<vmem>>, %arg4: memref<32x1xf32, #tpu.memory_space<vmem>>, %arg5: memref<32x1280xbf16, #tpu.memory_space<vmem>>, %arg6: memref<1x1280xf32, #tpu.memory_space<vmem>>, %arg7: memref<1280x512xbf16, #tpu.memory_space<vmem>>, %arg8: memref<1x512xf32, #tpu.memory_space<vmem>>, %arg9: memref<512x10xbf16, #tpu.memory_space<vmem>>, %arg10: memref<1x10xf32, #tpu.memory_space<vmem>>, %arg11: memref<1x6x10xf32, #tpu.memory_space<vmem>>, %arg12: memref<32x6xf32, #tpu.memory_space<vmem>>) attributes {dimension_semantics = [#tpu.dimension_semantics<parallel>, #tpu.dimension_semantics<arbitrary>], iteration_bounds = array<i64: 1, 1>, scalar_prefetch = 0 : i64, scratch_operands = 1 : i64, tpu.core_type = #tpu.core_type<tc>, window_params = [{transform_indices = @transform_0, window_bounds = array<i64: 32, 1536>}, {pipeline_mode = #tpu.pipeline_mode<synchronous>, transform_indices = @transform_1, window_bounds = array<i64: 32, 32>}, {pipeline_mode = #tpu.pipeline_mode<synchronous>, transform_indices = @transform_2, window_bounds = array<i64: 32, 1>}, {pipeline_mode = #tpu.pipeline_mode<synchronous>, transform_indices = @transform_3, window_bounds = array<i64: 32, 1280>}, {pipeline_mode = #tpu.pipeline_mode<synchronous>, transform_indices = @transform_4, window_bounds = array<i64: 1, 1280>}, {pipeline_mode = #tpu.pipeline_mode<synchronous>, transform_indices = @transform_5, window_bounds = array<i64: 1280, 512>}, {pipeline_mode = #tpu.pipeline_mode<synchronous>, transform_indices = @transform_6, window_bounds = array<i64: 1, 512>}, {pipeline_mode = #tpu.pipeline_mode<synchronous>, transform_indices = @transform_7, window_bounds = array<i64: 512, 10>}, {pipeline_mode = #tpu.pipeline_mode<synchronous>, transform_indices = @transform_8, window_bounds = array<i64: 1, 10>}, {transform_indices = @transform_9, window_bounds = array<i64: 1, 6, 10>}]} {
    %c0_i32 = arith.constant 0 : i32
    %0 = arith.cmpi eq, %arg1, %c0_i32 : i32
    %1 = arith.extui %0 : i1 to i32
    %c0_i32_0 = arith.constant 0 : i32
    %2 = arith.cmpi ne, %1, %c0_i32_0 : i32
    scf.if %2 {
      %cst_17 = arith.constant 0.000000e+00 : f32
      %39 = vector.broadcast %cst_17 : f32 to vector<32x6xf32>
      %c0_18 = arith.constant 0 : index
      %c0_19 = arith.constant 0 : index
      %40 = vector.load %arg12[%c0_18, %c0_19] : memref<32x6xf32, #tpu.memory_space<vmem>>, vector<32x6xf32>
      tpu.vector_store %arg12[%c0_18, %c0_19], %39 {strides = array<i32>} : memref<32x6xf32, #tpu.memory_space<vmem>>, vector<32x6xf32>,
    } else {
    }
    %c0 = arith.constant 0 : index
    %c0_1 = arith.constant 0 : index
    %3 = vector.load %arg3[%c0, %c0_1] : memref<32x32xbf16, #tpu.memory_space<vmem>>, vector<32x32xbf16>
    %c0_2 = arith.constant 0 : index
    %c0_3 = arith.constant 0 : index
    %4 = vector.load %arg2[%c0_2, %c0_3] : memref<32x1536xbf16, #tpu.memory_space<vmem>>, vector<32x1536xbf16>
    %cst = arith.constant dense<0.000000e+00> : vector<32x1536xf32>
    %5 = tpu.matmul %3, %4, %cst {dimension_numbers = #tpu.dot_dimension_numbers<[1], [0], [0], [1], [0, 0, 1, 1], [], []>} : vector<32x32xbf16>, vector<32x1536xbf16>, vector<32x1536xf32> -> vector<32x1536xf32>
    %c0_4 = arith.constant 0 : index
    %c0_5 = arith.constant 0 : index
    %6 = vector.load %arg4[%c0_4, %c0_5] : memref<32x1xf32, #tpu.memory_space<vmem>>, vector<32x1xf32>
    %7 = vector.broadcast %6 : vector<32x1xf32> to vector<32x1536xf32>
    %8 = arith.addf %5, %7 : vector<32x1536xf32>
    %9 = arith.negf %8 : vector<32x1536xf32>
    %10 = math.exp %9 : vector<32x1536xf32>
    %cst_6 = arith.constant 1.000000e+00 : f32
    %11 = vector.broadcast %cst_6 : f32 to vector<32x1536xf32>
    %12 = arith.addf %11, %10 : vector<32x1536xf32>
    %13 = arith.divf %11, %12 : vector<32x1536xf32>
    %14 = arith.mulf %8, %13 : vector<32x1536xf32>
    %15 = arith.truncf %14 : vector<32x1536xf32> to vector<32x1536xbf16>
    %c1536_i32 = arith.constant 1536 : i32
    %16 = arith.muli %arg1, %c1536_i32 : i32
    %17 = tpu.iota {dimensions = array<i32: 0>} : vector<1536x6xi32>
    %18 = vector.broadcast %16 : i32 to vector<1536x6xi32>
    %19 = arith.addi %18, %17 : vector<1536x6xi32>
    %20 = tpu.iota {dimensions = array<i32: 1>} : vector<1536x6xi32>
    %c256_i32 = arith.constant 256 : i32
    %21 = vector.broadcast %c256_i32 : i32 to vector<1536x6xi32>
    %22 = arith.muli %21, %20 : vector<1536x6xi32>
    %23 = arith.cmpi sge, %19, %22 : vector<1536x6xi32>
    %c256_i32_7 = arith.constant 256 : i32
    %24 = vector.broadcast %c256_i32_7 : i32 to vector<1536x6xi32>
    %25 = arith.addi %22, %24 : vector<1536x6xi32>
    %26 = arith.cmpi slt, %19, %25 : vector<1536x6xi32>
    %27 = arith.andi %23, %26 : vector<1536x6xi1>
    %cst_8 = arith.constant 1.000000e+00 : f32
    %cst_9 = arith.constant 0.000000e+00 : f32
    %28 = vector.broadcast %cst_8 : f32 to vector<1536x6xf32>
    %29 = vector.broadcast %cst_9 : f32 to vector<1536x6xf32>
    %30 = arith.select %27, %28, %29 : vector<1536x6xi1>, vector<1536x6xf32>
    %31 = arith.truncf %30 : vector<1536x6xf32> to vector<1536x6xbf16>
    %c0_10 = arith.constant 0 : index
    %c0_11 = arith.constant 0 : index
    %32 = vector.load %arg12[%c0_10, %c0_11] : memref<32x6xf32, #tpu.memory_space<vmem>>, vector<32x6xf32>
    %cst_12 = arith.constant dense<0.000000e+00> : vector<32x6xf32>
    %33 = tpu.matmul %15, %31, %cst_12 {dimension_numbers = #tpu.dot_dimension_numbers<[1], [0], [0], [1], [0, 0, 1, 1], [], []>} : vector<32x1536xbf16>, vector<1536x6xbf16>, vector<32x6xf32> -> vector<32x6xf32>
    %34 = arith.addf %32, %33 : vector<32x6xf32>
    %c0_13 = arith.constant 0 : index
    %c0_14 = arith.constant 0 : index
    %35 = vector.load %arg12[%c0_13, %c0_14] : memref<32x6xf32, #tpu.memory_space<vmem>>, vector<32x6xf32>
    tpu.vector_store %arg12[%c0_13, %c0_14], %34 {strides = array<i32>} : memref<32x6xf32, #tpu.memory_space<vmem>>, vector<32x6xf32>,
    %c0_i32_15 = arith.constant 0 : i32
    %36 = arith.cmpi eq, %arg1, %c0_i32_15 : i32
    %37 = arith.extui %36 : i1 to i32
    %c0_i32_16 = arith.constant 0 : i32
    %38 = arith.cmpi ne, %37, %c0_i32_16 : i32
    scf.if %38 {
      %c0_17 = arith.constant 0 : index
      %c0_18 = arith.constant 0 : index
      %39 = vector.load %arg12[%c0_17, %c0_18] : memref<32x6xf32, #tpu.memory_space<vmem>>, vector<32x6xf32>
      %40 = tpu.transpose %39, [1, 0] : vector<32x6xf32> -> vector<6x32xf32>
      %cst_19 = arith.constant 3.906250e-03 : f32
      %41 = vector.broadcast %cst_19 : f32 to vector<6x32xf32>
      %42 = arith.mulf %40, %41 : vector<6x32xf32>
      %43 = arith.truncf %42 : vector<6x32xf32> to vector<6x32xbf16>
      %c0_20 = arith.constant 0 : index
      %c0_21 = arith.constant 0 : index
      %44 = vector.load %arg5[%c0_20, %c0_21] : memref<32x1280xbf16, #tpu.memory_space<vmem>>, vector<32x1280xbf16>
      %cst_22 = arith.constant dense<0.000000e+00> : vector<6x1280xf32>
      %45 = tpu.matmul %43, %44, %cst_22 {dimension_numbers = #tpu.dot_dimension_numbers<[1], [0], [0], [1], [0, 0, 1, 1], [], []>} : vector<6x32xbf16>, vector<32x1280xbf16>, vector<6x1280xf32> -> vector<6x1280xf32>
      %c0_23 = arith.constant 0 : index
      %c0_24 = arith.constant 0 : index
      %46 = vector.load %arg6[%c0_23, %c0_24] : memref<1x1280xf32, #tpu.memory_space<vmem>>, vector<1x1280xf32>
      %47 = vector.broadcast %46 : vector<1x1280xf32> to vector<6x1280xf32>
      %48 = arith.addf %45, %47 : vector<6x1280xf32>
      %49 = arith.negf %48 : vector<6x1280xf32>
      %50 = math.exp %49 : vector<6x1280xf32>
      %cst_25 = arith.constant 1.000000e+00 : f32
      %51 = vector.broadcast %cst_25 : f32 to vector<6x1280xf32>
      %52 = arith.addf %51, %50 : vector<6x1280xf32>
      %53 = arith.divf %51, %52 : vector<6x1280xf32>
      %54 = arith.mulf %48, %53 : vector<6x1280xf32>
      %55 = arith.truncf %54 : vector<6x1280xf32> to vector<6x1280xbf16>
      %c0_26 = arith.constant 0 : index
      %c0_27 = arith.constant 0 : index
      %56 = vector.load %arg7[%c0_26, %c0_27] : memref<1280x512xbf16, #tpu.memory_space<vmem>>, vector<1280x512xbf16>
      %cst_28 = arith.constant dense<0.000000e+00> : vector<6x512xf32>
      %57 = tpu.matmul %55, %56, %cst_28 {dimension_numbers = #tpu.dot_dimension_numbers<[1], [0], [0], [1], [0, 0, 1, 1], [], []>} : vector<6x1280xbf16>, vector<1280x512xbf16>, vector<6x512xf32> -> vector<6x512xf32>
      %c0_29 = arith.constant 0 : index
      %c0_30 = arith.constant 0 : index
      %58 = vector.load %arg8[%c0_29, %c0_30] : memref<1x512xf32, #tpu.memory_space<vmem>>, vector<1x512xf32>
      %59 = vector.broadcast %58 : vector<1x512xf32> to vector<6x512xf32>
      %60 = arith.addf %57, %59 : vector<6x512xf32>
      %cst_31 = arith.constant 0.000000e+00 : f32
      %61 = vector.broadcast %cst_31 : f32 to vector<6x512xf32>
      %62 = arith.maximumf %60, %61 : vector<6x512xf32>
      %63 = arith.truncf %62 : vector<6x512xf32> to vector<6x512xbf16>
      %c0_32 = arith.constant 0 : index
      %c0_33 = arith.constant 0 : index
      %64 = vector.load %arg9[%c0_32, %c0_33] : memref<512x10xbf16, #tpu.memory_space<vmem>>, vector<512x10xbf16>
      %cst_34 = arith.constant dense<0.000000e+00> : vector<6x10xf32>
      %65 = tpu.matmul %63, %64, %cst_34 {dimension_numbers = #tpu.dot_dimension_numbers<[1], [0], [0], [1], [0, 0, 1, 1], [], []>} : vector<6x512xbf16>, vector<512x10xbf16>, vector<6x10xf32> -> vector<6x10xf32>
      %c0_35 = arith.constant 0 : index
      %c0_36 = arith.constant 0 : index
      %66 = vector.load %arg10[%c0_35, %c0_36] : memref<1x10xf32, #tpu.memory_space<vmem>>, vector<1x10xf32>
      %67 = vector.broadcast %66 : vector<1x10xf32> to vector<6x10xf32>
      %68 = arith.addf %65, %67 : vector<6x10xf32>
      %c0_37 = arith.constant 0 : index
      %c0_38 = arith.constant 0 : index
      %c0_39 = arith.constant 0 : index
      %69 = vector.load %arg11[%c0_37, %c0_38, %c0_39] : memref<1x6x10xf32, #tpu.memory_space<vmem>>, vector<1x6x10xf32>
      %70 = vector.shape_cast %69 : vector<1x6x10xf32> to vector<6x10xf32>
      %71 = vector.shape_cast %68 : vector<6x10xf32> to vector<1x6x10xf32>
      tpu.vector_store %arg11[%c0_37, %c0_38, %c0_39], %71 {strides = array<i32>} : memref<1x6x10xf32, #tpu.memory_space<vmem>>, vector<1x6x10xf32>,
    } else {
    }
    return
  }
  func.func @transform_0(%arg0: i32, %arg1: i32) -> (i32, i32) {
    %c1_i32 = arith.constant 1 : i32
    %0 = arith.muli %arg0, %c1_i32 : i32
    %1 = arith.addi %0, %arg1 : i32
    %c0_i32 = arith.constant 0 : i32
    %c0_i32_0 = arith.constant 0 : i32
    return %c0_i32, %1 : i32, i32
  }
  func.func @transform_1(%arg0: i32, %arg1: i32) -> (i32, i32) {
    %c0_i32 = arith.constant 0 : i32
    %c0_i32_0 = arith.constant 0 : i32
    %c0_i32_1 = arith.constant 0 : i32
    return %c0_i32, %c0_i32_0 : i32, i32
  }
  func.func @transform_2(%arg0: i32, %arg1: i32) -> (i32, i32) {
    %c0_i32 = arith.constant 0 : i32
    %c0_i32_0 = arith.constant 0 : i32
    %c0_i32_1 = arith.constant 0 : i32
    return %c0_i32, %c0_i32_0 : i32, i32
  }
  func.func @transform_3(%arg0: i32, %arg1: i32) -> (i32, i32) {
    %c0_i32 = arith.constant 0 : i32
    %c0_i32_0 = arith.constant 0 : i32
    %c0_i32_1 = arith.constant 0 : i32
    return %c0_i32, %c0_i32_0 : i32, i32
  }
  func.func @transform_4(%arg0: i32, %arg1: i32) -> (i32, i32) {
    %c0_i32 = arith.constant 0 : i32
    %c0_i32_0 = arith.constant 0 : i32
    %c0_i32_1 = arith.constant 0 : i32
    return %c0_i32, %c0_i32_0 : i32, i32
  }
  func.func @transform_5(%arg0: i32, %arg1: i32) -> (i32, i32) {
    %c0_i32 = arith.constant 0 : i32
    %c0_i32_0 = arith.constant 0 : i32
    %c0_i32_1 = arith.constant 0 : i32
    return %c0_i32, %c0_i32_0 : i32, i32
  }
  func.func @transform_6(%arg0: i32, %arg1: i32) -> (i32, i32) {
    %c0_i32 = arith.constant 0 : i32
    %c0_i32_0 = arith.constant 0 : i32
    %c0_i32_1 = arith.constant 0 : i32
    return %c0_i32, %c0_i32_0 : i32, i32
  }
  func.func @transform_7(%arg0: i32, %arg1: i32) -> (i32, i32) {
    %c0_i32 = arith.constant 0 : i32
    %c0_i32_0 = arith.constant 0 : i32
    %c0_i32_1 = arith.constant 0 : i32
    return %c0_i32, %c0_i32_0 : i32, i32
  }
  func.func @transform_8(%arg0: i32, %arg1: i32) -> (i32, i32) {
    %c0_i32 = arith.constant 0 : i32
    %c0_i32_0 = arith.constant 0 : i32
    %c0_i32_1 = arith.constant 0 : i32
    return %c0_i32, %c0_i32_0 : i32, i32
  }
  func.func @transform_9(%arg0: i32, %arg1: i32) -> (i32, i32, i32) {
    %c0_i32 = arith.constant 0 : i32
    %c0_i32_0 = arith.constant 0 : i32
    %c0_i32_1 = arith.constant 0 : i32
    return %arg0, %c0_i32, %c0_i32_0 : i32, i32, i32
  }
}

module attributes {stable_mosaic.version = 11 : i64} {
  func.func @_fused_kernel(%arg0: i32, %arg1: i32, %arg2: memref<32x1536xbf16, #tpu.memory_space<vmem>>, %arg3: memref<32x32xbf16, #tpu.memory_space<vmem>>, %arg4: memref<32x1xf32, #tpu.memory_space<vmem>>, %arg5: memref<32x1280xbf16, #tpu.memory_space<vmem>>, %arg6: memref<1x1280xf32, #tpu.memory_space<vmem>>, %arg7: memref<1280x512xbf16, #tpu.memory_space<vmem>>, %arg8: memref<1x512xf32, #tpu.memory_space<vmem>>, %arg9: memref<512x10xbf16, #tpu.memory_space<vmem>>, %arg10: memref<1x10xf32, #tpu.memory_space<vmem>>, %arg11: memref<1x6x10xf32, #tpu.memory_space<vmem>>, %arg12: memref<32x6xf32, #tpu.memory_space<vmem>>) attributes {dimension_semantics = [#tpu.dimension_semantics<parallel>, #tpu.dimension_semantics<arbitrary>], iteration_bounds = array<i64: 1, 1>, scalar_prefetch = 0 : i64, scratch_operands = 1 : i64, tpu.core_type = #tpu.core_type<tc>, window_params = [{transform_indices = @transform_0, window_bounds = array<i64: 32, 1536>}, {pipeline_mode = #tpu.pipeline_mode<synchronous>, transform_indices = @transform_1, window_bounds = array<i64: 32, 32>}, {pipeline_mode = #tpu.pipeline_mode<synchronous>, transform_indices = @transform_2, window_bounds = array<i64: 32, 1>}, {pipeline_mode = #tpu.pipeline_mode<synchronous>, transform_indices = @transform_3, window_bounds = array<i64: 32, 1280>}, {pipeline_mode = #tpu.pipeline_mode<synchronous>, transform_indices = @transform_4, window_bounds = array<i64: 1, 1280>}, {pipeline_mode = #tpu.pipeline_mode<synchronous>, transform_indices = @transform_5, window_bounds = array<i64: 1280, 512>}, {pipeline_mode = #tpu.pipeline_mode<synchronous>, transform_indices = @transform_6, window_bounds = array<i64: 1, 512>}, {pipeline_mode = #tpu.pipeline_mode<synchronous>, transform_indices = @transform_7, window_bounds = array<i64: 512, 10>}, {pipeline_mode = #tpu.pipeline_mode<synchronous>, transform_indices = @transform_8, window_bounds = array<i64: 1, 10>}, {transform_indices = @transform_9, window_bounds = array<i64: 1, 6, 10>}]} {
    %c0_i32 = arith.constant 0 : i32
    %0 = arith.cmpi eq, %arg1, %c0_i32 : i32
    %1 = arith.extui %0 : i1 to i32
    %c0_i32_0 = arith.constant 0 : i32
    %2 = arith.cmpi ne, %1, %c0_i32_0 : i32
    scf.if %2 {
      %cst_17 = arith.constant 0.000000e+00 : f32
      %39 = vector.broadcast %cst_17 : f32 to vector<32x6xf32>
      %c0_18 = arith.constant 0 : index
      %c0_19 = arith.constant 0 : index
      %40 = vector.load %arg12[%c0_18, %c0_19] : memref<32x6xf32, #tpu.memory_space<vmem>>, vector<32x6xf32>
      tpu.vector_store %arg12[%c0_18, %c0_19], %39 {strides = array<i32>} : memref<32x6xf32, #tpu.memory_space<vmem>>, vector<32x6xf32>,
    } else {
    }
    %c0 = arith.constant 0 : index
    %c0_1 = arith.constant 0 : index
    %3 = vector.load %arg3[%c0, %c0_1] : memref<32x32xbf16, #tpu.memory_space<vmem>>, vector<32x32xbf16>
    %c0_2 = arith.constant 0 : index
    %c0_3 = arith.constant 0 : index
    %4 = vector.load %arg2[%c0_2, %c0_3] : memref<32x1536xbf16, #tpu.memory_space<vmem>>, vector<32x1536xbf16>
    %cst = arith.constant dense<0.000000e+00> : vector<32x1536xf32>
    %5 = tpu.matmul %3, %4, %cst {dimension_numbers = #tpu.dot_dimension_numbers<[1], [0], [0], [1], [0, 0, 1, 1], [], []>} : vector<32x32xbf16>, vector<32x1536xbf16>, vector<32x1536xf32> -> vector<32x1536xf32>
    %c0_4 = arith.constant 0 : index
    %c0_5 = arith.constant 0 : index
    %6 = vector.load %arg4[%c0_4, %c0_5] : memref<32x1xf32, #tpu.memory_space<vmem>>, vector<32x1xf32>
    %7 = vector.broadcast %6 : vector<32x1xf32> to vector<32x1536xf32>
    %8 = arith.addf %5, %7 : vector<32x1536xf32>
    %9 = arith.negf %8 : vector<32x1536xf32>
    %10 = math.exp %9 : vector<32x1536xf32>
    %cst_6 = arith.constant 1.000000e+00 : f32
    %11 = vector.broadcast %cst_6 : f32 to vector<32x1536xf32>
    %12 = arith.addf %11, %10 : vector<32x1536xf32>
    %13 = arith.divf %11, %12 : vector<32x1536xf32>
    %14 = arith.mulf %8, %13 : vector<32x1536xf32>
    %15 = arith.truncf %14 : vector<32x1536xf32> to vector<32x1536xbf16>
    %c1536_i32 = arith.constant 1536 : i32
    %16 = arith.muli %arg1, %c1536_i32 : i32
    %17 = tpu.iota {dimensions = array<i32: 0>} : vector<1536x6xi32>
    %18 = vector.broadcast %16 : i32 to vector<1536x6xi32>
    %19 = arith.addi %18, %17 : vector<1536x6xi32>
    %20 = tpu.iota {dimensions = array<i32: 1>} : vector<1536x6xi32>
    %c256_i32 = arith.constant 256 : i32
    %21 = vector.broadcast %c256_i32 : i32 to vector<1536x6xi32>
    %22 = arith.muli %21, %20 : vector<1536x6xi32>
    %23 = arith.cmpi sge, %19, %22 : vector<1536x6xi32>
    %c256_i32_7 = arith.constant 256 : i32
    %24 = vector.broadcast %c256_i32_7 : i32 to vector<1536x6xi32>
    %25 = arith.addi %22, %24 : vector<1536x6xi32>
    %26 = arith.cmpi slt, %19, %25 : vector<1536x6xi32>
    %27 = arith.andi %23, %26 : vector<1536x6xi1>
    %cst_8 = arith.constant 1.000000e+00 : f32
    %cst_9 = arith.constant 0.000000e+00 : f32
    %28 = vector.broadcast %cst_8 : f32 to vector<1536x6xf32>
    %29 = vector.broadcast %cst_9 : f32 to vector<1536x6xf32>
    %30 = arith.select %27, %28, %29 : vector<1536x6xi1>, vector<1536x6xf32>
    %31 = arith.truncf %30 : vector<1536x6xf32> to vector<1536x6xbf16>
    %c0_10 = arith.constant 0 : index
    %c0_11 = arith.constant 0 : index
    %32 = vector.load %arg12[%c0_10, %c0_11] : memref<32x6xf32, #tpu.memory_space<vmem>>, vector<32x6xf32>
    %cst_12 = arith.constant dense<0.000000e+00> : vector<32x6xf32>
    %33 = tpu.matmul %15, %31, %cst_12 {dimension_numbers = #tpu.dot_dimension_numbers<[1], [0], [0], [1], [0, 0, 1, 1], [], []>} : vector<32x1536xbf16>, vector<1536x6xbf16>, vector<32x6xf32> -> vector<32x6xf32>
    %34 = arith.addf %32, %33 : vector<32x6xf32>
    %c0_13 = arith.constant 0 : index
    %c0_14 = arith.constant 0 : index
    %35 = vector.load %arg12[%c0_13, %c0_14] : memref<32x6xf32, #tpu.memory_space<vmem>>, vector<32x6xf32>
    tpu.vector_store %arg12[%c0_13, %c0_14], %34 {strides = array<i32>} : memref<32x6xf32, #tpu.memory_space<vmem>>, vector<32x6xf32>,
    %c0_i32_15 = arith.constant 0 : i32
    %36 = arith.cmpi eq, %arg1, %c0_i32_15 : i32
    %37 = arith.extui %36 : i1 to i32
    %c0_i32_16 = arith.constant 0 : i32
    %38 = arith.cmpi ne, %37, %c0_i32_16 : i32
    scf.if %38 {
      %c0_17 = arith.constant 0 : index
      %c0_18 = arith.constant 0 : index
      %39 = vector.load %arg12[%c0_17, %c0_18] : memref<32x6xf32, #tpu.memory_space<vmem>>, vector<32x6xf32>
      %40 = tpu.transpose %39, [1, 0] : vector<32x6xf32> -> vector<6x32xf32>
      %cst_19 = arith.constant 3.906250e-03 : f32
      %41 = vector.broadcast %cst_19 : f32 to vector<6x32xf32>
      %42 = arith.mulf %40, %41 : vector<6x32xf32>
      %43 = arith.truncf %42 : vector<6x32xf32> to vector<6x32xbf16>
      %c0_20 = arith.constant 0 : index
      %c0_21 = arith.constant 0 : index
      %44 = vector.load %arg5[%c0_20, %c0_21] : memref<32x1280xbf16, #tpu.memory_space<vmem>>, vector<32x1280xbf16>
      %cst_22 = arith.constant dense<0.000000e+00> : vector<6x1280xf32>
      %45 = tpu.matmul %43, %44, %cst_22 {dimension_numbers = #tpu.dot_dimension_numbers<[1], [0], [0], [1], [0, 0, 1, 1], [], []>} : vector<6x32xbf16>, vector<32x1280xbf16>, vector<6x1280xf32> -> vector<6x1280xf32>
      %c0_23 = arith.constant 0 : index
      %c0_24 = arith.constant 0 : index
      %46 = vector.load %arg6[%c0_23, %c0_24] : memref<1x1280xf32, #tpu.memory_space<vmem>>, vector<1x1280xf32>
      %47 = vector.broadcast %46 : vector<1x1280xf32> to vector<6x1280xf32>
      %48 = arith.addf %45, %47 : vector<6x1280xf32>
      %49 = arith.negf %48 : vector<6x1280xf32>
      %50 = math.exp %49 : vector<6x1280xf32>
      %cst_25 = arith.constant 1.000000e+00 : f32
      %51 = vector.broadcast %cst_25 : f32 to vector<6x1280xf32>
      %52 = arith.addf %51, %50 : vector<6x1280xf32>
      %53 = arith.divf %51, %52 : vector<6x1280xf32>
      %54 = arith.mulf %48, %53 : vector<6x1280xf32>
      %55 = arith.truncf %54 : vector<6x1280xf32> to vector<6x1280xbf16>
      %c0_26 = arith.constant 0 : index
      %c0_27 = arith.constant 0 : index
      %56 = vector.load %arg7[%c0_26, %c0_27] : memref<1280x512xbf16, #tpu.memory_space<vmem>>, vector<1280x512xbf16>
      %cst_28 = arith.constant dense<0.000000e+00> : vector<6x512xf32>
      %57 = tpu.matmul %55, %56, %cst_28 {dimension_numbers = #tpu.dot_dimension_numbers<[1], [0], [0], [1], [0, 0, 1, 1], [], []>} : vector<6x1280xbf16>, vector<1280x512xbf16>, vector<6x512xf32> -> vector<6x512xf32>
      %c0_29 = arith.constant 0 : index
      %c0_30 = arith.constant 0 : index
      %58 = vector.load %arg8[%c0_29, %c0_30] : memref<1x512xf32, #tpu.memory_space<vmem>>, vector<1x512xf32>
      %59 = vector.broadcast %58 : vector<1x512xf32> to vector<6x512xf32>
      %60 = arith.addf %57, %59 : vector<6x512xf32>
      %cst_31 = arith.constant 0.000000e+00 : f32
      %61 = vector.broadcast %cst_31 : f32 to vector<6x512xf32>
      %62 = arith.maximumf %60, %61 : vector<6x512xf32>
      %63 = arith.truncf %62 : vector<6x512xf32> to vector<6x512xbf16>
      %c0_32 = arith.constant 0 : index
      %c0_33 = arith.constant 0 : index
      %64 = vector.load %arg9[%c0_32, %c0_33] : memref<512x10xbf16, #tpu.memory_space<vmem>>, vector<512x10xbf16>
      %cst_34 = arith.constant dense<0.000000e+00> : vector<6x10xf32>
      %65 = tpu.matmul %63, %64, %cst_34 {dimension_numbers = #tpu.dot_dimension_numbers<[1], [0], [0], [1], [0, 0, 1, 1], [], []>} : vector<6x512xbf16>, vector<512x10xbf16>, vector<6x10xf32> -> vector<6x10xf32>
      %c0_35 = arith.constant 0 : index
      %c0_36 = arith.constant 0 : index
      %66 = vector.load %arg10[%c0_35, %c0_36] : memref<1x10xf32, #tpu.memory_space<vmem>>, vector<1x10xf32>
      %67 = vector.broadcast %66 : vector<1x10xf32> to vector<6x10xf32>
      %68 = arith.addf %65, %67 : vector<6x10xf32>
      %c0_37 = arith.constant 0 : index
      %c0_38 = arith.constant 0 : index
      %c0_39 = arith.constant 0 : index
      %69 = vector.load %arg11[%c0_37, %c0_38, %c0_39] : memref<1x6x10xf32, #tpu.memory_space<vmem>>, vector<1x6x10xf32>
      %70 = vector.shape_cast %69 : vector<1x6x10xf32> to vector<6x10xf32>
      %71 = vector.shape_cast %68 : vector<6x10xf32> to vector<1x6x10xf32>
      tpu.vector_store %arg11[%c0_37, %c0_38, %c0_39], %71 {strides = array<i32>} : memref<1x6x10xf32, #tpu.memory_space<vmem>>, vector<1x6x10xf32>,
    } else {
    }
    return
  }
  func.func @transform_0(%arg0: i32, %arg1: i32) -> (i32, i32) {
    %c1_i32 = arith.constant 1 : i32
    %0 = arith.muli %arg0, %c1_i32 : i32
    %1 = arith.addi %0, %arg1 : i32
    %c0_i32 = arith.constant 0 : i32
    %c0_i32_0 = arith.constant 0 : i32
    return %c0_i32, %1 : i32, i32
  }
  func.func @transform_1(%arg0: i32, %arg1: i32) -> (i32, i32) {
    %c0_i32 = arith.constant 0 : i32
    %c0_i32_0 = arith.constant 0 : i32
    %c0_i32_1 = arith.constant 0 : i32
    return %c0_i32, %c0_i32_0 : i32, i32
  }
  func.func @transform_2(%arg0: i32, %arg1: i32) -> (i32, i32) {
    %c0_i32 = arith.constant 0 : i32
    %c0_i32_0 = arith.constant 0 : i32
    %c0_i32_1 = arith.constant 0 : i32
    return %c0_i32, %c0_i32_0 : i32, i32
  }
  func.func @transform_3(%arg0: i32, %arg1: i32) -> (i32, i32) {
    %c0_i32 = arith.constant 0 : i32
    %c0_i32_0 = arith.constant 0 : i32
    %c0_i32_1 = arith.constant 0 : i32
    return %c0_i32, %c0_i32_0 : i32, i32
  }
  func.func @transform_4(%arg0: i32, %arg1: i32) -> (i32, i32) {
    %c0_i32 = arith.constant 0 : i32
    %c0_i32_0 = arith.constant 0 : i32
    %c0_i32_1 = arith.constant 0 : i32
    return %c0_i32, %c0_i32_0 : i32, i32
  }
  func.func @transform_5(%arg0: i32, %arg1: i32) -> (i32, i32) {
    %c0_i32 = arith.constant 0 : i32
    %c0_i32_0 = arith.constant 0 : i32
    %c0_i32_1 = arith.constant 0 : i32
    return %c0_i32, %c0_i32_0 : i32, i32
  }
  func.func @transform_6(%arg0: i32, %arg1: i32) -> (i32, i32) {
    %c0_i32 = arith.constant 0 : i32
    %c0_i32_0 = arith.constant 0 : i32
    %c0_i32_1 = arith.constant 0 : i32
    return %c0_i32, %c0_i32_0 : i32, i32
  }
  func.func @transform_7(%arg0: i32, %arg1: i32) -> (i32, i32) {
    %c0_i32 = arith.constant 0 : i32
    %c0_i32_0 = arith.constant 0 : i32
    %c0_i32_1 = arith.constant 0 : i32
    return %c0_i32, %c0_i32_0 : i32, i32
  }
  func.func @transform_8(%arg0: i32, %arg1: i32) -> (i32, i32) {
    %c0_i32 = arith.constant 0 : i32
    %c0_i32_0 = arith.constant 0 : i32
    %c0_i32_1 = arith.constant 0 : i32
    return %c0_i32, %c0_i32_0 : i32, i32
  }
  func.func @transform_9(%arg0: i32, %arg1: i32) -> (i32, i32, i32) {
    %c0_i32 = arith.constant 0 : i32
    %c0_i32_0 = arith.constant 0 : i32
    %c0_i32_1 = arith.constant 0 : i32
    return %arg0, %c0_i32, %c0_i32_0 : i32, i32, i32
  }
}

</mosaic_0001>

<llo_original>
// kernel: triplet_forward.1
$region0: #{triplet_forward.1}
  #allocation0 [shape = 'u32[]', space=smem, size = 0x4, offset = 0x4, fixed_abs, tag = 'smem constant byte address 0x4 - core index']
  #allocation1 [shape = 'u32[144,128]{1,0:T(1,128)}', space=vmem, size = 0x12000, scoped, tag = 'internal scratch']
  #allocation2 [shape = 'f32[32,6]{1,0:T(8,128)}', space=vmem, size = 0x4000, scoped, tag = 'scratch operand']
  %s0 = inlined_call_operand.vmem [shape: bf16[32,1536], index: 0, kind: input, shape index: {}]
  %s1 = inlined_call_operand.vmem [shape: bf16[32,32], index: 1, kind: input, shape index: {}]
  %s2 = inlined_call_operand.vmem [shape: f32[32,1], index: 2, kind: input, shape index: {}]
  %s3 = inlined_call_operand.vmem [shape: bf16[32,1280], index: 3, kind: input, shape index: {}]
  %s4 = inlined_call_operand.vmem [shape: f32[1,1280], index: 4, kind: input, shape index: {}]
  %s5 = inlined_call_operand.vmem [shape: bf16[1280,512], index: 5, kind: input, shape index: {}]
  %s6 = inlined_call_operand.vmem [shape: f32[1,512], index: 6, kind: input, shape index: {}]
  %s7 = inlined_call_operand.vmem [shape: bf16[512,10], index: 7, kind: input, shape index: {}]
  %s8 = inlined_call_operand.vmem [shape: f32[1,10], index: 8, kind: input, shape index: {}]
  %s9 = inlined_call_operand.vmem [shape: f32[1,6,10], index: 9, kind: output, shape index: {}]
  %s10 = sld [smem:[#allocation0]]
  $region54: #{triplet_forward.1} parent=0
    _
  %s12 = ssub.s32 1, %s10
  %s13 = scalar_select 0, %s12, %s10
  // Predicated region
  $region2: #{triplet_forward.1} parent=0 // pred_check
    _
  $region3: #{triplet_forward.1} parent=0 // pred_check_branch
    %15 = sbr.rel (0) target = $region5
  $region4: #{triplet_forward.1} parent=0 // pred_region
    %s16 = sadd.s32 0, 0
    %s17 = smul.u32 12, %s16
    %p18 = scmp.lt.s32.totalorder %s17, 11
    %s19 = scalar_select %p18, %s17, 11
    %s20 = smul.addr %s19, 4
    %s21 = scalar_lea.vmem %s0, %s20
    %s22 = sadd.s32 0, 0
    %s23 = smul.u32 12, %s22
  $region5: #{triplet_forward.1} parent=0 // pred_fallthru
    _
  // Predicated region
  $region6: #{triplet_forward.1} parent=0 // pred_check
    _
  $region7: #{triplet_forward.1} parent=0 // pred_check_branch
    %25 = sbr.rel (0) target = $region9
  $region8: #{triplet_forward.1} parent=0 // pred_region
    _
  $region9: #{triplet_forward.1} parent=0 // pred_fallthru
    _
  // Predicated region
  $region10: #{triplet_forward.1} parent=0 // pred_check
    _
  $region11: #{triplet_forward.1} parent=0 // pred_check_branch
    %27 = sbr.rel (0) target = $region13
  $region12: #{triplet_forward.1} parent=0 // pred_region
    _
  $region13: #{triplet_forward.1} parent=0 // pred_fallthru
    _
  // Predicated region
  $region14: #{triplet_forward.1} parent=0 // pred_check
    _
  $region15: #{triplet_forward.1} parent=0 // pred_check_branch
    %29 = sbr.rel (0) target = $region17
  $region16: #{triplet_forward.1} parent=0 // pred_region
    _
  $region17: #{triplet_forward.1} parent=0 // pred_fallthru
    _
  // Predicated region
  $region18: #{triplet_forward.1} parent=0 // pred_check
    _
  $region19: #{triplet_forward.1} parent=0 // pred_check_branch
    %31 = sbr.rel (0) target = $region21
  $region20: #{triplet_forward.1} parent=0 // pred_region
    _
  $region21: #{triplet_forward.1} parent=0 // pred_fallthru
    _
  // Predicated region
  $region22: #{triplet_forward.1} parent=0 // pred_check
    _
  $region23: #{triplet_forward.1} parent=0 // pred_check_branch
    %33 = sbr.rel (0) target = $region25
  $region24: #{triplet_forward.1} parent=0 // pred_region
    _
  $region25: #{triplet_forward.1} parent=0 // pred_fallthru
    _
  // Predicated region
  $region26: #{triplet_forward.1} parent=0 // pred_check
    _
  $region27: #{triplet_forward.1} parent=0 // pred_check_branch
    %35 = sbr.rel (0) target = $region29
  $region28: #{triplet_forward.1} parent=0 // pred_region
    _
  $region29: #{triplet_forward.1} parent=0 // pred_fallthru
    _
  // Predicated region
  $region30: #{triplet_forward.1} parent=0 // pred_check
    _
  $region31: #{triplet_forward.1} parent=0 // pred_check_branch
    %37 = sbr.rel (0) target = $region33
  $region32: #{triplet_forward.1} parent=0 // pred_region
    _
  $region33: #{triplet_forward.1} parent=0 // pred_fallthru
    _
  // Predicated region
  $region34: #{triplet_forward.1} parent=0 // pred_check
    _
  $region35: #{triplet_forward.1} parent=0 // pred_check_branch
    %39 = sbr.rel (0) target = $region37
  $region36: #{triplet_forward.1} parent=0 // pred_region
    _
  $region37: #{triplet_forward.1} parent=0 // pred_fallthru
    _
  %s40 = sadd.s32 0, 0
  %s41 = smul.u32 12, %s40
  %p42 = scmp.lt.s32.totalorder %s41, 11
  %s43 = scalar_select %p42, %s41, 11
  %s44 = smul.addr %s43, 4
  %s45 = scalar_lea.vmem %s0, %s44
  %s46 = sadd.s32 0, 0
  %s47 = smul.u32 12, %s46
  %p48 = scmp.lt.s32.totalorder %s47, 11
  %s49 = scalar_select %p48, %s47, 11
  %s50 = smul.addr %s49, 4
  %s51 = scalar_lea.vmem %s0, %s50
  %s52 = sadd.s32 0, 0
  %s53 = smul.u32 12, %s52
  %p55 = scmp.eq.s32.totalorder 0, 0
  // Predicated region
  $region38: #{triplet_forward.1} parent=0 // pred_check
    %p56 = pneg %p55
  $region39: #{triplet_forward.1} parent=0 // pred_check_branch
    %58 = sbr.rel (%p56) target = $region41
  $region40: #{triplet_forward.1} parent=0 // pred_region
    %vm59 = vcmask 48128
    %60 = vst.msk [vmem:[#allocation2] sm:$0xff] %vm59, 0.0
    %61 = vst.msk [vmem:[#allocation2 + $0x8] sm:$0xff] %vm59, 0.0
    %62 = vst.msk [vmem:[#allocation2 + $0x10] sm:$0xff] %vm59, 0.0
    %63 = vst.msk [vmem:[#allocation2 + $0x18] sm:$0xff] %vm59, 0.0
  $region41: #{triplet_forward.1} parent=0 // pred_fallthru
    _
  %v64 = vld [vmem:[%s1] sm:$0xf]
  %v65 = vld [vmem:[%s1 + $0x4] sm:$0xf]
  %v66 = vld [vmem:[%s1 + $0x8] sm:$0xf]
  %v67 = vld [vmem:[%s1 + $0xc] sm:$0xf]
  %v68 = vld [vmem:[%s51] sm:$0xff]
  %v69 = vld [vmem:[%s51 + $0x8] sm:$0xff]
  %v70 = vld [vmem:[%s51 + $0x10] sm:$0xff]
  %v71 = vld [vmem:[%s51 + $0x18] sm:$0xff]
  %v72 = vld [vmem:[%s51 + $0x20] sm:$0xff]
  %v73 = vld [vmem:[%s51 + $0x28] sm:$0xff]
  %v74 = vld [vmem:[%s51 + $0x30] sm:$0xff]
  %v75 = vld [vmem:[%s51 + $0x38] sm:$0xff]
  %v76 = vld [vmem:[%s51 + $0x40] sm:$0xff]
  %v77 = vld [vmem:[%s51 + $0x48] sm:$0xff]
  %v78 = vld [vmem:[%s51 + $0x50] sm:$0xff]
  %v79 = vld [vmem:[%s51 + $0x58] sm:$0xff]
  %v80 = vld [vmem:[%s51 + $0x60] sm:$0xff]
  %v81 = vld [vmem:[%s51 + $0x68] sm:$0xff]
  %v82 = vld [vmem:[%s51 + $0x70] sm:$0xff]
  %v83 = vld [vmem:[%s51 + $0x78] sm:$0xff]
  %v84 = vld [vmem:[%s51 + $0x80] sm:$0xff]
  %v85 = vld [vmem:[%s51 + $0x88] sm:$0xff]
  %v86 = vld [vmem:[%s51 + $0x90] sm:$0xff]
  %v87 = vld [vmem:[%s51 + $0x98] sm:$0xff]
  %v88 = vld [vmem:[%s51 + $0xa0] sm:$0xff]
  %v89 = vld [vmem:[%s51 + $0xa8] sm:$0xff]
  %v90 = vld [vmem:[%s51 + $0xb0] sm:$0xff]
  %v91 = vld [vmem:[%s51 + $0xb8] sm:$0xff]
  %v92 = vld [vmem:[%s2] sm:$0xff]
  %v93 = vld [vmem:[%s2 + $0x8] sm:$0xff]
  %v94 = vld [vmem:[%s2 + $0x10] sm:$0xff]
  %v95 = vld [vmem:[%s2 + $0x18] sm:$0xff]
  %97 = vset.pattern.permute.xlu0 0
  %98 = vperm.xlu0 %97, %v92
  %v99 = vpop.permute.xlu0 %98
  %102 = vset.pattern.permute.xlu0 0
  %103 = vperm.xlu0 %102, %v93
  %v104 = vpop.permute.xlu0 %103
  %107 = vset.pattern.permute.xlu0 0
  %108 = vperm.xlu0 %107, %v94
  %v109 = vpop.permute.xlu0 %108
  %112 = vset.pattern.permute.xlu0 0
  %113 = vperm.xlu0 %112, %v95
  %v114 = vpop.permute.xlu0 %113
  %v120 = vunpack.c.l.b16 %v64
  %v121 = vunpack.c.l.b16 %v65
  %v122 = vunpack.c.l.b16 %v66
  %v123 = vunpack.c.l.b16 %v67
  %v124 = vpack.c.b16 %v121, %v120
  %v125 = vpack.c.b16 %v123, %v122
  %v150 = vunpack.c.l.b16 %v68
  %v151 = vunpack.c.h.b16 %v68
  %v152 = vunpack.c.l.b16 %v69
  %v153 = vunpack.c.h.b16 %v69
  %v154 = vunpack.c.l.b16 %v70
  %v155 = vunpack.c.h.b16 %v70
  %v156 = vunpack.c.l.b16 %v71
  %v157 = vunpack.c.h.b16 %v71
  %v158 = vunpack.c.l.b16 %v72
  %v159 = vunpack.c.h.b16 %v72
  %v160 = vunpack.c.l.b16 %v73
  %v161 = vunpack.c.h.b16 %v73
  %v162 = vunpack.c.l.b16 %v74
  %v163 = vunpack.c.h.b16 %v74
  %v164 = vunpack.c.l.b16 %v75
  %v165 = vunpack.c.h.b16 %v75
  %v166 = vunpack.c.l.b16 %v76
  %v167 = vunpack.c.h.b16 %v76
  %v168 = vunpack.c.l.b16 %v77
  %v169 = vunpack.c.h.b16 %v77
  %v170 = vunpack.c.l.b16 %v78
  %v171 = vunpack.c.h.b16 %v78
  %v172 = vunpack.c.l.b16 %v79
  %v173 = vunpack.c.h.b16 %v79
  %v174 = vunpack.c.l.b16 %v80
  %v175 = vunpack.c.h.b16 %v80
  %v176 = vunpack.c.l.b16 %v81
  %v177 = vunpack.c.h.b16 %v81
  %v178 = vunpack.c.l.b16 %v82
  %v179 = vunpack.c.h.b16 %v82
  %v180 = vunpack.c.l.b16 %v83
  %v181 = vunpack.c.h.b16 %v83
  %v182 = vunpack.c.l.b16 %v84
  %v183 = vunpack.c.h.b16 %v84
  %v184 = vunpack.c.l.b16 %v85
  %v185 = vunpack.c.h.b16 %v85
  %v186 = vunpack.c.l.b16 %v86
  %v187 = vunpack.c.h.b16 %v86
  %v188 = vunpack.c.l.b16 %v87
  %v189 = vunpack.c.h.b16 %v87
  %v190 = vunpack.c.l.b16 %v88
  %v191 = vunpack.c.h.b16 %v88
  %v192 = vunpack.c.l.b16 %v89
  %v193 = vunpack.c.h.b16 %v89
  %v194 = vunpack.c.l.b16 %v90
  %v195 = vunpack.c.h.b16 %v90
  %v196 = vunpack.c.l.b16 %v91
  %v197 = vunpack.c.h.b16 %v91
  %v198 = vpack.c.b16 %v162, %v150
  %v199 = vpack.c.b16 %v163, %v151
  %v200 = vpack.c.b16 %v164, %v152
  %v201 = vpack.c.b16 %v165, %v153
  %v202 = vpack.c.b16 %v166, %v154
  %v203 = vpack.c.b16 %v167, %v155
  %v204 = vpack.c.b16 %v168, %v156
  %v205 = vpack.c.b16 %v169, %v157
  %v206 = vpack.c.b16 %v170, %v158
  %v207 = vpack.c.b16 %v171, %v159
  %v208 = vpack.c.b16 %v172, %v160
  %v209 = vpack.c.b16 %v173, %v161
  %v210 = vpack.c.b16 %v186, %v174
  %v211 = vpack.c.b16 %v187, %v175
  %v212 = vpack.c.b16 %v188, %v176
  %v213 = vpack.c.b16 %v189, %v177
  %v214 = vpack.c.b16 %v190, %v178
  %v215 = vpack.c.b16 %v191, %v179
  %v216 = vpack.c.b16 %v192, %v180
  %v217 = vpack.c.b16 %v193, %v181
  %v218 = vpack.c.b16 %v194, %v182
  %v219 = vpack.c.b16 %v195, %v183
  %v220 = vpack.c.b16 %v196, %v184
  %v221 = vpack.c.b16 %v197, %v185
  %vm246 = vcmask 261120
  %v248 = vsel %vm246, %v124, 0
  %v251 = vsel %vm246, %v125, 0
  %253 = vmatprep.subr.bf16.mxu0 0
  %254 = vmatpush1.bf16.msra.mxu0 0
  %255 = vmatprep.subr.bf16.mxu0 0
  %256 = vmatpush1.bf16.msra.mxu0 0
  %257 = vmatprep.subr.bf16.mxu0 0
  %258 = vmatpush1.bf16.msra.mxu0 0
  %259 = vmatprep.subr.bf16.mxu0 0
  %260 = vmatpush1.bf16.msra.mxu0 0
  %261 = vmatprep.subr.bf16.mxu0 0
  %262 = vmatpush1.bf16.msra.mxu0 0
  %263 = vmatprep.subr.bf16.mxu0 0
  %264 = vmatpush1.bf16.msra.mxu0 0
  %265 = vmatprep.subr.bf16.mxu0 %v211
  %266 = vmatpush1.bf16.msra.mxu0 %v210
  %267 = vmatprep.subr.bf16.mxu0 %v199
  %268 = vmatpush1.bf16.msra.mxu0 %v198
  %269 = vmatprep.subr.bf16.mxu0 0
  %270 = vmatpush2.bf16.msra.mxu0 0
  %271 = vmatprep.subr.bf16.mxu0 0
  %272 = vmatpush2.bf16.msra.mxu0 0
  %273 = vmatprep.subr.bf16.mxu0 0
  %274 = vmatpush2.bf16.msra.mxu0 0
  %275 = vmatprep.subr.bf16.mxu0 0
  %276 = vmatpush2.bf16.msra.mxu0 0
  %277 = vmatprep.subr.bf16.mxu0 0
  %278 = vmatpush2.bf16.msra.mxu0 0
  %279 = vmatprep.subr.bf16.mxu0 0
  %280 = vmatpush2.bf16.msra.mxu0 0
  %281 = vmatprep.subr.bf16.mxu0 0
  %282 = vmatpush2.bf16.msra.mxu0 0
  %283 = vmatprep.subr.bf16.mxu0 0
  %284 = vmatpush2.bf16.msra.mxu0 0
  %285 = vmatprep.mubr.bf16.mxu0 0
  %286 = vmatmul.mubr.bf16.gmra.mxu0 %v248
  %v287 = vpop.f32.mrf.mxu0
  %v288 = vadd.f32 %v99, %v287
  %v289 = vpop.f32.mrf.mxu0
  %v290 = vadd.f32 %v99, %v289
  %v291 = vpop.f32.mrf.mxu0
  %v292 = vadd.f32 %v104, %v291
  %v293 = vpop.f32.mrf.mxu0
  %v294 = vadd.f32 %v104, %v293
  %295 = vmatprep.mubr.bf16.mxu0 0
  %296 = vmatmul.mubr.bf16.gmra.mxu0 %v251
  %v297 = vpop.f32.mrf.mxu0
  %v298 = vadd.f32 %v109, %v297
  %v299 = vpop.f32.mrf.mxu0
  %v300 = vadd.f32 %v109, %v299
  %v301 = vpop.f32.mrf.mxu0
  %v302 = vadd.f32 %v114, %v301
  %v303 = vpop.f32.mrf.mxu0
  %v304 = vadd.f32 %v114, %v303
  %305 = vdwg.mxu0
  %306 = vmatprep.subr.bf16.mxu0 0
  %307 = vmatpush1.bf16.msra.mxu0 0
  %308 = vmatprep.subr.bf16.mxu0 0
  %309 = vmatpush1.bf16.msra.mxu0 0
  %310 = vmatprep.subr.bf16.mxu0 0
  %311 = vmatpush1.bf16.msra.mxu0 0
  %312 = vmatprep.subr.bf16.mxu0 0
  %313 = vmatpush1.bf16.msra.mxu0 0
  %314 = vmatprep.subr.bf16.mxu0 0
  %315 = vmatpush1.bf16.msra.mxu0 0
  %316 = vmatprep.subr.bf16.mxu0 0
  %317 = vmatpush1.bf16.msra.mxu0 0
  %318 = vmatprep.subr.bf16.mxu0 %v213
  %319 = vmatpush1.bf16.msra.mxu0 %v212
  %320 = vmatprep.subr.bf16.mxu0 %v201
  %321 = vmatpush1.bf16.msra.mxu0 %v200
  %322 = vmatprep.subr.bf16.mxu0 0
  %323 = vmatpush2.bf16.msra.mxu0 0
  %324 = vmatprep.subr.bf16.mxu0 0
  %325 = vmatpush2.bf16.msra.mxu0 0
  %326 = vmatprep.subr.bf16.mxu0 0
  %327 = vmatpush2.bf16.msra.mxu0 0
  %328 = vmatprep.subr.bf16.mxu0 0
  %329 = vmatpush2.bf16.msra.mxu0 0
  %330 = vmatprep.subr.bf16.mxu0 0
  %331 = vmatpush2.bf16.msra.mxu0 0
  %332 = vmatprep.subr.bf16.mxu0 0
  %333 = vmatpush2.bf16.msra.mxu0 0
  %334 = vmatprep.subr.bf16.mxu0 0
  %335 = vmatpush2.bf16.msra.mxu0 0
  %336 = vmatprep.subr.bf16.mxu0 0
  %337 = vmatpush2.bf16.msra.mxu0 0
  %338 = vmatprep.mubr.bf16.mxu0 0
  %339 = vmatmul.mubr.bf16.gmra.mxu0 %v248
  %v340 = vpop.f32.mrf.mxu0
  %v341 = vadd.f32 %v99, %v340
  %v342 = vpop.f32.mrf.mxu0
  %v343 = vadd.f32 %v99, %v342
  %v344 = vpop.f32.mrf.mxu0
  %v345 = vadd.f32 %v104, %v344
  %v346 = vpop.f32.mrf.mxu0
  %v347 = vadd.f32 %v104, %v346
  %348 = vmatprep.mubr.bf16.mxu0 0
  %349 = vmatmul.mubr.bf16.gmra.mxu0 %v251
  %v350 = vpop.f32.mrf.mxu0
  %v351 = vadd.f32 %v109, %v350
  %v352 = vpop.f32.mrf.mxu0
  %v353 = vadd.f32 %v109, %v352
  %v354 = vpop.f32.mrf.mxu0
  %v355 = vadd.f32 %v114, %v354
  %v356 = vpop.f32.mrf.mxu0
  %v357 = vadd.f32 %v114, %v356
  %358 = vdwg.mxu0
  %359 = vmatprep.subr.bf16.mxu0 0
  %360 = vmatpush1.bf16.msra.mxu0 0
  %361 = vmatprep.subr.bf16.mxu0 0
  %362 = vmatpush1.bf16.msra.mxu0 0
  %363 = vmatprep.subr.bf16.mxu0 0
  %364 = vmatpush1.bf16.msra.mxu0 0
  %365 = vmatprep.subr.bf16.mxu0 0
  %366 = vmatpush1.bf16.msra.mxu0 0
  %367 = vmatprep.subr.bf16.mxu0 0
  %368 = vmatpush1.bf16.msra.mxu0 0
  %369 = vmatprep.subr.bf16.mxu0 0
  %370 = vmatpush1.bf16.msra.mxu0 0
  %371 = vmatprep.subr.bf16.mxu0 %v215
  %372 = vmatpush1.bf16.msra.mxu0 %v214
  %373 = vmatprep.subr.bf16.mxu0 %v203
  %374 = vmatpush1.bf16.msra.mxu0 %v202
  %375 = vmatprep.subr.bf16.mxu0 0
  %376 = vmatpush2.bf16.msra.mxu0 0
  %377 = vmatprep.subr.bf16.mxu0 0
  %378 = vmatpush2.bf16.msra.mxu0 0
  %379 = vmatprep.subr.bf16.mxu0 0
  %380 = vmatpush2.bf16.msra.mxu0 0
  %381 = vmatprep.subr.bf16.mxu0 0
  %382 = vmatpush2.bf16.msra.mxu0 0
  %383 = vmatprep.subr.bf16.mxu0 0
  %384 = vmatpush2.bf16.msra.mxu0 0
  %385 = vmatprep.subr.bf16.mxu0 0
  %386 = vmatpush2.bf16.msra.mxu0 0
  %387 = vmatprep.subr.bf16.mxu0 0
  %388 = vmatpush2.bf16.msra.mxu0 0
  %389 = vmatprep.subr.bf16.mxu0 0
  %390 = vmatpush2.bf16.msra.mxu0 0
  %391 = vmatprep.mubr.bf16.mxu0 0
  %392 = vmatmul.mubr.bf16.gmra.mxu0 %v248
  %v393 = vpop.f32.mrf.mxu0
  %v394 = vadd.f32 %v99, %v393
  %v395 = vpop.f32.mrf.mxu0
  %v396 = vadd.f32 %v99, %v395
  %v397 = vpop.f32.mrf.mxu0
  %v398 = vadd.f32 %v104, %v397
  %v399 = vpop.f32.mrf.mxu0
  %v400 = vadd.f32 %v104, %v399
  %401 = vmatprep.mubr.bf16.mxu0 0
  %402 = vmatmul.mubr.bf16.gmra.mxu0 %v251
  %v403 = vpop.f32.mrf.mxu0
  %v404 = vadd.f32 %v109, %v403
  %v405 = vpop.f32.mrf.mxu0
  %v406 = vadd.f32 %v109, %v405
  %v407 = vpop.f32.mrf.mxu0
  %v408 = vadd.f32 %v114, %v407
  %v409 = vpop.f32.mrf.mxu0
  %v410 = vadd.f32 %v114, %v409
  %411 = vdwg.mxu0
  %412 = vmatprep.subr.bf16.mxu0 0
  %413 = vmatpush1.bf16.msra.mxu0 0
  %414 = vmatprep.subr.bf16.mxu0 0
  %415 = vmatpush1.bf16.msra.mxu0 0
  %416 = vmatprep.subr.bf16.mxu0 0
  %417 = vmatpush1.bf16.msra.mxu0 0
  %418 = vmatprep.subr.bf16.mxu0 0
  %419 = vmatpush1.bf16.msra.mxu0 0
  %420 = vmatprep.subr.bf16.mxu0 0
  %421 = vmatpush1.bf16.msra.mxu0 0
  %422 = vmatprep.subr.bf16.mxu0 0
  %423 = vmatpush1.bf16.msra.mxu0 0
  %424 = vmatprep.subr.bf16.mxu0 %v217
  %425 = vmatpush1.bf16.msra.mxu0 %v216
  %426 = vmatprep.subr.bf16.mxu0 %v205
  %427 = vmatpush1.bf16.msra.mxu0 %v204
  %428 = vmatprep.subr.bf16.mxu0 0
  %429 = vmatpush2.bf16.msra.mxu0 0
  %430 = vmatprep.subr.bf16.mxu0 0
  %431 = vmatpush2.bf16.msra.mxu0 0
  %432 = vmatprep.subr.bf16.mxu0 0
  %433 = vmatpush2.bf16.msra.mxu0 0
  %434 = vmatprep.subr.bf16.mxu0 0
  %435 = vmatpush2.bf16.msra.mxu0 0
  %436 = vmatprep.subr.bf16.mxu0 0
  %437 = vmatpush2.bf16.msra.mxu0 0
  %438 = vmatprep.subr.bf16.mxu0 0
  %439 = vmatpush2.bf16.msra.mxu0 0
  %440 = vmatprep.subr.bf16.mxu0 0
  %441 = vmatpush2.bf16.msra.mxu0 0
  %442 = vmatprep.subr.bf16.mxu0 0
  %443 = vmatpush2.bf16.msra.mxu0 0
  %444 = vmatprep.mubr.bf16.mxu0 0
  %445 = vmatmul.mubr.bf16.gmra.mxu0 %v248
  %v446 = vpop.f32.mrf.mxu0
  %v447 = vadd.f32 %v99, %v446
  %v448 = vpop.f32.mrf.mxu0
  %v449 = vadd.f32 %v99, %v448
  %v450 = vpop.f32.mrf.mxu0
  %v451 = vadd.f32 %v104, %v450
  %v452 = vpop.f32.mrf.mxu0
  %v453 = vadd.f32 %v104, %v452
  %454 = vmatprep.mubr.bf16.mxu0 0
  %455 = vmatmul.mubr.bf16.gmra.mxu0 %v251
  %v456 = vpop.f32.mrf.mxu0
  %v457 = vadd.f32 %v109, %v456
  %v458 = vpop.f32.mrf.mxu0
  %v459 = vadd.f32 %v109, %v458
  %v460 = vpop.f32.mrf.mxu0
  %v461 = vadd.f32 %v114, %v460
  %v462 = vpop.f32.mrf.mxu0
  %v463 = vadd.f32 %v114, %v462
  %464 = vdwg.mxu0
  %465 = vmatprep.subr.bf16.mxu0 0
  %466 = vmatpush1.bf16.msra.mxu0 0
  %467 = vmatprep.subr.bf16.mxu0 0
  %468 = vmatpush1.bf16.msra.mxu0 0
  %469 = vmatprep.subr.bf16.mxu0 0
  %470 = vmatpush1.bf16.msra.mxu0 0
  %471 = vmatprep.subr.bf16.mxu0 0
  %472 = vmatpush1.bf16.msra.mxu0 0
  %473 = vmatprep.subr.bf16.mxu0 0
  %474 = vmatpush1.bf16.msra.mxu0 0
  %475 = vmatprep.subr.bf16.mxu0 0
  %476 = vmatpush1.bf16.msra.mxu0 0
  %477 = vmatprep.subr.bf16.mxu0 %v219
  %478 = vmatpush1.bf16.msra.mxu0 %v218
  %479 = vmatprep.subr.bf16.mxu0 %v207
  %480 = vmatpush1.bf16.msra.mxu0 %v206
  %481 = vmatprep.subr.bf16.mxu0 0
  %482 = vmatpush2.bf16.msra.mxu0 0
  %483 = vmatprep.subr.bf16.mxu0 0
  %484 = vmatpush2.bf16.msra.mxu0 0
  %485 = vmatprep.subr.bf16.mxu0 0
  %486 = vmatpush2.bf16.msra.mxu0 0
  %487 = vmatprep.subr.bf16.mxu0 0
  %488 = vmatpush2.bf16.msra.mxu0 0
  %489 = vmatprep.subr.bf16.mxu0 0
  %490 = vmatpush2.bf16.msra.mxu0 0
  %491 = vmatprep.subr.bf16.mxu0 0
  %492 = vmatpush2.bf16.msra.mxu0 0
  %493 = vmatprep.subr.bf16.mxu0 0
  %494 = vmatpush2.bf16.msra.mxu0 0
  %495 = vmatprep.subr.bf16.mxu0 0
  %496 = vmatpush2.bf16.msra.mxu0 0
  %497 = vmatprep.mubr.bf16.mxu0 0
  %498 = vmatmul.mubr.bf16.gmra.mxu0 %v248
  %v499 = vpop.f32.mrf.mxu0
  %v500 = vadd.f32 %v99, %v499
  %v501 = vpop.f32.mrf.mxu0
  %v502 = vadd.f32 %v99, %v501
  %v503 = vpop.f32.mrf.mxu0
  %v504 = vadd.f32 %v104, %v503
  %v505 = vpop.f32.mrf.mxu0
  %v506 = vadd.f32 %v104, %v505
  %507 = vmatprep.mubr.bf16.mxu0 0
  %508 = vmatmul.mubr.bf16.gmra.mxu0 %v251
  %v509 = vpop.f32.mrf.mxu0
  %v510 = vadd.f32 %v109, %v509
  %v511 = vpop.f32.mrf.mxu0
  %v512 = vadd.f32 %v109, %v511
  %v513 = vpop.f32.mrf.mxu0
  %v514 = vadd.f32 %v114, %v513
  %v515 = vpop.f32.mrf.mxu0
  %v516 = vadd.f32 %v114, %v515
  %517 = vdwg.mxu0
  %518 = vmatprep.subr.bf16.mxu0 0
  %519 = vmatpush1.bf16.msra.mxu0 0
  %520 = vmatprep.subr.bf16.mxu0 0
  %521 = vmatpush1.bf16.msra.mxu0 0
  %522 = vmatprep.subr.bf16.mxu0 0
  %523 = vmatpush1.bf16.msra.mxu0 0
  %524 = vmatprep.subr.bf16.mxu0 0
  %525 = vmatpush1.bf16.msra.mxu0 0
  %526 = vmatprep.subr.bf16.mxu0 0
  %527 = vmatpush1.bf16.msra.mxu0 0
  %528 = vmatprep.subr.bf16.mxu0 0
  %529 = vmatpush1.bf16.msra.mxu0 0
  %530 = vmatprep.subr.bf16.mxu0 %v221
  %531 = vmatpush1.bf16.msra.mxu0 %v220
  %532 = vmatprep.subr.bf16.mxu0 %v209
  %533 = vmatpush1.bf16.msra.mxu0 %v208
  %534 = vmatprep.subr.bf16.mxu0 0
  %535 = vmatpush2.bf16.msra.mxu0 0
  %536 = vmatprep.subr.bf16.mxu0 0
  %537 = vmatpush2.bf16.msra.mxu0 0
  %538 = vmatprep.subr.bf16.mxu0 0
  %539 = vmatpush2.bf16.msra.mxu0 0
  %540 = vmatprep.subr.bf16.mxu0 0
  %541 = vmatpush2.bf16.msra.mxu0 0
  %542 = vmatprep.subr.bf16.mxu0 0
  %543 = vmatpush2.bf16.msra.mxu0 0
  %544 = vmatprep.subr.bf16.mxu0 0
  %545 = vmatpush2.bf16.msra.mxu0 0
  %546 = vmatprep.subr.bf16.mxu0 0
  %547 = vmatpush2.bf16.msra.mxu0 0
  %548 = vmatprep.subr.bf16.mxu0 0
  %549 = vmatpush2.bf16.msra.mxu0 0
  %550 = vmatprep.mubr.bf16.mxu0 0
  %551 = vmatmul.mubr.bf16.gmra.mxu0 %v248
  %v552 = vpop.f32.mrf.mxu0
  %v553 = vadd.f32 %v99, %v552
  %v554 = vpop.f32.mrf.mxu0
  %v555 = vadd.f32 %v99, %v554
  %v556 = vpop.f32.mrf.mxu0
  %v557 = vadd.f32 %v104, %v556
  %v558 = vpop.f32.mrf.mxu0
  %v559 = vadd.f32 %v104, %v558
  %560 = vmatprep.mubr.bf16.mxu0 0
  %561 = vmatmul.mubr.bf16.gmra.mxu0 %v251
  %v562 = vpop.f32.mrf.mxu0
  %v563 = vadd.f32 %v109, %v562
  %v564 = vpop.f32.mrf.mxu0
  %v565 = vadd.f32 %v109, %v564
  %v566 = vpop.f32.mrf.mxu0
  %v567 = vadd.f32 %v114, %v566
  %v568 = vpop.f32.mrf.mxu0
  %v569 = vadd.f32 %v114, %v568
  %570 = vdwg.mxu0
  %v571 = vxor.u32 %v288, 2147483648
  %v572 = vxor.u32 %v290, 2147483648
  %v573 = vxor.u32 %v341, 2147483648
  %v574 = vxor.u32 %v343, 2147483648
  %v575 = vxor.u32 %v394, 2147483648
  %v576 = vxor.u32 %v396, 2147483648
  %v577 = vxor.u32 %v447, 2147483648
  %v578 = vxor.u32 %v449, 2147483648
  %v579 = vxor.u32 %v500, 2147483648
  %v580 = vxor.u32 %v502, 2147483648
  %v581 = vxor.u32 %v553, 2147483648
  %v582 = vxor.u32 %v555, 2147483648
  %v583 = vxor.u32 %v292, 2147483648
  %v584 = vxor.u32 %v294, 2147483648
  %v585 = vxor.u32 %v345, 2147483648
  %v586 = vxor.u32 %v347, 2147483648
  %v587 = vxor.u32 %v398, 2147483648
  %v588 = vxor.u32 %v400, 2147483648
  %v589 = vxor.u32 %v451, 2147483648
  %v590 = vxor.u32 %v453, 2147483648
  %v591 = vxor.u32 %v504, 2147483648
  %v592 = vxor.u32 %v506, 2147483648
  %v593 = vxor.u32 %v557, 2147483648
  %v594 = vxor.u32 %v559, 2147483648
  %v595 = vxor.u32 %v298, 2147483648
  %v596 = vxor.u32 %v300, 2147483648
  %v597 = vxor.u32 %v351, 2147483648
  %v598 = vxor.u32 %v353, 2147483648
  %v599 = vxor.u32 %v404, 2147483648
  %v600 = vxor.u32 %v406, 2147483648
  %v601 = vxor.u32 %v457, 2147483648
  %v602 = vxor.u32 %v459, 2147483648
  %v603 = vxor.u32 %v510, 2147483648
  %v604 = vxor.u32 %v512, 2147483648
  %v605 = vxor.u32 %v563, 2147483648
  %v606 = vxor.u32 %v565, 2147483648
  %v607 = vxor.u32 %v302, 2147483648
  %v608 = vxor.u32 %v304, 2147483648
  %v609 = vxor.u32 %v355, 2147483648
  %v610 = vxor.u32 %v357, 2147483648
  %v611 = vxor.u32 %v408, 2147483648
  %v612 = vxor.u32 %v410, 2147483648
  %v613 = vxor.u32 %v461, 2147483648
  %v614 = vxor.u32 %v463, 2147483648
  %v615 = vxor.u32 %v514, 2147483648
  %v616 = vxor.u32 %v516, 2147483648
  %v617 = vxor.u32 %v567, 2147483648
  %v618 = vxor.u32 %v569, 2147483648
  %v619 = vmul.f32 %v571, 1.442695
  %v620 = vpow.pop %v619
  %v621 = vmul.f32 %v572, 1.442695
  %v622 = vpow.pop %v621
  %v623 = vmul.f32 %v573, 1.442695
  %v624 = vpow.pop %v623
  %v625 = vmul.f32 %v574, 1.442695
  %v626 = vpow.pop %v625
  %v627 = vmul.f32 %v575, 1.442695
  %v628 = vpow.pop %v627
  %v629 = vmul.f32 %v576, 1.442695
  %v630 = vpow.pop %v629
  %v631 = vmul.f32 %v577, 1.442695
  %v632 = vpow.pop %v631
  %v633 = vmul.f32 %v578, 1.442695
  %v634 = vpow.pop %v633
  %v635 = vmul.f32 %v579, 1.442695
  %v636 = vpow.pop %v635
  %v637 = vmul.f32 %v580, 1.442695
  %v638 = vpow.pop %v637
  %v639 = vmul.f32 %v581, 1.442695
  %v640 = vpow.pop %v639
  %v641 = vmul.f32 %v582, 1.442695
  %v642 = vpow.pop %v641
  %v643 = vmul.f32 %v583, 1.442695
  %v644 = vpow.pop %v643
  %v645 = vmul.f32 %v584, 1.442695
  %v646 = vpow.pop %v645
  %v647 = vmul.f32 %v585, 1.442695
  %v648 = vpow.pop %v647
  %v649 = vmul.f32 %v586, 1.442695
  %v650 = vpow.pop %v649
  %v651 = vmul.f32 %v587, 1.442695
  %v652 = vpow.pop %v651
  %v653 = vmul.f32 %v588, 1.442695
  %v654 = vpow.pop %v653
  %v655 = vmul.f32 %v589, 1.442695
  %v656 = vpow.pop %v655
  %v657 = vmul.f32 %v590, 1.442695
  %v658 = vpow.pop %v657
  %v659 = vmul.f32 %v591, 1.442695
  %v660 = vpow.pop %v659
  %v661 = vmul.f32 %v592, 1.442695
  %v662 = vpow.pop %v661
  %v663 = vmul.f32 %v593, 1.442695
  %v664 = vpow.pop %v663
  %v665 = vmul.f32 %v594, 1.442695
  %v666 = vpow.pop %v665
  %v667 = vmul.f32 %v595, 1.442695
  %v668 = vpow.pop %v667
  %v669 = vmul.f32 %v596, 1.442695
  %v670 = vpow.pop %v669
  %v671 = vmul.f32 %v597, 1.442695
  %v672 = vpow.pop %v671
  %v673 = vmul.f32 %v598, 1.442695
  %v674 = vpow.pop %v673
  %v675 = vmul.f32 %v599, 1.442695
  %v676 = vpow.pop %v675
  %v677 = vmul.f32 %v600, 1.442695
  %v678 = vpow.pop %v677
  %v679 = vmul.f32 %v601, 1.442695
  %v680 = vpow.pop %v679
  %v681 = vmul.f32 %v602, 1.442695
  %v682 = vpow.pop %v681
  %v683 = vmul.f32 %v603, 1.442695
  %v684 = vpow.pop %v683
  %v685 = vmul.f32 %v604, 1.442695
  %v686 = vpow.pop %v685
  %v687 = vmul.f32 %v605, 1.442695
  %v688 = vpow.pop %v687
  %v689 = vmul.f32 %v606, 1.442695
  %v690 = vpow.pop %v689
  %v691 = vmul.f32 %v607, 1.442695
  %v692 = vpow.pop %v691
  %v693 = vmul.f32 %v608, 1.442695
  %v694 = vpow.pop %v693
  %v695 = vmul.f32 %v609, 1.442695
  %v696 = vpow.pop %v695
  %v697 = vmul.f32 %v610, 1.442695
  %v698 = vpow.pop %v697
  %v699 = vmul.f32 %v611, 1.442695
  %v700 = vpow.pop %v699
  %v701 = vmul.f32 %v612, 1.442695
  %v702 = vpow.pop %v701
  %v703 = vmul.f32 %v613, 1.442695
  %v704 = vpow.pop %v703
  %v705 = vmul.f32 %v614, 1.442695
  %v706 = vpow.pop %v705
  %v707 = vmul.f32 %v615, 1.442695
  %v708 = vpow.pop %v707
  %v709 = vmul.f32 %v616, 1.442695
  %v710 = vpow.pop %v709
  %v711 = vmul.f32 %v617, 1.442695
  %v712 = vpow.pop %v711
  %v713 = vmul.f32 %v618, 1.442695
  %v714 = vpow.pop %v713
  %v715 = vadd.f32 %v620, 1.0
  %v716 = vadd.f32 %v622, 1.0
  %v717 = vadd.f32 %v624, 1.0
  %v718 = vadd.f32 %v626, 1.0
  %v719 = vadd.f32 %v628, 1.0
  %v720 = vadd.f32 %v630, 1.0
  %v721 = vadd.f32 %v632, 1.0
  %v722 = vadd.f32 %v634, 1.0
  %v723 = vadd.f32 %v636, 1.0
  %v724 = vadd.f32 %v638, 1.0
  %v725 = vadd.f32 %v640, 1.0
  %v726 = vadd.f32 %v642, 1.0
  %v727 = vadd.f32 %v644, 1.0
  %v728 = vadd.f32 %v646, 1.0
  %v729 = vadd.f32 %v648, 1.0
  %v730 = vadd.f32 %v650, 1.0
  %v731 = vadd.f32 %v652, 1.0
  %v732 = vadd.f32 %v654, 1.0
  %v733 = vadd.f32 %v656, 1.0
  %v734 = vadd.f32 %v658, 1.0
  %v735 = vadd.f32 %v660, 1.0
  %v736 = vadd.f32 %v662, 1.0
  %v737 = vadd.f32 %v664, 1.0
  %v738 = vadd.f32 %v666, 1.0
  %v739 = vadd.f32 %v668, 1.0
  %v740 = vadd.f32 %v670, 1.0
  %v741 = vadd.f32 %v672, 1.0
  %v742 = vadd.f32 %v674, 1.0
  %v743 = vadd.f32 %v676, 1.0
  %v744 = vadd.f32 %v678, 1.0
  %v745 = vadd.f32 %v680, 1.0
  %v746 = vadd.f32 %v682, 1.0
  %v747 = vadd.f32 %v684, 1.0
  %v748 = vadd.f32 %v686, 1.0
  %v749 = vadd.f32 %v688, 1.0
  %v750 = vadd.f32 %v690, 1.0
  %v751 = vadd.f32 %v692, 1.0
  %v752 = vadd.f32 %v694, 1.0
  %v753 = vadd.f32 %v696, 1.0
  %v754 = vadd.f32 %v698, 1.0
  %v755 = vadd.f32 %v700, 1.0
  %v756 = vadd.f32 %v702, 1.0
  %v757 = vadd.f32 %v704, 1.0
  %v758 = vadd.f32 %v706, 1.0
  %v759 = vadd.f32 %v708, 1.0
  %v760 = vadd.f32 %v710, 1.0
  %v761 = vadd.f32 %v712, 1.0
  %v762 = vadd.f32 %v714, 1.0
  %v763 = vrcp.pop %v715
  %v764 = vmul.f32 1.0, %v763
  %v765 = vrcp.pop %v716
  %v766 = vmul.f32 1.0, %v765
  %v767 = vrcp.pop %v717
  %v768 = vmul.f32 1.0, %v767
  %v769 = vrcp.pop %v718
  %v770 = vmul.f32 1.0, %v769
  %v771 = vrcp.pop %v719
  %v772 = vmul.f32 1.0, %v771
  %v773 = vrcp.pop %v720
  %v774 = vmul.f32 1.0, %v773
  %v775 = vrcp.pop %v721
  %v776 = vmul.f32 1.0, %v775
  %v777 = vrcp.pop %v722
  %v778 = vmul.f32 1.0, %v777
  %v779 = vrcp.pop %v723
  %v780 = vmul.f32 1.0, %v779
  %v781 = vrcp.pop %v724
  %v782 = vmul.f32 1.0, %v781
  %v783 = vrcp.pop %v725
  %v784 = vmul.f32 1.0, %v783
  %v785 = vrcp.pop %v726
  %v786 = vmul.f32 1.0, %v785
  %v787 = vrcp.pop %v727
  %v788 = vmul.f32 1.0, %v787
  %v789 = vrcp.pop %v728
  %v790 = vmul.f32 1.0, %v789
  %v791 = vrcp.pop %v729
  %v792 = vmul.f32 1.0, %v791
  %v793 = vrcp.pop %v730
  %v794 = vmul.f32 1.0, %v793
  %v795 = vrcp.pop %v731
  %v796 = vmul.f32 1.0, %v795
  %v797 = vrcp.pop %v732
  %v798 = vmul.f32 1.0, %v797
  %v799 = vrcp.pop %v733
  %v800 = vmul.f32 1.0, %v799
  %v801 = vrcp.pop %v734
  %v802 = vmul.f32 1.0, %v801
  %v803 = vrcp.pop %v735
  %v804 = vmul.f32 1.0, %v803
  %v805 = vrcp.pop %v736
  %v806 = vmul.f32 1.0, %v805
  %v807 = vrcp.pop %v737
  %v808 = vmul.f32 1.0, %v807
  %v809 = vrcp.pop %v738
  %v810 = vmul.f32 1.0, %v809
  %v811 = vrcp.pop %v739
  %v812 = vmul.f32 1.0, %v811
  %v813 = vrcp.pop %v740
  %v814 = vmul.f32 1.0, %v813
  %v815 = vrcp.pop %v741
  %v816 = vmul.f32 1.0, %v815
  %v817 = vrcp.pop %v742
  %v818 = vmul.f32 1.0, %v817
  %v819 = vrcp.pop %v743
  %v820 = vmul.f32 1.0, %v819
  %v821 = vrcp.pop %v744
  %v822 = vmul.f32 1.0, %v821
  %v823 = vrcp.pop %v745
  %v824 = vmul.f32 1.0, %v823
  %v825 = vrcp.pop %v746
  %v826 = vmul.f32 1.0, %v825
  %v827 = vrcp.pop %v747
  %v828 = vmul.f32 1.0, %v827
  %v829 = vrcp.pop %v748
  %v830 = vmul.f32 1.0, %v829
  %v831 = vrcp.pop %v749
  %v832 = vmul.f32 1.0, %v831
  %v833 = vrcp.pop %v750
  %v834 = vmul.f32 1.0, %v833
  %v835 = vrcp.pop %v751
  %v836 = vmul.f32 1.0, %v835
  %v837 = vrcp.pop %v752
  %v838 = vmul.f32 1.0, %v837
  %v839 = vrcp.pop %v753
  %v840 = vmul.f32 1.0, %v839
  %v841 = vrcp.pop %v754
  %v842 = vmul.f32 1.0, %v841
  %v843 = vrcp.pop %v755
  %v844 = vmul.f32 1.0, %v843
  %v845 = vrcp.pop %v756
  %v846 = vmul.f32 1.0, %v845
  %v847 = vrcp.pop %v757
  %v848 = vmul.f32 1.0, %v847
  %v849 = vrcp.pop %v758
  %v850 = vmul.f32 1.0, %v849
  %v851 = vrcp.pop %v759
  %v852 = vmul.f32 1.0, %v851
  %v853 = vrcp.pop %v760
  %v854 = vmul.f32 1.0, %v853
  %v855 = vrcp.pop %v761
  %v856 = vmul.f32 1.0, %v855
  %v857 = vrcp.pop %v762
  %v858 = vmul.f32 1.0, %v857
  %v859 = vmul.f32 %v288, %v764
  %v860 = vmul.f32 %v290, %v766
  %v861 = vmul.f32 %v341, %v768
  %v862 = vmul.f32 %v343, %v770
  %v863 = vmul.f32 %v394, %v772
  %v864 = vmul.f32 %v396, %v774
  %v865 = vmul.f32 %v447, %v776
  %v866 = vmul.f32 %v449, %v778
  %v867 = vmul.f32 %v500, %v780
  %v868 = vmul.f32 %v502, %v782
  %v869 = vmul.f32 %v553, %v784
  %v870 = vmul.f32 %v555, %v786
  %v871 = vmul.f32 %v292, %v788
  %v872 = vmul.f32 %v294, %v790
  %v873 = vmul.f32 %v345, %v792
  %v874 = vmul.f32 %v347, %v794
  %v875 = vmul.f32 %v398, %v796
  %v876 = vmul.f32 %v400, %v798
  %v877 = vmul.f32 %v451, %v800
  %v878 = vmul.f32 %v453, %v802
  %v879 = vmul.f32 %v504, %v804
  %v880 = vmul.f32 %v506, %v806
  %v881 = vmul.f32 %v557, %v808
  %v882 = vmul.f32 %v559, %v810
  %v883 = vmul.f32 %v298, %v812
  %v884 = vmul.f32 %v300, %v814
  %v885 = vmul.f32 %v351, %v816
  %v886 = vmul.f32 %v353, %v818
  %v887 = vmul.f32 %v404, %v820
  %v888 = vmul.f32 %v406, %v822
  %v889 = vmul.f32 %v457, %v824
  %v890 = vmul.f32 %v459, %v826
  %v891 = vmul.f32 %v510, %v828
  %v892 = vmul.f32 %v512, %v830
  %v893 = vmul.f32 %v563, %v832
  %v894 = vmul.f32 %v565, %v834
  %v895 = vmul.f32 %v302, %v836
  %v896 = vmul.f32 %v304, %v838
  %v897 = vmul.f32 %v355, %v840
  %v898 = vmul.f32 %v357, %v842
  %v899 = vmul.f32 %v408, %v844
  %v900 = vmul.f32 %v410, %v846
  %v901 = vmul.f32 %v461, %v848
  %v902 = vmul.f32 %v463, %v850
  %v903 = vmul.f32 %v514, %v852
  %v904 = vmul.f32 %v516, %v854
  %v905 = vmul.f32 %v567, %v856
  %v906 = vmul.f32 %v569, %v858
  %v907 = vpack.c.bf16 %v871, %v859
  %v908 = vpack.c.bf16 %v872, %v860
  %v909 = vpack.c.bf16 %v873, %v861
  %v910 = vpack.c.bf16 %v874, %v862
  %v911 = vpack.c.bf16 %v875, %v863
  %v912 = vpack.c.bf16 %v876, %v864
  %v913 = vpack.c.bf16 %v877, %v865
  %v914 = vpack.c.bf16 %v878, %v866
  %v915 = vpack.c.bf16 %v879, %v867
  %v916 = vpack.c.bf16 %v880, %v868
  %v917 = vpack.c.bf16 %v881, %v869
  %v918 = vpack.c.bf16 %v882, %v870
  %v919 = vpack.c.bf16 %v895, %v883
  %v920 = vpack.c.bf16 %v896, %v884
  %v921 = vpack.c.bf16 %v897, %v885
  %v922 = vpack.c.bf16 %v898, %v886
  %v923 = vpack.c.bf16 %v899, %v887
  %v924 = vpack.c.bf16 %v900, %v888
  %v925 = vpack.c.bf16 %v901, %v889
  %v926 = vpack.c.bf16 %v902, %v890
  %v927 = vpack.c.bf16 %v903, %v891
  %v928 = vpack.c.bf16 %v904, %v892
  %v929 = vpack.c.bf16 %v905, %v893
  %v930 = vpack.c.bf16 %v906, %v894
  %s931 = smul.u32 0, 1536
  %v932 = vlaneseq
  %v933 = vshrl.u32 %v932, 7
  %v934 = vadd.s32 %v933, 8
  %v935 = vadd.s32 %v933, 16
  %v936 = vadd.s32 %v933, 24
  %v937 = vadd.s32 %v933, 32
  %v938 = vadd.s32 %v933, 40
  %v939 = vadd.s32 %v933, 48
  %v940 = vadd.s32 %v933, 56
  %v941 = vadd.s32 %v933, 64
  %v942 = vadd.s32 %v933, 72
  %v943 = vadd.s32 %v933, 80
  %v944 = vadd.s32 %v933, 88
  %v945 = vadd.s32 %v933, 96
  %v946 = vadd.s32 %v933, 104
  %v947 = vadd.s32 %v933, 112
  %v948 = vadd.s32 %v933, 120
  %v949 = vadd.s32 %v933, 128
  %v950 = vadd.s32 %v933, 136
  %v951 = vadd.s32 %v933, 144
  %v952 = vadd.s32 %v933, 152
  %v953 = vadd.s32 %v933, 160
  %v954 = vadd.s32 %v933, 168
  %v955 = vadd.s32 %v933, 176
  %v956 = vadd.s32 %v933, 184
  %v957 = vadd.s32 %v933, 192
  %v958 = vadd.s32 %v933, 200
  %v959 = vadd.s32 %v933, 208
  %v960 = vadd.s32 %v933, 216
  %v961 = vadd.s32 %v933, 224
  %v962 = vadd.s32 %v933, 232
  %v963 = vadd.s32 %v933, 240
  %v964 = vadd.s32 %v933, 248
  %v965 = vadd.s32 %v933, 256
  %v966 = vadd.s32 %v933, 264
  %v967 = vadd.s32 %v933, 272
  %v968 = vadd.s32 %v933, 280
  %v969 = vadd.s32 %v933, 288
  %v970 = vadd.s32 %v933, 296
  %v971 = vadd.s32 %v933, 304
  %v972 = vadd.s32 %v933, 312
  %v973 = vadd.s32 %v933, 320
  %v974 = vadd.s32 %v933, 328
  %v975 = vadd.s32 %v933, 336
  %v976 = vadd.s32 %v933, 344
  %v977 = vadd.s32 %v933, 352
  %v978 = vadd.s32 %v933, 360
  %v979 = vadd.s32 %v933, 368
  %v980 = vadd.s32 %v933, 376
  %v981 = vadd.s32 %v933, 384
  %v982 = vadd.s32 %v933, 392
  %v983 = vadd.s32 %v933, 400
  %v984 = vadd.s32 %v933, 408
  %v985 = vadd.s32 %v933, 416
  %v986 = vadd.s32 %v933, 424
  %v987 = vadd.s32 %v933, 432
  %v988 = vadd.s32 %v933, 440
  %v989 = vadd.s32 %v933, 448
  %v990 = vadd.s32 %v933, 456
  %v991 = vadd.s32 %v933, 464
  %v992 = vadd.s32 %v933, 472
  %v993 = vadd.s32 %v933, 480
  %v994 = vadd.s32 %v933, 488
  %v995 = vadd.s32 %v933, 496
  %v996 = vadd.s32 %v933, 504
  %v997 = vadd.s32 %v933, 512
  %v998 = vadd.s32 %v933, 520
  %v999 = vadd.s32 %v933, 528
  %v1000 = vadd.s32 %v933, 536
  %v1001 = vadd.s32 %v933, 544
  %v1002 = vadd.s32 %v933, 552
  %v1003 = vadd.s32 %v933, 560
  %v1004 = vadd.s32 %v933, 568
  %v1005 = vadd.s32 %v933, 576
  %v1006 = vadd.s32 %v933, 584
  %v1007 = vadd.s32 %v933, 592
  %v1008 = vadd.s32 %v933, 600
  %v1009 = vadd.s32 %v933, 608
  %v1010 = vadd.s32 %v933, 616
  %v1011 = vadd.s32 %v933, 624
  %v1012 = vadd.s32 %v933, 632
  %v1013 = vadd.s32 %v933, 640
  %v1014 = vadd.s32 %v933, 648
  %v1015 = vadd.s32 %v933, 656
  %v1016 = vadd.s32 %v933, 664
  %v1017 = vadd.s32 %v933, 672
  %v1018 = vadd.s32 %v933, 680
  %v1019 = vadd.s32 %v933, 688
  %v1020 = vadd.s32 %v933, 696
  %v1021 = vadd.s32 %v933, 704
  %v1022 = vadd.s32 %v933, 712
  %v1023 = vadd.s32 %v933, 720
  %v1024 = vadd.s32 %v933, 728
  %v1025 = vadd.s32 %v933, 736
  %v1026 = vadd.s32 %v933, 744
  %v1027 = vadd.s32 %v933, 752
  %v1028 = vadd.s32 %v933, 760
  %v1029 = vadd.s32 %v933, 768
  %v1030 = vadd.s32 %v933, 776
  %v1031 = vadd.s32 %v933, 784
  %v1032 = vadd.s32 %v933, 792
  %v1033 = vadd.s32 %v933, 800
  %v1034 = vadd.s32 %v933, 808
  %v1035 = vadd.s32 %v933, 816
  %v1036 = vadd.s32 %v933, 824
  %v1037 = vadd.s32 %v933, 832
  %v1038 = vadd.s32 %v933, 840
  %v1039 = vadd.s32 %v933, 848
  %v1040 = vadd.s32 %v933, 856
  %v1041 = vadd.s32 %v933, 864
  %v1042 = vadd.s32 %v933, 872
  %v1043 = vadd.s32 %v933, 880
  %v1044 = vadd.s32 %v933, 888
  %v1045 = vadd.s32 %v933, 896
  %v1046 = vadd.s32 %v933, 904
  %v1047 = vadd.s32 %v933, 912
  %v1048 = vadd.s32 %v933, 920
  %v1049 = vadd.s32 %v933, 928
  %v1050 = vadd.s32 %v933, 936
  %v1051 = vadd.s32 %v933, 944
  %v1052 = vadd.s32 %v933, 952
  %v1053 = vadd.s32 %v933, 960
  %v1054 = vadd.s32 %v933, 968
  %v1055 = vadd.s32 %v933, 976
  %v1056 = vadd.s32 %v933, 984
  %v1057 = vadd.s32 %v933, 992
  %v1058 = vadd.s32 %v933, 1000
  %v1059 = vadd.s32 %v933, 1008
  %v1060 = vadd.s32 %v933, 1016
  %v1061 = vadd.s32 %v933, 1024
  %v1062 = vadd.s32 %v933, 1032
  %v1063 = vadd.s32 %v933, 1040
  %v1064 = vadd.s32 %v933, 1048
  %v1065 = vadd.s32 %v933, 1056
  %v1066 = vadd.s32 %v933, 1064
  %v1067 = vadd.s32 %v933, 1072
  %v1068 = vadd.s32 %v933, 1080
  %v1069 = vadd.s32 %v933, 1088
  %v1070 = vadd.s32 %v933, 1096
  %v1071 = vadd.s32 %v933, 1104
  %v1072 = vadd.s32 %v933, 1112
  %v1073 = vadd.s32 %v933, 1120
  %v1074 = vadd.s32 %v933, 1128
  %v1075 = vadd.s32 %v933, 1136
  %v1076 = vadd.s32 %v933, 1144
  %v1077 = vadd.s32 %v933, 1152
  %v1078 = vadd.s32 %v933, 1160
  %v1079 = vadd.s32 %v933, 1168
  %v1080 = vadd.s32 %v933, 1176
  %v1081 = vadd.s32 %v933, 1184
  %v1082 = vadd.s32 %v933, 1192
  %v1083 = vadd.s32 %v933, 1200
  %v1084 = vadd.s32 %v933, 1208
  %v1085 = vadd.s32 %v933, 1216
  %v1086 = vadd.s32 %v933, 1224
  %v1087 = vadd.s32 %v933, 1232
  %v1088 = vadd.s32 %v933, 1240
  %v1089 = vadd.s32 %v933, 1248
  %v1090 = vadd.s32 %v933, 1256
  %v1091 = vadd.s32 %v933, 1264
  %v1092 = vadd.s32 %v933, 1272
  %v1093 = vadd.s32 %v933, 1280
  %v1094 = vadd.s32 %v933, 1288
  %v1095 = vadd.s32 %v933, 1296
  %v1096 = vadd.s32 %v933, 1304
  %v1097 = vadd.s32 %v933, 1312
  %v1098 = vadd.s32 %v933, 1320
  %v1099 = vadd.s32 %v933, 1328
  %v1100 = vadd.s32 %v933, 1336
  %v1101 = vadd.s32 %v933, 1344
  %v1102 = vadd.s32 %v933, 1352
  %v1103 = vadd.s32 %v933, 1360
  %v1104 = vadd.s32 %v933, 1368
  %v1105 = vadd.s32 %v933, 1376
  %v1106 = vadd.s32 %v933, 1384
  %v1107 = vadd.s32 %v933, 1392
  %v1108 = vadd.s32 %v933, 1400
  %v1109 = vadd.s32 %v933, 1408
  %v1110 = vadd.s32 %v933, 1416
  %v1111 = vadd.s32 %v933, 1424
  %v1112 = vadd.s32 %v933, 1432
  %v1113 = vadd.s32 %v933, 1440
  %v1114 = vadd.s32 %v933, 1448
  %v1115 = vadd.s32 %v933, 1456
  %v1116 = vadd.s32 %v933, 1464
  %v1117 = vadd.s32 %v933, 1472
  %v1118 = vadd.s32 %v933, 1480
  %v1119 = vadd.s32 %v933, 1488
  %v1120 = vadd.s32 %v933, 1496
  %v1121 = vadd.s32 %v933, 1504
  %v1122 = vadd.s32 %v933, 1512
  %v1123 = vadd.s32 %v933, 1520
  %v1124 = vadd.s32 %v933, 1528
  %v1125 = vstv %s931
  %v1126 = vadd.s32 %v1125, %v933
  %v1127 = vadd.s32 %v1125, %v934
  %v1128 = vadd.s32 %v1125, %v935
  %v1129 = vadd.s32 %v1125, %v936
  %v1130 = vadd.s32 %v1125, %v937
  %v1131 = vadd.s32 %v1125, %v938
  %v1132 = vadd.s32 %v1125, %v939
  %v1133 = vadd.s32 %v1125, %v940
  %v1134 = vadd.s32 %v1125, %v941
  %v1135 = vadd.s32 %v1125, %v942
  %v1136 = vadd.s32 %v1125, %v943
  %v1137 = vadd.s32 %v1125, %v944
  %v1138 = vadd.s32 %v1125, %v945
  %v1139 = vadd.s32 %v1125, %v946
  %v1140 = vadd.s32 %v1125, %v947
  %v1141 = vadd.s32 %v1125, %v948
  %v1142 = vadd.s32 %v1125, %v949
  %v1143 = vadd.s32 %v1125, %v950
  %v1144 = vadd.s32 %v1125, %v951
  %v1145 = vadd.s32 %v1125, %v952
  %v1146 = vadd.s32 %v1125, %v953
  %v1147 = vadd.s32 %v1125, %v954
  %v1148 = vadd.s32 %v1125, %v955
  %v1149 = vadd.s32 %v1125, %v956
  %v1150 = vadd.s32 %v1125, %v957
  %v1151 = vadd.s32 %v1125, %v958
  %v1152 = vadd.s32 %v1125, %v959
  %v1153 = vadd.s32 %v1125, %v960
  %v1154 = vadd.s32 %v1125, %v961
  %v1155 = vadd.s32 %v1125, %v962
  %v1156 = vadd.s32 %v1125, %v963
  %v1157 = vadd.s32 %v1125, %v964
  %v1158 = vadd.s32 %v1125, %v965
  %v1159 = vadd.s32 %v1125, %v966
  %v1160 = vadd.s32 %v1125, %v967
  %v1161 = vadd.s32 %v1125, %v968
  %v1162 = vadd.s32 %v1125, %v969
  %v1163 = vadd.s32 %v1125, %v970
  %v1164 = vadd.s32 %v1125, %v971
  %v1165 = vadd.s32 %v1125, %v972
  %v1166 = vadd.s32 %v1125, %v973
  %v1167 = vadd.s32 %v1125, %v974
  %v1168 = vadd.s32 %v1125, %v975
  %v1169 = vadd.s32 %v1125, %v976
  %v1170 = vadd.s32 %v1125, %v977
  %v1171 = vadd.s32 %v1125, %v978
  %v1172 = vadd.s32 %v1125, %v979
  %v1173 = vadd.s32 %v1125, %v980
  %v1174 = vadd.s32 %v1125, %v981
  %v1175 = vadd.s32 %v1125, %v982
  %v1176 = vadd.s32 %v1125, %v983
  %v1177 = vadd.s32 %v1125, %v984
  %v1178 = vadd.s32 %v1125, %v985
  %v1179 = vadd.s32 %v1125, %v986
  %v1180 = vadd.s32 %v1125, %v987
  %v1181 = vadd.s32 %v1125, %v988
  %v1182 = vadd.s32 %v1125, %v989
  %v1183 = vadd.s32 %v1125, %v990
  %v1184 = vadd.s32 %v1125, %v991
  %v1185 = vadd.s32 %v1125, %v992
  %v1186 = vadd.s32 %v1125, %v993
  %v1187 = vadd.s32 %v1125, %v994
  %v1188 = vadd.s32 %v1125, %v995
  %v1189 = vadd.s32 %v1125, %v996
  %v1190 = vadd.s32 %v1125, %v997
  %v1191 = vadd.s32 %v1125, %v998
  %v1192 = vadd.s32 %v1125, %v999
  %v1193 = vadd.s32 %v1125, %v1000
  %v1194 = vadd.s32 %v1125, %v1001
  %v1195 = vadd.s32 %v1125, %v1002
  %v1196 = vadd.s32 %v1125, %v1003
  %v1197 = vadd.s32 %v1125, %v1004
  %v1198 = vadd.s32 %v1125, %v1005
  %v1199 = vadd.s32 %v1125, %v1006
  %v1200 = vadd.s32 %v1125, %v1007
  %v1201 = vadd.s32 %v1125, %v1008
  %v1202 = vadd.s32 %v1125, %v1009
  %v1203 = vadd.s32 %v1125, %v1010
  %v1204 = vadd.s32 %v1125, %v1011
  %v1205 = vadd.s32 %v1125, %v1012
  %v1206 = vadd.s32 %v1125, %v1013
  %v1207 = vadd.s32 %v1125, %v1014
  %v1208 = vadd.s32 %v1125, %v1015
  %v1209 = vadd.s32 %v1125, %v1016
  %v1210 = vadd.s32 %v1125, %v1017
  %v1211 = vadd.s32 %v1125, %v1018
  %v1212 = vadd.s32 %v1125, %v1019
  %v1213 = vadd.s32 %v1125, %v1020
  %v1214 = vadd.s32 %v1125, %v1021
  %v1215 = vadd.s32 %v1125, %v1022
  %v1216 = vadd.s32 %v1125, %v1023
  %v1217 = vadd.s32 %v1125, %v1024
  %v1218 = vadd.s32 %v1125, %v1025
  %v1219 = vadd.s32 %v1125, %v1026
  %v1220 = vadd.s32 %v1125, %v1027
  %v1221 = vadd.s32 %v1125, %v1028
  %v1222 = vadd.s32 %v1125, %v1029
  %v1223 = vadd.s32 %v1125, %v1030
  %v1224 = vadd.s32 %v1125, %v1031
  %v1225 = vadd.s32 %v1125, %v1032
  %v1226 = vadd.s32 %v1125, %v1033
  %v1227 = vadd.s32 %v1125, %v1034
  %v1228 = vadd.s32 %v1125, %v1035
  %v1229 = vadd.s32 %v1125, %v1036
  %v1230 = vadd.s32 %v1125, %v1037
  %v1231 = vadd.s32 %v1125, %v1038
  %v1232 = vadd.s32 %v1125, %v1039
  %v1233 = vadd.s32 %v1125, %v1040
  %v1234 = vadd.s32 %v1125, %v1041
  %v1235 = vadd.s32 %v1125, %v1042
  %v1236 = vadd.s32 %v1125, %v1043
  %v1237 = vadd.s32 %v1125, %v1044
  %v1238 = vadd.s32 %v1125, %v1045
  %v1239 = vadd.s32 %v1125, %v1046
  %v1240 = vadd.s32 %v1125, %v1047
  %v1241 = vadd.s32 %v1125, %v1048
  %v1242 = vadd.s32 %v1125, %v1049
  %v1243 = vadd.s32 %v1125, %v1050
  %v1244 = vadd.s32 %v1125, %v1051
  %v1245 = vadd.s32 %v1125, %v1052
  %v1246 = vadd.s32 %v1125, %v1053
  %v1247 = vadd.s32 %v1125, %v1054
  %v1248 = vadd.s32 %v1125, %v1055
  %v1249 = vadd.s32 %v1125, %v1056
  %v1250 = vadd.s32 %v1125, %v1057
  %v1251 = vadd.s32 %v1125, %v1058
  %v1252 = vadd.s32 %v1125, %v1059
  %v1253 = vadd.s32 %v1125, %v1060
  %v1254 = vadd.s32 %v1125, %v1061
  %v1255 = vadd.s32 %v1125, %v1062
  %v1256 = vadd.s32 %v1125, %v1063
  %v1257 = vadd.s32 %v1125, %v1064
  %v1258 = vadd.s32 %v1125, %v1065
  %v1259 = vadd.s32 %v1125, %v1066
  %v1260 = vadd.s32 %v1125, %v1067
  %v1261 = vadd.s32 %v1125, %v1068
  %v1262 = vadd.s32 %v1125, %v1069
  %v1263 = vadd.s32 %v1125, %v1070
  %v1264 = vadd.s32 %v1125, %v1071
  %v1265 = vadd.s32 %v1125, %v1072
  %v1266 = vadd.s32 %v1125, %v1073
  %v1267 = vadd.s32 %v1125, %v1074
  %v1268 = vadd.s32 %v1125, %v1075
  %v1269 = vadd.s32 %v1125, %v1076
  %v1270 = vadd.s32 %v1125, %v1077
  %v1271 = vadd.s32 %v1125, %v1078
  %v1272 = vadd.s32 %v1125, %v1079
  %v1273 = vadd.s32 %v1125, %v1080
  %v1274 = vadd.s32 %v1125, %v1081
  %v1275 = vadd.s32 %v1125, %v1082
  %v1276 = vadd.s32 %v1125, %v1083
  %v1277 = vadd.s32 %v1125, %v1084
  %v1278 = vadd.s32 %v1125, %v1085
  %v1279 = vadd.s32 %v1125, %v1086
  %v1280 = vadd.s32 %v1125, %v1087
  %v1281 = vadd.s32 %v1125, %v1088
  %v1282 = vadd.s32 %v1125, %v1089
  %v1283 = vadd.s32 %v1125, %v1090
  %v1284 = vadd.s32 %v1125, %v1091
  %v1285 = vadd.s32 %v1125, %v1092
  %v1286 = vadd.s32 %v1125, %v1093
  %v1287 = vadd.s32 %v1125, %v1094
  %v1288 = vadd.s32 %v1125, %v1095
  %v1289 = vadd.s32 %v1125, %v1096
  %v1290 = vadd.s32 %v1125, %v1097
  %v1291 = vadd.s32 %v1125, %v1098
  %v1292 = vadd.s32 %v1125, %v1099
  %v1293 = vadd.s32 %v1125, %v1100
  %v1294 = vadd.s32 %v1125, %v1101
  %v1295 = vadd.s32 %v1125, %v1102
  %v1296 = vadd.s32 %v1125, %v1103
  %v1297 = vadd.s32 %v1125, %v1104
  %v1298 = vadd.s32 %v1125, %v1105
  %v1299 = vadd.s32 %v1125, %v1106
  %v1300 = vadd.s32 %v1125, %v1107
  %v1301 = vadd.s32 %v1125, %v1108
  %v1302 = vadd.s32 %v1125, %v1109
  %v1303 = vadd.s32 %v1125, %v1110
  %v1304 = vadd.s32 %v1125, %v1111
  %v1305 = vadd.s32 %v1125, %v1112
  %v1306 = vadd.s32 %v1125, %v1113
  %v1307 = vadd.s32 %v1125, %v1114
  %v1308 = vadd.s32 %v1125, %v1115
  %v1309 = vadd.s32 %v1125, %v1116
  %v1310 = vadd.s32 %v1125, %v1117
  %v1311 = vadd.s32 %v1125, %v1118
  %v1312 = vadd.s32 %v1125, %v1119
  %v1313 = vadd.s32 %v1125, %v1120
  %v1314 = vadd.s32 %v1125, %v1121
  %v1315 = vadd.s32 %v1125, %v1122
  %v1316 = vadd.s32 %v1125, %v1123
  %v1317 = vadd.s32 %v1125, %v1124
  %v1318 = vlaneseq
  %v1319 = vand.u32 %v1318, 127
  %v1320 = vmul.u32 %v1319, 256
  %vm1321 = vcmp.ge.s32.totalorder %v1126, %v1320
  %vm1322 = vcmp.ge.s32.totalorder %v1127, %v1320
  %vm1323 = vcmp.ge.s32.totalorder %v1128, %v1320
  %vm1324 = vcmp.ge.s32.totalorder %v1129, %v1320
  %vm1325 = vcmp.ge.s32.totalorder %v1130, %v1320
  %vm1326 = vcmp.ge.s32.totalorder %v1131, %v1320
  %vm1327 = vcmp.ge.s32.totalorder %v1132, %v1320
  %vm1328 = vcmp.ge.s32.totalorder %v1133, %v1320
  %vm1329 = vcmp.ge.s32.totalorder %v1134, %v1320
  %vm1330 = vcmp.ge.s32.totalorder %v1135, %v1320
  %vm1331 = vcmp.ge.s32.totalorder %v1136, %v1320
  %vm1332 = vcmp.ge.s32.totalorder %v1137, %v1320
  %vm1333 = vcmp.ge.s32.totalorder %v1138, %v1320
  %vm1334 = vcmp.ge.s32.totalorder %v1139, %v1320
  %vm1335 = vcmp.ge.s32.totalorder %v1140, %v1320
  %vm1336 = vcmp.ge.s32.totalorder %v1141, %v1320
  %vm1337 = vcmp.ge.s32.totalorder %v1142, %v1320
  %vm1338 = vcmp.ge.s32.totalorder %v1143, %v1320
  %vm1339 = vcmp.ge.s32.totalorder %v1144, %v1320
  %vm1340 = vcmp.ge.s32.totalorder %v1145, %v1320
  %vm1341 = vcmp.ge.s32.totalorder %v1146, %v1320
  %vm1342 = vcmp.ge.s32.totalorder %v1147, %v1320
  %vm1343 = vcmp.ge.s32.totalorder %v1148, %v1320
  %vm1344 = vcmp.ge.s32.totalorder %v1149, %v1320
  %vm1345 = vcmp.ge.s32.totalorder %v1150, %v1320
  %vm1346 = vcmp.ge.s32.totalorder %v1151, %v1320
  %vm1347 = vcmp.ge.s32.totalorder %v1152, %v1320
  %vm1348 = vcmp.ge.s32.totalorder %v1153, %v1320
  %vm1349 = vcmp.ge.s32.totalorder %v1154, %v1320
  %vm1350 = vcmp.ge.s32.totalorder %v1155, %v1320
  %vm1351 = vcmp.ge.s32.totalorder %v1156, %v1320
  %vm1352 = vcmp.ge.s32.totalorder %v1157, %v1320
  %vm1353 = vcmp.ge.s32.totalorder %v1158, %v1320
  %vm1354 = vcmp.ge.s32.totalorder %v1159, %v1320
  %vm1355 = vcmp.ge.s32.totalorder %v1160, %v1320
  %vm1356 = vcmp.ge.s32.totalorder %v1161, %v1320
  %vm1357 = vcmp.ge.s32.totalorder %v1162, %v1320
  %vm1358 = vcmp.ge.s32.totalorder %v1163, %v1320
  %vm1359 = vcmp.ge.s32.totalorder %v1164, %v1320
  %vm1360 = vcmp.ge.s32.totalorder %v1165, %v1320
  %vm1361 = vcmp.ge.s32.totalorder %v1166, %v1320
  %vm1362 = vcmp.ge.s32.totalorder %v1167, %v1320
  %vm1363 = vcmp.ge.s32.totalorder %v1168, %v1320
  %vm1364 = vcmp.ge.s32.totalorder %v1169, %v1320
  %vm1365 = vcmp.ge.s32.totalorder %v1170, %v1320
  %vm1366 = vcmp.ge.s32.totalorder %v1171, %v1320
  %vm1367 = vcmp.ge.s32.totalorder %v1172, %v1320
  %vm1368 = vcmp.ge.s32.totalorder %v1173, %v1320
  %vm1369 = vcmp.ge.s32.totalorder %v1174, %v1320
  %vm1370 = vcmp.ge.s32.totalorder %v1175, %v1320
  %vm1371 = vcmp.ge.s32.totalorder %v1176, %v1320
  %vm1372 = vcmp.ge.s32.totalorder %v1177, %v1320
  %vm1373 = vcmp.ge.s32.totalorder %v1178, %v1320
  %vm1374 = vcmp.ge.s32.totalorder %v1179, %v1320
  %vm1375 = vcmp.ge.s32.totalorder %v1180, %v1320
  %vm1376 = vcmp.ge.s32.totalorder %v1181, %v1320
  %vm1377 = vcmp.ge.s32.totalorder %v1182, %v1320
  %vm1378 = vcmp.ge.s32.totalorder %v1183, %v1320
  %vm1379 = vcmp.ge.s32.totalorder %v1184, %v1320
  %vm1380 = vcmp.ge.s32.totalorder %v1185, %v1320
  %vm1381 = vcmp.ge.s32.totalorder %v1186, %v1320
  %vm1382 = vcmp.ge.s32.totalorder %v1187, %v1320
  %vm1383 = vcmp.ge.s32.totalorder %v1188, %v1320
  %vm1384 = vcmp.ge.s32.totalorder %v1189, %v1320
  %vm1385 = vcmp.ge.s32.totalorder %v1190, %v1320
  %vm1386 = vcmp.ge.s32.totalorder %v1191, %v1320
  %vm1387 = vcmp.ge.s32.totalorder %v1192, %v1320
  %vm1388 = vcmp.ge.s32.totalorder %v1193, %v1320
  %vm1389 = vcmp.ge.s32.totalorder %v1194, %v1320
  %vm1390 = vcmp.ge.s32.totalorder %v1195, %v1320
  %vm1391 = vcmp.ge.s32.totalorder %v1196, %v1320
  %vm1392 = vcmp.ge.s32.totalorder %v1197, %v1320
  %vm1393 = vcmp.ge.s32.totalorder %v1198, %v1320
  %vm1394 = vcmp.ge.s32.totalorder %v1199, %v1320
  %vm1395 = vcmp.ge.s32.totalorder %v1200, %v1320
  %vm1396 = vcmp.ge.s32.totalorder %v1201, %v1320
  %vm1397 = vcmp.ge.s32.totalorder %v1202, %v1320
  %vm1398 = vcmp.ge.s32.totalorder %v1203, %v1320
  %vm1399 = vcmp.ge.s32.totalorder %v1204, %v1320
  %vm1400 = vcmp.ge.s32.totalorder %v1205, %v1320
  %vm1401 = vcmp.ge.s32.totalorder %v1206, %v1320
  %vm1402 = vcmp.ge.s32.totalorder %v1207, %v1320
  %vm1403 = vcmp.ge.s32.totalorder %v1208, %v1320
  %vm1404 = vcmp.ge.s32.totalorder %v1209, %v1320
  %vm1405 = vcmp.ge.s32.totalorder %v1210, %v1320
  %vm1406 = vcmp.ge.s32.totalorder %v1211, %v1320
  %vm1407 = vcmp.ge.s32.totalorder %v1212, %v1320
  %vm1408 = vcmp.ge.s32.totalorder %v1213, %v1320
  %vm1409 = vcmp.ge.s32.totalorder %v1214, %v1320
  %vm1410 = vcmp.ge.s32.totalorder %v1215, %v1320
  %vm1411 = vcmp.ge.s32.totalorder %v1216, %v1320
  %vm1412 = vcmp.ge.s32.totalorder %v1217, %v1320
  %vm1413 = vcmp.ge.s32.totalorder %v1218, %v1320
  %vm1414 = vcmp.ge.s32.totalorder %v1219, %v1320
  %vm1415 = vcmp.ge.s32.totalorder %v1220, %v1320
  %vm1416 = vcmp.ge.s32.totalorder %v1221, %v1320
  %vm1417 = vcmp.ge.s32.totalorder %v1222, %v1320
  %vm1418 = vcmp.ge.s32.totalorder %v1223, %v1320
  %vm1419 = vcmp.ge.s32.totalorder %v1224, %v1320
  %vm1420 = vcmp.ge.s32.totalorder %v1225, %v1320
  %vm1421 = vcmp.ge.s32.totalorder %v1226, %v1320
  %vm1422 = vcmp.ge.s32.totalorder %v1227, %v1320
  %vm1423 = vcmp.ge.s32.totalorder %v1228, %v1320
  %vm1424 = vcmp.ge.s32.totalorder %v1229, %v1320
  %vm1425 = vcmp.ge.s32.totalorder %v1230, %v1320
  %vm1426 = vcmp.ge.s32.totalorder %v1231, %v1320
  %vm1427 = vcmp.ge.s32.totalorder %v1232, %v1320
  %vm1428 = vcmp.ge.s32.totalorder %v1233, %v1320
  %vm1429 = vcmp.ge.s32.totalorder %v1234, %v1320
  %vm1430 = vcmp.ge.s32.totalorder %v1235, %v1320
  %vm1431 = vcmp.ge.s32.totalorder %v1236, %v1320
  %vm1432 = vcmp.ge.s32.totalorder %v1237, %v1320
  %vm1433 = vcmp.ge.s32.totalorder %v1238, %v1320
  %vm1434 = vcmp.ge.s32.totalorder %v1239, %v1320
  %vm1435 = vcmp.ge.s32.totalorder %v1240, %v1320
  %vm1436 = vcmp.ge.s32.totalorder %v1241, %v1320
  %vm1437 = vcmp.ge.s32.totalorder %v1242, %v1320
  %vm1438 = vcmp.ge.s32.totalorder %v1243, %v1320
  %vm1439 = vcmp.ge.s32.totalorder %v1244, %v1320
  %vm1440 = vcmp.ge.s32.totalorder %v1245, %v1320
  %vm1441 = vcmp.ge.s32.totalorder %v1246, %v1320
  %vm1442 = vcmp.ge.s32.totalorder %v1247, %v1320
  %vm1443 = vcmp.ge.s32.totalorder %v1248, %v1320
  %vm1444 = vcmp.ge.s32.totalorder %v1249, %v1320
  %vm1445 = vcmp.ge.s32.totalorder %v1250, %v1320
  %vm1446 = vcmp.ge.s32.totalorder %v1251, %v1320
  %vm1447 = vcmp.ge.s32.totalorder %v1252, %v1320
  %vm1448 = vcmp.ge.s32.totalorder %v1253, %v1320
  %vm1449 = vcmp.ge.s32.totalorder %v1254, %v1320
  %vm1450 = vcmp.ge.s32.totalorder %v1255, %v1320
  %vm1451 = vcmp.ge.s32.totalorder %v1256, %v1320
  %vm1452 = vcmp.ge.s32.totalorder %v1257, %v1320
  %vm1453 = vcmp.ge.s32.totalorder %v1258, %v1320
  %vm1454 = vcmp.ge.s32.totalorder %v1259, %v1320
  %vm1455 = vcmp.ge.s32.totalorder %v1260, %v1320
  %vm1456 = vcmp.ge.s32.totalorder %v1261, %v1320
  %vm1457 = vcmp.ge.s32.totalorder %v1262, %v1320
  %vm1458 = vcmp.ge.s32.totalorder %v1263, %v1320
  %vm1459 = vcmp.ge.s32.totalorder %v1264, %v1320
  %vm1460 = vcmp.ge.s32.totalorder %v1265, %v1320
  %vm1461 = vcmp.ge.s32.totalorder %v1266, %v1320
  %vm1462 = vcmp.ge.s32.totalorder %v1267, %v1320
  %vm1463 = vcmp.ge.s32.totalorder %v1268, %v1320
  %vm1464 = vcmp.ge.s32.totalorder %v1269, %v1320
  %vm1465 = vcmp.ge.s32.totalorder %v1270, %v1320
  %vm1466 = vcmp.ge.s32.totalorder %v1271, %v1320
  %vm1467 = vcmp.ge.s32.totalorder %v1272, %v1320
  %vm1468 = vcmp.ge.s32.totalorder %v1273, %v1320
  %vm1469 = vcmp.ge.s32.totalorder %v1274, %v1320
  %vm1470 = vcmp.ge.s32.totalorder %v1275, %v1320
  %vm1471 = vcmp.ge.s32.totalorder %v1276, %v1320
  %vm1472 = vcmp.ge.s32.totalorder %v1277, %v1320
  %vm1473 = vcmp.ge.s32.totalorder %v1278, %v1320
  %vm1474 = vcmp.ge.s32.totalorder %v1279, %v1320
  %vm1475 = vcmp.ge.s32.totalorder %v1280, %v1320
  %vm1476 = vcmp.ge.s32.totalorder %v1281, %v1320
  %vm1477 = vcmp.ge.s32.totalorder %v1282, %v1320
  %vm1478 = vcmp.ge.s32.totalorder %v1283, %v1320
  %vm1479 = vcmp.ge.s32.totalorder %v1284, %v1320
  %vm1480 = vcmp.ge.s32.totalorder %v1285, %v1320
  %vm1481 = vcmp.ge.s32.totalorder %v1286, %v1320
  %vm1482 = vcmp.ge.s32.totalorder %v1287, %v1320
  %vm1483 = vcmp.ge.s32.totalorder %v1288, %v1320
  %vm1484 = vcmp.ge.s32.totalorder %v1289, %v1320
  %vm1485 = vcmp.ge.s32.totalorder %v1290, %v1320
  %vm1486 = vcmp.ge.s32.totalorder %v1291, %v1320
  %vm1487 = vcmp.ge.s32.totalorder %v1292, %v1320
  %vm1488 = vcmp.ge.s32.totalorder %v1293, %v1320
  %vm1489 = vcmp.ge.s32.totalorder %v1294, %v1320
  %vm1490 = vcmp.ge.s32.totalorder %v1295, %v1320
  %vm1491 = vcmp.ge.s32.totalorder %v1296, %v1320
  %vm1492 = vcmp.ge.s32.totalorder %v1297, %v1320
  %vm1493 = vcmp.ge.s32.totalorder %v1298, %v1320
  %vm1494 = vcmp.ge.s32.totalorder %v1299, %v1320
  %vm1495 = vcmp.ge.s32.totalorder %v1300, %v1320
  %vm1496 = vcmp.ge.s32.totalorder %v1301, %v1320
  %vm1497 = vcmp.ge.s32.totalorder %v1302, %v1320
  %vm1498 = vcmp.ge.s32.totalorder %v1303, %v1320
  %vm1499 = vcmp.ge.s32.totalorder %v1304, %v1320
  %vm1500 = vcmp.ge.s32.totalorder %v1305, %v1320
  %vm1501 = vcmp.ge.s32.totalorder %v1306, %v1320
  %vm1502 = vcmp.ge.s32.totalorder %v1307, %v1320
  %vm1503 = vcmp.ge.s32.totalorder %v1308, %v1320
  %vm1504 = vcmp.ge.s32.totalorder %v1309, %v1320
  %vm1505 = vcmp.ge.s32.totalorder %v1310, %v1320
  %vm1506 = vcmp.ge.s32.totalorder %v1311, %v1320
  %vm1507 = vcmp.ge.s32.totalorder %v1312, %v1320
  %vm1508 = vcmp.ge.s32.totalorder %v1313, %v1320
  %vm1509 = vcmp.ge.s32.totalorder %v1314, %v1320
  %vm1510 = vcmp.ge.s32.totalorder %v1315, %v1320
  %vm1511 = vcmp.ge.s32.totalorder %v1316, %v1320
  %vm1512 = vcmp.ge.s32.totalorder %v1317, %v1320
  %v1513 = vadd.s32 %v1320, 256
  %vm1514 = vcmp.lt.s32.totalorder %v1126, %v1513
  %vm1515 = vcmp.lt.s32.totalorder %v1127, %v1513
  %vm1516 = vcmp.lt.s32.totalorder %v1128, %v1513
  %vm1517 = vcmp.lt.s32.totalorder %v1129, %v1513
  %vm1518 = vcmp.lt.s32.totalorder %v1130, %v1513
  %vm1519 = vcmp.lt.s32.totalorder %v1131, %v1513
  %vm1520 = vcmp.lt.s32.totalorder %v1132, %v1513
  %vm1521 = vcmp.lt.s32.totalorder %v1133, %v1513
  %vm1522 = vcmp.lt.s32.totalorder %v1134, %v1513
  %vm1523 = vcmp.lt.s32.totalorder %v1135, %v1513
  %vm1524 = vcmp.lt.s32.totalorder %v1136, %v1513
  %vm1525 = vcmp.lt.s32.totalorder %v1137, %v1513
  %vm1526 = vcmp.lt.s32.totalorder %v1138, %v1513
  %vm1527 = vcmp.lt.s32.totalorder %v1139, %v1513
  %vm1528 = vcmp.lt.s32.totalorder %v1140, %v1513
  %vm1529 = vcmp.lt.s32.totalorder %v1141, %v1513
  %vm1530 = vcmp.lt.s32.totalorder %v1142, %v1513
  %vm1531 = vcmp.lt.s32.totalorder %v1143, %v1513
  %vm1532 = vcmp.lt.s32.totalorder %v1144, %v1513
  %vm1533 = vcmp.lt.s32.totalorder %v1145, %v1513
  %vm1534 = vcmp.lt.s32.totalorder %v1146, %v1513
  %vm1535 = vcmp.lt.s32.totalorder %v1147, %v1513
  %vm1536 = vcmp.lt.s32.totalorder %v1148, %v1513
  %vm1537 = vcmp.lt.s32.totalorder %v1149, %v1513
  %vm1538 = vcmp.lt.s32.totalorder %v1150, %v1513
  %vm1539 = vcmp.lt.s32.totalorder %v1151, %v1513
  %vm1540 = vcmp.lt.s32.totalorder %v1152, %v1513
  %vm1541 = vcmp.lt.s32.totalorder %v1153, %v1513
  %vm1542 = vcmp.lt.s32.totalorder %v1154, %v1513
  %vm1543 = vcmp.lt.s32.totalorder %v1155, %v1513
  %vm1544 = vcmp.lt.s32.totalorder %v1156, %v1513
  %vm1545 = vcmp.lt.s32.totalorder %v1157, %v1513
  %vm1546 = vcmp.lt.s32.totalorder %v1158, %v1513
  %vm1547 = vcmp.lt.s32.totalorder %v1159, %v1513
  %vm1548 = vcmp.lt.s32.totalorder %v1160, %v1513
  %vm1549 = vcmp.lt.s32.totalorder %v1161, %v1513
  %vm1550 = vcmp.lt.s32.totalorder %v1162, %v1513
  %vm1551 = vcmp.lt.s32.totalorder %v1163, %v1513
  %vm1552 = vcmp.lt.s32.totalorder %v1164, %v1513
  %vm1553 = vcmp.lt.s32.totalorder %v1165, %v1513
  %vm1554 = vcmp.lt.s32.totalorder %v1166, %v1513
  %vm1555 = vcmp.lt.s32.totalorder %v1167, %v1513
  %vm1556 = vcmp.lt.s32.totalorder %v1168, %v1513
  %vm1557 = vcmp.lt.s32.totalorder %v1169, %v1513
  %vm1558 = vcmp.lt.s32.totalorder %v1170, %v1513
  %vm1559 = vcmp.lt.s32.totalorder %v1171, %v1513
  %vm1560 = vcmp.lt.s32.totalorder %v1172, %v1513
  %vm1561 = vcmp.lt.s32.totalorder %v1173, %v1513
  %vm1562 = vcmp.lt.s32.totalorder %v1174, %v1513
  %vm1563 = vcmp.lt.s32.totalorder %v1175, %v1513
  %vm1564 = vcmp.lt.s32.totalorder %v1176, %v1513
  %vm1565 = vcmp.lt.s32.totalorder %v1177, %v1513
  %vm1566 = vcmp.lt.s32.totalorder %v1178, %v1513
  %vm1567 = vcmp.lt.s32.totalorder %v1179, %v1513
  %vm1568 = vcmp.lt.s32.totalorder %v1180, %v1513
  %vm1569 = vcmp.lt.s32.totalorder %v1181, %v1513
  %vm1570 = vcmp.lt.s32.totalorder %v1182, %v1513
  %vm1571 = vcmp.lt.s32.totalorder %v1183, %v1513
  %vm1572 = vcmp.lt.s32.totalorder %v1184, %v1513
  %vm1573 = vcmp.lt.s32.totalorder %v1185, %v1513
  %vm1574 = vcmp.lt.s32.totalorder %v1186, %v1513
  %vm1575 = vcmp.lt.s32.totalorder %v1187, %v1513
  %vm1576 = vcmp.lt.s32.totalorder %v1188, %v1513
  %vm1577 = vcmp.lt.s32.totalorder %v1189, %v1513
  %vm1578 = vcmp.lt.s32.totalorder %v1190, %v1513
  %vm1579 = vcmp.lt.s32.totalorder %v1191, %v1513
  %vm1580 = vcmp.lt.s32.totalorder %v1192, %v1513
  %vm1581 = vcmp.lt.s32.totalorder %v1193, %v1513
  %vm1582 = vcmp.lt.s32.totalorder %v1194, %v1513
  %vm1583 = vcmp.lt.s32.totalorder %v1195, %v1513
  %vm1584 = vcmp.lt.s32.totalorder %v1196, %v1513
  %vm1585 = vcmp.lt.s32.totalorder %v1197, %v1513
  %vm1586 = vcmp.lt.s32.totalorder %v1198, %v1513
  %vm1587 = vcmp.lt.s32.totalorder %v1199, %v1513
  %vm1588 = vcmp.lt.s32.totalorder %v1200, %v1513
  %vm1589 = vcmp.lt.s32.totalorder %v1201, %v1513
  %vm1590 = vcmp.lt.s32.totalorder %v1202, %v1513
  %vm1591 = vcmp.lt.s32.totalorder %v1203, %v1513
  %vm1592 = vcmp.lt.s32.totalorder %v1204, %v1513
  %vm1593 = vcmp.lt.s32.totalorder %v1205, %v1513
  %vm1594 = vcmp.lt.s32.totalorder %v1206, %v1513
  %vm1595 = vcmp.lt.s32.totalorder %v1207, %v1513
  %vm1596 = vcmp.lt.s32.totalorder %v1208, %v1513
  %vm1597 = vcmp.lt.s32.totalorder %v1209, %v1513
  %vm1598 = vcmp.lt.s32.totalorder %v1210, %v1513
  %vm1599 = vcmp.lt.s32.totalorder %v1211, %v1513
  %vm1600 = vcmp.lt.s32.totalorder %v1212, %v1513
  %vm1601 = vcmp.lt.s32.totalorder %v1213, %v1513
  %vm1602 = vcmp.lt.s32.totalorder %v1214, %v1513
  %vm1603 = vcmp.lt.s32.totalorder %v1215, %v1513
  %vm1604 = vcmp.lt.s32.totalorder %v1216, %v1513
  %vm1605 = vcmp.lt.s32.totalorder %v1217, %v1513
  %vm1606 = vcmp.lt.s32.totalorder %v1218, %v1513
  %vm1607 = vcmp.lt.s32.totalorder %v1219, %v1513
  %vm1608 = vcmp.lt.s32.totalorder %v1220, %v1513
  %vm1609 = vcmp.lt.s32.totalorder %v1221, %v1513
  %vm1610 = vcmp.lt.s32.totalorder %v1222, %v1513
  %vm1611 = vcmp.lt.s32.totalorder %v1223, %v1513
  %vm1612 = vcmp.lt.s32.totalorder %v1224, %v1513
  %vm1613 = vcmp.lt.s32.totalorder %v1225, %v1513
  %vm1614 = vcmp.lt.s32.totalorder %v1226, %v1513
  %vm1615 = vcmp.lt.s32.totalorder %v1227, %v1513
  %vm1616 = vcmp.lt.s32.totalorder %v1228, %v1513
  %vm1617 = vcmp.lt.s32.totalorder %v1229, %v1513
  %vm1618 = vcmp.lt.s32.totalorder %v1230, %v1513
  %vm1619 = vcmp.lt.s32.totalorder %v1231, %v1513
  %vm1620 = vcmp.lt.s32.totalorder %v1232, %v1513
  %vm1621 = vcmp.lt.s32.totalorder %v1233, %v1513
  %vm1622 = vcmp.lt.s32.totalorder %v1234, %v1513
  %vm1623 = vcmp.lt.s32.totalorder %v1235, %v1513
  %vm1624 = vcmp.lt.s32.totalorder %v1236, %v1513
  %vm1625 = vcmp.lt.s32.totalorder %v1237, %v1513
  %vm1626 = vcmp.lt.s32.totalorder %v1238, %v1513
  %vm1627 = vcmp.lt.s32.totalorder %v1239, %v1513
  %vm1628 = vcmp.lt.s32.totalorder %v1240, %v1513
  %vm1629 = vcmp.lt.s32.totalorder %v1241, %v1513
  %vm1630 = vcmp.lt.s32.totalorder %v1242, %v1513
  %vm1631 = vcmp.lt.s32.totalorder %v1243, %v1513
  %vm1632 = vcmp.lt.s32.totalorder %v1244, %v1513
  %vm1633 = vcmp.lt.s32.totalorder %v1245, %v1513
  %vm1634 = vcmp.lt.s32.totalorder %v1246, %v1513
  %vm1635 = vcmp.lt.s32.totalorder %v1247, %v1513
  %vm1636 = vcmp.lt.s32.totalorder %v1248, %v1513
  %vm1637 = vcmp.lt.s32.totalorder %v1249, %v1513
  %vm1638 = vcmp.lt.s32.totalorder %v1250, %v1513
  %vm1639 = vcmp.lt.s32.totalorder %v1251, %v1513
  %vm1640 = vcmp.lt.s32.totalorder %v1252, %v1513
  %vm1641 = vcmp.lt.s32.totalorder %v1253, %v1513
  %vm1642 = vcmp.lt.s32.totalorder %v1254, %v1513
  %vm1643 = vcmp.lt.s32.totalorder %v1255, %v1513
  %vm1644 = vcmp.lt.s32.totalorder %v1256, %v1513
  %vm1645 = vcmp.lt.s32.totalorder %v1257, %v1513
  %vm1646 = vcmp.lt.s32.totalorder %v1258, %v1513
  %vm1647 = vcmp.lt.s32.totalorder %v1259, %v1513
  %vm1648 = vcmp.lt.s32.totalorder %v1260, %v1513
  %vm1649 = vcmp.lt.s32.totalorder %v1261, %v1513
  %vm1650 = vcmp.lt.s32.totalorder %v1262, %v1513
  %vm1651 = vcmp.lt.s32.totalorder %v1263, %v1513
  %vm1652 = vcmp.lt.s32.totalorder %v1264, %v1513
  %vm1653 = vcmp.lt.s32.totalorder %v1265, %v1513
  %vm1654 = vcmp.lt.s32.totalorder %v1266, %v1513
  %vm1655 = vcmp.lt.s32.totalorder %v1267, %v1513
  %vm1656 = vcmp.lt.s32.totalorder %v1268, %v1513
  %vm1657 = vcmp.lt.s32.totalorder %v1269, %v1513
  %vm1658 = vcmp.lt.s32.totalorder %v1270, %v1513
  %vm1659 = vcmp.lt.s32.totalorder %v1271, %v1513
  %vm1660 = vcmp.lt.s32.totalorder %v1272, %v1513
  %vm1661 = vcmp.lt.s32.totalorder %v1273, %v1513
  %vm1662 = vcmp.lt.s32.totalorder %v1274, %v1513
  %vm1663 = vcmp.lt.s32.totalorder %v1275, %v1513
  %vm1664 = vcmp.lt.s32.totalorder %v1276, %v1513
  %vm1665 = vcmp.lt.s32.totalorder %v1277, %v1513
  %vm1666 = vcmp.lt.s32.totalorder %v1278, %v1513
  %vm1667 = vcmp.lt.s32.totalorder %v1279, %v1513
  %vm1668 = vcmp.lt.s32.totalorder %v1280, %v1513
  %vm1669 = vcmp.lt.s32.totalorder %v1281, %v1513
  %vm1670 = vcmp.lt.s32.totalorder %v1282, %v1513
  %vm1671 = vcmp.lt.s32.totalorder %v1283, %v1513
  %vm1672 = vcmp.lt.s32.totalorder %v1284, %v1513
  %vm1673 = vcmp.lt.s32.totalorder %v1285, %v1513
  %vm1674 = vcmp.lt.s32.totalorder %v1286, %v1513
  %vm1675 = vcmp.lt.s32.totalorder %v1287, %v1513
  %vm1676 = vcmp.lt.s32.totalorder %v1288, %v1513
  %vm1677 = vcmp.lt.s32.totalorder %v1289, %v1513
  %vm1678 = vcmp.lt.s32.totalorder %v1290, %v1513
  %vm1679 = vcmp.lt.s32.totalorder %v1291, %v1513
  %vm1680 = vcmp.lt.s32.totalorder %v1292, %v1513
  %vm1681 = vcmp.lt.s32.totalorder %v1293, %v1513
  %vm1682 = vcmp.lt.s32.totalorder %v1294, %v1513
  %vm1683 = vcmp.lt.s32.totalorder %v1295, %v1513
  %vm1684 = vcmp.lt.s32.totalorder %v1296, %v1513
  %vm1685 = vcmp.lt.s32.totalorder %v1297, %v1513
  %vm1686 = vcmp.lt.s32.totalorder %v1298, %v1513
  %vm1687 = vcmp.lt.s32.totalorder %v1299, %v1513
  %vm1688 = vcmp.lt.s32.totalorder %v1300, %v1513
  %vm1689 = vcmp.lt.s32.totalorder %v1301, %v1513
  %vm1690 = vcmp.lt.s32.totalorder %v1302, %v1513
  %vm1691 = vcmp.lt.s32.totalorder %v1303, %v1513
  %vm1692 = vcmp.lt.s32.totalorder %v1304, %v1513
  %vm1693 = vcmp.lt.s32.totalorder %v1305, %v1513
  %vm1694 = vcmp.lt.s32.totalorder %v1306, %v1513
  %vm1695 = vcmp.lt.s32.totalorder %v1307, %v1513
  %vm1696 = vcmp.lt.s32.totalorder %v1308, %v1513
  %vm1697 = vcmp.lt.s32.totalorder %v1309, %v1513
  %vm1698 = vcmp.lt.s32.totalorder %v1310, %v1513
  %vm1699 = vcmp.lt.s32.totalorder %v1311, %v1513
  %vm1700 = vcmp.lt.s32.totalorder %v1312, %v1513
  %vm1701 = vcmp.lt.s32.totalorder %v1313, %v1513
  %vm1702 = vcmp.lt.s32.totalorder %v1314, %v1513
  %vm1703 = vcmp.lt.s32.totalorder %v1315, %v1513
  %vm1704 = vcmp.lt.s32.totalorder %v1316, %v1513
  %vm1705 = vcmp.lt.s32.totalorder %v1317, %v1513
  %vm1706 = vmand %vm1321, %vm1514
  %vm1707 = vmand %vm1322, %vm1515
  %vm1708 = vmand %vm1323, %vm1516
  %vm1709 = vmand %vm1324, %vm1517
  %vm1710 = vmand %vm1325, %vm1518
  %vm1711 = vmand %vm1326, %vm1519
  %vm1712 = vmand %vm1327, %vm1520
  %vm1713 = vmand %vm1328, %vm1521
  %vm1714 = vmand %vm1329, %vm1522
  %vm1715 = vmand %vm1330, %vm1523
  %vm1716 = vmand %vm1331, %vm1524
  %vm1717 = vmand %vm1332, %vm1525
  %vm1718 = vmand %vm1333, %vm1526
  %vm1719 = vmand %vm1334, %vm1527
  %vm1720 = vmand %vm1335, %vm1528
  %vm1721 = vmand %vm1336, %vm1529
  %vm1722 = vmand %vm1337, %vm1530
  %vm1723 = vmand %vm1338, %vm1531
  %vm1724 = vmand %vm1339, %vm1532
  %vm1725 = vmand %vm1340, %vm1533
  %vm1726 = vmand %vm1341, %vm1534
  %vm1727 = vmand %vm1342, %vm1535
  %vm1728 = vmand %vm1343, %vm1536
  %vm1729 = vmand %vm1344, %vm1537
  %vm1730 = vmand %vm1345, %vm1538
  %vm1731 = vmand %vm1346, %vm1539
  %vm1732 = vmand %vm1347, %vm1540
  %vm1733 = vmand %vm1348, %vm1541
  %vm1734 = vmand %vm1349, %vm1542
  %vm1735 = vmand %vm1350, %vm1543
  %vm1736 = vmand %vm1351, %vm1544
  %vm1737 = vmand %vm1352, %vm1545
  %vm1738 = vmand %vm1353, %vm1546
  %vm1739 = vmand %vm1354, %vm1547
  %vm1740 = vmand %vm1355, %vm1548
  %vm1741 = vmand %vm1356, %vm1549
  %vm1742 = vmand %vm1357, %vm1550
  %vm1743 = vmand %vm1358, %vm1551
  %vm1744 = vmand %vm1359, %vm1552
  %vm1745 = vmand %vm1360, %vm1553
  %vm1746 = vmand %vm1361, %vm1554
  %vm1747 = vmand %vm1362, %vm1555
  %vm1748 = vmand %vm1363, %vm1556
  %vm1749 = vmand %vm1364, %vm1557
  %vm1750 = vmand %vm1365, %vm1558
  %vm1751 = vmand %vm1366, %vm1559
  %vm1752 = vmand %vm1367, %vm1560
  %vm1753 = vmand %vm1368, %vm1561
  %vm1754 = vmand %vm1369, %vm1562
  %vm1755 = vmand %vm1370, %vm1563
  %vm1756 = vmand %vm1371, %vm1564
  %vm1757 = vmand %vm1372, %vm1565
  %vm1758 = vmand %vm1373, %vm1566
  %vm1759 = vmand %vm1374, %vm1567
  %vm1760 = vmand %vm1375, %vm1568
  %vm1761 = vmand %vm1376, %vm1569
  %vm1762 = vmand %vm1377, %vm1570
  %vm1763 = vmand %vm1378, %vm1571
  %vm1764 = vmand %vm1379, %vm1572
  %vm1765 = vmand %vm1380, %vm1573
  %vm1766 = vmand %vm1381, %vm1574
  %vm1767 = vmand %vm1382, %vm1575
  %vm1768 = vmand %vm1383, %vm1576
  %vm1769 = vmand %vm1384, %vm1577
  %vm1770 = vmand %vm1385, %vm1578
  %vm1771 = vmand %vm1386, %vm1579
  %vm1772 = vmand %vm1387, %vm1580
  %vm1773 = vmand %vm1388, %vm1581
  %vm1774 = vmand %vm1389, %vm1582
  %vm1775 = vmand %vm1390, %vm1583
  %vm1776 = vmand %vm1391, %vm1584
  %vm1777 = vmand %vm1392, %vm1585
  %vm1778 = vmand %vm1393, %vm1586
  %vm1779 = vmand %vm1394, %vm1587
  %vm1780 = vmand %vm1395, %vm1588
  %vm1781 = vmand %vm1396, %vm1589
  %vm1782 = vmand %vm1397, %vm1590
  %vm1783 = vmand %vm1398, %vm1591
  %vm1784 = vmand %vm1399, %vm1592
  %vm1785 = vmand %vm1400, %vm1593
  %vm1786 = vmand %vm1401, %vm1594
  %vm1787 = vmand %vm1402, %vm1595
  %vm1788 = vmand %vm1403, %vm1596
  %vm1789 = vmand %vm1404, %vm1597
  %vm1790 = vmand %vm1405, %vm1598
  %vm1791 = vmand %vm1406, %vm1599
  %vm1792 = vmand %vm1407, %vm1600
  %vm1793 = vmand %vm1408, %vm1601
  %vm1794 = vmand %vm1409, %vm1602
  %vm1795 = vmand %vm1410, %vm1603
  %vm1796 = vmand %vm1411, %vm1604
  %vm1797 = vmand %vm1412, %vm1605
  %vm1798 = vmand %vm1413, %vm1606
  %vm1799 = vmand %vm1414, %vm1607
  %vm1800 = vmand %vm1415, %vm1608
  %vm1801 = vmand %vm1416, %vm1609
  %vm1802 = vmand %vm1417, %vm1610
  %vm1803 = vmand %vm1418, %vm1611
  %vm1804 = vmand %vm1419, %vm1612
  %vm1805 = vmand %vm1420, %vm1613
  %vm1806 = vmand %vm1421, %vm1614
  %vm1807 = vmand %vm1422, %vm1615
  %vm1808 = vmand %vm1423, %vm1616
  %vm1809 = vmand %vm1424, %vm1617
  %vm1810 = vmand %vm1425, %vm1618
  %vm1811 = vmand %vm1426, %vm1619
  %vm1812 = vmand %vm1427, %vm1620
  %vm1813 = vmand %vm1428, %vm1621
  %vm1814 = vmand %vm1429, %vm1622
  %vm1815 = vmand %vm1430, %vm1623
  %vm1816 = vmand %vm1431, %vm1624
  %vm1817 = vmand %vm1432, %vm1625
  %vm1818 = vmand %vm1433, %vm1626
  %vm1819 = vmand %vm1434, %vm1627
  %vm1820 = vmand %vm1435, %vm1628
  %vm1821 = vmand %vm1436, %vm1629
  %vm1822 = vmand %vm1437, %vm1630
  %vm1823 = vmand %vm1438, %vm1631
  %vm1824 = vmand %vm1439, %vm1632
  %vm1825 = vmand %vm1440, %vm1633
  %vm1826 = vmand %vm1441, %vm1634
  %vm1827 = vmand %vm1442, %vm1635
  %vm1828 = vmand %vm1443, %vm1636
  %vm1829 = vmand %vm1444, %vm1637
  %vm1830 = vmand %vm1445, %vm1638
  %vm1831 = vmand %vm1446, %vm1639
  %vm1832 = vmand %vm1447, %vm1640
  %vm1833 = vmand %vm1448, %vm1641
  %vm1834 = vmand %vm1449, %vm1642
  %vm1835 = vmand %vm1450, %vm1643
  %vm1836 = vmand %vm1451, %vm1644
  %vm1837 = vmand %vm1452, %vm1645
  %vm1838 = vmand %vm1453, %vm1646
  %vm1839 = vmand %vm1454, %vm1647
  %vm1840 = vmand %vm1455, %vm1648
  %vm1841 = vmand %vm1456, %vm1649
  %vm1842 = vmand %vm1457, %vm1650
  %vm1843 = vmand %vm1458, %vm1651
  %vm1844 = vmand %vm1459, %vm1652
  %vm1845 = vmand %vm1460, %vm1653
  %vm1846 = vmand %vm1461, %vm1654
  %vm1847 = vmand %vm1462, %vm1655
  %vm1848 = vmand %vm1463, %vm1656
  %vm1849 = vmand %vm1464, %vm1657
  %vm1850 = vmand %vm1465, %vm1658
  %vm1851 = vmand %vm1466, %vm1659
  %vm1852 = vmand %vm1467, %vm1660
  %vm1853 = vmand %vm1468, %vm1661
  %vm1854 = vmand %vm1469, %vm1662
  %vm1855 = vmand %vm1470, %vm1663
  %vm1856 = vmand %vm1471, %vm1664
  %vm1857 = vmand %vm1472, %vm1665
  %vm1858 = vmand %vm1473, %vm1666
  %vm1859 = vmand %vm1474, %vm1667
  %vm1860 = vmand %vm1475, %vm1668
  %vm1861 = vmand %vm1476, %vm1669
  %vm1862 = vmand %vm1477, %vm1670
  %vm1863 = vmand %vm1478, %vm1671
  %vm1864 = vmand %vm1479, %vm1672
  %vm1865 = vmand %vm1480, %vm1673
  %vm1866 = vmand %vm1481, %vm1674
  %vm1867 = vmand %vm1482, %vm1675
  %vm1868 = vmand %vm1483, %vm1676
  %vm1869 = vmand %vm1484, %vm1677
  %vm1870 = vmand %vm1485, %vm1678
  %vm1871 = vmand %vm1486, %vm1679
  %vm1872 = vmand %vm1487, %vm1680
  %vm1873 = vmand %vm1488, %vm1681
  %vm1874 = vmand %vm1489, %vm1682
  %vm1875 = vmand %vm1490, %vm1683
  %vm1876 = vmand %vm1491, %vm1684
  %vm1877 = vmand %vm1492, %vm1685
  %vm1878 = vmand %vm1493, %vm1686
  %vm1879 = vmand %vm1494, %vm1687
  %vm1880 = vmand %vm1495, %vm1688
  %vm1881 = vmand %vm1496, %vm1689
  %vm1882 = vmand %vm1497, %vm1690
  %vm1883 = vmand %vm1498, %vm1691
  %vm1884 = vmand %vm1499, %vm1692
  %vm1885 = vmand %vm1500, %vm1693
  %vm1886 = vmand %vm1501, %vm1694
  %vm1887 = vmand %vm1502, %vm1695
  %vm1888 = vmand %vm1503, %vm1696
  %vm1889 = vmand %vm1504, %vm1697
  %vm1890 = vmand %vm1505, %vm1698
  %vm1891 = vmand %vm1506, %vm1699
  %vm1892 = vmand %vm1507, %vm1700
  %vm1893 = vmand %vm1508, %vm1701
  %vm1894 = vmand %vm1509, %vm1702
  %vm1895 = vmand %vm1510, %vm1703
  %vm1896 = vmand %vm1511, %vm1704
  %vm1897 = vmand %vm1512, %vm1705
  %v1898 = vsel %vm1706, 1.0, 0.0
  %v1899 = vsel %vm1707, 1.0, 0.0
  %v1900 = vsel %vm1708, 1.0, 0.0
  %v1901 = vsel %vm1709, 1.0, 0.0
  %v1902 = vsel %vm1710, 1.0, 0.0
  %v1903 = vsel %vm1711, 1.0, 0.0
  %v1904 = vsel %vm1712, 1.0, 0.0
  %v1905 = vsel %vm1713, 1.0, 0.0
  %v1906 = vsel %vm1714, 1.0, 0.0
  %v1907 = vsel %vm1715, 1.0, 0.0
  %v1908 = vsel %vm1716, 1.0, 0.0
  %v1909 = vsel %vm1717, 1.0, 0.0
  %v1910 = vsel %vm1718, 1.0, 0.0
  %v1911 = vsel %vm1719, 1.0, 0.0
  %v1912 = vsel %vm1720, 1.0, 0.0
  %v1913 = vsel %vm1721, 1.0, 0.0
  %v1914 = vsel %vm1722, 1.0, 0.0
  %v1915 = vsel %vm1723, 1.0, 0.0
  %v1916 = vsel %vm1724, 1.0, 0.0
  %v1917 = vsel %vm1725, 1.0, 0.0
  %v1918 = vsel %vm1726, 1.0, 0.0
  %v1919 = vsel %vm1727, 1.0, 0.0
  %v1920 = vsel %vm1728, 1.0, 0.0
  %v1921 = vsel %vm1729, 1.0, 0.0
  %v1922 = vsel %vm1730, 1.0, 0.0
  %v1923 = vsel %vm1731, 1.0, 0.0
  %v1924 = vsel %vm1732, 1.0, 0.0
  %v1925 = vsel %vm1733, 1.0, 0.0
  %v1926 = vsel %vm1734, 1.0, 0.0
  %v1927 = vsel %vm1735, 1.0, 0.0
  %v1928 = vsel %vm1736, 1.0, 0.0
  %v1929 = vsel %vm1737, 1.0, 0.0
  %v1930 = vsel %vm1738, 1.0, 0.0
  %v1931 = vsel %vm1739, 1.0, 0.0
  %v1932 = vsel %vm1740, 1.0, 0.0
  %v1933 = vsel %vm1741, 1.0, 0.0
  %v1934 = vsel %vm1742, 1.0, 0.0
  %v1935 = vsel %vm1743, 1.0, 0.0
  %v1936 = vsel %vm1744, 1.0, 0.0
  %v1937 = vsel %vm1745, 1.0, 0.0
  %v1938 = vsel %vm1746, 1.0, 0.0
  %v1939 = vsel %vm1747, 1.0, 0.0
  %v1940 = vsel %vm1748, 1.0, 0.0
  %v1941 = vsel %vm1749, 1.0, 0.0
  %v1942 = vsel %vm1750, 1.0, 0.0
  %v1943 = vsel %vm1751, 1.0, 0.0
  %v1944 = vsel %vm1752, 1.0, 0.0
  %v1945 = vsel %vm1753, 1.0, 0.0
  %v1946 = vsel %vm1754, 1.0, 0.0
  %v1947 = vsel %vm1755, 1.0, 0.0
  %v1948 = vsel %vm1756, 1.0, 0.0
  %v1949 = vsel %vm1757, 1.0, 0.0
  %v1950 = vsel %vm1758, 1.0, 0.0
  %v1951 = vsel %vm1759, 1.0, 0.0
  %v1952 = vsel %vm1760, 1.0, 0.0
  %v1953 = vsel %vm1761, 1.0, 0.0
  %v1954 = vsel %vm1762, 1.0, 0.0
  %v1955 = vsel %vm1763, 1.0, 0.0
  %v1956 = vsel %vm1764, 1.0, 0.0
  %v1957 = vsel %vm1765, 1.0, 0.0
  %v1958 = vsel %vm1766, 1.0, 0.0
  %v1959 = vsel %vm1767, 1.0, 0.0
  %v1960 = vsel %vm1768, 1.0, 0.0
  %v1961 = vsel %vm1769, 1.0, 0.0
  %v1962 = vsel %vm1770, 1.0, 0.0
  %v1963 = vsel %vm1771, 1.0, 0.0
  %v1964 = vsel %vm1772, 1.0, 0.0
  %v1965 = vsel %vm1773, 1.0, 0.0
  %v1966 = vsel %vm1774, 1.0, 0.0
  %v1967 = vsel %vm1775, 1.0, 0.0
  %v1968 = vsel %vm1776, 1.0, 0.0
  %v1969 = vsel %vm1777, 1.0, 0.0
  %v1970 = vsel %vm1778, 1.0, 0.0
  %v1971 = vsel %vm1779, 1.0, 0.0
  %v1972 = vsel %vm1780, 1.0, 0.0
  %v1973 = vsel %vm1781, 1.0, 0.0
  %v1974 = vsel %vm1782, 1.0, 0.0
  %v1975 = vsel %vm1783, 1.0, 0.0
  %v1976 = vsel %vm1784, 1.0, 0.0
  %v1977 = vsel %vm1785, 1.0, 0.0
  %v1978 = vsel %vm1786, 1.0, 0.0
  %v1979 = vsel %vm1787, 1.0, 0.0
  %v1980 = vsel %vm1788, 1.0, 0.0
  %v1981 = vsel %vm1789, 1.0, 0.0
  %v1982 = vsel %vm1790, 1.0, 0.0
  %v1983 = vsel %vm1791, 1.0, 0.0
  %v1984 = vsel %vm1792, 1.0, 0.0
  %v1985 = vsel %vm1793, 1.0, 0.0
  %v1986 = vsel %vm1794, 1.0, 0.0
  %v1987 = vsel %vm1795, 1.0, 0.0
  %v1988 = vsel %vm1796, 1.0, 0.0
  %v1989 = vsel %vm1797, 1.0, 0.0
  %v1990 = vsel %vm1798, 1.0, 0.0
  %v1991 = vsel %vm1799, 1.0, 0.0
  %v1992 = vsel %vm1800, 1.0, 0.0
  %v1993 = vsel %vm1801, 1.0, 0.0
  %v1994 = vsel %vm1802, 1.0, 0.0
  %v1995 = vsel %vm1803, 1.0, 0.0
  %v1996 = vsel %vm1804, 1.0, 0.0
  %v1997 = vsel %vm1805, 1.0, 0.0
  %v1998 = vsel %vm1806, 1.0, 0.0
  %v1999 = vsel %vm1807, 1.0, 0.0
  %v2000 = vsel %vm1808, 1.0, 0.0
  %v2001 = vsel %vm1809, 1.0, 0.0
  %v2002 = vsel %vm1810, 1.0, 0.0
  %v2003 = vsel %vm1811, 1.0, 0.0
  %v2004 = vsel %vm1812, 1.0, 0.0
  %v2005 = vsel %vm1813, 1.0, 0.0
  %v2006 = vsel %vm1814, 1.0, 0.0
  %v2007 = vsel %vm1815, 1.0, 0.0
  %v2008 = vsel %vm1816, 1.0, 0.0
  %v2009 = vsel %vm1817, 1.0, 0.0
  %v2010 = vsel %vm1818, 1.0, 0.0
  %v2011 = vsel %vm1819, 1.0, 0.0
  %v2012 = vsel %vm1820, 1.0, 0.0
  %v2013 = vsel %vm1821, 1.0, 0.0
  %v2014 = vsel %vm1822, 1.0, 0.0
  %v2015 = vsel %vm1823, 1.0, 0.0
  %v2016 = vsel %vm1824, 1.0, 0.0
  %v2017 = vsel %vm1825, 1.0, 0.0
  %v2018 = vsel %vm1826, 1.0, 0.0
  %v2019 = vsel %vm1827, 1.0, 0.0
  %v2020 = vsel %vm1828, 1.0, 0.0
  %v2021 = vsel %vm1829, 1.0, 0.0
  %v2022 = vsel %vm1830, 1.0, 0.0
  %v2023 = vsel %vm1831, 1.0, 0.0
  %v2024 = vsel %vm1832, 1.0, 0.0
  %v2025 = vsel %vm1833, 1.0, 0.0
  %v2026 = vsel %vm1834, 1.0, 0.0
  %v2027 = vsel %vm1835, 1.0, 0.0
  %v2028 = vsel %vm1836, 1.0, 0.0
  %v2029 = vsel %vm1837, 1.0, 0.0
  %v2030 = vsel %vm1838, 1.0, 0.0
  %v2031 = vsel %vm1839, 1.0, 0.0
  %v2032 = vsel %vm1840, 1.0, 0.0
  %v2033 = vsel %vm1841, 1.0, 0.0
  %v2034 = vsel %vm1842, 1.0, 0.0
  %v2035 = vsel %vm1843, 1.0, 0.0
  %v2036 = vsel %vm1844, 1.0, 0.0
  %v2037 = vsel %vm1845, 1.0, 0.0
  %v2038 = vsel %vm1846, 1.0, 0.0
  %v2039 = vsel %vm1847, 1.0, 0.0
  %v2040 = vsel %vm1848, 1.0, 0.0
  %v2041 = vsel %vm1849, 1.0, 0.0
  %v2042 = vsel %vm1850, 1.0, 0.0
  %v2043 = vsel %vm1851, 1.0, 0.0
  %v2044 = vsel %vm1852, 1.0, 0.0
  %v2045 = vsel %vm1853, 1.0, 0.0
  %v2046 = vsel %vm1854, 1.0, 0.0
  %v2047 = vsel %vm1855, 1.0, 0.0
  %v2048 = vsel %vm1856, 1.0, 0.0
  %v2049 = vsel %vm1857, 1.0, 0.0
  %v2050 = vsel %vm1858, 1.0, 0.0
  %v2051 = vsel %vm1859, 1.0, 0.0
  %v2052 = vsel %vm1860, 1.0, 0.0
  %v2053 = vsel %vm1861, 1.0, 0.0
  %v2054 = vsel %vm1862, 1.0, 0.0
  %v2055 = vsel %vm1863, 1.0, 0.0
  %v2056 = vsel %vm1864, 1.0, 0.0
  %v2057 = vsel %vm1865, 1.0, 0.0
  %v2058 = vsel %vm1866, 1.0, 0.0
  %v2059 = vsel %vm1867, 1.0, 0.0
  %v2060 = vsel %vm1868, 1.0, 0.0
  %v2061 = vsel %vm1869, 1.0, 0.0
  %v2062 = vsel %vm1870, 1.0, 0.0
  %v2063 = vsel %vm1871, 1.0, 0.0
  %v2064 = vsel %vm1872, 1.0, 0.0
  %v2065 = vsel %vm1873, 1.0, 0.0
  %v2066 = vsel %vm1874, 1.0, 0.0
  %v2067 = vsel %vm1875, 1.0, 0.0
  %v2068 = vsel %vm1876, 1.0, 0.0
  %v2069 = vsel %vm1877, 1.0, 0.0
  %v2070 = vsel %vm1878, 1.0, 0.0
  %v2071 = vsel %vm1879, 1.0, 0.0
  %v2072 = vsel %vm1880, 1.0, 0.0
  %v2073 = vsel %vm1881, 1.0, 0.0
  %v2074 = vsel %vm1882, 1.0, 0.0
  %v2075 = vsel %vm1883, 1.0, 0.0
  %v2076 = vsel %vm1884, 1.0, 0.0
  %v2077 = vsel %vm1885, 1.0, 0.0
  %v2078 = vsel %vm1886, 1.0, 0.0
  %v2079 = vsel %vm1887, 1.0, 0.0
  %v2080 = vsel %vm1888, 1.0, 0.0
  %v2081 = vsel %vm1889, 1.0, 0.0
  %v2082 = vsel %vm1890, 1.0, 0.0
  %v2083 = vsel %vm1891, 1.0, 0.0
  %v2084 = vsel %vm1892, 1.0, 0.0
  %v2085 = vsel %vm1893, 1.0, 0.0
  %v2086 = vsel %vm1894, 1.0, 0.0
  %v2087 = vsel %vm1895, 1.0, 0.0
  %v2088 = vsel %vm1896, 1.0, 0.0
  %v2089 = vsel %vm1897, 1.0, 0.0
  %v2090 = vpack.c.bf16 %v1899, %v1898
  %v2091 = vpack.c.bf16 %v1901, %v1900
  %v2092 = vpack.c.bf16 %v1903, %v1902
  %v2093 = vpack.c.bf16 %v1905, %v1904
  %v2094 = vpack.c.bf16 %v1907, %v1906
  %v2095 = vpack.c.bf16 %v1909, %v1908
  %v2096 = vpack.c.bf16 %v1911, %v1910
  %v2097 = vpack.c.bf16 %v1913, %v1912
  %v2098 = vpack.c.bf16 %v1915, %v1914
  %v2099 = vpack.c.bf16 %v1917, %v1916
  %v2100 = vpack.c.bf16 %v1919, %v1918
  %v2101 = vpack.c.bf16 %v1921, %v1920
  %v2102 = vpack.c.bf16 %v1923, %v1922
  %v2103 = vpack.c.bf16 %v1925, %v1924
  %v2104 = vpack.c.bf16 %v1927, %v1926
  %v2105 = vpack.c.bf16 %v1929, %v1928
  %v2106 = vpack.c.bf16 %v1931, %v1930
  %v2107 = vpack.c.bf16 %v1933, %v1932
  %v2108 = vpack.c.bf16 %v1935, %v1934
  %v2109 = vpack.c.bf16 %v1937, %v1936
  %v2110 = vpack.c.bf16 %v1939, %v1938
  %v2111 = vpack.c.bf16 %v1941, %v1940
  %v2112 = vpack.c.bf16 %v1943, %v1942
  %v2113 = vpack.c.bf16 %v1945, %v1944
  %v2114 = vpack.c.bf16 %v1947, %v1946
  %v2115 = vpack.c.bf16 %v1949, %v1948
  %v2116 = vpack.c.bf16 %v1951, %v1950
  %v2117 = vpack.c.bf16 %v1953, %v1952
  %v2118 = vpack.c.bf16 %v1955, %v1954
  %v2119 = vpack.c.bf16 %v1957, %v1956
  %v2120 = vpack.c.bf16 %v1959, %v1958
  %v2121 = vpack.c.bf16 %v1961, %v1960
  %v2122 = vpack.c.bf16 %v1963, %v1962
  %v2123 = vpack.c.bf16 %v1965, %v1964
  %v2124 = vpack.c.bf16 %v1967, %v1966
  %v2125 = vpack.c.bf16 %v1969, %v1968
  %v2126 = vpack.c.bf16 %v1971, %v1970
  %v2127 = vpack.c.bf16 %v1973, %v1972
  %v2128 = vpack.c.bf16 %v1975, %v1974
  %v2129 = vpack.c.bf16 %v1977, %v1976
  %v2130 = vpack.c.bf16 %v1979, %v1978
  %v2131 = vpack.c.bf16 %v1981, %v1980
  %v2132 = vpack.c.bf16 %v1983, %v1982
  %v2133 = vpack.c.bf16 %v1985, %v1984
  %v2134 = vpack.c.bf16 %v1987, %v1986
  %v2135 = vpack.c.bf16 %v1989, %v1988
  %v2136 = vpack.c.bf16 %v1991, %v1990
  %v2137 = vpack.c.bf16 %v1993, %v1992
  %v2138 = vpack.c.bf16 %v1995, %v1994
  %v2139 = vpack.c.bf16 %v1997, %v1996
  %v2140 = vpack.c.bf16 %v1999, %v1998
  %v2141 = vpack.c.bf16 %v2001, %v2000
  %v2142 = vpack.c.bf16 %v2003, %v2002
  %v2143 = vpack.c.bf16 %v2005, %v2004
  %v2144 = vpack.c.bf16 %v2007, %v2006
  %v2145 = vpack.c.bf16 %v2009, %v2008
  %v2146 = vpack.c.bf16 %v2011, %v2010
  %v2147 = vpack.c.bf16 %v2013, %v2012
  %v2148 = vpack.c.bf16 %v2015, %v2014
  %v2149 = vpack.c.bf16 %v2017, %v2016
  %v2150 = vpack.c.bf16 %v2019, %v2018
  %v2151 = vpack.c.bf16 %v2021, %v2020
  %v2152 = vpack.c.bf16 %v2023, %v2022
  %v2153 = vpack.c.bf16 %v2025, %v2024
  %v2154 = vpack.c.bf16 %v2027, %v2026
  %v2155 = vpack.c.bf16 %v2029, %v2028
  %v2156 = vpack.c.bf16 %v2031, %v2030
  %v2157 = vpack.c.bf16 %v2033, %v2032
  %v2158 = vpack.c.bf16 %v2035, %v2034
  %v2159 = vpack.c.bf16 %v2037, %v2036
  %v2160 = vpack.c.bf16 %v2039, %v2038
  %v2161 = vpack.c.bf16 %v2041, %v2040
  %v2162 = vpack.c.bf16 %v2043, %v2042
  %v2163 = vpack.c.bf16 %v2045, %v2044
  %v2164 = vpack.c.bf16 %v2047, %v2046
  %v2165 = vpack.c.bf16 %v2049, %v2048
  %v2166 = vpack.c.bf16 %v2051, %v2050
  %v2167 = vpack.c.bf16 %v2053, %v2052
  %v2168 = vpack.c.bf16 %v2055, %v2054
  %v2169 = vpack.c.bf16 %v2057, %v2056
  %v2170 = vpack.c.bf16 %v2059, %v2058
  %v2171 = vpack.c.bf16 %v2061, %v2060
  %v2172 = vpack.c.bf16 %v2063, %v2062
  %v2173 = vpack.c.bf16 %v2065, %v2064
  %v2174 = vpack.c.bf16 %v2067, %v2066
  %v2175 = vpack.c.bf16 %v2069, %v2068
  %v2176 = vpack.c.bf16 %v2071, %v2070
  %v2177 = vpack.c.bf16 %v2073, %v2072
  %v2178 = vpack.c.bf16 %v2075, %v2074
  %v2179 = vpack.c.bf16 %v2077, %v2076
  %v2180 = vpack.c.bf16 %v2079, %v2078
  %v2181 = vpack.c.bf16 %v2081, %v2080
  %v2182 = vpack.c.bf16 %v2083, %v2082
  %v2183 = vpack.c.bf16 %v2085, %v2084
  %v2184 = vpack.c.bf16 %v2087, %v2086
  %v2185 = vpack.c.bf16 %v2089, %v2088
  %v2186 = vld [vmem:[#allocation2] sm:$0xff]
  %v2187 = vld [vmem:[#allocation2 + $0x8] sm:$0xff]
  %v2188 = vld [vmem:[#allocation2 + $0x10] sm:$0xff]
  %v2189 = vld [vmem:[#allocation2 + $0x18] sm:$0xff]
  %2190 = vmatprep.subr.bf16.mxu0 0
  %2191 = vmatpush1.bf16.msra.mxu0 %v2097
  %2192 = vmatprep.subr.bf16.mxu0 0
  %2193 = vmatpush1.bf16.msra.mxu0 %v2096
  %2194 = vmatprep.subr.bf16.mxu0 0
  %2195 = vmatpush1.bf16.msra.mxu0 %v2095
  %2196 = vmatprep.subr.bf16.mxu0 0
  %2197 = vmatpush1.bf16.msra.mxu0 %v2094
  %2198 = vmatprep.subr.bf16.mxu0 0
  %2199 = vmatpush1.bf16.msra.mxu0 %v2093
  %2200 = vmatprep.subr.bf16.mxu0 0
  %2201 = vmatpush1.bf16.msra.mxu0 %v2092
  %2202 = vmatprep.subr.bf16.mxu0 0
  %2203 = vmatpush1.bf16.msra.mxu0 %v2091
  %2204 = vmatprep.subr.bf16.mxu0 0
  %2205 = vmatpush1.bf16.msra.mxu0 %v2090
  %2206 = vmatprep.subr.bf16.mxu0 0
  %2207 = vmatpush2.bf16.msra.mxu0 %v2105
  %2208 = vmatprep.subr.bf16.mxu0 0
  %2209 = vmatpush2.bf16.msra.mxu0 %v2104
  %2210 = vmatprep.subr.bf16.mxu0 0
  %2211 = vmatpush2.bf16.msra.mxu0 %v2103
  %2212 = vmatprep.subr.bf16.mxu0 0
  %2213 = vmatpush2.bf16.msra.mxu0 %v2102
  %2214 = vmatprep.subr.bf16.mxu0 0
  %2215 = vmatpush2.bf16.msra.mxu0 %v2101
  %2216 = vmatprep.subr.bf16.mxu0 0
  %2217 = vmatpush2.bf16.msra.mxu0 %v2100
  %2218 = vmatprep.subr.bf16.mxu0 0
  %2219 = vmatpush2.bf16.msra.mxu0 %v2099
  %2220 = vmatprep.subr.bf16.mxu0 0
  %2221 = vmatpush2.bf16.msra.mxu0 %v2098
  %2222 = vmatprep.mubr.bf16.mxu0 %v908
  %2223 = vmatmul.mubr.bf16.gmra.mxu0 %v907
  %v2224 = vpop.f32.mrf.mxu0
  %v2225 = vadd.f32 0.0, %v2224
  %v2226 = vpop.f32.mrf.mxu0
  %v2227 = vpop.f32.mrf.mxu0
  %v2228 = vadd.f32 0.0, %v2227
  %v2229 = vpop.f32.mrf.mxu0
  %2230 = vmatprep.mubr.bf16.mxu0 %v920
  %2231 = vmatmul.mubr.bf16.gmra.mxu0 %v919
  %v2232 = vpop.f32.mrf.mxu0
  %v2233 = vadd.f32 0.0, %v2232
  %v2234 = vpop.f32.mrf.mxu0
  %v2235 = vpop.f32.mrf.mxu0
  %v2236 = vadd.f32 0.0, %v2235
  %v2237 = vpop.f32.mrf.mxu0
  %2238 = vdwg.mxu0
  %2239 = vmatprep.subr.bf16.mxu0 0
  %2240 = vmatpush1.bf16.msra.mxu0 %v2113
  %2241 = vmatprep.subr.bf16.mxu0 0
  %2242 = vmatpush1.bf16.msra.mxu0 %v2112
  %2243 = vmatprep.subr.bf16.mxu0 0
  %2244 = vmatpush1.bf16.msra.mxu0 %v2111
  %2245 = vmatprep.subr.bf16.mxu0 0
  %2246 = vmatpush1.bf16.msra.mxu0 %v2110
  %2247 = vmatprep.subr.bf16.mxu0 0
  %2248 = vmatpush1.bf16.msra.mxu0 %v2109
  %2249 = vmatprep.subr.bf16.mxu0 0
  %2250 = vmatpush1.bf16.msra.mxu0 %v2108
  %2251 = vmatprep.subr.bf16.mxu0 0
  %2252 = vmatpush1.bf16.msra.mxu0 %v2107
  %2253 = vmatprep.subr.bf16.mxu0 0
  %2254 = vmatpush1.bf16.msra.mxu0 %v2106
  %2255 = vmatprep.subr.bf16.mxu0 0
  %2256 = vmatpush2.bf16.msra.mxu0 %v2121
  %2257 = vmatprep.subr.bf16.mxu0 0
  %2258 = vmatpush2.bf16.msra.mxu0 %v2120
  %2259 = vmatprep.subr.bf16.mxu0 0
  %2260 = vmatpush2.bf16.msra.mxu0 %v2119
  %2261 = vmatprep.subr.bf16.mxu0 0
  %2262 = vmatpush2.bf16.msra.mxu0 %v2118
  %2263 = vmatprep.subr.bf16.mxu0 0
  %2264 = vmatpush2.bf16.msra.mxu0 %v2117
  %2265 = vmatprep.subr.bf16.mxu0 0
  %2266 = vmatpush2.bf16.msra.mxu0 %v2116
  %2267 = vmatprep.subr.bf16.mxu0 0
  %2268 = vmatpush2.bf16.msra.mxu0 %v2115
  %2269 = vmatprep.subr.bf16.mxu0 0
  %2270 = vmatpush2.bf16.msra.mxu0 %v2114
  %2271 = vmatprep.mubr.bf16.mxu0 %v910
  %2272 = vmatmul.mubr.bf16.gmra.mxu0 %v909
  %v2273 = vpop.f32.mrf.mxu0
  %v2274 = vadd.f32 %v2225, %v2273
  %v2275 = vpop.f32.mrf.mxu0
  %v2276 = vpop.f32.mrf.mxu0
  %v2277 = vadd.f32 %v2228, %v2276
  %v2278 = vpop.f32.mrf.mxu0
  %2279 = vmatprep.mubr.bf16.mxu0 %v922
  %2280 = vmatmul.mubr.bf16.gmra.mxu0 %v921
  %v2281 = vpop.f32.mrf.mxu0
  %v2282 = vadd.f32 %v2233, %v2281
  %v2283 = vpop.f32.mrf.mxu0
  %v2284 = vpop.f32.mrf.mxu0
  %v2285 = vadd.f32 %v2236, %v2284
  %v2286 = vpop.f32.mrf.mxu0
  %2287 = vdwg.mxu0
  %2288 = vmatprep.subr.bf16.mxu0 0
  %2289 = vmatpush1.bf16.msra.mxu0 %v2129
  %2290 = vmatprep.subr.bf16.mxu0 0
  %2291 = vmatpush1.bf16.msra.mxu0 %v2128
  %2292 = vmatprep.subr.bf16.mxu0 0
  %2293 = vmatpush1.bf16.msra.mxu0 %v2127
  %2294 = vmatprep.subr.bf16.mxu0 0
  %2295 = vmatpush1.bf16.msra.mxu0 %v2126
  %2296 = vmatprep.subr.bf16.mxu0 0
  %2297 = vmatpush1.bf16.msra.mxu0 %v2125
  %2298 = vmatprep.subr.bf16.mxu0 0
  %2299 = vmatpush1.bf16.msra.mxu0 %v2124
  %2300 = vmatprep.subr.bf16.mxu0 0
  %2301 = vmatpush1.bf16.msra.mxu0 %v2123
  %2302 = vmatprep.subr.bf16.mxu0 0
  %2303 = vmatpush1.bf16.msra.mxu0 %v2122
  %2304 = vmatprep.subr.bf16.mxu0 0
  %2305 = vmatpush2.bf16.msra.mxu0 %v2137
  %2306 = vmatprep.subr.bf16.mxu0 0
  %2307 = vmatpush2.bf16.msra.mxu0 %v2136
  %2308 = vmatprep.subr.bf16.mxu0 0
  %2309 = vmatpush2.bf16.msra.mxu0 %v2135
  %2310 = vmatprep.subr.bf16.mxu0 0
  %2311 = vmatpush2.bf16.msra.mxu0 %v2134
  %2312 = vmatprep.subr.bf16.mxu0 0
  %2313 = vmatpush2.bf16.msra.mxu0 %v2133
  %2314 = vmatprep.subr.bf16.mxu0 0
  %2315 = vmatpush2.bf16.msra.mxu0 %v2132
  %2316 = vmatprep.subr.bf16.mxu0 0
  %2317 = vmatpush2.bf16.msra.mxu0 %v2131
  %2318 = vmatprep.subr.bf16.mxu0 0
  %2319 = vmatpush2.bf16.msra.mxu0 %v2130
  %2320 = vmatprep.mubr.bf16.mxu0 %v912
  %2321 = vmatmul.mubr.bf16.gmra.mxu0 %v911
  %v2322 = vpop.f32.mrf.mxu0
  %v2323 = vadd.f32 %v2274, %v2322
  %v2324 = vpop.f32.mrf.mxu0
  %v2325 = vpop.f32.mrf.mxu0
  %v2326 = vadd.f32 %v2277, %v2325
  %v2327 = vpop.f32.mrf.mxu0
  %2328 = vmatprep.mubr.bf16.mxu0 %v924
  %2329 = vmatmul.mubr.bf16.gmra.mxu0 %v923
  %v2330 = vpop.f32.mrf.mxu0
  %v2331 = vadd.f32 %v2282, %v2330
  %v2332 = vpop.f32.mrf.mxu0
  %v2333 = vpop.f32.mrf.mxu0
  %v2334 = vadd.f32 %v2285, %v2333
  %v2335 = vpop.f32.mrf.mxu0
  %2336 = vdwg.mxu0
  %2337 = vmatprep.subr.bf16.mxu0 0
  %2338 = vmatpush1.bf16.msra.mxu0 %v2145
  %2339 = vmatprep.subr.bf16.mxu0 0
  %2340 = vmatpush1.bf16.msra.mxu0 %v2144
  %2341 = vmatprep.subr.bf16.mxu0 0
  %2342 = vmatpush1.bf16.msra.mxu0 %v2143
  %2343 = vmatprep.subr.bf16.mxu0 0
  %2344 = vmatpush1.bf16.msra.mxu0 %v2142
  %2345 = vmatprep.subr.bf16.mxu0 0
  %2346 = vmatpush1.bf16.msra.mxu0 %v2141
  %2347 = vmatprep.subr.bf16.mxu0 0
  %2348 = vmatpush1.bf16.msra.mxu0 %v2140
  %2349 = vmatprep.subr.bf16.mxu0 0
  %2350 = vmatpush1.bf16.msra.mxu0 %v2139
  %2351 = vmatprep.subr.bf16.mxu0 0
  %2352 = vmatpush1.bf16.msra.mxu0 %v2138
  %2353 = vmatprep.subr.bf16.mxu0 0
  %2354 = vmatpush2.bf16.msra.mxu0 %v2153
  %2355 = vmatprep.subr.bf16.mxu0 0
  %2356 = vmatpush2.bf16.msra.mxu0 %v2152
  %2357 = vmatprep.subr.bf16.mxu0 0
  %2358 = vmatpush2.bf16.msra.mxu0 %v2151
  %2359 = vmatprep.subr.bf16.mxu0 0
  %2360 = vmatpush2.bf16.msra.mxu0 %v2150
  %2361 = vmatprep.subr.bf16.mxu0 0
  %2362 = vmatpush2.bf16.msra.mxu0 %v2149
  %2363 = vmatprep.subr.bf16.mxu0 0
  %2364 = vmatpush2.bf16.msra.mxu0 %v2148
  %2365 = vmatprep.subr.bf16.mxu0 0
  %2366 = vmatpush2.bf16.msra.mxu0 %v2147
  %2367 = vmatprep.subr.bf16.mxu0 0
  %2368 = vmatpush2.bf16.msra.mxu0 %v2146
  %2369 = vmatprep.mubr.bf16.mxu0 %v914
  %2370 = vmatmul.mubr.bf16.gmra.mxu0 %v913
  %v2371 = vpop.f32.mrf.mxu0
  %v2372 = vadd.f32 %v2323, %v2371
  %v2373 = vpop.f32.mrf.mxu0
  %v2374 = vpop.f32.mrf.mxu0
  %v2375 = vadd.f32 %v2326, %v2374
  %v2376 = vpop.f32.mrf.mxu0
  %2377 = vmatprep.mubr.bf16.mxu0 %v926
  %2378 = vmatmul.mubr.bf16.gmra.mxu0 %v925
  %v2379 = vpop.f32.mrf.mxu0
  %v2380 = vadd.f32 %v2331, %v2379
  %v2381 = vpop.f32.mrf.mxu0
  %v2382 = vpop.f32.mrf.mxu0
  %v2383 = vadd.f32 %v2334, %v2382
  %v2384 = vpop.f32.mrf.mxu0
  %2385 = vdwg.mxu0
  %2386 = vmatprep.subr.bf16.mxu0 0
  %2387 = vmatpush1.bf16.msra.mxu0 %v2161
  %2388 = vmatprep.subr.bf16.mxu0 0
  %2389 = vmatpush1.bf16.msra.mxu0 %v2160
  %2390 = vmatprep.subr.bf16.mxu0 0
  %2391 = vmatpush1.bf16.msra.mxu0 %v2159
  %2392 = vmatprep.subr.bf16.mxu0 0
  %2393 = vmatpush1.bf16.msra.mxu0 %v2158
  %2394 = vmatprep.subr.bf16.mxu0 0
  %2395 = vmatpush1.bf16.msra.mxu0 %v2157
  %2396 = vmatprep.subr.bf16.mxu0 0
  %2397 = vmatpush1.bf16.msra.mxu0 %v2156
  %2398 = vmatprep.subr.bf16.mxu0 0
  %2399 = vmatpush1.bf16.msra.mxu0 %v2155
  %2400 = vmatprep.subr.bf16.mxu0 0
  %2401 = vmatpush1.bf16.msra.mxu0 %v2154
  %2402 = vmatprep.subr.bf16.mxu0 0
  %2403 = vmatpush2.bf16.msra.mxu0 %v2169
  %2404 = vmatprep.subr.bf16.mxu0 0
  %2405 = vmatpush2.bf16.msra.mxu0 %v2168
  %2406 = vmatprep.subr.bf16.mxu0 0
  %2407 = vmatpush2.bf16.msra.mxu0 %v2167
  %2408 = vmatprep.subr.bf16.mxu0 0
  %2409 = vmatpush2.bf16.msra.mxu0 %v2166
  %2410 = vmatprep.subr.bf16.mxu0 0
  %2411 = vmatpush2.bf16.msra.mxu0 %v2165
  %2412 = vmatprep.subr.bf16.mxu0 0
  %2413 = vmatpush2.bf16.msra.mxu0 %v2164
  %2414 = vmatprep.subr.bf16.mxu0 0
  %2415 = vmatpush2.bf16.msra.mxu0 %v2163
  %2416 = vmatprep.subr.bf16.mxu0 0
  %2417 = vmatpush2.bf16.msra.mxu0 %v2162
  %2418 = vmatprep.mubr.bf16.mxu0 %v916
  %2419 = vmatmul.mubr.bf16.gmra.mxu0 %v915
  %v2420 = vpop.f32.mrf.mxu0
  %v2421 = vadd.f32 %v2372, %v2420
  %v2422 = vpop.f32.mrf.mxu0
  %v2423 = vpop.f32.mrf.mxu0
  %v2424 = vadd.f32 %v2375, %v2423
  %v2425 = vpop.f32.mrf.mxu0
  %2426 = vmatprep.mubr.bf16.mxu0 %v928
  %2427 = vmatmul.mubr.bf16.gmra.mxu0 %v927
  %v2428 = vpop.f32.mrf.mxu0
  %v2429 = vadd.f32 %v2380, %v2428
  %v2430 = vpop.f32.mrf.mxu0
  %v2431 = vpop.f32.mrf.mxu0
  %v2432 = vadd.f32 %v2383, %v2431
  %v2433 = vpop.f32.mrf.mxu0
  %2434 = vdwg.mxu0
  %2435 = vmatprep.subr.bf16.mxu0 0
  %2436 = vmatpush1.bf16.msra.mxu0 %v2177
  %2437 = vmatprep.subr.bf16.mxu0 0
  %2438 = vmatpush1.bf16.msra.mxu0 %v2176
  %2439 = vmatprep.subr.bf16.mxu0 0
  %2440 = vmatpush1.bf16.msra.mxu0 %v2175
  %2441 = vmatprep.subr.bf16.mxu0 0
  %2442 = vmatpush1.bf16.msra.mxu0 %v2174
  %2443 = vmatprep.subr.bf16.mxu0 0
  %2444 = vmatpush1.bf16.msra.mxu0 %v2173
  %2445 = vmatprep.subr.bf16.mxu0 0
  %2446 = vmatpush1.bf16.msra.mxu0 %v2172
  %2447 = vmatprep.subr.bf16.mxu0 0
  %2448 = vmatpush1.bf16.msra.mxu0 %v2171
  %2449 = vmatprep.subr.bf16.mxu0 0
  %2450 = vmatpush1.bf16.msra.mxu0 %v2170
  %2451 = vmatprep.subr.bf16.mxu0 0
  %2452 = vmatpush2.bf16.msra.mxu0 %v2185
  %2453 = vmatprep.subr.bf16.mxu0 0
  %2454 = vmatpush2.bf16.msra.mxu0 %v2184
  %2455 = vmatprep.subr.bf16.mxu0 0
  %2456 = vmatpush2.bf16.msra.mxu0 %v2183
  %2457 = vmatprep.subr.bf16.mxu0 0
  %2458 = vmatpush2.bf16.msra.mxu0 %v2182
  %2459 = vmatprep.subr.bf16.mxu0 0
  %2460 = vmatpush2.bf16.msra.mxu0 %v2181
  %2461 = vmatprep.subr.bf16.mxu0 0
  %2462 = vmatpush2.bf16.msra.mxu0 %v2180
  %2463 = vmatprep.subr.bf16.mxu0 0
  %2464 = vmatpush2.bf16.msra.mxu0 %v2179
  %2465 = vmatprep.subr.bf16.mxu0 0
  %2466 = vmatpush2.bf16.msra.mxu0 %v2178
  %2467 = vmatprep.mubr.bf16.mxu0 %v918
  %2468 = vmatmul.mubr.bf16.gmra.mxu0 %v917
  %v2469 = vpop.f32.mrf.mxu0
  %v2470 = vadd.f32 %v2421, %v2469
  %v2471 = vpop.f32.mrf.mxu0
  %v2472 = vpop.f32.mrf.mxu0
  %v2473 = vadd.f32 %v2424, %v2472
  %v2474 = vpop.f32.mrf.mxu0
  %2475 = vmatprep.mubr.bf16.mxu0 %v930
  %2476 = vmatmul.mubr.bf16.gmra.mxu0 %v929
  %v2477 = vpop.f32.mrf.mxu0
  %v2478 = vadd.f32 %v2429, %v2477
  %v2479 = vpop.f32.mrf.mxu0
  %v2480 = vpop.f32.mrf.mxu0
  %v2481 = vadd.f32 %v2432, %v2480
  %v2482 = vpop.f32.mrf.mxu0
  %2483 = vdwg.mxu0
  %v2484 = vadd.f32 %v2186, %v2470
  %v2485 = vadd.f32 %v2187, %v2473
  %v2486 = vadd.f32 %v2188, %v2478
  %v2487 = vadd.f32 %v2189, %v2481
  %vm2488 = vcmask 48128
  %2489 = vst.msk [vmem:[#allocation2] sm:$0xff] %vm2488, %v2484
  %2490 = vst.msk [vmem:[#allocation2 + $0x8] sm:$0xff] %vm2488, %v2485
  %2491 = vst.msk [vmem:[#allocation2 + $0x10] sm:$0xff] %vm2488, %v2486
  %2492 = vst.msk [vmem:[#allocation2 + $0x18] sm:$0xff] %vm2488, %v2487
  // Predicated region
  $region42: #{triplet_forward.1} parent=0 // pred_check
    %p2493 = pneg %p55
  $region43: #{triplet_forward.1} parent=0 // pred_check_branch
    %2495 = sbr.rel (%p2493) target = $region45
  $region44: #{triplet_forward.1} parent=0 // pred_region
    %v2496 = vld [vmem:[#allocation2] sm:$0xff]
    %v2497 = vld [vmem:[#allocation2 + $0x8] sm:$0xff]
    %v2498 = vld [vmem:[#allocation2 + $0x10] sm:$0xff]
    %v2499 = vld [vmem:[#allocation2 + $0x18] sm:$0xff]
    %2500 = vxpose.xlu0.b32.start [1/16] %v2496, 128
    %2501 = vxpose.xlu0.b32.cont [2/16] %v2497, 128
    %2502 = vxpose.xlu0.b32.cont [3/16] %v2498, 128
    %2503 = vxpose.xlu0.b32.cont [4/16] %v2499, 128
    %2504 = vxpose.xlu0.b32.cont [5/16] 0.0, 128
    %2505 = vxpose.xlu0.b32.cont [6/16] 0.0, 128
    %2506 = vxpose.xlu0.b32.cont [7/16] 0.0, 128
    %2507 = vxpose.xlu0.b32.cont [8/16] 0.0, 128
    %2508 = vxpose.xlu0.b32.cont [9/16] 0.0, 128
    %2509 = vxpose.xlu0.b32.cont [10/16] 0.0, 128
    %2510 = vxpose.xlu0.b32.cont [11/16] 0.0, 128
    %2511 = vxpose.xlu0.b32.cont [12/16] 0.0, 128
    %2512 = vxpose.xlu0.b32.cont [13/16] 0.0, 128
    %2513 = vxpose.xlu0.b32.cont [14/16] 0.0, 128
    %2514 = vxpose.xlu0.b32.cont [15/16] 0.0, 128
    %2515 = vxpose.xlu0.b32.end [16/16] 0.0, 128
    %v2516 = vpop.trf.xlu0
    %v2517 = vpop.trf.xlu0
    %v2518 = vpop.trf.xlu0
    %v2519 = vpop.trf.xlu0
    %v2520 = vpop.trf.xlu0
    %v2521 = vpop.trf.xlu0
    %v2522 = vpop.trf.xlu0
    %v2523 = vpop.trf.xlu0
    %v2524 = vpop.trf.xlu0
    %v2525 = vpop.trf.xlu0
    %v2526 = vpop.trf.xlu0
    %v2527 = vpop.trf.xlu0
    %v2528 = vpop.trf.xlu0
    %v2529 = vpop.trf.xlu0
    %v2530 = vpop.trf.xlu0
    %v2531 = vpop.trf.xlu0
    %v2532 = vmul.f32 %v2516, 0.00390625
    %v2533 = vpack.c.bf16 %v2532, %v2532
    %v2534 = vld [vmem:[%s3] sm:$0xff]
    %v2535 = vld [vmem:[%s3 + $0x8] sm:$0xff]
    %v2536 = vld [vmem:[%s3 + $0x10] sm:$0xff]
    %v2537 = vld [vmem:[%s3 + $0x18] sm:$0xff]
    %v2538 = vld [vmem:[%s3 + $0x20] sm:$0xff]
    %v2539 = vld [vmem:[%s3 + $0x28] sm:$0xff]
    %v2540 = vld [vmem:[%s3 + $0x30] sm:$0xff]
    %v2541 = vld [vmem:[%s3 + $0x38] sm:$0xff]
    %v2542 = vld [vmem:[%s3 + $0x40] sm:$0xff]
    %v2543 = vld [vmem:[%s3 + $0x48] sm:$0xff]
    %v2544 = vld [vmem:[%s3 + $0x50] sm:$0xff]
    %v2545 = vld [vmem:[%s3 + $0x58] sm:$0xff]
    %v2546 = vld [vmem:[%s3 + $0x60] sm:$0xff]
    %v2547 = vld [vmem:[%s3 + $0x68] sm:$0xff]
    %v2548 = vld [vmem:[%s3 + $0x70] sm:$0xff]
    %v2549 = vld [vmem:[%s3 + $0x78] sm:$0xff]
    %v2550 = vld [vmem:[%s3 + $0x80] sm:$0xff]
    %v2551 = vld [vmem:[%s3 + $0x88] sm:$0xff]
    %v2552 = vld [vmem:[%s3 + $0x90] sm:$0xff]
    %v2553 = vld [vmem:[%s3 + $0x98] sm:$0xff]
    %v2554 = vld [vmem:[%s4] sm:$0xff]
    %v2555 = vld [vmem:[%s4 + $0x8] sm:$0x3]
    %v2558 = vlaneseq
    %v2559 = vshrl.u32 %v2558, 7
    %v2560 = vsub.s32 0, %v2559
    %v2561 = vrot.slane %v2554, %v2560
    %v2562 = vlaneseq
    %v2563 = vshrl.u32 %v2562, 7
    %v2564 = vsub.s32 1, %v2563
    %v2565 = vrot.slane %v2554, %v2564
    %v2566 = vlaneseq
    %v2567 = vshrl.u32 %v2566, 7
    %v2568 = vsub.s32 2, %v2567
    %v2569 = vrot.slane %v2554, %v2568
    %v2570 = vlaneseq
    %v2571 = vshrl.u32 %v2570, 7
    %v2572 = vsub.s32 3, %v2571
    %v2573 = vrot.slane %v2554, %v2572
    %v2574 = vlaneseq
    %v2575 = vshrl.u32 %v2574, 7
    %v2576 = vsub.s32 4, %v2575
    %v2577 = vrot.slane %v2554, %v2576
    %v2578 = vlaneseq
    %v2579 = vshrl.u32 %v2578, 7
    %v2580 = vsub.s32 5, %v2579
    %v2581 = vrot.slane %v2554, %v2580
    %v2582 = vlaneseq
    %v2583 = vshrl.u32 %v2582, 7
    %v2584 = vsub.s32 6, %v2583
    %v2585 = vrot.slane %v2554, %v2584
    %v2586 = vlaneseq
    %v2587 = vshrl.u32 %v2586, 7
    %v2588 = vsub.s32 7, %v2587
    %v2589 = vrot.slane %v2554, %v2588
    %v2590 = vlaneseq
    %v2591 = vshrl.u32 %v2590, 7
    %v2592 = vsub.s32 0, %v2591
    %v2593 = vrot.slane %v2555, %v2592
    %v2594 = vlaneseq
    %v2595 = vshrl.u32 %v2594, 7
    %v2596 = vsub.s32 1, %v2595
    %v2597 = vrot.slane %v2555, %v2596
    %v2628 = vunpack.c.l.b16 %v2534
    %v2629 = vunpack.c.h.b16 %v2534
    %v2630 = vunpack.c.l.b16 %v2535
    %v2631 = vunpack.c.h.b16 %v2535
    %v2632 = vunpack.c.l.b16 %v2536
    %v2633 = vunpack.c.h.b16 %v2536
    %v2634 = vunpack.c.l.b16 %v2537
    %v2635 = vunpack.c.h.b16 %v2537
    %v2636 = vunpack.c.l.b16 %v2538
    %v2637 = vunpack.c.h.b16 %v2538
    %v2638 = vunpack.c.l.b16 %v2539
    %v2639 = vunpack.c.h.b16 %v2539
    %v2640 = vunpack.c.l.b16 %v2540
    %v2641 = vunpack.c.h.b16 %v2540
    %v2642 = vunpack.c.l.b16 %v2541
    %v2643 = vunpack.c.h.b16 %v2541
    %v2644 = vunpack.c.l.b16 %v2542
    %v2645 = vunpack.c.h.b16 %v2542
    %v2646 = vunpack.c.l.b16 %v2543
    %v2647 = vunpack.c.h.b16 %v2543
    %v2648 = vunpack.c.l.b16 %v2544
    %v2649 = vunpack.c.h.b16 %v2544
    %v2650 = vunpack.c.l.b16 %v2545
    %v2651 = vunpack.c.h.b16 %v2545
    %v2652 = vunpack.c.l.b16 %v2546
    %v2653 = vunpack.c.h.b16 %v2546
    %v2654 = vunpack.c.l.b16 %v2547
    %v2655 = vunpack.c.h.b16 %v2547
    %v2656 = vunpack.c.l.b16 %v2548
    %v2657 = vunpack.c.h.b16 %v2548
    %v2658 = vunpack.c.l.b16 %v2549
    %v2659 = vunpack.c.h.b16 %v2549
    %v2660 = vunpack.c.l.b16 %v2550
    %v2661 = vunpack.c.h.b16 %v2550
    %v2662 = vunpack.c.l.b16 %v2551
    %v2663 = vunpack.c.h.b16 %v2551
    %v2664 = vunpack.c.l.b16 %v2552
    %v2665 = vunpack.c.h.b16 %v2552
    %v2666 = vunpack.c.l.b16 %v2553
    %v2667 = vunpack.c.h.b16 %v2553
    %v2668 = vpack.c.b16 %v2638, %v2628
    %v2669 = vpack.c.b16 %v2639, %v2629
    %v2670 = vpack.c.b16 %v2640, %v2630
    %v2671 = vpack.c.b16 %v2641, %v2631
    %v2672 = vpack.c.b16 %v2642, %v2632
    %v2673 = vpack.c.b16 %v2643, %v2633
    %v2674 = vpack.c.b16 %v2644, %v2634
    %v2675 = vpack.c.b16 %v2645, %v2635
    %v2676 = vpack.c.b16 %v2646, %v2636
    %v2677 = vpack.c.b16 %v2647, %v2637
    %v2678 = vpack.c.b16 %v2658, %v2648
    %v2679 = vpack.c.b16 %v2659, %v2649
    %v2680 = vpack.c.b16 %v2660, %v2650
    %v2681 = vpack.c.b16 %v2661, %v2651
    %v2682 = vpack.c.b16 %v2662, %v2652
    %v2683 = vpack.c.b16 %v2663, %v2653
    %v2684 = vpack.c.b16 %v2664, %v2654
    %v2685 = vpack.c.b16 %v2665, %v2655
    %v2686 = vpack.c.b16 %v2666, %v2656
    %v2687 = vpack.c.b16 %v2667, %v2657
    %v2709 = vsel %vm246, %v2533, 0
    %2711 = vmatprep.subr.bf16.mxu0 0
    %2712 = vmatpush1.bf16.msra.mxu0 0
    %2713 = vmatprep.subr.bf16.mxu0 0
    %2714 = vmatpush1.bf16.msra.mxu0 0
    %2715 = vmatprep.subr.bf16.mxu0 0
    %2716 = vmatpush1.bf16.msra.mxu0 0
    %2717 = vmatprep.subr.bf16.mxu0 0
    %2718 = vmatpush1.bf16.msra.mxu0 0
    %2719 = vmatprep.subr.bf16.mxu0 0
    %2720 = vmatpush1.bf16.msra.mxu0 0
    %2721 = vmatprep.subr.bf16.mxu0 0
    %2722 = vmatpush1.bf16.msra.mxu0 0
    %2723 = vmatprep.subr.bf16.mxu0 %v2679
    %2724 = vmatpush1.bf16.msra.mxu0 %v2678
    %2725 = vmatprep.subr.bf16.mxu0 %v2669
    %2726 = vmatpush1.bf16.msra.mxu0 %v2668
    %2727 = vmatprep.subr.bf16.mxu0 0
    %2728 = vmatpush2.bf16.msra.mxu0 0
    %2729 = vmatprep.subr.bf16.mxu0 0
    %2730 = vmatpush2.bf16.msra.mxu0 0
    %2731 = vmatprep.subr.bf16.mxu0 0
    %2732 = vmatpush2.bf16.msra.mxu0 0
    %2733 = vmatprep.subr.bf16.mxu0 0
    %2734 = vmatpush2.bf16.msra.mxu0 0
    %2735 = vmatprep.subr.bf16.mxu0 0
    %2736 = vmatpush2.bf16.msra.mxu0 0
    %2737 = vmatprep.subr.bf16.mxu0 0
    %2738 = vmatpush2.bf16.msra.mxu0 0
    %2739 = vmatprep.subr.bf16.mxu0 0
    %2740 = vmatpush2.bf16.msra.mxu0 0
    %2741 = vmatprep.subr.bf16.mxu0 0
    %2742 = vmatpush2.bf16.msra.mxu0 0
    %2743 = vmatprep.mubr.bf16.mxu0 0
    %2744 = vmatmul.mubr.bf16.gmra.mxu0 %v2709
    %v2745 = vpop.f32.mrf.mxu0
    %v2746 = vadd.f32 %v2561, %v2745
    %v2747 = vpop.f32.mrf.mxu0
    %v2748 = vadd.f32 %v2565, %v2747
    %v2749 = vpop.f32.mrf.mxu0
    %v2750 = vpop.f32.mrf.mxu0
    %2751 = vdwg.mxu0
    %2752 = vmatprep.subr.bf16.mxu0 0
    %2753 = vmatpush1.bf16.msra.mxu0 0
    %2754 = vmatprep.subr.bf16.mxu0 0
    %2755 = vmatpush1.bf16.msra.mxu0 0
    %2756 = vmatprep.subr.bf16.mxu0 0
    %2757 = vmatpush1.bf16.msra.mxu0 0
    %2758 = vmatprep.subr.bf16.mxu0 0
    %2759 = vmatpush1.bf16.msra.mxu0 0
    %2760 = vmatprep.subr.bf16.mxu0 0
    %2761 = vmatpush1.bf16.msra.mxu0 0
    %2762 = vmatprep.subr.bf16.mxu0 0
    %2763 = vmatpush1.bf16.msra.mxu0 0
    %2764 = vmatprep.subr.bf16.mxu0 %v2681
    %2765 = vmatpush1.bf16.msra.mxu0 %v2680
    %2766 = vmatprep.subr.bf16.mxu0 %v2671
    %2767 = vmatpush1.bf16.msra.mxu0 %v2670
    %2768 = vmatprep.subr.bf16.mxu0 0
    %2769 = vmatpush2.bf16.msra.mxu0 0
    %2770 = vmatprep.subr.bf16.mxu0 0
    %2771 = vmatpush2.bf16.msra.mxu0 0
    %2772 = vmatprep.subr.bf16.mxu0 0
    %2773 = vmatpush2.bf16.msra.mxu0 0
    %2774 = vmatprep.subr.bf16.mxu0 0
    %2775 = vmatpush2.bf16.msra.mxu0 0
    %2776 = vmatprep.subr.bf16.mxu0 0
    %2777 = vmatpush2.bf16.msra.mxu0 0
    %2778 = vmatprep.subr.bf16.mxu0 0
    %2779 = vmatpush2.bf16.msra.mxu0 0
    %2780 = vmatprep.subr.bf16.mxu0 0
    %2781 = vmatpush2.bf16.msra.mxu0 0
    %2782 = vmatprep.subr.bf16.mxu0 0
    %2783 = vmatpush2.bf16.msra.mxu0 0
    %2784 = vmatprep.mubr.bf16.mxu0 0
    %2785 = vmatmul.mubr.bf16.gmra.mxu0 %v2709
    %v2786 = vpop.f32.mrf.mxu0
    %v2787 = vadd.f32 %v2569, %v2786
    %v2788 = vpop.f32.mrf.mxu0
    %v2789 = vadd.f32 %v2573, %v2788
    %v2790 = vpop.f32.mrf.mxu0
    %v2791 = vpop.f32.mrf.mxu0
    %2792 = vdwg.mxu0
    %2793 = vmatprep.subr.bf16.mxu0 0
    %2794 = vmatpush1.bf16.msra.mxu0 0
    %2795 = vmatprep.subr.bf16.mxu0 0
    %2796 = vmatpush1.bf16.msra.mxu0 0
    %2797 = vmatprep.subr.bf16.mxu0 0
    %2798 = vmatpush1.bf16.msra.mxu0 0
    %2799 = vmatprep.subr.bf16.mxu0 0
    %2800 = vmatpush1.bf16.msra.mxu0 0
    %2801 = vmatprep.subr.bf16.mxu0 0
    %2802 = vmatpush1.bf16.msra.mxu0 0
    %2803 = vmatprep.subr.bf16.mxu0 0
    %2804 = vmatpush1.bf16.msra.mxu0 0
    %2805 = vmatprep.subr.bf16.mxu0 %v2683
    %2806 = vmatpush1.bf16.msra.mxu0 %v2682
    %2807 = vmatprep.subr.bf16.mxu0 %v2673
    %2808 = vmatpush1.bf16.msra.mxu0 %v2672
    %2809 = vmatprep.subr.bf16.mxu0 0
    %2810 = vmatpush2.bf16.msra.mxu0 0
    %2811 = vmatprep.subr.bf16.mxu0 0
    %2812 = vmatpush2.bf16.msra.mxu0 0
    %2813 = vmatprep.subr.bf16.mxu0 0
    %2814 = vmatpush2.bf16.msra.mxu0 0
    %2815 = vmatprep.subr.bf16.mxu0 0
    %2816 = vmatpush2.bf16.msra.mxu0 0
    %2817 = vmatprep.subr.bf16.mxu0 0
    %2818 = vmatpush2.bf16.msra.mxu0 0
    %2819 = vmatprep.subr.bf16.mxu0 0
    %2820 = vmatpush2.bf16.msra.mxu0 0
    %2821 = vmatprep.subr.bf16.mxu0 0
    %2822 = vmatpush2.bf16.msra.mxu0 0
    %2823 = vmatprep.subr.bf16.mxu0 0
    %2824 = vmatpush2.bf16.msra.mxu0 0
    %2825 = vmatprep.mubr.bf16.mxu0 0
    %2826 = vmatmul.mubr.bf16.gmra.mxu0 %v2709
    %v2827 = vpop.f32.mrf.mxu0
    %v2828 = vadd.f32 %v2577, %v2827
    %v2829 = vpop.f32.mrf.mxu0
    %v2830 = vadd.f32 %v2581, %v2829
    %v2831 = vpop.f32.mrf.mxu0
    %v2832 = vpop.f32.mrf.mxu0
    %2833 = vdwg.mxu0
    %2834 = vmatprep.subr.bf16.mxu0 0
    %2835 = vmatpush1.bf16.msra.mxu0 0
    %2836 = vmatprep.subr.bf16.mxu0 0
    %2837 = vmatpush1.bf16.msra.mxu0 0
    %2838 = vmatprep.subr.bf16.mxu0 0
    %2839 = vmatpush1.bf16.msra.mxu0 0
    %2840 = vmatprep.subr.bf16.mxu0 0
    %2841 = vmatpush1.bf16.msra.mxu0 0
    %2842 = vmatprep.subr.bf16.mxu0 0
    %2843 = vmatpush1.bf16.msra.mxu0 0
    %2844 = vmatprep.subr.bf16.mxu0 0
    %2845 = vmatpush1.bf16.msra.mxu0 0
    %2846 = vmatprep.subr.bf16.mxu0 %v2685
    %2847 = vmatpush1.bf16.msra.mxu0 %v2684
    %2848 = vmatprep.subr.bf16.mxu0 %v2675
    %2849 = vmatpush1.bf16.msra.mxu0 %v2674
    %2850 = vmatprep.subr.bf16.mxu0 0
    %2851 = vmatpush2.bf16.msra.mxu0 0
    %2852 = vmatprep.subr.bf16.mxu0 0
    %2853 = vmatpush2.bf16.msra.mxu0 0
    %2854 = vmatprep.subr.bf16.mxu0 0
    %2855 = vmatpush2.bf16.msra.mxu0 0
    %2856 = vmatprep.subr.bf16.mxu0 0
    %2857 = vmatpush2.bf16.msra.mxu0 0
    %2858 = vmatprep.subr.bf16.mxu0 0
    %2859 = vmatpush2.bf16.msra.mxu0 0
    %2860 = vmatprep.subr.bf16.mxu0 0
    %2861 = vmatpush2.bf16.msra.mxu0 0
    %2862 = vmatprep.subr.bf16.mxu0 0
    %2863 = vmatpush2.bf16.msra.mxu0 0
    %2864 = vmatprep.subr.bf16.mxu0 0
    %2865 = vmatpush2.bf16.msra.mxu0 0
    %2866 = vmatprep.mubr.bf16.mxu0 0
    %2867 = vmatmul.mubr.bf16.gmra.mxu0 %v2709
    %v2868 = vpop.f32.mrf.mxu0
    %v2869 = vadd.f32 %v2585, %v2868
    %v2870 = vpop.f32.mrf.mxu0
    %v2871 = vadd.f32 %v2589, %v2870
    %v2872 = vpop.f32.mrf.mxu0
    %v2873 = vpop.f32.mrf.mxu0
    %2874 = vdwg.mxu0
    %2875 = vmatprep.subr.bf16.mxu0 0
    %2876 = vmatpush1.bf16.msra.mxu0 0
    %2877 = vmatprep.subr.bf16.mxu0 0
    %2878 = vmatpush1.bf16.msra.mxu0 0
    %2879 = vmatprep.subr.bf16.mxu0 0
    %2880 = vmatpush1.bf16.msra.mxu0 0
    %2881 = vmatprep.subr.bf16.mxu0 0
    %2882 = vmatpush1.bf16.msra.mxu0 0
    %2883 = vmatprep.subr.bf16.mxu0 0
    %2884 = vmatpush1.bf16.msra.mxu0 0
    %2885 = vmatprep.subr.bf16.mxu0 0
    %2886 = vmatpush1.bf16.msra.mxu0 0
    %2887 = vmatprep.subr.bf16.mxu0 %v2687
    %2888 = vmatpush1.bf16.msra.mxu0 %v2686
    %2889 = vmatprep.subr.bf16.mxu0 %v2677
    %2890 = vmatpush1.bf16.msra.mxu0 %v2676
    %2891 = vmatprep.subr.bf16.mxu0 0
    %2892 = vmatpush2.bf16.msra.mxu0 0
    %2893 = vmatprep.subr.bf16.mxu0 0
    %2894 = vmatpush2.bf16.msra.mxu0 0
    %2895 = vmatprep.subr.bf16.mxu0 0
    %2896 = vmatpush2.bf16.msra.mxu0 0
    %2897 = vmatprep.subr.bf16.mxu0 0
    %2898 = vmatpush2.bf16.msra.mxu0 0
    %2899 = vmatprep.subr.bf16.mxu0 0
    %2900 = vmatpush2.bf16.msra.mxu0 0
    %2901 = vmatprep.subr.bf16.mxu0 0
    %2902 = vmatpush2.bf16.msra.mxu0 0
    %2903 = vmatprep.subr.bf16.mxu0 0
    %2904 = vmatpush2.bf16.msra.mxu0 0
    %2905 = vmatprep.subr.bf16.mxu0 0
    %2906 = vmatpush2.bf16.msra.mxu0 0
    %2907 = vmatprep.mubr.bf16.mxu0 0
    %2908 = vmatmul.mubr.bf16.gmra.mxu0 %v2709
    %v2909 = vpop.f32.mrf.mxu0
    %v2910 = vadd.f32 %v2593, %v2909
    %v2911 = vpop.f32.mrf.mxu0
    %v2912 = vadd.f32 %v2597, %v2911
    %v2913 = vpop.f32.mrf.mxu0
    %v2914 = vpop.f32.mrf.mxu0
    %2915 = vdwg.mxu0
    %v2916 = vxor.u32 %v2746, 2147483648
    %v2917 = vxor.u32 %v2748, 2147483648
    %v2918 = vxor.u32 %v2787, 2147483648
    %v2919 = vxor.u32 %v2789, 2147483648
    %v2920 = vxor.u32 %v2828, 2147483648
    %v2921 = vxor.u32 %v2830, 2147483648
    %v2922 = vxor.u32 %v2869, 2147483648
    %v2923 = vxor.u32 %v2871, 2147483648
    %v2924 = vxor.u32 %v2910, 2147483648
    %v2925 = vxor.u32 %v2912, 2147483648
    %v2926 = vmul.f32 %v2916, 1.442695
    %v2927 = vpow.pop %v2926
    %v2928 = vmul.f32 %v2917, 1.442695
    %v2929 = vpow.pop %v2928
    %v2930 = vmul.f32 %v2918, 1.442695
    %v2931 = vpow.pop %v2930
    %v2932 = vmul.f32 %v2919, 1.442695
    %v2933 = vpow.pop %v2932
    %v2934 = vmul.f32 %v2920, 1.442695
    %v2935 = vpow.pop %v2934
    %v2936 = vmul.f32 %v2921, 1.442695
    %v2937 = vpow.pop %v2936
    %v2938 = vmul.f32 %v2922, 1.442695
    %v2939 = vpow.pop %v2938
    %v2940 = vmul.f32 %v2923, 1.442695
    %v2941 = vpow.pop %v2940
    %v2942 = vmul.f32 %v2924, 1.442695
    %v2943 = vpow.pop %v2942
    %v2944 = vmul.f32 %v2925, 1.442695
    %v2945 = vpow.pop %v2944
    %v2946 = vadd.f32 %v2927, 1.0
    %v2947 = vadd.f32 %v2929, 1.0
    %v2948 = vadd.f32 %v2931, 1.0
    %v2949 = vadd.f32 %v2933, 1.0
    %v2950 = vadd.f32 %v2935, 1.0
    %v2951 = vadd.f32 %v2937, 1.0
    %v2952 = vadd.f32 %v2939, 1.0
    %v2953 = vadd.f32 %v2941, 1.0
    %v2954 = vadd.f32 %v2943, 1.0
    %v2955 = vadd.f32 %v2945, 1.0
    %v2956 = vrcp.pop %v2946
    %v2957 = vmul.f32 1.0, %v2956
    %v2958 = vrcp.pop %v2947
    %v2959 = vmul.f32 1.0, %v2958
    %v2960 = vrcp.pop %v2948
    %v2961 = vmul.f32 1.0, %v2960
    %v2962 = vrcp.pop %v2949
    %v2963 = vmul.f32 1.0, %v2962
    %v2964 = vrcp.pop %v2950
    %v2965 = vmul.f32 1.0, %v2964
    %v2966 = vrcp.pop %v2951
    %v2967 = vmul.f32 1.0, %v2966
    %v2968 = vrcp.pop %v2952
    %v2969 = vmul.f32 1.0, %v2968
    %v2970 = vrcp.pop %v2953
    %v2971 = vmul.f32 1.0, %v2970
    %v2972 = vrcp.pop %v2954
    %v2973 = vmul.f32 1.0, %v2972
    %v2974 = vrcp.pop %v2955
    %v2975 = vmul.f32 1.0, %v2974
    %v2976 = vmul.f32 %v2746, %v2957
    %v2977 = vmul.f32 %v2748, %v2959
    %v2978 = vmul.f32 %v2787, %v2961
    %v2979 = vmul.f32 %v2789, %v2963
    %v2980 = vmul.f32 %v2828, %v2965
    %v2981 = vmul.f32 %v2830, %v2967
    %v2982 = vmul.f32 %v2869, %v2969
    %v2983 = vmul.f32 %v2871, %v2971
    %v2984 = vmul.f32 %v2910, %v2973
    %v2985 = vmul.f32 %v2912, %v2975
    %v2986 = vpack.c.bf16 %v2976, %v2976
    %v2987 = vpack.c.bf16 %v2977, %v2977
    %v2988 = vpack.c.bf16 %v2978, %v2978
    %v2989 = vpack.c.bf16 %v2979, %v2979
    %v2990 = vpack.c.bf16 %v2980, %v2980
    %v2991 = vpack.c.bf16 %v2981, %v2981
    %v2992 = vpack.c.bf16 %v2982, %v2982
    %v2993 = vpack.c.bf16 %v2983, %v2983
    %v2994 = vpack.c.bf16 %v2984, %v2984
    %v2995 = vpack.c.bf16 %v2985, %v2985
    %v2996 = vld [vmem:[%s5] sm:$0xff]
    %v2997 = vld [vmem:[%s5 + $0x8] sm:$0xff]
    %v2998 = vld [vmem:[%s5 + $0x10] sm:$0xff]
    %v2999 = vld [vmem:[%s5 + $0x18] sm:$0xff]
    %v3000 = vld [vmem:[%s5 + $0x20] sm:$0xff]
    %v3001 = vld [vmem:[%s5 + $0x28] sm:$0xff]
    %v3002 = vld [vmem:[%s5 + $0x30] sm:$0xff]
    %v3003 = vld [vmem:[%s5 + $0x38] sm:$0xff]
    %v3004 = vld [vmem:[%s5 + $0x40] sm:$0xff]
    %v3005 = vld [vmem:[%s5 + $0x48] sm:$0xff]
    %v3006 = vld [vmem:[%s5 + $0x50] sm:$0xff]
    %v3007 = vld [vmem:[%s5 + $0x58] sm:$0xff]
    %v3008 = vld [vmem:[%s5 + $0x60] sm:$0xff]
    %v3009 = vld [vmem:[%s5 + $0x68] sm:$0xff]
    %v3010 = vld [vmem:[%s5 + $0x70] sm:$0xff]
    %v3011 = vld [vmem:[%s5 + $0x78] sm:$0xff]
    %v3012 = vld [vmem:[%s5 + $0x80] sm:$0xff]
    %v3013 = vld [vmem:[%s5 + $0x88] sm:$0xff]
    %v3014 = vld [vmem:[%s5 + $0x90] sm:$0xff]
    %v3015 = vld [vmem:[%s5 + $0x98] sm:$0xff]
    %v3016 = vld [vmem:[%s5 + $0xa0] sm:$0xff]
    %v3017 = vld [vmem:[%s5 + $0xa8] sm:$0xff]
    %v3018 = vld [vmem:[%s5 + $0xb0] sm:$0xff]
    %v3019 = vld [vmem:[%s5 + $0xb8] sm:$0xff]
    %v3020 = vld [vmem:[%s5 + $0xc0] sm:$0xff]
    %v3021 = vld [vmem:[%s5 + $0xc8] sm:$0xff]
    %v3022 = vld [vmem:[%s5 + $0xd0] sm:$0xff]
    %v3023 = vld [vmem:[%s5 + $0xd8] sm:$0xff]
    %v3024 = vld [vmem:[%s5 + $0xe0] sm:$0xff]
    %v3025 = vld [vmem:[%s5 + $0xe8] sm:$0xff]
    %v3026 = vld [vmem:[%s5 + $0xf0] sm:$0xff]
    %v3027 = vld [vmem:[%s5 + $0xf8] sm:$0xff]
    %v3028 = vld [vmem:[%s5 + $0x100] sm:$0xff]
    %v3029 = vld [vmem:[%s5 + $0x108] sm:$0xff]
    %v3030 = vld [vmem:[%s5 + $0x110] sm:$0xff]
    %v3031 = vld [vmem:[%s5 + $0x118] sm:$0xff]
    %v3032 = vld [vmem:[%s5 + $0x120] sm:$0xff]
    %v3033 = vld [vmem:[%s5 + $0x128] sm:$0xff]
    %v3034 = vld [vmem:[%s5 + $0x130] sm:$0xff]
    %v3035 = vld [vmem:[%s5 + $0x138] sm:$0xff]
    %v3036 = vld [vmem:[%s5 + $0x140] sm:$0xff]
    %v3037 = vld [vmem:[%s5 + $0x148] sm:$0xff]
    %v3038 = vld [vmem:[%s5 + $0x150] sm:$0xff]
    %v3039 = vld [vmem:[%s5 + $0x158] sm:$0xff]
    %v3040 = vld [vmem:[%s5 + $0x160] sm:$0xff]
    %v3041 = vld [vmem:[%s5 + $0x168] sm:$0xff]
    %v3042 = vld [vmem:[%s5 + $0x170] sm:$0xff]
    %v3043 = vld [vmem:[%s5 + $0x178] sm:$0xff]
    %v3044 = vld [vmem:[%s5 + $0x180] sm:$0xff]
    %v3045 = vld [vmem:[%s5 + $0x188] sm:$0xff]
    %v3046 = vld [vmem:[%s5 + $0x190] sm:$0xff]
    %v3047 = vld [vmem:[%s5 + $0x198] sm:$0xff]
    %v3048 = vld [vmem:[%s5 + $0x1a0] sm:$0xff]
    %v3049 = vld [vmem:[%s5 + $0x1a8] sm:$0xff]
    %v3050 = vld [vmem:[%s5 + $0x1b0] sm:$0xff]
    %v3051 = vld [vmem:[%s5 + $0x1b8] sm:$0xff]
    %v3052 = vld [vmem:[%s5 + $0x1c0] sm:$0xff]
    %v3053 = vld [vmem:[%s5 + $0x1c8] sm:$0xff]
    %v3054 = vld [vmem:[%s5 + $0x1d0] sm:$0xff]
    %v3055 = vld [vmem:[%s5 + $0x1d8] sm:$0xff]
    %v3056 = vld [vmem:[%s5 + $0x1e0] sm:$0xff]
    %v3057 = vld [vmem:[%s5 + $0x1e8] sm:$0xff]
    %v3058 = vld [vmem:[%s5 + $0x1f0] sm:$0xff]
    %v3059 = vld [vmem:[%s5 + $0x1f8] sm:$0xff]
    %v3060 = vld [vmem:[%s5 + $0x200] sm:$0xff]
    %v3061 = vld [vmem:[%s5 + $0x208] sm:$0xff]
    %v3062 = vld [vmem:[%s5 + $0x210] sm:$0xff]
    %v3063 = vld [vmem:[%s5 + $0x218] sm:$0xff]
    %v3064 = vld [vmem:[%s5 + $0x220] sm:$0xff]
    %v3065 = vld [vmem:[%s5 + $0x228] sm:$0xff]
    %v3066 = vld [vmem:[%s5 + $0x230] sm:$0xff]
    %v3067 = vld [vmem:[%s5 + $0x238] sm:$0xff]
    %v3068 = vld [vmem:[%s5 + $0x240] sm:$0xff]
    %v3069 = vld [vmem:[%s5 + $0x248] sm:$0xff]
    %v3070 = vld [vmem:[%s5 + $0x250] sm:$0xff]
    %v3071 = vld [vmem:[%s5 + $0x258] sm:$0xff]
    %v3072 = vld [vmem:[%s5 + $0x260] sm:$0xff]
    %v3073 = vld [vmem:[%s5 + $0x268] sm:$0xff]
    %v3074 = vld [vmem:[%s5 + $0x270] sm:$0xff]
    %v3075 = vld [vmem:[%s5 + $0x278] sm:$0xff]
    %v3076 = vld [vmem:[%s5 + $0x280] sm:$0xff]
    %v3077 = vld [vmem:[%s5 + $0x288] sm:$0xff]
    %v3078 = vld [vmem:[%s5 + $0x290] sm:$0xff]
    %v3079 = vld [vmem:[%s5 + $0x298] sm:$0xff]
    %v3080 = vld [vmem:[%s5 + $0x2a0] sm:$0xff]
    %v3081 = vld [vmem:[%s5 + $0x2a8] sm:$0xff]
    %v3082 = vld [vmem:[%s5 + $0x2b0] sm:$0xff]
    %v3083 = vld [vmem:[%s5 + $0x2b8] sm:$0xff]
    %v3084 = vld [vmem:[%s5 + $0x2c0] sm:$0xff]
    %v3085 = vld [vmem:[%s5 + $0x2c8] sm:$0xff]
    %v3086 = vld [vmem:[%s5 + $0x2d0] sm:$0xff]
    %v3087 = vld [vmem:[%s5 + $0x2d8] sm:$0xff]
    %v3088 = vld [vmem:[%s5 + $0x2e0] sm:$0xff]
    %v3089 = vld [vmem:[%s5 + $0x2e8] sm:$0xff]
    %v3090 = vld [vmem:[%s5 + $0x2f0] sm:$0xff]
    %v3091 = vld [vmem:[%s5 + $0x2f8] sm:$0xff]
    %v3092 = vld [vmem:[%s5 + $0x300] sm:$0xff]
    %v3093 = vld [vmem:[%s5 + $0x308] sm:$0xff]
    %v3094 = vld [vmem:[%s5 + $0x310] sm:$0xff]
    %v3095 = vld [vmem:[%s5 + $0x318] sm:$0xff]
    %v3096 = vld [vmem:[%s5 + $0x320] sm:$0xff]
    %v3097 = vld [vmem:[%s5 + $0x328] sm:$0xff]
    %v3098 = vld [vmem:[%s5 + $0x330] sm:$0xff]
    %v3099 = vld [vmem:[%s5 + $0x338] sm:$0xff]
    %v3100 = vld [vmem:[%s5 + $0x340] sm:$0xff]
    %v3101 = vld [vmem:[%s5 + $0x348] sm:$0xff]
    %v3102 = vld [vmem:[%s5 + $0x350] sm:$0xff]
    %v3103 = vld [vmem:[%s5 + $0x358] sm:$0xff]
    %v3104 = vld [vmem:[%s5 + $0x360] sm:$0xff]
    %v3105 = vld [vmem:[%s5 + $0x368] sm:$0xff]
    %v3106 = vld [vmem:[%s5 + $0x370] sm:$0xff]
    %v3107 = vld [vmem:[%s5 + $0x378] sm:$0xff]
    %v3108 = vld [vmem:[%s5 + $0x380] sm:$0xff]
    %v3109 = vld [vmem:[%s5 + $0x388] sm:$0xff]
    %v3110 = vld [vmem:[%s5 + $0x390] sm:$0xff]
    %v3111 = vld [vmem:[%s5 + $0x398] sm:$0xff]
    %v3112 = vld [vmem:[%s5 + $0x3a0] sm:$0xff]
    %v3113 = vld [vmem:[%s5 + $0x3a8] sm:$0xff]
    %v3114 = vld [vmem:[%s5 + $0x3b0] sm:$0xff]
    %v3115 = vld [vmem:[%s5 + $0x3b8] sm:$0xff]
    %v3116 = vld [vmem:[%s5 + $0x3c0] sm:$0xff]
    %v3117 = vld [vmem:[%s5 + $0x3c8] sm:$0xff]
    %v3118 = vld [vmem:[%s5 + $0x3d0] sm:$0xff]
    %v3119 = vld [vmem:[%s5 + $0x3d8] sm:$0xff]
    %v3120 = vld [vmem:[%s5 + $0x3e0] sm:$0xff]
    %v3121 = vld [vmem:[%s5 + $0x3e8] sm:$0xff]
    %v3122 = vld [vmem:[%s5 + $0x3f0] sm:$0xff]
    %v3123 = vld [vmem:[%s5 + $0x3f8] sm:$0xff]
    %v3124 = vld [vmem:[%s5 + $0x400] sm:$0xff]
    %v3125 = vld [vmem:[%s5 + $0x408] sm:$0xff]
    %v3126 = vld [vmem:[%s5 + $0x410] sm:$0xff]
    %v3127 = vld [vmem:[%s5 + $0x418] sm:$0xff]
    %v3128 = vld [vmem:[%s5 + $0x420] sm:$0xff]
    %v3129 = vld [vmem:[%s5 + $0x428] sm:$0xff]
    %v3130 = vld [vmem:[%s5 + $0x430] sm:$0xff]
    %v3131 = vld [vmem:[%s5 + $0x438] sm:$0xff]
    %v3132 = vld [vmem:[%s5 + $0x440] sm:$0xff]
    %v3133 = vld [vmem:[%s5 + $0x448] sm:$0xff]
    %v3134 = vld [vmem:[%s5 + $0x450] sm:$0xff]
    %v3135 = vld [vmem:[%s5 + $0x458] sm:$0xff]
    %v3136 = vld [vmem:[%s5 + $0x460] sm:$0xff]
    %v3137 = vld [vmem:[%s5 + $0x468] sm:$0xff]
    %v3138 = vld [vmem:[%s5 + $0x470] sm:$0xff]
    %v3139 = vld [vmem:[%s5 + $0x478] sm:$0xff]
    %v3140 = vld [vmem:[%s5 + $0x480] sm:$0xff]
    %v3141 = vld [vmem:[%s5 + $0x488] sm:$0xff]
    %v3142 = vld [vmem:[%s5 + $0x490] sm:$0xff]
    %v3143 = vld [vmem:[%s5 + $0x498] sm:$0xff]
    %v3144 = vld [vmem:[%s5 + $0x4a0] sm:$0xff]
    %v3145 = vld [vmem:[%s5 + $0x4a8] sm:$0xff]
    %v3146 = vld [vmem:[%s5 + $0x4b0] sm:$0xff]
    %v3147 = vld [vmem:[%s5 + $0x4b8] sm:$0xff]
    %v3148 = vld [vmem:[%s5 + $0x4c0] sm:$0xff]
    %v3149 = vld [vmem:[%s5 + $0x4c8] sm:$0xff]
    %v3150 = vld [vmem:[%s5 + $0x4d0] sm:$0xff]
    %v3151 = vld [vmem:[%s5 + $0x4d8] sm:$0xff]
    %v3152 = vld [vmem:[%s5 + $0x4e0] sm:$0xff]
    %v3153 = vld [vmem:[%s5 + $0x4e8] sm:$0xff]
    %v3154 = vld [vmem:[%s5 + $0x4f0] sm:$0xff]
    %v3155 = vld [vmem:[%s5 + $0x4f8] sm:$0xff]
    %v3156 = vld [vmem:[%s5 + $0x500] sm:$0xff]
    %v3157 = vld [vmem:[%s5 + $0x508] sm:$0xff]
    %v3158 = vld [vmem:[%s5 + $0x510] sm:$0xff]
    %v3159 = vld [vmem:[%s5 + $0x518] sm:$0xff]
    %v3160 = vld [vmem:[%s5 + $0x520] sm:$0xff]
    %v3161 = vld [vmem:[%s5 + $0x528] sm:$0xff]
    %v3162 = vld [vmem:[%s5 + $0x530] sm:$0xff]
    %v3163 = vld [vmem:[%s5 + $0x538] sm:$0xff]
    %v3164 = vld [vmem:[%s5 + $0x540] sm:$0xff]
    %v3165 = vld [vmem:[%s5 + $0x548] sm:$0xff]
    %v3166 = vld [vmem:[%s5 + $0x550] sm:$0xff]
    %v3167 = vld [vmem:[%s5 + $0x558] sm:$0xff]
    %v3168 = vld [vmem:[%s5 + $0x560] sm:$0xff]
    %v3169 = vld [vmem:[%s5 + $0x568] sm:$0xff]
    %v3170 = vld [vmem:[%s5 + $0x570] sm:$0xff]
    %v3171 = vld [vmem:[%s5 + $0x578] sm:$0xff]
    %v3172 = vld [vmem:[%s5 + $0x580] sm:$0xff]
    %v3173 = vld [vmem:[%s5 + $0x588] sm:$0xff]
    %v3174 = vld [vmem:[%s5 + $0x590] sm:$0xff]
    %v3175 = vld [vmem:[%s5 + $0x598] sm:$0xff]
    %v3176 = vld [vmem:[%s5 + $0x5a0] sm:$0xff]
    %v3177 = vld [vmem:[%s5 + $0x5a8] sm:$0xff]
    %v3178 = vld [vmem:[%s5 + $0x5b0] sm:$0xff]
    %v3179 = vld [vmem:[%s5 + $0x5b8] sm:$0xff]
    %v3180 = vld [vmem:[%s5 + $0x5c0] sm:$0xff]
    %v3181 = vld [vmem:[%s5 + $0x5c8] sm:$0xff]
    %v3182 = vld [vmem:[%s5 + $0x5d0] sm:$0xff]
    %v3183 = vld [vmem:[%s5 + $0x5d8] sm:$0xff]
    %v3184 = vld [vmem:[%s5 + $0x5e0] sm:$0xff]
    %v3185 = vld [vmem:[%s5 + $0x5e8] sm:$0xff]
    %v3186 = vld [vmem:[%s5 + $0x5f0] sm:$0xff]
    %v3187 = vld [vmem:[%s5 + $0x5f8] sm:$0xff]
    %v3188 = vld [vmem:[%s5 + $0x600] sm:$0xff]
    %v3189 = vld [vmem:[%s5 + $0x608] sm:$0xff]
    %v3190 = vld [vmem:[%s5 + $0x610] sm:$0xff]
    %v3191 = vld [vmem:[%s5 + $0x618] sm:$0xff]
    %v3192 = vld [vmem:[%s5 + $0x620] sm:$0xff]
    %v3193 = vld [vmem:[%s5 + $0x628] sm:$0xff]
    %v3194 = vld [vmem:[%s5 + $0x630] sm:$0xff]
    %v3195 = vld [vmem:[%s5 + $0x638] sm:$0xff]
    %v3196 = vld [vmem:[%s5 + $0x640] sm:$0xff]
    %v3197 = vld [vmem:[%s5 + $0x648] sm:$0xff]
    %v3198 = vld [vmem:[%s5 + $0x650] sm:$0xff]
    %v3199 = vld [vmem:[%s5 + $0x658] sm:$0xff]
    %v3200 = vld [vmem:[%s5 + $0x660] sm:$0xff]
    %v3201 = vld [vmem:[%s5 + $0x668] sm:$0xff]
    %v3202 = vld [vmem:[%s5 + $0x670] sm:$0xff]
    %v3203 = vld [vmem:[%s5 + $0x678] sm:$0xff]
    %v3204 = vld [vmem:[%s5 + $0x680] sm:$0xff]
    %v3205 = vld [vmem:[%s5 + $0x688] sm:$0xff]
    %v3206 = vld [vmem:[%s5 + $0x690] sm:$0xff]
    %v3207 = vld [vmem:[%s5 + $0x698] sm:$0xff]
    %v3208 = vld [vmem:[%s5 + $0x6a0] sm:$0xff]
    %v3209 = vld [vmem:[%s5 + $0x6a8] sm:$0xff]
    %v3210 = vld [vmem:[%s5 + $0x6b0] sm:$0xff]
    %v3211 = vld [vmem:[%s5 + $0x6b8] sm:$0xff]
    %v3212 = vld [vmem:[%s5 + $0x6c0] sm:$0xff]
    %v3213 = vld [vmem:[%s5 + $0x6c8] sm:$0xff]
    %v3214 = vld [vmem:[%s5 + $0x6d0] sm:$0xff]
    %v3215 = vld [vmem:[%s5 + $0x6d8] sm:$0xff]
    %v3216 = vld [vmem:[%s5 + $0x6e0] sm:$0xff]
    %v3217 = vld [vmem:[%s5 + $0x6e8] sm:$0xff]
    %v3218 = vld [vmem:[%s5 + $0x6f0] sm:$0xff]
    %v3219 = vld [vmem:[%s5 + $0x6f8] sm:$0xff]
    %v3220 = vld [vmem:[%s5 + $0x700] sm:$0xff]
    %v3221 = vld [vmem:[%s5 + $0x708] sm:$0xff]
    %v3222 = vld [vmem:[%s5 + $0x710] sm:$0xff]
    %v3223 = vld [vmem:[%s5 + $0x718] sm:$0xff]
    %v3224 = vld [vmem:[%s5 + $0x720] sm:$0xff]
    %v3225 = vld [vmem:[%s5 + $0x728] sm:$0xff]
    %v3226 = vld [vmem:[%s5 + $0x730] sm:$0xff]
    %v3227 = vld [vmem:[%s5 + $0x738] sm:$0xff]
    %v3228 = vld [vmem:[%s5 + $0x740] sm:$0xff]
    %v3229 = vld [vmem:[%s5 + $0x748] sm:$0xff]
    %v3230 = vld [vmem:[%s5 + $0x750] sm:$0xff]
    %v3231 = vld [vmem:[%s5 + $0x758] sm:$0xff]
    %v3232 = vld [vmem:[%s5 + $0x760] sm:$0xff]
    %v3233 = vld [vmem:[%s5 + $0x768] sm:$0xff]
    %v3234 = vld [vmem:[%s5 + $0x770] sm:$0xff]
    %v3235 = vld [vmem:[%s5 + $0x778] sm:$0xff]
    %v3236 = vld [vmem:[%s5 + $0x780] sm:$0xff]
    %v3237 = vld [vmem:[%s5 + $0x788] sm:$0xff]
    %v3238 = vld [vmem:[%s5 + $0x790] sm:$0xff]
    %v3239 = vld [vmem:[%s5 + $0x798] sm:$0xff]
    %v3240 = vld [vmem:[%s5 + $0x7a0] sm:$0xff]
    %v3241 = vld [vmem:[%s5 + $0x7a8] sm:$0xff]
    %v3242 = vld [vmem:[%s5 + $0x7b0] sm:$0xff]
    %v3243 = vld [vmem:[%s5 + $0x7b8] sm:$0xff]
    %v3244 = vld [vmem:[%s5 + $0x7c0] sm:$0xff]
    %v3245 = vld [vmem:[%s5 + $0x7c8] sm:$0xff]
    %v3246 = vld [vmem:[%s5 + $0x7d0] sm:$0xff]
    %v3247 = vld [vmem:[%s5 + $0x7d8] sm:$0xff]
    %v3248 = vld [vmem:[%s5 + $0x7e0] sm:$0xff]
    %v3249 = vld [vmem:[%s5 + $0x7e8] sm:$0xff]
    %v3250 = vld [vmem:[%s5 + $0x7f0] sm:$0xff]
    %v3251 = vld [vmem:[%s5 + $0x7f8] sm:$0xff]
    %v3252 = vld [vmem:[%s5 + $0x800] sm:$0xff]
    %v3253 = vld [vmem:[%s5 + $0x808] sm:$0xff]
    %v3254 = vld [vmem:[%s5 + $0x810] sm:$0xff]
    %v3255 = vld [vmem:[%s5 + $0x818] sm:$0xff]
    %v3256 = vld [vmem:[%s5 + $0x820] sm:$0xff]
    %v3257 = vld [vmem:[%s5 + $0x828] sm:$0xff]
    %v3258 = vld [vmem:[%s5 + $0x830] sm:$0xff]
    %v3259 = vld [vmem:[%s5 + $0x838] sm:$0xff]
    %v3260 = vld [vmem:[%s5 + $0x840] sm:$0xff]
    %v3261 = vld [vmem:[%s5 + $0x848] sm:$0xff]
    %v3262 = vld [vmem:[%s5 + $0x850] sm:$0xff]
    %v3263 = vld [vmem:[%s5 + $0x858] sm:$0xff]
    %v3264 = vld [vmem:[%s5 + $0x860] sm:$0xff]
    %v3265 = vld [vmem:[%s5 + $0x868] sm:$0xff]
    %v3266 = vld [vmem:[%s5 + $0x870] sm:$0xff]
    %v3267 = vld [vmem:[%s5 + $0x878] sm:$0xff]
    %v3268 = vld [vmem:[%s5 + $0x880] sm:$0xff]
    %v3269 = vld [vmem:[%s5 + $0x888] sm:$0xff]
    %v3270 = vld [vmem:[%s5 + $0x890] sm:$0xff]
    %v3271 = vld [vmem:[%s5 + $0x898] sm:$0xff]
    %v3272 = vld [vmem:[%s5 + $0x8a0] sm:$0xff]
    %v3273 = vld [vmem:[%s5 + $0x8a8] sm:$0xff]
    %v3274 = vld [vmem:[%s5 + $0x8b0] sm:$0xff]
    %v3275 = vld [vmem:[%s5 + $0x8b8] sm:$0xff]
    %v3276 = vld [vmem:[%s5 + $0x8c0] sm:$0xff]
    %v3277 = vld [vmem:[%s5 + $0x8c8] sm:$0xff]
    %v3278 = vld [vmem:[%s5 + $0x8d0] sm:$0xff]
    %v3279 = vld [vmem:[%s5 + $0x8d8] sm:$0xff]
    %v3280 = vld [vmem:[%s5 + $0x8e0] sm:$0xff]
    %v3281 = vld [vmem:[%s5 + $0x8e8] sm:$0xff]
    %v3282 = vld [vmem:[%s5 + $0x8f0] sm:$0xff]
    %v3283 = vld [vmem:[%s5 + $0x8f8] sm:$0xff]
    %v3284 = vld [vmem:[%s5 + $0x900] sm:$0xff]
    %v3285 = vld [vmem:[%s5 + $0x908] sm:$0xff]
    %v3286 = vld [vmem:[%s5 + $0x910] sm:$0xff]
    %v3287 = vld [vmem:[%s5 + $0x918] sm:$0xff]
    %v3288 = vld [vmem:[%s5 + $0x920] sm:$0xff]
    %v3289 = vld [vmem:[%s5 + $0x928] sm:$0xff]
    %v3290 = vld [vmem:[%s5 + $0x930] sm:$0xff]
    %v3291 = vld [vmem:[%s5 + $0x938] sm:$0xff]
    %v3292 = vld [vmem:[%s5 + $0x940] sm:$0xff]
    %v3293 = vld [vmem:[%s5 + $0x948] sm:$0xff]
    %v3294 = vld [vmem:[%s5 + $0x950] sm:$0xff]
    %v3295 = vld [vmem:[%s5 + $0x958] sm:$0xff]
    %v3296 = vld [vmem:[%s5 + $0x960] sm:$0xff]
    %v3297 = vld [vmem:[%s5 + $0x968] sm:$0xff]
    %v3298 = vld [vmem:[%s5 + $0x970] sm:$0xff]
    %v3299 = vld [vmem:[%s5 + $0x978] sm:$0xff]
    %v3300 = vld [vmem:[%s5 + $0x980] sm:$0xff]
    %v3301 = vld [vmem:[%s5 + $0x988] sm:$0xff]
    %v3302 = vld [vmem:[%s5 + $0x990] sm:$0xff]
    %v3303 = vld [vmem:[%s5 + $0x998] sm:$0xff]
    %v3304 = vld [vmem:[%s5 + $0x9a0] sm:$0xff]
    %v3305 = vld [vmem:[%s5 + $0x9a8] sm:$0xff]
    %v3306 = vld [vmem:[%s5 + $0x9b0] sm:$0xff]
    %v3307 = vld [vmem:[%s5 + $0x9b8] sm:$0xff]
    %v3308 = vld [vmem:[%s5 + $0x9c0] sm:$0xff]
    %v3309 = vld [vmem:[%s5 + $0x9c8] sm:$0xff]
    %v3310 = vld [vmem:[%s5 + $0x9d0] sm:$0xff]
    %v3311 = vld [vmem:[%s5 + $0x9d8] sm:$0xff]
    %v3312 = vld [vmem:[%s5 + $0x9e0] sm:$0xff]
    %v3313 = vld [vmem:[%s5 + $0x9e8] sm:$0xff]
    %v3314 = vld [vmem:[%s5 + $0x9f0] sm:$0xff]
    %v3315 = vld [vmem:[%s5 + $0x9f8] sm:$0xff]
    %v3316 = vld [vmem:[%s6] sm:$0xf]
    %v3318 = vlaneseq
    %v3319 = vshrl.u32 %v3318, 7
    %v3320 = vsub.s32 0, %v3319
    %v3321 = vrot.slane %v3316, %v3320
    %v3322 = vlaneseq
    %v3323 = vshrl.u32 %v3322, 7
    %v3324 = vsub.s32 1, %v3323
    %v3325 = vrot.slane %v3316, %v3324
    %v3326 = vlaneseq
    %v3327 = vshrl.u32 %v3326, 7
    %v3328 = vsub.s32 2, %v3327
    %v3329 = vrot.slane %v3316, %v3328
    %v3330 = vlaneseq
    %v3331 = vshrl.u32 %v3330, 7
    %v3332 = vsub.s32 3, %v3331
    %v3333 = vrot.slane %v3316, %v3332
    %v3658 = vunpack.c.l.b16 %v2996
    %v3659 = vunpack.c.h.b16 %v2996
    %v3660 = vunpack.c.l.b16 %v2997
    %v3661 = vunpack.c.h.b16 %v2997
    %v3662 = vunpack.c.l.b16 %v2998
    %v3663 = vunpack.c.h.b16 %v2998
    %v3664 = vunpack.c.l.b16 %v2999
    %v3665 = vunpack.c.h.b16 %v2999
    %v3666 = vunpack.c.l.b16 %v3000
    %v3667 = vunpack.c.h.b16 %v3000
    %v3668 = vunpack.c.l.b16 %v3001
    %v3669 = vunpack.c.h.b16 %v3001
    %v3670 = vunpack.c.l.b16 %v3002
    %v3671 = vunpack.c.h.b16 %v3002
    %v3672 = vunpack.c.l.b16 %v3003
    %v3673 = vunpack.c.h.b16 %v3003
    %v3674 = vunpack.c.l.b16 %v3004
    %v3675 = vunpack.c.h.b16 %v3004
    %v3676 = vunpack.c.l.b16 %v3005
    %v3677 = vunpack.c.h.b16 %v3005
    %v3678 = vunpack.c.l.b16 %v3006
    %v3679 = vunpack.c.h.b16 %v3006
    %v3680 = vunpack.c.l.b16 %v3007
    %v3681 = vunpack.c.h.b16 %v3007
    %v3682 = vunpack.c.l.b16 %v3008
    %v3683 = vunpack.c.h.b16 %v3008
    %v3684 = vunpack.c.l.b16 %v3009
    %v3685 = vunpack.c.h.b16 %v3009
    %v3686 = vunpack.c.l.b16 %v3010
    %v3687 = vunpack.c.h.b16 %v3010
    %v3688 = vunpack.c.l.b16 %v3011
    %v3689 = vunpack.c.h.b16 %v3011
    %v3690 = vunpack.c.l.b16 %v3012
    %v3691 = vunpack.c.h.b16 %v3012
    %v3692 = vunpack.c.l.b16 %v3013
    %v3693 = vunpack.c.h.b16 %v3013
    %v3694 = vunpack.c.l.b16 %v3014
    %v3695 = vunpack.c.h.b16 %v3014
    %v3696 = vunpack.c.l.b16 %v3015
    %v3697 = vunpack.c.h.b16 %v3015
    %v3698 = vunpack.c.l.b16 %v3016
    %v3699 = vunpack.c.h.b16 %v3016
    %v3700 = vunpack.c.l.b16 %v3017
    %v3701 = vunpack.c.h.b16 %v3017
    %v3702 = vunpack.c.l.b16 %v3018
    %v3703 = vunpack.c.h.b16 %v3018
    %v3704 = vunpack.c.l.b16 %v3019
    %v3705 = vunpack.c.h.b16 %v3019
    %v3706 = vunpack.c.l.b16 %v3020
    %v3707 = vunpack.c.h.b16 %v3020
    %v3708 = vunpack.c.l.b16 %v3021
    %v3709 = vunpack.c.h.b16 %v3021
    %v3710 = vunpack.c.l.b16 %v3022
    %v3711 = vunpack.c.h.b16 %v3022
    %v3712 = vunpack.c.l.b16 %v3023
    %v3713 = vunpack.c.h.b16 %v3023
    %v3714 = vunpack.c.l.b16 %v3024
    %v3715 = vunpack.c.h.b16 %v3024
    %v3716 = vunpack.c.l.b16 %v3025
    %v3717 = vunpack.c.h.b16 %v3025
    %v3718 = vunpack.c.l.b16 %v3026
    %v3719 = vunpack.c.h.b16 %v3026
    %v3720 = vunpack.c.l.b16 %v3027
    %v3721 = vunpack.c.h.b16 %v3027
    %v3722 = vunpack.c.l.b16 %v3028
    %v3723 = vunpack.c.h.b16 %v3028
    %v3724 = vunpack.c.l.b16 %v3029
    %v3725 = vunpack.c.h.b16 %v3029
    %v3726 = vunpack.c.l.b16 %v3030
    %v3727 = vunpack.c.h.b16 %v3030
    %v3728 = vunpack.c.l.b16 %v3031
    %v3729 = vunpack.c.h.b16 %v3031
    %v3730 = vunpack.c.l.b16 %v3032
    %v3731 = vunpack.c.h.b16 %v3032
    %v3732 = vunpack.c.l.b16 %v3033
    %v3733 = vunpack.c.h.b16 %v3033
    %v3734 = vunpack.c.l.b16 %v3034
    %v3735 = vunpack.c.h.b16 %v3034
    %v3736 = vunpack.c.l.b16 %v3035
    %v3737 = vunpack.c.h.b16 %v3035
    %v3738 = vunpack.c.l.b16 %v3036
    %v3739 = vunpack.c.h.b16 %v3036
    %v3740 = vunpack.c.l.b16 %v3037
    %v3741 = vunpack.c.h.b16 %v3037
    %v3742 = vunpack.c.l.b16 %v3038
    %v3743 = vunpack.c.h.b16 %v3038
    %v3744 = vunpack.c.l.b16 %v3039
    %v3745 = vunpack.c.h.b16 %v3039
    %v3746 = vunpack.c.l.b16 %v3040
    %v3747 = vunpack.c.h.b16 %v3040
    %v3748 = vunpack.c.l.b16 %v3041
    %v3749 = vunpack.c.h.b16 %v3041
    %v3750 = vunpack.c.l.b16 %v3042
    %v3751 = vunpack.c.h.b16 %v3042
    %v3752 = vunpack.c.l.b16 %v3043
    %v3753 = vunpack.c.h.b16 %v3043
    %v3754 = vunpack.c.l.b16 %v3044
    %v3755 = vunpack.c.h.b16 %v3044
    %v3756 = vunpack.c.l.b16 %v3045
    %v3757 = vunpack.c.h.b16 %v3045
    %v3758 = vunpack.c.l.b16 %v3046
    %v3759 = vunpack.c.h.b16 %v3046
    %v3760 = vunpack.c.l.b16 %v3047
    %v3761 = vunpack.c.h.b16 %v3047
    %v3762 = vunpack.c.l.b16 %v3048
    %v3763 = vunpack.c.h.b16 %v3048
    %v3764 = vunpack.c.l.b16 %v3049
    %v3765 = vunpack.c.h.b16 %v3049
    %v3766 = vunpack.c.l.b16 %v3050
    %v3767 = vunpack.c.h.b16 %v3050
    %v3768 = vunpack.c.l.b16 %v3051
    %v3769 = vunpack.c.h.b16 %v3051
    %v3770 = vunpack.c.l.b16 %v3052
    %v3771 = vunpack.c.h.b16 %v3052
    %v3772 = vunpack.c.l.b16 %v3053
    %v3773 = vunpack.c.h.b16 %v3053
    %v3774 = vunpack.c.l.b16 %v3054
    %v3775 = vunpack.c.h.b16 %v3054
    %v3776 = vunpack.c.l.b16 %v3055
    %v3777 = vunpack.c.h.b16 %v3055
    %v3778 = vunpack.c.l.b16 %v3056
    %v3779 = vunpack.c.h.b16 %v3056
    %v3780 = vunpack.c.l.b16 %v3057
    %v3781 = vunpack.c.h.b16 %v3057
    %v3782 = vunpack.c.l.b16 %v3058
    %v3783 = vunpack.c.h.b16 %v3058
    %v3784 = vunpack.c.l.b16 %v3059
    %v3785 = vunpack.c.h.b16 %v3059
    %v3786 = vunpack.c.l.b16 %v3060
    %v3787 = vunpack.c.h.b16 %v3060
    %v3788 = vunpack.c.l.b16 %v3061
    %v3789 = vunpack.c.h.b16 %v3061
    %v3790 = vunpack.c.l.b16 %v3062
    %v3791 = vunpack.c.h.b16 %v3062
    %v3792 = vunpack.c.l.b16 %v3063
    %v3793 = vunpack.c.h.b16 %v3063
    %v3794 = vunpack.c.l.b16 %v3064
    %v3795 = vunpack.c.h.b16 %v3064
    %v3796 = vunpack.c.l.b16 %v3065
    %v3797 = vunpack.c.h.b16 %v3065
    %v3798 = vunpack.c.l.b16 %v3066
    %v3799 = vunpack.c.h.b16 %v3066
    %v3800 = vunpack.c.l.b16 %v3067
    %v3801 = vunpack.c.h.b16 %v3067
    %v3802 = vunpack.c.l.b16 %v3068
    %v3803 = vunpack.c.h.b16 %v3068
    %v3804 = vunpack.c.l.b16 %v3069
    %v3805 = vunpack.c.h.b16 %v3069
    %v3806 = vunpack.c.l.b16 %v3070
    %v3807 = vunpack.c.h.b16 %v3070
    %v3808 = vunpack.c.l.b16 %v3071
    %v3809 = vunpack.c.h.b16 %v3071
    %v3810 = vunpack.c.l.b16 %v3072
    %v3811 = vunpack.c.h.b16 %v3072
    %v3812 = vunpack.c.l.b16 %v3073
    %v3813 = vunpack.c.h.b16 %v3073
    %v3814 = vunpack.c.l.b16 %v3074
    %v3815 = vunpack.c.h.b16 %v3074
    %v3816 = vunpack.c.l.b16 %v3075
    %v3817 = vunpack.c.h.b16 %v3075
    %v3818 = vunpack.c.l.b16 %v3076
    %v3819 = vunpack.c.h.b16 %v3076
    %v3820 = vunpack.c.l.b16 %v3077
    %v3821 = vunpack.c.h.b16 %v3077
    %v3822 = vunpack.c.l.b16 %v3078
    %v3823 = vunpack.c.h.b16 %v3078
    %v3824 = vunpack.c.l.b16 %v3079
    %v3825 = vunpack.c.h.b16 %v3079
    %v3826 = vunpack.c.l.b16 %v3080
    %v3827 = vunpack.c.h.b16 %v3080
    %v3828 = vunpack.c.l.b16 %v3081
    %v3829 = vunpack.c.h.b16 %v3081
    %v3830 = vunpack.c.l.b16 %v3082
    %v3831 = vunpack.c.h.b16 %v3082
    %v3832 = vunpack.c.l.b16 %v3083
    %v3833 = vunpack.c.h.b16 %v3083
    %v3834 = vunpack.c.l.b16 %v3084
    %v3835 = vunpack.c.h.b16 %v3084
    %v3836 = vunpack.c.l.b16 %v3085
    %v3837 = vunpack.c.h.b16 %v3085
    %v3838 = vunpack.c.l.b16 %v3086
    %v3839 = vunpack.c.h.b16 %v3086
    %v3840 = vunpack.c.l.b16 %v3087
    %v3841 = vunpack.c.h.b16 %v3087
    %v3842 = vunpack.c.l.b16 %v3088
    %v3843 = vunpack.c.h.b16 %v3088
    %v3844 = vunpack.c.l.b16 %v3089
    %v3845 = vunpack.c.h.b16 %v3089
    %v3846 = vunpack.c.l.b16 %v3090
    %v3847 = vunpack.c.h.b16 %v3090
    %v3848 = vunpack.c.l.b16 %v3091
    %v3849 = vunpack.c.h.b16 %v3091
    %v3850 = vunpack.c.l.b16 %v3092
    %v3851 = vunpack.c.h.b16 %v3092
    %v3852 = vunpack.c.l.b16 %v3093
    %v3853 = vunpack.c.h.b16 %v3093
    %v3854 = vunpack.c.l.b16 %v3094
    %v3855 = vunpack.c.h.b16 %v3094
    %v3856 = vunpack.c.l.b16 %v3095
    %v3857 = vunpack.c.h.b16 %v3095
    %v3858 = vunpack.c.l.b16 %v3096
    %v3859 = vunpack.c.h.b16 %v3096
    %v3860 = vunpack.c.l.b16 %v3097
    %v3861 = vunpack.c.h.b16 %v3097
    %v3862 = vunpack.c.l.b16 %v3098
    %v3863 = vunpack.c.h.b16 %v3098
    %v3864 = vunpack.c.l.b16 %v3099
    %v3865 = vunpack.c.h.b16 %v3099
    %v3866 = vunpack.c.l.b16 %v3100
    %v3867 = vunpack.c.h.b16 %v3100
    %v3868 = vunpack.c.l.b16 %v3101
    %v3869 = vunpack.c.h.b16 %v3101
    %v3870 = vunpack.c.l.b16 %v3102
    %v3871 = vunpack.c.h.b16 %v3102
    %v3872 = vunpack.c.l.b16 %v3103
    %v3873 = vunpack.c.h.b16 %v3103
    %v3874 = vunpack.c.l.b16 %v3104
    %v3875 = vunpack.c.h.b16 %v3104
    %v3876 = vunpack.c.l.b16 %v3105
    %v3877 = vunpack.c.h.b16 %v3105
    %v3878 = vunpack.c.l.b16 %v3106
    %v3879 = vunpack.c.h.b16 %v3106
    %v3880 = vunpack.c.l.b16 %v3107
    %v3881 = vunpack.c.h.b16 %v3107
    %v3882 = vunpack.c.l.b16 %v3108
    %v3883 = vunpack.c.h.b16 %v3108
    %v3884 = vunpack.c.l.b16 %v3109
    %v3885 = vunpack.c.h.b16 %v3109
    %v3886 = vunpack.c.l.b16 %v3110
    %v3887 = vunpack.c.h.b16 %v3110
    %v3888 = vunpack.c.l.b16 %v3111
    %v3889 = vunpack.c.h.b16 %v3111
    %v3890 = vunpack.c.l.b16 %v3112
    %v3891 = vunpack.c.h.b16 %v3112
    %v3892 = vunpack.c.l.b16 %v3113
    %v3893 = vunpack.c.h.b16 %v3113
    %v3894 = vunpack.c.l.b16 %v3114
    %v3895 = vunpack.c.h.b16 %v3114
    %v3896 = vunpack.c.l.b16 %v3115
    %v3897 = vunpack.c.h.b16 %v3115
    %v3898 = vunpack.c.l.b16 %v3116
    %v3899 = vunpack.c.h.b16 %v3116
    %v3900 = vunpack.c.l.b16 %v3117
    %v3901 = vunpack.c.h.b16 %v3117
    %v3902 = vunpack.c.l.b16 %v3118
    %v3903 = vunpack.c.h.b16 %v3118
    %v3904 = vunpack.c.l.b16 %v3119
    %v3905 = vunpack.c.h.b16 %v3119
    %v3906 = vunpack.c.l.b16 %v3120
    %v3907 = vunpack.c.h.b16 %v3120
    %v3908 = vunpack.c.l.b16 %v3121
    %v3909 = vunpack.c.h.b16 %v3121
    %v3910 = vunpack.c.l.b16 %v3122
    %v3911 = vunpack.c.h.b16 %v3122
    %v3912 = vunpack.c.l.b16 %v3123
    %v3913 = vunpack.c.h.b16 %v3123
    %v3914 = vunpack.c.l.b16 %v3124
    %v3915 = vunpack.c.h.b16 %v3124
    %v3916 = vunpack.c.l.b16 %v3125
    %v3917 = vunpack.c.h.b16 %v3125
    %v3918 = vunpack.c.l.b16 %v3126
    %v3919 = vunpack.c.h.b16 %v3126
    %v3920 = vunpack.c.l.b16 %v3127
    %v3921 = vunpack.c.h.b16 %v3127
    %v3922 = vunpack.c.l.b16 %v3128
    %v3923 = vunpack.c.h.b16 %v3128
    %v3924 = vunpack.c.l.b16 %v3129
    %v3925 = vunpack.c.h.b16 %v3129
    %v3926 = vunpack.c.l.b16 %v3130
    %v3927 = vunpack.c.h.b16 %v3130
    %v3928 = vunpack.c.l.b16 %v3131
    %v3929 = vunpack.c.h.b16 %v3131
    %v3930 = vunpack.c.l.b16 %v3132
    %v3931 = vunpack.c.h.b16 %v3132
    %v3932 = vunpack.c.l.b16 %v3133
    %v3933 = vunpack.c.h.b16 %v3133
    %v3934 = vunpack.c.l.b16 %v3134
    %v3935 = vunpack.c.h.b16 %v3134
    %v3936 = vunpack.c.l.b16 %v3135
    %v3937 = vunpack.c.h.b16 %v3135
    %v3938 = vunpack.c.l.b16 %v3136
    %v3939 = vunpack.c.h.b16 %v3136
    %v3940 = vunpack.c.l.b16 %v3137
    %v3941 = vunpack.c.h.b16 %v3137
    %v3942 = vunpack.c.l.b16 %v3138
    %v3943 = vunpack.c.h.b16 %v3138
    %v3944 = vunpack.c.l.b16 %v3139
    %v3945 = vunpack.c.h.b16 %v3139
    %v3946 = vunpack.c.l.b16 %v3140
    %v3947 = vunpack.c.h.b16 %v3140
    %v3948 = vunpack.c.l.b16 %v3141
    %v3949 = vunpack.c.h.b16 %v3141
    %v3950 = vunpack.c.l.b16 %v3142
    %v3951 = vunpack.c.h.b16 %v3142
    %v3952 = vunpack.c.l.b16 %v3143
    %v3953 = vunpack.c.h.b16 %v3143
    %v3954 = vunpack.c.l.b16 %v3144
    %v3955 = vunpack.c.h.b16 %v3144
    %v3956 = vunpack.c.l.b16 %v3145
    %v3957 = vunpack.c.h.b16 %v3145
    %v3958 = vunpack.c.l.b16 %v3146
    %v3959 = vunpack.c.h.b16 %v3146
    %v3960 = vunpack.c.l.b16 %v3147
    %v3961 = vunpack.c.h.b16 %v3147
    %v3962 = vunpack.c.l.b16 %v3148
    %v3963 = vunpack.c.h.b16 %v3148
    %v3964 = vunpack.c.l.b16 %v3149
    %v3965 = vunpack.c.h.b16 %v3149
    %v3966 = vunpack.c.l.b16 %v3150
    %v3967 = vunpack.c.h.b16 %v3150
    %v3968 = vunpack.c.l.b16 %v3151
    %v3969 = vunpack.c.h.b16 %v3151
    %v3970 = vunpack.c.l.b16 %v3152
    %v3971 = vunpack.c.h.b16 %v3152
    %v3972 = vunpack.c.l.b16 %v3153
    %v3973 = vunpack.c.h.b16 %v3153
    %v3974 = vunpack.c.l.b16 %v3154
    %v3975 = vunpack.c.h.b16 %v3154
    %v3976 = vunpack.c.l.b16 %v3155
    %v3977 = vunpack.c.h.b16 %v3155
    %v3978 = vunpack.c.l.b16 %v3156
    %v3979 = vunpack.c.h.b16 %v3156
    %v3980 = vunpack.c.l.b16 %v3157
    %v3981 = vunpack.c.h.b16 %v3157
    %v3982 = vunpack.c.l.b16 %v3158
    %v3983 = vunpack.c.h.b16 %v3158
    %v3984 = vunpack.c.l.b16 %v3159
    %v3985 = vunpack.c.h.b16 %v3159
    %v3986 = vunpack.c.l.b16 %v3160
    %v3987 = vunpack.c.h.b16 %v3160
    %v3988 = vunpack.c.l.b16 %v3161
    %v3989 = vunpack.c.h.b16 %v3161
    %v3990 = vunpack.c.l.b16 %v3162
    %v3991 = vunpack.c.h.b16 %v3162
    %v3992 = vunpack.c.l.b16 %v3163
    %v3993 = vunpack.c.h.b16 %v3163
    %v3994 = vunpack.c.l.b16 %v3164
    %v3995 = vunpack.c.h.b16 %v3164
    %v3996 = vunpack.c.l.b16 %v3165
    %v3997 = vunpack.c.h.b16 %v3165
    %v3998 = vunpack.c.l.b16 %v3166
    %v3999 = vunpack.c.h.b16 %v3166
    %v4000 = vunpack.c.l.b16 %v3167
    %v4001 = vunpack.c.h.b16 %v3167
    %v4002 = vunpack.c.l.b16 %v3168
    %v4003 = vunpack.c.h.b16 %v3168
    %v4004 = vunpack.c.l.b16 %v3169
    %v4005 = vunpack.c.h.b16 %v3169
    %v4006 = vunpack.c.l.b16 %v3170
    %v4007 = vunpack.c.h.b16 %v3170
    %v4008 = vunpack.c.l.b16 %v3171
    %v4009 = vunpack.c.h.b16 %v3171
    %v4010 = vunpack.c.l.b16 %v3172
    %v4011 = vunpack.c.h.b16 %v3172
    %v4012 = vunpack.c.l.b16 %v3173
    %v4013 = vunpack.c.h.b16 %v3173
    %v4014 = vunpack.c.l.b16 %v3174
    %v4015 = vunpack.c.h.b16 %v3174
    %v4016 = vunpack.c.l.b16 %v3175
    %v4017 = vunpack.c.h.b16 %v3175
    %v4018 = vunpack.c.l.b16 %v3176
    %v4019 = vunpack.c.h.b16 %v3176
    %v4020 = vunpack.c.l.b16 %v3177
    %v4021 = vunpack.c.h.b16 %v3177
    %v4022 = vunpack.c.l.b16 %v3178
    %v4023 = vunpack.c.h.b16 %v3178
    %v4024 = vunpack.c.l.b16 %v3179
    %v4025 = vunpack.c.h.b16 %v3179
    %v4026 = vunpack.c.l.b16 %v3180
    %v4027 = vunpack.c.h.b16 %v3180
    %v4028 = vunpack.c.l.b16 %v3181
    %v4029 = vunpack.c.h.b16 %v3181
    %v4030 = vunpack.c.l.b16 %v3182
    %v4031 = vunpack.c.h.b16 %v3182
    %v4032 = vunpack.c.l.b16 %v3183
    %v4033 = vunpack.c.h.b16 %v3183
    %v4034 = vunpack.c.l.b16 %v3184
    %v4035 = vunpack.c.h.b16 %v3184
    %v4036 = vunpack.c.l.b16 %v3185
    %v4037 = vunpack.c.h.b16 %v3185
    %v4038 = vunpack.c.l.b16 %v3186
    %v4039 = vunpack.c.h.b16 %v3186
    %v4040 = vunpack.c.l.b16 %v3187
    %v4041 = vunpack.c.h.b16 %v3187
    %v4042 = vunpack.c.l.b16 %v3188
    %v4043 = vunpack.c.h.b16 %v3188
    %v4044 = vunpack.c.l.b16 %v3189
    %v4045 = vunpack.c.h.b16 %v3189
    %v4046 = vunpack.c.l.b16 %v3190
    %v4047 = vunpack.c.h.b16 %v3190
    %v4048 = vunpack.c.l.b16 %v3191
    %v4049 = vunpack.c.h.b16 %v3191
    %v4050 = vunpack.c.l.b16 %v3192
    %v4051 = vunpack.c.h.b16 %v3192
    %v4052 = vunpack.c.l.b16 %v3193
    %v4053 = vunpack.c.h.b16 %v3193
    %v4054 = vunpack.c.l.b16 %v3194
    %v4055 = vunpack.c.h.b16 %v3194
    %v4056 = vunpack.c.l.b16 %v3195
    %v4057 = vunpack.c.h.b16 %v3195
    %v4058 = vunpack.c.l.b16 %v3196
    %v4059 = vunpack.c.h.b16 %v3196
    %v4060 = vunpack.c.l.b16 %v3197
    %v4061 = vunpack.c.h.b16 %v3197
    %v4062 = vunpack.c.l.b16 %v3198
    %v4063 = vunpack.c.h.b16 %v3198
    %v4064 = vunpack.c.l.b16 %v3199
    %v4065 = vunpack.c.h.b16 %v3199
    %v4066 = vunpack.c.l.b16 %v3200
    %v4067 = vunpack.c.h.b16 %v3200
    %v4068 = vunpack.c.l.b16 %v3201
    %v4069 = vunpack.c.h.b16 %v3201
    %v4070 = vunpack.c.l.b16 %v3202
    %v4071 = vunpack.c.h.b16 %v3202
    %v4072 = vunpack.c.l.b16 %v3203
    %v4073 = vunpack.c.h.b16 %v3203
    %v4074 = vunpack.c.l.b16 %v3204
    %v4075 = vunpack.c.h.b16 %v3204
    %v4076 = vunpack.c.l.b16 %v3205
    %v4077 = vunpack.c.h.b16 %v3205
    %v4078 = vunpack.c.l.b16 %v3206
    %v4079 = vunpack.c.h.b16 %v3206
    %v4080 = vunpack.c.l.b16 %v3207
    %v4081 = vunpack.c.h.b16 %v3207
    %v4082 = vunpack.c.l.b16 %v3208
    %v4083 = vunpack.c.h.b16 %v3208
    %v4084 = vunpack.c.l.b16 %v3209
    %v4085 = vunpack.c.h.b16 %v3209
    %v4086 = vunpack.c.l.b16 %v3210
    %v4087 = vunpack.c.h.b16 %v3210
    %v4088 = vunpack.c.l.b16 %v3211
    %v4089 = vunpack.c.h.b16 %v3211
    %v4090 = vunpack.c.l.b16 %v3212
    %v4091 = vunpack.c.h.b16 %v3212
    %v4092 = vunpack.c.l.b16 %v3213
    %v4093 = vunpack.c.h.b16 %v3213
    %v4094 = vunpack.c.l.b16 %v3214
    %v4095 = vunpack.c.h.b16 %v3214
    %v4096 = vunpack.c.l.b16 %v3215
    %v4097 = vunpack.c.h.b16 %v3215
    %v4098 = vunpack.c.l.b16 %v3216
    %v4099 = vunpack.c.h.b16 %v3216
    %v4100 = vunpack.c.l.b16 %v3217
    %v4101 = vunpack.c.h.b16 %v3217
    %v4102 = vunpack.c.l.b16 %v3218
    %v4103 = vunpack.c.h.b16 %v3218
    %v4104 = vunpack.c.l.b16 %v3219
    %v4105 = vunpack.c.h.b16 %v3219
    %v4106 = vunpack.c.l.b16 %v3220
    %v4107 = vunpack.c.h.b16 %v3220
    %v4108 = vunpack.c.l.b16 %v3221
    %v4109 = vunpack.c.h.b16 %v3221
    %v4110 = vunpack.c.l.b16 %v3222
    %v4111 = vunpack.c.h.b16 %v3222
    %v4112 = vunpack.c.l.b16 %v3223
    %v4113 = vunpack.c.h.b16 %v3223
    %v4114 = vunpack.c.l.b16 %v3224
    %v4115 = vunpack.c.h.b16 %v3224
    %v4116 = vunpack.c.l.b16 %v3225
    %v4117 = vunpack.c.h.b16 %v3225
    %v4118 = vunpack.c.l.b16 %v3226
    %v4119 = vunpack.c.h.b16 %v3226
    %v4120 = vunpack.c.l.b16 %v3227
    %v4121 = vunpack.c.h.b16 %v3227
    %v4122 = vunpack.c.l.b16 %v3228
    %v4123 = vunpack.c.h.b16 %v3228
    %v4124 = vunpack.c.l.b16 %v3229
    %v4125 = vunpack.c.h.b16 %v3229
    %v4126 = vunpack.c.l.b16 %v3230
    %v4127 = vunpack.c.h.b16 %v3230
    %v4128 = vunpack.c.l.b16 %v3231
    %v4129 = vunpack.c.h.b16 %v3231
    %v4130 = vunpack.c.l.b16 %v3232
    %v4131 = vunpack.c.h.b16 %v3232
    %v4132 = vunpack.c.l.b16 %v3233
    %v4133 = vunpack.c.h.b16 %v3233
    %v4134 = vunpack.c.l.b16 %v3234
    %v4135 = vunpack.c.h.b16 %v3234
    %v4136 = vunpack.c.l.b16 %v3235
    %v4137 = vunpack.c.h.b16 %v3235
    %v4138 = vunpack.c.l.b16 %v3236
    %v4139 = vunpack.c.h.b16 %v3236
    %v4140 = vunpack.c.l.b16 %v3237
    %v4141 = vunpack.c.h.b16 %v3237
    %v4142 = vunpack.c.l.b16 %v3238
    %v4143 = vunpack.c.h.b16 %v3238
    %v4144 = vunpack.c.l.b16 %v3239
    %v4145 = vunpack.c.h.b16 %v3239
    %v4146 = vunpack.c.l.b16 %v3240
    %v4147 = vunpack.c.h.b16 %v3240
    %v4148 = vunpack.c.l.b16 %v3241
    %v4149 = vunpack.c.h.b16 %v3241
    %v4150 = vunpack.c.l.b16 %v3242
    %v4151 = vunpack.c.h.b16 %v3242
    %v4152 = vunpack.c.l.b16 %v3243
    %v4153 = vunpack.c.h.b16 %v3243
    %v4154 = vunpack.c.l.b16 %v3244
    %v4155 = vunpack.c.h.b16 %v3244
    %v4156 = vunpack.c.l.b16 %v3245
    %v4157 = vunpack.c.h.b16 %v3245
    %v4158 = vunpack.c.l.b16 %v3246
    %v4159 = vunpack.c.h.b16 %v3246
    %v4160 = vunpack.c.l.b16 %v3247
    %v4161 = vunpack.c.h.b16 %v3247
    %v4162 = vunpack.c.l.b16 %v3248
    %v4163 = vunpack.c.h.b16 %v3248
    %v4164 = vunpack.c.l.b16 %v3249
    %v4165 = vunpack.c.h.b16 %v3249
    %v4166 = vunpack.c.l.b16 %v3250
    %v4167 = vunpack.c.h.b16 %v3250
    %v4168 = vunpack.c.l.b16 %v3251
    %v4169 = vunpack.c.h.b16 %v3251
    %v4170 = vunpack.c.l.b16 %v3252
    %v4171 = vunpack.c.h.b16 %v3252
    %v4172 = vunpack.c.l.b16 %v3253
    %v4173 = vunpack.c.h.b16 %v3253
    %v4174 = vunpack.c.l.b16 %v3254
    %v4175 = vunpack.c.h.b16 %v3254
    %v4176 = vunpack.c.l.b16 %v3255
    %v4177 = vunpack.c.h.b16 %v3255
    %v4178 = vunpack.c.l.b16 %v3256
    %v4179 = vunpack.c.h.b16 %v3256
    %v4180 = vunpack.c.l.b16 %v3257
    %v4181 = vunpack.c.h.b16 %v3257
    %v4182 = vunpack.c.l.b16 %v3258
    %v4183 = vunpack.c.h.b16 %v3258
    %v4184 = vunpack.c.l.b16 %v3259
    %v4185 = vunpack.c.h.b16 %v3259
    %v4186 = vunpack.c.l.b16 %v3260
    %v4187 = vunpack.c.h.b16 %v3260
    %v4188 = vunpack.c.l.b16 %v3261
    %v4189 = vunpack.c.h.b16 %v3261
    %v4190 = vunpack.c.l.b16 %v3262
    %v4191 = vunpack.c.h.b16 %v3262
    %v4192 = vunpack.c.l.b16 %v3263
    %v4193 = vunpack.c.h.b16 %v3263
    %v4194 = vunpack.c.l.b16 %v3264
    %v4195 = vunpack.c.h.b16 %v3264
    %v4196 = vunpack.c.l.b16 %v3265
    %v4197 = vunpack.c.h.b16 %v3265
    %v4198 = vunpack.c.l.b16 %v3266
    %v4199 = vunpack.c.h.b16 %v3266
    %v4200 = vunpack.c.l.b16 %v3267
    %v4201 = vunpack.c.h.b16 %v3267
    %v4202 = vunpack.c.l.b16 %v3268
    %v4203 = vunpack.c.h.b16 %v3268
    %v4204 = vunpack.c.l.b16 %v3269
    %v4205 = vunpack.c.h.b16 %v3269
    %v4206 = vunpack.c.l.b16 %v3270
    %v4207 = vunpack.c.h.b16 %v3270
    %v4208 = vunpack.c.l.b16 %v3271
    %v4209 = vunpack.c.h.b16 %v3271
    %v4210 = vunpack.c.l.b16 %v3272
    %v4211 = vunpack.c.h.b16 %v3272
    %v4212 = vunpack.c.l.b16 %v3273
    %v4213 = vunpack.c.h.b16 %v3273
    %v4214 = vunpack.c.l.b16 %v3274
    %v4215 = vunpack.c.h.b16 %v3274
    %v4216 = vunpack.c.l.b16 %v3275
    %v4217 = vunpack.c.h.b16 %v3275
    %v4218 = vunpack.c.l.b16 %v3276
    %v4219 = vunpack.c.h.b16 %v3276
    %v4220 = vunpack.c.l.b16 %v3277
    %v4221 = vunpack.c.h.b16 %v3277
    %v4222 = vunpack.c.l.b16 %v3278
    %v4223 = vunpack.c.h.b16 %v3278
    %v4224 = vunpack.c.l.b16 %v3279
    %v4225 = vunpack.c.h.b16 %v3279
    %v4226 = vunpack.c.l.b16 %v3280
    %v4227 = vunpack.c.h.b16 %v3280
    %v4228 = vunpack.c.l.b16 %v3281
    %v4229 = vunpack.c.h.b16 %v3281
    %v4230 = vunpack.c.l.b16 %v3282
    %v4231 = vunpack.c.h.b16 %v3282
    %v4232 = vunpack.c.l.b16 %v3283
    %v4233 = vunpack.c.h.b16 %v3283
    %v4234 = vunpack.c.l.b16 %v3284
    %v4235 = vunpack.c.h.b16 %v3284
    %v4236 = vunpack.c.l.b16 %v3285
    %v4237 = vunpack.c.h.b16 %v3285
    %v4238 = vunpack.c.l.b16 %v3286
    %v4239 = vunpack.c.h.b16 %v3286
    %v4240 = vunpack.c.l.b16 %v3287
    %v4241 = vunpack.c.h.b16 %v3287
    %v4242 = vunpack.c.l.b16 %v3288
    %v4243 = vunpack.c.h.b16 %v3288
    %v4244 = vunpack.c.l.b16 %v3289
    %v4245 = vunpack.c.h.b16 %v3289
    %v4246 = vunpack.c.l.b16 %v3290
    %v4247 = vunpack.c.h.b16 %v3290
    %v4248 = vunpack.c.l.b16 %v3291
    %v4249 = vunpack.c.h.b16 %v3291
    %v4250 = vunpack.c.l.b16 %v3292
    %v4251 = vunpack.c.h.b16 %v3292
    %v4252 = vunpack.c.l.b16 %v3293
    %v4253 = vunpack.c.h.b16 %v3293
    %v4254 = vunpack.c.l.b16 %v3294
    %v4255 = vunpack.c.h.b16 %v3294
    %v4256 = vunpack.c.l.b16 %v3295
    %v4257 = vunpack.c.h.b16 %v3295
    %v4258 = vunpack.c.l.b16 %v3296
    %v4259 = vunpack.c.h.b16 %v3296
    %v4260 = vunpack.c.l.b16 %v3297
    %v4261 = vunpack.c.h.b16 %v3297
    %v4262 = vunpack.c.l.b16 %v3298
    %v4263 = vunpack.c.h.b16 %v3298
    %v4264 = vunpack.c.l.b16 %v3299
    %v4265 = vunpack.c.h.b16 %v3299
    %v4266 = vunpack.c.l.b16 %v3300
    %v4267 = vunpack.c.h.b16 %v3300
    %v4268 = vunpack.c.l.b16 %v3301
    %v4269 = vunpack.c.h.b16 %v3301
    %v4270 = vunpack.c.l.b16 %v3302
    %v4271 = vunpack.c.h.b16 %v3302
    %v4272 = vunpack.c.l.b16 %v3303
    %v4273 = vunpack.c.h.b16 %v3303
    %v4274 = vunpack.c.l.b16 %v3304
    %v4275 = vunpack.c.h.b16 %v3304
    %v4276 = vunpack.c.l.b16 %v3305
    %v4277 = vunpack.c.h.b16 %v3305
    %v4278 = vunpack.c.l.b16 %v3306
    %v4279 = vunpack.c.h.b16 %v3306
    %v4280 = vunpack.c.l.b16 %v3307
    %v4281 = vunpack.c.h.b16 %v3307
    %v4282 = vunpack.c.l.b16 %v3308
    %v4283 = vunpack.c.h.b16 %v3308
    %v4284 = vunpack.c.l.b16 %v3309
    %v4285 = vunpack.c.h.b16 %v3309
    %v4286 = vunpack.c.l.b16 %v3310
    %v4287 = vunpack.c.h.b16 %v3310
    %v4288 = vunpack.c.l.b16 %v3311
    %v4289 = vunpack.c.h.b16 %v3311
    %v4290 = vunpack.c.l.b16 %v3312
    %v4291 = vunpack.c.h.b16 %v3312
    %v4292 = vunpack.c.l.b16 %v3313
    %v4293 = vunpack.c.h.b16 %v3313
    %v4294 = vunpack.c.l.b16 %v3314
    %v4295 = vunpack.c.h.b16 %v3314
    %v4296 = vunpack.c.l.b16 %v3315
    %v4297 = vunpack.c.h.b16 %v3315
    %v4298 = vpack.c.b16 %v3662, %v3658
    %v4299 = vpack.c.b16 %v3663, %v3659
    %v4300 = vpack.c.b16 %v3664, %v3660
    %v4301 = vpack.c.b16 %v3665, %v3661
    %v4302 = vpack.c.b16 %v3670, %v3666
    %v4303 = vpack.c.b16 %v3671, %v3667
    %v4304 = vpack.c.b16 %v3672, %v3668
    %v4305 = vpack.c.b16 %v3673, %v3669
    %v4306 = vpack.c.b16 %v3678, %v3674
    %v4307 = vpack.c.b16 %v3679, %v3675
    %v4308 = vpack.c.b16 %v3680, %v3676
    %v4309 = vpack.c.b16 %v3681, %v3677
    %v4310 = vpack.c.b16 %v3686, %v3682
    %v4311 = vpack.c.b16 %v3687, %v3683
    %v4312 = vpack.c.b16 %v3688, %v3684
    %v4313 = vpack.c.b16 %v3689, %v3685
    %v4314 = vpack.c.b16 %v3694, %v3690
    %v4315 = vpack.c.b16 %v3695, %v3691
    %v4316 = vpack.c.b16 %v3696, %v3692
    %v4317 = vpack.c.b16 %v3697, %v3693
    %v4318 = vpack.c.b16 %v3702, %v3698
    %v4319 = vpack.c.b16 %v3703, %v3699
    %v4320 = vpack.c.b16 %v3704, %v3700
    %v4321 = vpack.c.b16 %v3705, %v3701
    %v4322 = vpack.c.b16 %v3710, %v3706
    %v4323 = vpack.c.b16 %v3711, %v3707
    %v4324 = vpack.c.b16 %v3712, %v3708
    %v4325 = vpack.c.b16 %v3713, %v3709
    %v4326 = vpack.c.b16 %v3718, %v3714
    %v4327 = vpack.c.b16 %v3719, %v3715
    %v4328 = vpack.c.b16 %v3720, %v3716
    %v4329 = vpack.c.b16 %v3721, %v3717
    %v4330 = vpack.c.b16 %v3726, %v3722
    %v4331 = vpack.c.b16 %v3727, %v3723
    %v4332 = vpack.c.b16 %v3728, %v3724
    %v4333 = vpack.c.b16 %v3729, %v3725
    %v4334 = vpack.c.b16 %v3734, %v3730
    %v4335 = vpack.c.b16 %v3735, %v3731
    %v4336 = vpack.c.b16 %v3736, %v3732
    %v4337 = vpack.c.b16 %v3737, %v3733
    %v4338 = vpack.c.b16 %v3742, %v3738
    %v4339 = vpack.c.b16 %v3743, %v3739
    %v4340 = vpack.c.b16 %v3744, %v3740
    %v4341 = vpack.c.b16 %v3745, %v3741
    %v4342 = vpack.c.b16 %v3750, %v3746
    %v4343 = vpack.c.b16 %v3751, %v3747
    %v4344 = vpack.c.b16 %v3752, %v3748
    %v4345 = vpack.c.b16 %v3753, %v3749
    %v4346 = vpack.c.b16 %v3758, %v3754
    %v4347 = vpack.c.b16 %v3759, %v3755
    %v4348 = vpack.c.b16 %v3760, %v3756
    %v4349 = vpack.c.b16 %v3761, %v3757
    %v4350 = vpack.c.b16 %v3766, %v3762
    %v4351 = vpack.c.b16 %v3767, %v3763
    %v4352 = vpack.c.b16 %v3768, %v3764
    %v4353 = vpack.c.b16 %v3769, %v3765
    %v4354 = vpack.c.b16 %v3774, %v3770
    %v4355 = vpack.c.b16 %v3775, %v3771
    %v4356 = vpack.c.b16 %v3776, %v3772
    %v4357 = vpack.c.b16 %v3777, %v3773
    %v4358 = vpack.c.b16 %v3782, %v3778
    %v4359 = vpack.c.b16 %v3783, %v3779
    %v4360 = vpack.c.b16 %v3784, %v3780
    %v4361 = vpack.c.b16 %v3785, %v3781
    %v4362 = vpack.c.b16 %v3790, %v3786
    %v4363 = vpack.c.b16 %v3791, %v3787
    %v4364 = vpack.c.b16 %v3792, %v3788
    %v4365 = vpack.c.b16 %v3793, %v3789
    %v4366 = vpack.c.b16 %v3798, %v3794
    %v4367 = vpack.c.b16 %v3799, %v3795
    %v4368 = vpack.c.b16 %v3800, %v3796
    %v4369 = vpack.c.b16 %v3801, %v3797
    %v4370 = vpack.c.b16 %v3806, %v3802
    %v4371 = vpack.c.b16 %v3807, %v3803
    %v4372 = vpack.c.b16 %v3808, %v3804
    %v4373 = vpack.c.b16 %v3809, %v3805
    %v4374 = vpack.c.b16 %v3814, %v3810
    %v4375 = vpack.c.b16 %v3815, %v3811
    %v4376 = vpack.c.b16 %v3816, %v3812
    %v4377 = vpack.c.b16 %v3817, %v3813
    %v4378 = vpack.c.b16 %v3822, %v3818
    %v4379 = vpack.c.b16 %v3823, %v3819
    %v4380 = vpack.c.b16 %v3824, %v3820
    %v4381 = vpack.c.b16 %v3825, %v3821
    %v4382 = vpack.c.b16 %v3830, %v3826
    %v4383 = vpack.c.b16 %v3831, %v3827
    %v4384 = vpack.c.b16 %v3832, %v3828
    %v4385 = vpack.c.b16 %v3833, %v3829
    %v4386 = vpack.c.b16 %v3838, %v3834
    %v4387 = vpack.c.b16 %v3839, %v3835
    %v4388 = vpack.c.b16 %v3840, %v3836
    %v4389 = vpack.c.b16 %v3841, %v3837
    %v4390 = vpack.c.b16 %v3846, %v3842
    %v4391 = vpack.c.b16 %v3847, %v3843
    %v4392 = vpack.c.b16 %v3848, %v3844
    %v4393 = vpack.c.b16 %v3849, %v3845
    %v4394 = vpack.c.b16 %v3854, %v3850
    %v4395 = vpack.c.b16 %v3855, %v3851
    %v4396 = vpack.c.b16 %v3856, %v3852
    %v4397 = vpack.c.b16 %v3857, %v3853
    %v4398 = vpack.c.b16 %v3862, %v3858
    %v4399 = vpack.c.b16 %v3863, %v3859
    %v4400 = vpack.c.b16 %v3864, %v3860
    %v4401 = vpack.c.b16 %v3865, %v3861
    %v4402 = vpack.c.b16 %v3870, %v3866
    %v4403 = vpack.c.b16 %v3871, %v3867
    %v4404 = vpack.c.b16 %v3872, %v3868
    %v4405 = vpack.c.b16 %v3873, %v3869
    %v4406 = vpack.c.b16 %v3878, %v3874
    %v4407 = vpack.c.b16 %v3879, %v3875
    %v4408 = vpack.c.b16 %v3880, %v3876
    %v4409 = vpack.c.b16 %v3881, %v3877
    %v4410 = vpack.c.b16 %v3886, %v3882
    %v4411 = vpack.c.b16 %v3887, %v3883
    %v4412 = vpack.c.b16 %v3888, %v3884
    %v4413 = vpack.c.b16 %v3889, %v3885
    %v4414 = vpack.c.b16 %v3894, %v3890
    %v4415 = vpack.c.b16 %v3895, %v3891
    %v4416 = vpack.c.b16 %v3896, %v3892
    %v4417 = vpack.c.b16 %v3897, %v3893
    %v4418 = vpack.c.b16 %v3902, %v3898
    %v4419 = vpack.c.b16 %v3903, %v3899
    %v4420 = vpack.c.b16 %v3904, %v3900
    %v4421 = vpack.c.b16 %v3905, %v3901
    %v4422 = vpack.c.b16 %v3910, %v3906
    %v4423 = vpack.c.b16 %v3911, %v3907
    %v4424 = vpack.c.b16 %v3912, %v3908
    %v4425 = vpack.c.b16 %v3913, %v3909
    %v4426 = vpack.c.b16 %v3918, %v3914
    %v4427 = vpack.c.b16 %v3919, %v3915
    %v4428 = vpack.c.b16 %v3920, %v3916
    %v4429 = vpack.c.b16 %v3921, %v3917
    %v4430 = vpack.c.b16 %v3926, %v3922
    %v4431 = vpack.c.b16 %v3927, %v3923
    %v4432 = vpack.c.b16 %v3928, %v3924
    %v4433 = vpack.c.b16 %v3929, %v3925
    %v4434 = vpack.c.b16 %v3934, %v3930
    %v4435 = vpack.c.b16 %v3935, %v3931
    %v4436 = vpack.c.b16 %v3936, %v3932
    %v4437 = vpack.c.b16 %v3937, %v3933
    %v4438 = vpack.c.b16 %v3942, %v3938
    %v4439 = vpack.c.b16 %v3943, %v3939
    %v4440 = vpack.c.b16 %v3944, %v3940
    %v4441 = vpack.c.b16 %v3945, %v3941
    %v4442 = vpack.c.b16 %v3950, %v3946
    %v4443 = vpack.c.b16 %v3951, %v3947
    %v4444 = vpack.c.b16 %v3952, %v3948
    %v4445 = vpack.c.b16 %v3953, %v3949
    %v4446 = vpack.c.b16 %v3958, %v3954
    %v4447 = vpack.c.b16 %v3959, %v3955
    %v4448 = vpack.c.b16 %v3960, %v3956
    %v4449 = vpack.c.b16 %v3961, %v3957
    %v4450 = vpack.c.b16 %v3966, %v3962
    %v4451 = vpack.c.b16 %v3967, %v3963
    %v4452 = vpack.c.b16 %v3968, %v3964
    %v4453 = vpack.c.b16 %v3969, %v3965
    %v4454 = vpack.c.b16 %v3974, %v3970
    %v4455 = vpack.c.b16 %v3975, %v3971
    %v4456 = vpack.c.b16 %v3976, %v3972
    %v4457 = vpack.c.b16 %v3977, %v3973
    %v4458 = vpack.c.b16 %v3982, %v3978
    %v4459 = vpack.c.b16 %v3983, %v3979
    %v4460 = vpack.c.b16 %v3984, %v3980
    %v4461 = vpack.c.b16 %v3985, %v3981
    %v4462 = vpack.c.b16 %v3990, %v3986
    %v4463 = vpack.c.b16 %v3991, %v3987
    %v4464 = vpack.c.b16 %v3992, %v3988
    %v4465 = vpack.c.b16 %v3993, %v3989
    %v4466 = vpack.c.b16 %v3998, %v3994
    %v4467 = vpack.c.b16 %v3999, %v3995
    %v4468 = vpack.c.b16 %v4000, %v3996
    %v4469 = vpack.c.b16 %v4001, %v3997
    %v4470 = vpack.c.b16 %v4006, %v4002
    %v4471 = vpack.c.b16 %v4007, %v4003
    %v4472 = vpack.c.b16 %v4008, %v4004
    %v4473 = vpack.c.b16 %v4009, %v4005
    %v4474 = vpack.c.b16 %v4014, %v4010
    %v4475 = vpack.c.b16 %v4015, %v4011
    %v4476 = vpack.c.b16 %v4016, %v4012
    %v4477 = vpack.c.b16 %v4017, %v4013
    %v4478 = vpack.c.b16 %v4022, %v4018
    %v4479 = vpack.c.b16 %v4023, %v4019
    %v4480 = vpack.c.b16 %v4024, %v4020
    %v4481 = vpack.c.b16 %v4025, %v4021
    %v4482 = vpack.c.b16 %v4030, %v4026
    %v4483 = vpack.c.b16 %v4031, %v4027
    %v4484 = vpack.c.b16 %v4032, %v4028
    %v4485 = vpack.c.b16 %v4033, %v4029
    %v4486 = vpack.c.b16 %v4038, %v4034
    %v4487 = vpack.c.b16 %v4039, %v4035
    %v4488 = vpack.c.b16 %v4040, %v4036
    %v4489 = vpack.c.b16 %v4041, %v4037
    %v4490 = vpack.c.b16 %v4046, %v4042
    %v4491 = vpack.c.b16 %v4047, %v4043
    %v4492 = vpack.c.b16 %v4048, %v4044
    %v4493 = vpack.c.b16 %v4049, %v4045
    %v4494 = vpack.c.b16 %v4054, %v4050
    %v4495 = vpack.c.b16 %v4055, %v4051
    %v4496 = vpack.c.b16 %v4056, %v4052
    %v4497 = vpack.c.b16 %v4057, %v4053
    %v4498 = vpack.c.b16 %v4062, %v4058
    %v4499 = vpack.c.b16 %v4063, %v4059
    %v4500 = vpack.c.b16 %v4064, %v4060
    %v4501 = vpack.c.b16 %v4065, %v4061
    %v4502 = vpack.c.b16 %v4070, %v4066
    %v4503 = vpack.c.b16 %v4071, %v4067
    %v4504 = vpack.c.b16 %v4072, %v4068
    %v4505 = vpack.c.b16 %v4073, %v4069
    %v4506 = vpack.c.b16 %v4078, %v4074
    %v4507 = vpack.c.b16 %v4079, %v4075
    %v4508 = vpack.c.b16 %v4080, %v4076
    %v4509 = vpack.c.b16 %v4081, %v4077
    %v4510 = vpack.c.b16 %v4086, %v4082
    %v4511 = vpack.c.b16 %v4087, %v4083
    %v4512 = vpack.c.b16 %v4088, %v4084
    %v4513 = vpack.c.b16 %v4089, %v4085
    %v4514 = vpack.c.b16 %v4094, %v4090
    %v4515 = vpack.c.b16 %v4095, %v4091
    %v4516 = vpack.c.b16 %v4096, %v4092
    %v4517 = vpack.c.b16 %v4097, %v4093
    %v4518 = vpack.c.b16 %v4102, %v4098
    %v4519 = vpack.c.b16 %v4103, %v4099
    %v4520 = vpack.c.b16 %v4104, %v4100
    %v4521 = vpack.c.b16 %v4105, %v4101
    %v4522 = vpack.c.b16 %v4110, %v4106
    %v4523 = vpack.c.b16 %v4111, %v4107
    %v4524 = vpack.c.b16 %v4112, %v4108
    %v4525 = vpack.c.b16 %v4113, %v4109
    %v4526 = vpack.c.b16 %v4118, %v4114
    %v4527 = vpack.c.b16 %v4119, %v4115
    %v4528 = vpack.c.b16 %v4120, %v4116
    %v4529 = vpack.c.b16 %v4121, %v4117
    %v4530 = vpack.c.b16 %v4126, %v4122
    %v4531 = vpack.c.b16 %v4127, %v4123
    %v4532 = vpack.c.b16 %v4128, %v4124
    %v4533 = vpack.c.b16 %v4129, %v4125
    %v4534 = vpack.c.b16 %v4134, %v4130
    %v4535 = vpack.c.b16 %v4135, %v4131
    %v4536 = vpack.c.b16 %v4136, %v4132
    %v4537 = vpack.c.b16 %v4137, %v4133
    %v4538 = vpack.c.b16 %v4142, %v4138
    %v4539 = vpack.c.b16 %v4143, %v4139
    %v4540 = vpack.c.b16 %v4144, %v4140
    %v4541 = vpack.c.b16 %v4145, %v4141
    %v4542 = vpack.c.b16 %v4150, %v4146
    %v4543 = vpack.c.b16 %v4151, %v4147
    %v4544 = vpack.c.b16 %v4152, %v4148
    %v4545 = vpack.c.b16 %v4153, %v4149
    %v4546 = vpack.c.b16 %v4158, %v4154
    %v4547 = vpack.c.b16 %v4159, %v4155
    %v4548 = vpack.c.b16 %v4160, %v4156
    %v4549 = vpack.c.b16 %v4161, %v4157
    %v4550 = vpack.c.b16 %v4166, %v4162
    %v4551 = vpack.c.b16 %v4167, %v4163
    %v4552 = vpack.c.b16 %v4168, %v4164
    %v4553 = vpack.c.b16 %v4169, %v4165
    %v4554 = vpack.c.b16 %v4174, %v4170
    %v4555 = vpack.c.b16 %v4175, %v4171
    %v4556 = vpack.c.b16 %v4176, %v4172
    %v4557 = vpack.c.b16 %v4177, %v4173
    %v4558 = vpack.c.b16 %v4182, %v4178
    %v4559 = vpack.c.b16 %v4183, %v4179
    %v4560 = vpack.c.b16 %v4184, %v4180
    %v4561 = vpack.c.b16 %v4185, %v4181
    %v4562 = vpack.c.b16 %v4190, %v4186
    %v4563 = vpack.c.b16 %v4191, %v4187
    %v4564 = vpack.c.b16 %v4192, %v4188
    %v4565 = vpack.c.b16 %v4193, %v4189
    %v4566 = vpack.c.b16 %v4198, %v4194
    %v4567 = vpack.c.b16 %v4199, %v4195
    %v4568 = vpack.c.b16 %v4200, %v4196
    %v4569 = vpack.c.b16 %v4201, %v4197
    %v4570 = vpack.c.b16 %v4206, %v4202
    %v4571 = vpack.c.b16 %v4207, %v4203
    %v4572 = vpack.c.b16 %v4208, %v4204
    %v4573 = vpack.c.b16 %v4209, %v4205
    %v4574 = vpack.c.b16 %v4214, %v4210
    %v4575 = vpack.c.b16 %v4215, %v4211
    %v4576 = vpack.c.b16 %v4216, %v4212
    %v4577 = vpack.c.b16 %v4217, %v4213
    %v4578 = vpack.c.b16 %v4222, %v4218
    %v4579 = vpack.c.b16 %v4223, %v4219
    %v4580 = vpack.c.b16 %v4224, %v4220
    %v4581 = vpack.c.b16 %v4225, %v4221
    %v4582 = vpack.c.b16 %v4230, %v4226
    %v4583 = vpack.c.b16 %v4231, %v4227
    %v4584 = vpack.c.b16 %v4232, %v4228
    %v4585 = vpack.c.b16 %v4233, %v4229
    %v4586 = vpack.c.b16 %v4238, %v4234
    %v4587 = vpack.c.b16 %v4239, %v4235
    %v4588 = vpack.c.b16 %v4240, %v4236
    %v4589 = vpack.c.b16 %v4241, %v4237
    %v4590 = vpack.c.b16 %v4246, %v4242
    %v4591 = vpack.c.b16 %v4247, %v4243
    %v4592 = vpack.c.b16 %v4248, %v4244
    %v4593 = vpack.c.b16 %v4249, %v4245
    %v4594 = vpack.c.b16 %v4254, %v4250
    %v4595 = vpack.c.b16 %v4255, %v4251
    %v4596 = vpack.c.b16 %v4256, %v4252
    %v4597 = vpack.c.b16 %v4257, %v4253
    %v4598 = vpack.c.b16 %v4262, %v4258
    %v4599 = vpack.c.b16 %v4263, %v4259
    %v4600 = vpack.c.b16 %v4264, %v4260
    %v4601 = vpack.c.b16 %v4265, %v4261
    %v4602 = vpack.c.b16 %v4270, %v4266
    %v4603 = vpack.c.b16 %v4271, %v4267
    %v4604 = vpack.c.b16 %v4272, %v4268
    %v4605 = vpack.c.b16 %v4273, %v4269
    %v4606 = vpack.c.b16 %v4278, %v4274
    %v4607 = vpack.c.b16 %v4279, %v4275
    %v4608 = vpack.c.b16 %v4280, %v4276
    %v4609 = vpack.c.b16 %v4281, %v4277
    %v4610 = vpack.c.b16 %v4286, %v4282
    %v4611 = vpack.c.b16 %v4287, %v4283
    %v4612 = vpack.c.b16 %v4288, %v4284
    %v4613 = vpack.c.b16 %v4289, %v4285
    %v4614 = vpack.c.b16 %v4294, %v4290
    %v4615 = vpack.c.b16 %v4295, %v4291
    %v4616 = vpack.c.b16 %v4296, %v4292
    %v4617 = vpack.c.b16 %v4297, %v4293
    %4938 = vmatprep.subr.bf16.mxu0 %v4327
    %4939 = vmatpush1.bf16.msra.mxu0 %v4326
    %4940 = vmatprep.subr.bf16.mxu0 %v4323
    %4941 = vmatpush1.bf16.msra.mxu0 %v4322
    %4942 = vmatprep.subr.bf16.mxu0 %v4319
    %4943 = vmatpush1.bf16.msra.mxu0 %v4318
    %4944 = vmatprep.subr.bf16.mxu0 %v4315
    %4945 = vmatpush1.bf16.msra.mxu0 %v4314
    %4946 = vmatprep.subr.bf16.mxu0 %v4311
    %4947 = vmatpush1.bf16.msra.mxu0 %v4310
    %4948 = vmatprep.subr.bf16.mxu0 %v4307
    %4949 = vmatpush1.bf16.msra.mxu0 %v4306
    %4950 = vmatprep.subr.bf16.mxu0 %v4303
    %4951 = vmatpush1.bf16.msra.mxu0 %v4302
    %4952 = vmatprep.subr.bf16.mxu0 %v4299
    %4953 = vmatpush1.bf16.msra.mxu0 %v4298
    %4954 = vmatprep.subr.bf16.mxu0 %v4359
    %4955 = vmatpush2.bf16.msra.mxu0 %v4358
    %4956 = vmatprep.subr.bf16.mxu0 %v4355
    %4957 = vmatpush2.bf16.msra.mxu0 %v4354
    %4958 = vmatprep.subr.bf16.mxu0 %v4351
    %4959 = vmatpush2.bf16.msra.mxu0 %v4350
    %4960 = vmatprep.subr.bf16.mxu0 %v4347
    %4961 = vmatpush2.bf16.msra.mxu0 %v4346
    %4962 = vmatprep.subr.bf16.mxu0 %v4343
    %4963 = vmatpush2.bf16.msra.mxu0 %v4342
    %4964 = vmatprep.subr.bf16.mxu0 %v4339
    %4965 = vmatpush2.bf16.msra.mxu0 %v4338
    %4966 = vmatprep.subr.bf16.mxu0 %v4335
    %4967 = vmatpush2.bf16.msra.mxu0 %v4334
    %4968 = vmatprep.subr.bf16.mxu0 %v4331
    %4969 = vmatpush2.bf16.msra.mxu0 %v4330
    %4970 = vmatprep.mubr.bf16.mxu0 %v2987
    %4971 = vmatmul.mubr.bf16.gmra.mxu0 %v2986
    %v4972 = vpop.f32.mrf.mxu0
    %v4973 = vadd.f32 %v3321, %v4972
    %v4974 = vpop.f32.mrf.mxu0
    %v4975 = vadd.f32 %v3325, %v4974
    %v4976 = vpop.f32.mrf.mxu0
    %v4977 = vpop.f32.mrf.mxu0
    %4978 = vdwg.mxu0
    %4979 = vmatprep.subr.bf16.mxu0 %v4391
    %4980 = vmatpush1.bf16.msra.mxu0 %v4390
    %4981 = vmatprep.subr.bf16.mxu0 %v4387
    %4982 = vmatpush1.bf16.msra.mxu0 %v4386
    %4983 = vmatprep.subr.bf16.mxu0 %v4383
    %4984 = vmatpush1.bf16.msra.mxu0 %v4382
    %4985 = vmatprep.subr.bf16.mxu0 %v4379
    %4986 = vmatpush1.bf16.msra.mxu0 %v4378
    %4987 = vmatprep.subr.bf16.mxu0 %v4375
    %4988 = vmatpush1.bf16.msra.mxu0 %v4374
    %4989 = vmatprep.subr.bf16.mxu0 %v4371
    %4990 = vmatpush1.bf16.msra.mxu0 %v4370
    %4991 = vmatprep.subr.bf16.mxu0 %v4367
    %4992 = vmatpush1.bf16.msra.mxu0 %v4366
    %4993 = vmatprep.subr.bf16.mxu0 %v4363
    %4994 = vmatpush1.bf16.msra.mxu0 %v4362
    %4995 = vmatprep.subr.bf16.mxu0 %v4423
    %4996 = vmatpush2.bf16.msra.mxu0 %v4422
    %4997 = vmatprep.subr.bf16.mxu0 %v4419
    %4998 = vmatpush2.bf16.msra.mxu0 %v4418
    %4999 = vmatprep.subr.bf16.mxu0 %v4415
    %5000 = vmatpush2.bf16.msra.mxu0 %v4414
    %5001 = vmatprep.subr.bf16.mxu0 %v4411
    %5002 = vmatpush2.bf16.msra.mxu0 %v4410
    %5003 = vmatprep.subr.bf16.mxu0 %v4407
    %5004 = vmatpush2.bf16.msra.mxu0 %v4406
    %5005 = vmatprep.subr.bf16.mxu0 %v4403
    %5006 = vmatpush2.bf16.msra.mxu0 %v4402
    %5007 = vmatprep.subr.bf16.mxu0 %v4399
    %5008 = vmatpush2.bf16.msra.mxu0 %v4398
    %5009 = vmatprep.subr.bf16.mxu0 %v4395
    %5010 = vmatpush2.bf16.msra.mxu0 %v4394
    %5011 = vmatprep.mubr.bf16.mxu0 %v2989
    %5012 = vmatmul.mubr.bf16.gmra.mxu0 %v2988
    %v5013 = vpop.f32.mrf.mxu0
    %v5014 = vadd.f32 %v4973, %v5013
    %v5015 = vpop.f32.mrf.mxu0
    %v5016 = vadd.f32 %v4975, %v5015
    %v5017 = vpop.f32.mrf.mxu0
    %v5018 = vpop.f32.mrf.mxu0
    %5019 = vdwg.mxu0
    %5020 = vmatprep.subr.bf16.mxu0 %v4455
    %5021 = vmatpush1.bf16.msra.mxu0 %v4454
    %5022 = vmatprep.subr.bf16.mxu0 %v4451
    %5023 = vmatpush1.bf16.msra.mxu0 %v4450
    %5024 = vmatprep.subr.bf16.mxu0 %v4447
    %5025 = vmatpush1.bf16.msra.mxu0 %v4446
    %5026 = vmatprep.subr.bf16.mxu0 %v4443
    %5027 = vmatpush1.bf16.msra.mxu0 %v4442
    %5028 = vmatprep.subr.bf16.mxu0 %v4439
    %5029 = vmatpush1.bf16.msra.mxu0 %v4438
    %5030 = vmatprep.subr.bf16.mxu0 %v4435
    %5031 = vmatpush1.bf16.msra.mxu0 %v4434
    %5032 = vmatprep.subr.bf16.mxu0 %v4431
    %5033 = vmatpush1.bf16.msra.mxu0 %v4430
    %5034 = vmatprep.subr.bf16.mxu0 %v4427
    %5035 = vmatpush1.bf16.msra.mxu0 %v4426
    %5036 = vmatprep.subr.bf16.mxu0 %v4487
    %5037 = vmatpush2.bf16.msra.mxu0 %v4486
    %5038 = vmatprep.subr.bf16.mxu0 %v4483
    %5039 = vmatpush2.bf16.msra.mxu0 %v4482
    %5040 = vmatprep.subr.bf16.mxu0 %v4479
    %5041 = vmatpush2.bf16.msra.mxu0 %v4478
    %5042 = vmatprep.subr.bf16.mxu0 %v4475
    %5043 = vmatpush2.bf16.msra.mxu0 %v4474
    %5044 = vmatprep.subr.bf16.mxu0 %v4471
    %5045 = vmatpush2.bf16.msra.mxu0 %v4470
    %5046 = vmatprep.subr.bf16.mxu0 %v4467
    %5047 = vmatpush2.bf16.msra.mxu0 %v4466
    %5048 = vmatprep.subr.bf16.mxu0 %v4463
    %5049 = vmatpush2.bf16.msra.mxu0 %v4462
    %5050 = vmatprep.subr.bf16.mxu0 %v4459
    %5051 = vmatpush2.bf16.msra.mxu0 %v4458
    %5052 = vmatprep.mubr.bf16.mxu0 %v2991
    %5053 = vmatmul.mubr.bf16.gmra.mxu0 %v2990
    %v5054 = vpop.f32.mrf.mxu0
    %v5055 = vadd.f32 %v5014, %v5054
    %v5056 = vpop.f32.mrf.mxu0
    %v5057 = vadd.f32 %v5016, %v5056
    %v5058 = vpop.f32.mrf.mxu0
    %v5059 = vpop.f32.mrf.mxu0
    %5060 = vdwg.mxu0
    %5061 = vmatprep.subr.bf16.mxu0 %v4519
    %5062 = vmatpush1.bf16.msra.mxu0 %v4518
    %5063 = vmatprep.subr.bf16.mxu0 %v4515
    %5064 = vmatpush1.bf16.msra.mxu0 %v4514
    %5065 = vmatprep.subr.bf16.mxu0 %v4511
    %5066 = vmatpush1.bf16.msra.mxu0 %v4510
    %5067 = vmatprep.subr.bf16.mxu0 %v4507
    %5068 = vmatpush1.bf16.msra.mxu0 %v4506
    %5069 = vmatprep.subr.bf16.mxu0 %v4503
    %5070 = vmatpush1.bf16.msra.mxu0 %v4502
    %5071 = vmatprep.subr.bf16.mxu0 %v4499
    %5072 = vmatpush1.bf16.msra.mxu0 %v4498
    %5073 = vmatprep.subr.bf16.mxu0 %v4495
    %5074 = vmatpush1.bf16.msra.mxu0 %v4494
    %5075 = vmatprep.subr.bf16.mxu0 %v4491
    %5076 = vmatpush1.bf16.msra.mxu0 %v4490
    %5077 = vmatprep.subr.bf16.mxu0 %v4551
    %5078 = vmatpush2.bf16.msra.mxu0 %v4550
    %5079 = vmatprep.subr.bf16.mxu0 %v4547
    %5080 = vmatpush2.bf16.msra.mxu0 %v4546
    %5081 = vmatprep.subr.bf16.mxu0 %v4543
    %5082 = vmatpush2.bf16.msra.mxu0 %v4542
    %5083 = vmatprep.subr.bf16.mxu0 %v4539
    %5084 = vmatpush2.bf16.msra.mxu0 %v4538
    %5085 = vmatprep.subr.bf16.mxu0 %v4535
    %5086 = vmatpush2.bf16.msra.mxu0 %v4534
    %5087 = vmatprep.subr.bf16.mxu0 %v4531
    %5088 = vmatpush2.bf16.msra.mxu0 %v4530
    %5089 = vmatprep.subr.bf16.mxu0 %v4527
    %5090 = vmatpush2.bf16.msra.mxu0 %v4526
    %5091 = vmatprep.subr.bf16.mxu0 %v4523
    %5092 = vmatpush2.bf16.msra.mxu0 %v4522
    %5093 = vmatprep.mubr.bf16.mxu0 %v2993
    %5094 = vmatmul.mubr.bf16.gmra.mxu0 %v2992
    %v5095 = vpop.f32.mrf.mxu0
    %v5096 = vadd.f32 %v5055, %v5095
    %v5097 = vpop.f32.mrf.mxu0
    %v5098 = vadd.f32 %v5057, %v5097
    %v5099 = vpop.f32.mrf.mxu0
    %v5100 = vpop.f32.mrf.mxu0
    %5101 = vdwg.mxu0
    %5102 = vmatprep.subr.bf16.mxu0 %v4583
    %5103 = vmatpush1.bf16.msra.mxu0 %v4582
    %5104 = vmatprep.subr.bf16.mxu0 %v4579
    %5105 = vmatpush1.bf16.msra.mxu0 %v4578
    %5106 = vmatprep.subr.bf16.mxu0 %v4575
    %5107 = vmatpush1.bf16.msra.mxu0 %v4574
    %5108 = vmatprep.subr.bf16.mxu0 %v4571
    %5109 = vmatpush1.bf16.msra.mxu0 %v4570
    %5110 = vmatprep.subr.bf16.mxu0 %v4567
    %5111 = vmatpush1.bf16.msra.mxu0 %v4566
    %5112 = vmatprep.subr.bf16.mxu0 %v4563
    %5113 = vmatpush1.bf16.msra.mxu0 %v4562
    %5114 = vmatprep.subr.bf16.mxu0 %v4559
    %5115 = vmatpush1.bf16.msra.mxu0 %v4558
    %5116 = vmatprep.subr.bf16.mxu0 %v4555
    %5117 = vmatpush1.bf16.msra.mxu0 %v4554
    %5118 = vmatprep.subr.bf16.mxu0 %v4615
    %5119 = vmatpush2.bf16.msra.mxu0 %v4614
    %5120 = vmatprep.subr.bf16.mxu0 %v4611
    %5121 = vmatpush2.bf16.msra.mxu0 %v4610
    %5122 = vmatprep.subr.bf16.mxu0 %v4607
    %5123 = vmatpush2.bf16.msra.mxu0 %v4606
    %5124 = vmatprep.subr.bf16.mxu0 %v4603
    %5125 = vmatpush2.bf16.msra.mxu0 %v4602
    %5126 = vmatprep.subr.bf16.mxu0 %v4599
    %5127 = vmatpush2.bf16.msra.mxu0 %v4598
    %5128 = vmatprep.subr.bf16.mxu0 %v4595
    %5129 = vmatpush2.bf16.msra.mxu0 %v4594
    %5130 = vmatprep.subr.bf16.mxu0 %v4591
    %5131 = vmatpush2.bf16.msra.mxu0 %v4590
    %5132 = vmatprep.subr.bf16.mxu0 %v4587
    %5133 = vmatpush2.bf16.msra.mxu0 %v4586
    %5134 = vmatprep.mubr.bf16.mxu0 %v2995
    %5135 = vmatmul.mubr.bf16.gmra.mxu0 %v2994
    %v5136 = vpop.f32.mrf.mxu0
    %v5137 = vadd.f32 %v5096, %v5136
    %v5138 = vpop.f32.mrf.mxu0
    %v5139 = vadd.f32 %v5098, %v5138
    %v5140 = vpop.f32.mrf.mxu0
    %v5141 = vpop.f32.mrf.mxu0
    %5142 = vdwg.mxu0
    %5143 = vmatprep.subr.bf16.mxu0 %v4329
    %5144 = vmatpush1.bf16.msra.mxu0 %v4328
    %5145 = vmatprep.subr.bf16.mxu0 %v4325
    %5146 = vmatpush1.bf16.msra.mxu0 %v4324
    %5147 = vmatprep.subr.bf16.mxu0 %v4321
    %5148 = vmatpush1.bf16.msra.mxu0 %v4320
    %5149 = vmatprep.subr.bf16.mxu0 %v4317
    %5150 = vmatpush1.bf16.msra.mxu0 %v4316
    %5151 = vmatprep.subr.bf16.mxu0 %v4313
    %5152 = vmatpush1.bf16.msra.mxu0 %v4312
    %5153 = vmatprep.subr.bf16.mxu0 %v4309
    %5154 = vmatpush1.bf16.msra.mxu0 %v4308
    %5155 = vmatprep.subr.bf16.mxu0 %v4305
    %5156 = vmatpush1.bf16.msra.mxu0 %v4304
    %5157 = vmatprep.subr.bf16.mxu0 %v4301
    %5158 = vmatpush1.bf16.msra.mxu0 %v4300
    %5159 = vmatprep.subr.bf16.mxu0 %v4361
    %5160 = vmatpush2.bf16.msra.mxu0 %v4360
    %5161 = vmatprep.subr.bf16.mxu0 %v4357
    %5162 = vmatpush2.bf16.msra.mxu0 %v4356
    %5163 = vmatprep.subr.bf16.mxu0 %v4353
    %5164 = vmatpush2.bf16.msra.mxu0 %v4352
    %5165 = vmatprep.subr.bf16.mxu0 %v4349
    %5166 = vmatpush2.bf16.msra.mxu0 %v4348
    %5167 = vmatprep.subr.bf16.mxu0 %v4345
    %5168 = vmatpush2.bf16.msra.mxu0 %v4344
    %5169 = vmatprep.subr.bf16.mxu0 %v4341
    %5170 = vmatpush2.bf16.msra.mxu0 %v4340
    %5171 = vmatprep.subr.bf16.mxu0 %v4337
    %5172 = vmatpush2.bf16.msra.mxu0 %v4336
    %5173 = vmatprep.subr.bf16.mxu0 %v4333
    %5174 = vmatpush2.bf16.msra.mxu0 %v4332
    %5175 = vmatprep.mubr.bf16.mxu0 %v2987
    %5176 = vmatmul.mubr.bf16.gmra.mxu0 %v2986
    %v5177 = vpop.f32.mrf.mxu0
    %v5178 = vadd.f32 %v3329, %v5177
    %v5179 = vpop.f32.mrf.mxu0
    %v5180 = vadd.f32 %v3333, %v5179
    %v5181 = vpop.f32.mrf.mxu0
    %v5182 = vpop.f32.mrf.mxu0
    %5183 = vdwg.mxu0
    %5184 = vmatprep.subr.bf16.mxu0 %v4393
    %5185 = vmatpush1.bf16.msra.mxu0 %v4392
    %5186 = vmatprep.subr.bf16.mxu0 %v4389
    %5187 = vmatpush1.bf16.msra.mxu0 %v4388
    %5188 = vmatprep.subr.bf16.mxu0 %v4385
    %5189 = vmatpush1.bf16.msra.mxu0 %v4384
    %5190 = vmatprep.subr.bf16.mxu0 %v4381
    %5191 = vmatpush1.bf16.msra.mxu0 %v4380
    %5192 = vmatprep.subr.bf16.mxu0 %v4377
    %5193 = vmatpush1.bf16.msra.mxu0 %v4376
    %5194 = vmatprep.subr.bf16.mxu0 %v4373
    %5195 = vmatpush1.bf16.msra.mxu0 %v4372
    %5196 = vmatprep.subr.bf16.mxu0 %v4369
    %5197 = vmatpush1.bf16.msra.mxu0 %v4368
    %5198 = vmatprep.subr.bf16.mxu0 %v4365
    %5199 = vmatpush1.bf16.msra.mxu0 %v4364
    %5200 = vmatprep.subr.bf16.mxu0 %v4425
    %5201 = vmatpush2.bf16.msra.mxu0 %v4424
    %5202 = vmatprep.subr.bf16.mxu0 %v4421
    %5203 = vmatpush2.bf16.msra.mxu0 %v4420
    %5204 = vmatprep.subr.bf16.mxu0 %v4417
    %5205 = vmatpush2.bf16.msra.mxu0 %v4416
    %5206 = vmatprep.subr.bf16.mxu0 %v4413
    %5207 = vmatpush2.bf16.msra.mxu0 %v4412
    %5208 = vmatprep.subr.bf16.mxu0 %v4409
    %5209 = vmatpush2.bf16.msra.mxu0 %v4408
    %5210 = vmatprep.subr.bf16.mxu0 %v4405
    %5211 = vmatpush2.bf16.msra.mxu0 %v4404
    %5212 = vmatprep.subr.bf16.mxu0 %v4401
    %5213 = vmatpush2.bf16.msra.mxu0 %v4400
    %5214 = vmatprep.subr.bf16.mxu0 %v4397
    %5215 = vmatpush2.bf16.msra.mxu0 %v4396
    %5216 = vmatprep.mubr.bf16.mxu0 %v2989
    %5217 = vmatmul.mubr.bf16.gmra.mxu0 %v2988
    %v5218 = vpop.f32.mrf.mxu0
    %v5219 = vadd.f32 %v5178, %v5218
    %v5220 = vpop.f32.mrf.mxu0
    %v5221 = vadd.f32 %v5180, %v5220
    %v5222 = vpop.f32.mrf.mxu0
    %v5223 = vpop.f32.mrf.mxu0
    %5224 = vdwg.mxu0
    %5225 = vmatprep.subr.bf16.mxu0 %v4457
    %5226 = vmatpush1.bf16.msra.mxu0 %v4456
    %5227 = vmatprep.subr.bf16.mxu0 %v4453
    %5228 = vmatpush1.bf16.msra.mxu0 %v4452
    %5229 = vmatprep.subr.bf16.mxu0 %v4449
    %5230 = vmatpush1.bf16.msra.mxu0 %v4448
    %5231 = vmatprep.subr.bf16.mxu0 %v4445
    %5232 = vmatpush1.bf16.msra.mxu0 %v4444
    %5233 = vmatprep.subr.bf16.mxu0 %v4441
    %5234 = vmatpush1.bf16.msra.mxu0 %v4440
    %5235 = vmatprep.subr.bf16.mxu0 %v4437
    %5236 = vmatpush1.bf16.msra.mxu0 %v4436
    %5237 = vmatprep.subr.bf16.mxu0 %v4433
    %5238 = vmatpush1.bf16.msra.mxu0 %v4432
    %5239 = vmatprep.subr.bf16.mxu0 %v4429
    %5240 = vmatpush1.bf16.msra.mxu0 %v4428
    %5241 = vmatprep.subr.bf16.mxu0 %v4489
    %5242 = vmatpush2.bf16.msra.mxu0 %v4488
    %5243 = vmatprep.subr.bf16.mxu0 %v4485
    %5244 = vmatpush2.bf16.msra.mxu0 %v4484
    %5245 = vmatprep.subr.bf16.mxu0 %v4481
    %5246 = vmatpush2.bf16.msra.mxu0 %v4480
    %5247 = vmatprep.subr.bf16.mxu0 %v4477
    %5248 = vmatpush2.bf16.msra.mxu0 %v4476
    %5249 = vmatprep.subr.bf16.mxu0 %v4473
    %5250 = vmatpush2.bf16.msra.mxu0 %v4472
    %5251 = vmatprep.subr.bf16.mxu0 %v4469
    %5252 = vmatpush2.bf16.msra.mxu0 %v4468
    %5253 = vmatprep.subr.bf16.mxu0 %v4465
    %5254 = vmatpush2.bf16.msra.mxu0 %v4464
    %5255 = vmatprep.subr.bf16.mxu0 %v4461
    %5256 = vmatpush2.bf16.msra.mxu0 %v4460
    %5257 = vmatprep.mubr.bf16.mxu0 %v2991
    %5258 = vmatmul.mubr.bf16.gmra.mxu0 %v2990
    %v5259 = vpop.f32.mrf.mxu0
    %v5260 = vadd.f32 %v5219, %v5259
    %v5261 = vpop.f32.mrf.mxu0
    %v5262 = vadd.f32 %v5221, %v5261
    %v5263 = vpop.f32.mrf.mxu0
    %v5264 = vpop.f32.mrf.mxu0
    %5265 = vdwg.mxu0
    %5266 = vmatprep.subr.bf16.mxu0 %v4521
    %5267 = vmatpush1.bf16.msra.mxu0 %v4520
    %5268 = vmatprep.subr.bf16.mxu0 %v4517
    %5269 = vmatpush1.bf16.msra.mxu0 %v4516
    %5270 = vmatprep.subr.bf16.mxu0 %v4513
    %5271 = vmatpush1.bf16.msra.mxu0 %v4512
    %5272 = vmatprep.subr.bf16.mxu0 %v4509
    %5273 = vmatpush1.bf16.msra.mxu0 %v4508
    %5274 = vmatprep.subr.bf16.mxu0 %v4505
    %5275 = vmatpush1.bf16.msra.mxu0 %v4504
    %5276 = vmatprep.subr.bf16.mxu0 %v4501
    %5277 = vmatpush1.bf16.msra.mxu0 %v4500
    %5278 = vmatprep.subr.bf16.mxu0 %v4497
    %5279 = vmatpush1.bf16.msra.mxu0 %v4496
    %5280 = vmatprep.subr.bf16.mxu0 %v4493
    %5281 = vmatpush1.bf16.msra.mxu0 %v4492
    %5282 = vmatprep.subr.bf16.mxu0 %v4553
    %5283 = vmatpush2.bf16.msra.mxu0 %v4552
    %5284 = vmatprep.subr.bf16.mxu0 %v4549
    %5285 = vmatpush2.bf16.msra.mxu0 %v4548
    %5286 = vmatprep.subr.bf16.mxu0 %v4545
    %5287 = vmatpush2.bf16.msra.mxu0 %v4544
    %5288 = vmatprep.subr.bf16.mxu0 %v4541
    %5289 = vmatpush2.bf16.msra.mxu0 %v4540
    %5290 = vmatprep.subr.bf16.mxu0 %v4537
    %5291 = vmatpush2.bf16.msra.mxu0 %v4536
    %5292 = vmatprep.subr.bf16.mxu0 %v4533
    %5293 = vmatpush2.bf16.msra.mxu0 %v4532
    %5294 = vmatprep.subr.bf16.mxu0 %v4529
    %5295 = vmatpush2.bf16.msra.mxu0 %v4528
    %5296 = vmatprep.subr.bf16.mxu0 %v4525
    %5297 = vmatpush2.bf16.msra.mxu0 %v4524
    %5298 = vmatprep.mubr.bf16.mxu0 %v2993
    %5299 = vmatmul.mubr.bf16.gmra.mxu0 %v2992
    %v5300 = vpop.f32.mrf.mxu0
    %v5301 = vadd.f32 %v5260, %v5300
    %v5302 = vpop.f32.mrf.mxu0
    %v5303 = vadd.f32 %v5262, %v5302
    %v5304 = vpop.f32.mrf.mxu0
    %v5305 = vpop.f32.mrf.mxu0
    %5306 = vdwg.mxu0
    %5307 = vmatprep.subr.bf16.mxu0 %v4585
    %5308 = vmatpush1.bf16.msra.mxu0 %v4584
    %5309 = vmatprep.subr.bf16.mxu0 %v4581
    %5310 = vmatpush1.bf16.msra.mxu0 %v4580
    %5311 = vmatprep.subr.bf16.mxu0 %v4577
    %5312 = vmatpush1.bf16.msra.mxu0 %v4576
    %5313 = vmatprep.subr.bf16.mxu0 %v4573
    %5314 = vmatpush1.bf16.msra.mxu0 %v4572
    %5315 = vmatprep.subr.bf16.mxu0 %v4569
    %5316 = vmatpush1.bf16.msra.mxu0 %v4568
    %5317 = vmatprep.subr.bf16.mxu0 %v4565
    %5318 = vmatpush1.bf16.msra.mxu0 %v4564
    %5319 = vmatprep.subr.bf16.mxu0 %v4561
    %5320 = vmatpush1.bf16.msra.mxu0 %v4560
    %5321 = vmatprep.subr.bf16.mxu0 %v4557
    %5322 = vmatpush1.bf16.msra.mxu0 %v4556
    %5323 = vmatprep.subr.bf16.mxu0 %v4617
    %5324 = vmatpush2.bf16.msra.mxu0 %v4616
    %5325 = vmatprep.subr.bf16.mxu0 %v4613
    %5326 = vmatpush2.bf16.msra.mxu0 %v4612
    %5327 = vmatprep.subr.bf16.mxu0 %v4609
    %5328 = vmatpush2.bf16.msra.mxu0 %v4608
    %5329 = vmatprep.subr.bf16.mxu0 %v4605
    %5330 = vmatpush2.bf16.msra.mxu0 %v4604
    %5331 = vmatprep.subr.bf16.mxu0 %v4601
    %5332 = vmatpush2.bf16.msra.mxu0 %v4600
    %5333 = vmatprep.subr.bf16.mxu0 %v4597
    %5334 = vmatpush2.bf16.msra.mxu0 %v4596
    %5335 = vmatprep.subr.bf16.mxu0 %v4593
    %5336 = vmatpush2.bf16.msra.mxu0 %v4592
    %5337 = vmatprep.subr.bf16.mxu0 %v4589
    %5338 = vmatpush2.bf16.msra.mxu0 %v4588
    %5339 = vmatprep.mubr.bf16.mxu0 %v2995
    %5340 = vmatmul.mubr.bf16.gmra.mxu0 %v2994
    %v5341 = vpop.f32.mrf.mxu0
    %v5342 = vadd.f32 %v5301, %v5341
    %v5343 = vpop.f32.mrf.mxu0
    %v5344 = vadd.f32 %v5303, %v5343
    %v5345 = vpop.f32.mrf.mxu0
    %v5346 = vpop.f32.mrf.mxu0
    %5347 = vdwg.mxu0
    %v5348 = vmax.f32 %v5137, 0.0
    %v5349 = vmax.f32 %v5139, 0.0
    %v5350 = vmax.f32 %v5342, 0.0
    %v5351 = vmax.f32 %v5344, 0.0
    %v5352 = vpack.c.bf16 %v5348, %v5348
    %v5353 = vpack.c.bf16 %v5349, %v5349
    %v5354 = vpack.c.bf16 %v5350, %v5350
    %v5355 = vpack.c.bf16 %v5351, %v5351
    %v5356 = vld [vmem:[%s7] sm:$0xf]
    %v5357 = vld [vmem:[%s7 + $0x4] sm:$0xf]
    %v5358 = vld [vmem:[%s7 + $0x8] sm:$0xf]
    %v5359 = vld [vmem:[%s7 + $0xc] sm:$0xf]
    %v5360 = vld [vmem:[%s7 + $0x10] sm:$0xf]
    %v5361 = vld [vmem:[%s7 + $0x14] sm:$0xf]
    %v5362 = vld [vmem:[%s7 + $0x18] sm:$0xf]
    %v5363 = vld [vmem:[%s7 + $0x1c] sm:$0xf]
    %v5364 = vld [vmem:[%s7 + $0x20] sm:$0xf]
    %v5365 = vld [vmem:[%s7 + $0x24] sm:$0xf]
    %v5366 = vld [vmem:[%s7 + $0x28] sm:$0xf]
    %v5367 = vld [vmem:[%s7 + $0x2c] sm:$0xf]
    %v5368 = vld [vmem:[%s7 + $0x30] sm:$0xf]
    %v5369 = vld [vmem:[%s7 + $0x34] sm:$0xf]
    %v5370 = vld [vmem:[%s7 + $0x38] sm:$0xf]
    %v5371 = vld [vmem:[%s7 + $0x3c] sm:$0xf]
    %v5372 = vld [vmem:[%s7 + $0x40] sm:$0xf]
    %v5373 = vld [vmem:[%s7 + $0x44] sm:$0xf]
    %v5374 = vld [vmem:[%s7 + $0x48] sm:$0xf]
    %v5375 = vld [vmem:[%s7 + $0x4c] sm:$0xf]
    %v5376 = vld [vmem:[%s7 + $0x50] sm:$0xf]
    %v5377 = vld [vmem:[%s7 + $0x54] sm:$0xf]
    %v5378 = vld [vmem:[%s7 + $0x58] sm:$0xf]
    %v5379 = vld [vmem:[%s7 + $0x5c] sm:$0xf]
    %v5380 = vld [vmem:[%s7 + $0x60] sm:$0xf]
    %v5381 = vld [vmem:[%s7 + $0x64] sm:$0xf]
    %v5382 = vld [vmem:[%s7 + $0x68] sm:$0xf]
    %v5383 = vld [vmem:[%s7 + $0x6c] sm:$0xf]
    %v5384 = vld [vmem:[%s7 + $0x70] sm:$0xf]
    %v5385 = vld [vmem:[%s7 + $0x74] sm:$0xf]
    %v5386 = vld [vmem:[%s7 + $0x78] sm:$0xf]
    %v5387 = vld [vmem:[%s7 + $0x7c] sm:$0xf]
    %v5388 = vld [vmem:[%s7 + $0x80] sm:$0xf]
    %v5389 = vld [vmem:[%s7 + $0x84] sm:$0xf]
    %v5390 = vld [vmem:[%s7 + $0x88] sm:$0xf]
    %v5391 = vld [vmem:[%s7 + $0x8c] sm:$0xf]
    %v5392 = vld [vmem:[%s7 + $0x90] sm:$0xf]
    %v5393 = vld [vmem:[%s7 + $0x94] sm:$0xf]
    %v5394 = vld [vmem:[%s7 + $0x98] sm:$0xf]
    %v5395 = vld [vmem:[%s7 + $0x9c] sm:$0xf]
    %v5396 = vld [vmem:[%s7 + $0xa0] sm:$0xf]
    %v5397 = vld [vmem:[%s7 + $0xa4] sm:$0xf]
    %v5398 = vld [vmem:[%s7 + $0xa8] sm:$0xf]
    %v5399 = vld [vmem:[%s7 + $0xac] sm:$0xf]
    %v5400 = vld [vmem:[%s7 + $0xb0] sm:$0xf]
    %v5401 = vld [vmem:[%s7 + $0xb4] sm:$0xf]
    %v5402 = vld [vmem:[%s7 + $0xb8] sm:$0xf]
    %v5403 = vld [vmem:[%s7 + $0xbc] sm:$0xf]
    %v5404 = vld [vmem:[%s7 + $0xc0] sm:$0xf]
    %v5405 = vld [vmem:[%s7 + $0xc4] sm:$0xf]
    %v5406 = vld [vmem:[%s7 + $0xc8] sm:$0xf]
    %v5407 = vld [vmem:[%s7 + $0xcc] sm:$0xf]
    %v5408 = vld [vmem:[%s7 + $0xd0] sm:$0xf]
    %v5409 = vld [vmem:[%s7 + $0xd4] sm:$0xf]
    %v5410 = vld [vmem:[%s7 + $0xd8] sm:$0xf]
    %v5411 = vld [vmem:[%s7 + $0xdc] sm:$0xf]
    %v5412 = vld [vmem:[%s7 + $0xe0] sm:$0xf]
    %v5413 = vld [vmem:[%s7 + $0xe4] sm:$0xf]
    %v5414 = vld [vmem:[%s7 + $0xe8] sm:$0xf]
    %v5415 = vld [vmem:[%s7 + $0xec] sm:$0xf]
    %v5416 = vld [vmem:[%s7 + $0xf0] sm:$0xf]
    %v5417 = vld [vmem:[%s7 + $0xf4] sm:$0xf]
    %v5418 = vld [vmem:[%s7 + $0xf8] sm:$0xf]
    %v5419 = vld [vmem:[%s7 + $0xfc] sm:$0xf]
    %v5420 = vld [vmem:[%s8] sm:$0x1]
    %v5422 = vlaneseq
    %v5423 = vshrl.u32 %v5422, 7
    %v5424 = vsub.s32 0, %v5423
    %v5425 = vrot.slane %v5420, %v5424
    %v5491 = vunpack.c.l.b16 %v5356
    %v5492 = vunpack.c.l.b16 %v5357
    %v5493 = vunpack.c.l.b16 %v5358
    %v5494 = vunpack.c.l.b16 %v5359
    %v5495 = vunpack.c.l.b16 %v5360
    %v5496 = vunpack.c.l.b16 %v5361
    %v5497 = vunpack.c.l.b16 %v5362
    %v5498 = vunpack.c.l.b16 %v5363
    %v5499 = vunpack.c.l.b16 %v5364
    %v5500 = vunpack.c.l.b16 %v5365
    %v5501 = vunpack.c.l.b16 %v5366
    %v5502 = vunpack.c.l.b16 %v5367
    %v5503 = vunpack.c.l.b16 %v5368
    %v5504 = vunpack.c.l.b16 %v5369
    %v5505 = vunpack.c.l.b16 %v5370
    %v5506 = vunpack.c.l.b16 %v5371
    %v5507 = vunpack.c.l.b16 %v5372
    %v5508 = vunpack.c.l.b16 %v5373
    %v5509 = vunpack.c.l.b16 %v5374
    %v5510 = vunpack.c.l.b16 %v5375
    %v5511 = vunpack.c.l.b16 %v5376
    %v5512 = vunpack.c.l.b16 %v5377
    %v5513 = vunpack.c.l.b16 %v5378
    %v5514 = vunpack.c.l.b16 %v5379
    %v5515 = vunpack.c.l.b16 %v5380
    %v5516 = vunpack.c.l.b16 %v5381
    %v5517 = vunpack.c.l.b16 %v5382
    %v5518 = vunpack.c.l.b16 %v5383
    %v5519 = vunpack.c.l.b16 %v5384
    %v5520 = vunpack.c.l.b16 %v5385
    %v5521 = vunpack.c.l.b16 %v5386
    %v5522 = vunpack.c.l.b16 %v5387
    %v5523 = vunpack.c.l.b16 %v5388
    %v5524 = vunpack.c.l.b16 %v5389
    %v5525 = vunpack.c.l.b16 %v5390
    %v5526 = vunpack.c.l.b16 %v5391
    %v5527 = vunpack.c.l.b16 %v5392
    %v5528 = vunpack.c.l.b16 %v5393
    %v5529 = vunpack.c.l.b16 %v5394
    %v5530 = vunpack.c.l.b16 %v5395
    %v5531 = vunpack.c.l.b16 %v5396
    %v5532 = vunpack.c.l.b16 %v5397
    %v5533 = vunpack.c.l.b16 %v5398
    %v5534 = vunpack.c.l.b16 %v5399
    %v5535 = vunpack.c.l.b16 %v5400
    %v5536 = vunpack.c.l.b16 %v5401
    %v5537 = vunpack.c.l.b16 %v5402
    %v5538 = vunpack.c.l.b16 %v5403
    %v5539 = vunpack.c.l.b16 %v5404
    %v5540 = vunpack.c.l.b16 %v5405
    %v5541 = vunpack.c.l.b16 %v5406
    %v5542 = vunpack.c.l.b16 %v5407
    %v5543 = vunpack.c.l.b16 %v5408
    %v5544 = vunpack.c.l.b16 %v5409
    %v5545 = vunpack.c.l.b16 %v5410
    %v5546 = vunpack.c.l.b16 %v5411
    %v5547 = vunpack.c.l.b16 %v5412
    %v5548 = vunpack.c.l.b16 %v5413
    %v5549 = vunpack.c.l.b16 %v5414
    %v5550 = vunpack.c.l.b16 %v5415
    %v5551 = vunpack.c.l.b16 %v5416
    %v5552 = vunpack.c.l.b16 %v5417
    %v5553 = vunpack.c.l.b16 %v5418
    %v5554 = vunpack.c.l.b16 %v5419
    %v5555 = vpack.c.b16 %v5492, %v5491
    %v5556 = vpack.c.b16 %v5494, %v5493
    %v5557 = vpack.c.b16 %v5496, %v5495
    %v5558 = vpack.c.b16 %v5498, %v5497
    %v5559 = vpack.c.b16 %v5500, %v5499
    %v5560 = vpack.c.b16 %v5502, %v5501
    %v5561 = vpack.c.b16 %v5504, %v5503
    %v5562 = vpack.c.b16 %v5506, %v5505
    %v5563 = vpack.c.b16 %v5508, %v5507
    %v5564 = vpack.c.b16 %v5510, %v5509
    %v5565 = vpack.c.b16 %v5512, %v5511
    %v5566 = vpack.c.b16 %v5514, %v5513
    %v5567 = vpack.c.b16 %v5516, %v5515
    %v5568 = vpack.c.b16 %v5518, %v5517
    %v5569 = vpack.c.b16 %v5520, %v5519
    %v5570 = vpack.c.b16 %v5522, %v5521
    %v5571 = vpack.c.b16 %v5524, %v5523
    %v5572 = vpack.c.b16 %v5526, %v5525
    %v5573 = vpack.c.b16 %v5528, %v5527
    %v5574 = vpack.c.b16 %v5530, %v5529
    %v5575 = vpack.c.b16 %v5532, %v5531
    %v5576 = vpack.c.b16 %v5534, %v5533
    %v5577 = vpack.c.b16 %v5536, %v5535
    %v5578 = vpack.c.b16 %v5538, %v5537
    %v5579 = vpack.c.b16 %v5540, %v5539
    %v5580 = vpack.c.b16 %v5542, %v5541
    %v5581 = vpack.c.b16 %v5544, %v5543
    %v5582 = vpack.c.b16 %v5546, %v5545
    %v5583 = vpack.c.b16 %v5548, %v5547
    %v5584 = vpack.c.b16 %v5550, %v5549
    %v5585 = vpack.c.b16 %v5552, %v5551
    %v5586 = vpack.c.b16 %v5554, %v5553
    %5619 = vmatprep.subr.bf16.mxu0 0
    %5620 = vmatpush1.bf16.msra.mxu0 %v5562
    %5621 = vmatprep.subr.bf16.mxu0 0
    %5622 = vmatpush1.bf16.msra.mxu0 %v5561
    %5623 = vmatprep.subr.bf16.mxu0 0
    %5624 = vmatpush1.bf16.msra.mxu0 %v5560
    %5625 = vmatprep.subr.bf16.mxu0 0
    %5626 = vmatpush1.bf16.msra.mxu0 %v5559
    %5627 = vmatprep.subr.bf16.mxu0 0
    %5628 = vmatpush1.bf16.msra.mxu0 %v5558
    %5629 = vmatprep.subr.bf16.mxu0 0
    %5630 = vmatpush1.bf16.msra.mxu0 %v5557
    %5631 = vmatprep.subr.bf16.mxu0 0
    %5632 = vmatpush1.bf16.msra.mxu0 %v5556
    %5633 = vmatprep.subr.bf16.mxu0 0
    %5634 = vmatpush1.bf16.msra.mxu0 %v5555
    %5635 = vmatprep.subr.bf16.mxu0 0
    %5636 = vmatpush2.bf16.msra.mxu0 %v5570
    %5637 = vmatprep.subr.bf16.mxu0 0
    %5638 = vmatpush2.bf16.msra.mxu0 %v5569
    %5639 = vmatprep.subr.bf16.mxu0 0
    %5640 = vmatpush2.bf16.msra.mxu0 %v5568
    %5641 = vmatprep.subr.bf16.mxu0 0
    %5642 = vmatpush2.bf16.msra.mxu0 %v5567
    %5643 = vmatprep.subr.bf16.mxu0 0
    %5644 = vmatpush2.bf16.msra.mxu0 %v5566
    %5645 = vmatprep.subr.bf16.mxu0 0
    %5646 = vmatpush2.bf16.msra.mxu0 %v5565
    %5647 = vmatprep.subr.bf16.mxu0 0
    %5648 = vmatpush2.bf16.msra.mxu0 %v5564
    %5649 = vmatprep.subr.bf16.mxu0 0
    %5650 = vmatpush2.bf16.msra.mxu0 %v5563
    %5651 = vmatprep.mubr.bf16.mxu0 %v5353
    %5652 = vmatmul.mubr.bf16.gmra.mxu0 %v5352
    %v5653 = vpop.f32.mrf.mxu0
    %v5654 = vadd.f32 %v5425, %v5653
    %v5655 = vpop.f32.mrf.mxu0
    %v5656 = vpop.f32.mrf.mxu0
    %v5657 = vpop.f32.mrf.mxu0
    %5658 = vdwg.mxu0
    %5659 = vmatprep.subr.bf16.mxu0 0
    %5660 = vmatpush1.bf16.msra.mxu0 %v5578
    %5661 = vmatprep.subr.bf16.mxu0 0
    %5662 = vmatpush1.bf16.msra.mxu0 %v5577
    %5663 = vmatprep.subr.bf16.mxu0 0
    %5664 = vmatpush1.bf16.msra.mxu0 %v5576
    %5665 = vmatprep.subr.bf16.mxu0 0
    %5666 = vmatpush1.bf16.msra.mxu0 %v5575
    %5667 = vmatprep.subr.bf16.mxu0 0
    %5668 = vmatpush1.bf16.msra.mxu0 %v5574
    %5669 = vmatprep.subr.bf16.mxu0 0
    %5670 = vmatpush1.bf16.msra.mxu0 %v5573
    %5671 = vmatprep.subr.bf16.mxu0 0
    %5672 = vmatpush1.bf16.msra.mxu0 %v5572
    %5673 = vmatprep.subr.bf16.mxu0 0
    %5674 = vmatpush1.bf16.msra.mxu0 %v5571
    %5675 = vmatprep.subr.bf16.mxu0 0
    %5676 = vmatpush2.bf16.msra.mxu0 %v5586
    %5677 = vmatprep.subr.bf16.mxu0 0
    %5678 = vmatpush2.bf16.msra.mxu0 %v5585
    %5679 = vmatprep.subr.bf16.mxu0 0
    %5680 = vmatpush2.bf16.msra.mxu0 %v5584
    %5681 = vmatprep.subr.bf16.mxu0 0
    %5682 = vmatpush2.bf16.msra.mxu0 %v5583
    %5683 = vmatprep.subr.bf16.mxu0 0
    %5684 = vmatpush2.bf16.msra.mxu0 %v5582
    %5685 = vmatprep.subr.bf16.mxu0 0
    %5686 = vmatpush2.bf16.msra.mxu0 %v5581
    %5687 = vmatprep.subr.bf16.mxu0 0
    %5688 = vmatpush2.bf16.msra.mxu0 %v5580
    %5689 = vmatprep.subr.bf16.mxu0 0
    %5690 = vmatpush2.bf16.msra.mxu0 %v5579
    %5691 = vmatprep.mubr.bf16.mxu0 %v5355
    %5692 = vmatmul.mubr.bf16.gmra.mxu0 %v5354
    %v5693 = vpop.f32.mrf.mxu0
    %v5694 = vadd.f32 %v5654, %v5693
    %v5695 = vpop.f32.mrf.mxu0
    %v5696 = vpop.f32.mrf.mxu0
    %v5697 = vpop.f32.mrf.mxu0
    %5698 = vdwg.mxu0
    %vm5699 = vcmask 78848
    %5700 = vst.msk [vmem:[%s9] sm:$0x3f] %vm5699, %v5694
  $region45: #{triplet_forward.1} parent=0 // pred_fallthru
    _
  // Predicated region
  $region46: #{triplet_forward.1} parent=0 // pred_check
    _
  $region47: #{triplet_forward.1} parent=0 // pred_check_branch
    %5702 = sbr.rel (0) target = $region49
  $region48: #{triplet_forward.1} parent=0 // pred_region
    _
  $region49: #{triplet_forward.1} parent=0 // pred_fallthru
    _
  // Predicated region
  $region50: #{triplet_forward.1} parent=0 // pred_check
    _
  $region51: #{triplet_forward.1} parent=0 // pred_check_branch
    %5704 = sbr.rel (0) target = $region53
  $region52: #{triplet_forward.1} parent=0 // pred_region
    _
  $region53: #{triplet_forward.1} parent=0 // pred_fallthru
    _

// kernel: triplet_forward.1
$region0: #{triplet_forward.1}
  #allocation0 [shape = 'u32[]', space=smem, size = 0x4, offset = 0x4, fixed_abs, tag = 'smem constant byte address 0x4 - core index']
  #allocation1 [shape = 'u32[144,128]{1,0:T(1,128)}', space=vmem, size = 0x12000, scoped, tag = 'internal scratch']
  #allocation2 [shape = 'f32[32,6]{1,0:T(8,128)}', space=vmem, size = 0x4000, scoped, tag = 'scratch operand']
  %s0 = inlined_call_operand.vmem [shape: bf16[32,1536], index: 0, kind: input, shape index: {}]
  %s1 = inlined_call_operand.vmem [shape: bf16[32,32], index: 1, kind: input, shape index: {}]
  %s2 = inlined_call_operand.vmem [shape: f32[32,1], index: 2, kind: input, shape index: {}]
  %s3 = inlined_call_operand.vmem [shape: bf16[32,1280], index: 3, kind: input, shape index: {}]
  %s4 = inlined_call_operand.vmem [shape: f32[1,1280], index: 4, kind: input, shape index: {}]
  %s5 = inlined_call_operand.vmem [shape: bf16[1280,512], index: 5, kind: input, shape index: {}]
  %s6 = inlined_call_operand.vmem [shape: f32[1,512], index: 6, kind: input, shape index: {}]
  %s7 = inlined_call_operand.vmem [shape: bf16[512,10], index: 7, kind: input, shape index: {}]
  %s8 = inlined_call_operand.vmem [shape: f32[1,10], index: 8, kind: input, shape index: {}]
  %s9 = inlined_call_operand.vmem [shape: f32[1,6,10], index: 9, kind: output, shape index: {}]
  %s10 = sld [smem:[#allocation0]]
  $region54: #{triplet_forward.1} parent=0
    _
  %s12 = ssub.s32 1, %s10
  %s13 = scalar_select 0, %s12, %s10
  // Predicated region
  $region2: #{triplet_forward.1} parent=0 // pred_check
    _
  $region3: #{triplet_forward.1} parent=0 // pred_check_branch
    %15 = sbr.rel (0) target = $region5
  $region4: #{triplet_forward.1} parent=0 // pred_region
    %s16 = sadd.s32 0, 0
    %s17 = smul.u32 12, %s16
    %p18 = scmp.lt.s32.totalorder %s17, 11
    %s19 = scalar_select %p18, %s17, 11
    %s20 = smul.addr %s19, 4
    %s21 = scalar_lea.vmem %s0, %s20
    %s22 = sadd.s32 0, 0
    %s23 = smul.u32 12, %s22
  $region5: #{triplet_forward.1} parent=0 // pred_fallthru
    _
  // Predicated region
  $region6: #{triplet_forward.1} parent=0 // pred_check
    _
  $region7: #{triplet_forward.1} parent=0 // pred_check_branch
    %25 = sbr.rel (0) target = $region9
  $region8: #{triplet_forward.1} parent=0 // pred_region
    _
  $region9: #{triplet_forward.1} parent=0 // pred_fallthru
    _
  // Predicated region
  $region10: #{triplet_forward.1} parent=0 // pred_check
    _
  $region11: #{triplet_forward.1} parent=0 // pred_check_branch
    %27 = sbr.rel (0) target = $region13
  $region12: #{triplet_forward.1} parent=0 // pred_region
    _
  $region13: #{triplet_forward.1} parent=0 // pred_fallthru
    _
  // Predicated region
  $region14: #{triplet_forward.1} parent=0 // pred_check
    _
  $region15: #{triplet_forward.1} parent=0 // pred_check_branch
    %29 = sbr.rel (0) target = $region17
  $region16: #{triplet_forward.1} parent=0 // pred_region
    _
  $region17: #{triplet_forward.1} parent=0 // pred_fallthru
    _
  // Predicated region
  $region18: #{triplet_forward.1} parent=0 // pred_check
    _
  $region19: #{triplet_forward.1} parent=0 // pred_check_branch
    %31 = sbr.rel (0) target = $region21
  $region20: #{triplet_forward.1} parent=0 // pred_region
    _
  $region21: #{triplet_forward.1} parent=0 // pred_fallthru
    _
  // Predicated region
  $region22: #{triplet_forward.1} parent=0 // pred_check
    _
  $region23: #{triplet_forward.1} parent=0 // pred_check_branch
    %33 = sbr.rel (0) target = $region25
  $region24: #{triplet_forward.1} parent=0 // pred_region
    _
  $region25: #{triplet_forward.1} parent=0 // pred_fallthru
    _
  // Predicated region
  $region26: #{triplet_forward.1} parent=0 // pred_check
    _
  $region27: #{triplet_forward.1} parent=0 // pred_check_branch
    %35 = sbr.rel (0) target = $region29
  $region28: #{triplet_forward.1} parent=0 // pred_region
    _
  $region29: #{triplet_forward.1} parent=0 // pred_fallthru
    _
  // Predicated region
  $region30: #{triplet_forward.1} parent=0 // pred_check
    _
  $region31: #{triplet_forward.1} parent=0 // pred_check_branch
    %37 = sbr.rel (0) target = $region33
  $region32: #{triplet_forward.1} parent=0 // pred_region
    _
  $region33: #{triplet_forward.1} parent=0 // pred_fallthru
    _
  // Predicated region
  $region34: #{triplet_forward.1} parent=0 // pred_check
    _
  $region35: #{triplet_forward.1} parent=0 // pred_check_branch
    %39 = sbr.rel (0) target = $region37
  $region36: #{triplet_forward.1} parent=0 // pred_region
    _
  $region37: #{triplet_forward.1} parent=0 // pred_fallthru
    _
  %s40 = sadd.s32 0, 0
  %s41 = smul.u32 12, %s40
  %p42 = scmp.lt.s32.totalorder %s41, 11
  %s43 = scalar_select %p42, %s41, 11
  %s44 = smul.addr %s43, 4
  %s45 = scalar_lea.vmem %s0, %s44
  %s46 = sadd.s32 0, 0
  %s47 = smul.u32 12, %s46
  %p48 = scmp.lt.s32.totalorder %s47, 11
  %s49 = scalar_select %p48, %s47, 11
  %s50 = smul.addr %s49, 4
  %s51 = scalar_lea.vmem %s0, %s50
  %s52 = sadd.s32 0, 0
  %s53 = smul.u32 12, %s52
  %p55 = scmp.eq.s32.totalorder 0, 0
  // Predicated region
  $region38: #{triplet_forward.1} parent=0 // pred_check
    %p56 = pneg %p55
  $region39: #{triplet_forward.1} parent=0 // pred_check_branch
    %58 = sbr.rel (%p56) target = $region41
  $region40: #{triplet_forward.1} parent=0 // pred_region
    %vm59 = vcmask 48128
    %60 = vst.msk [vmem:[#allocation2] sm:$0xff] %vm59, 0.0
    %61 = vst.msk [vmem:[#allocation2 + $0x8] sm:$0xff] %vm59, 0.0
    %62 = vst.msk [vmem:[#allocation2 + $0x10] sm:$0xff] %vm59, 0.0
    %63 = vst.msk [vmem:[#allocation2 + $0x18] sm:$0xff] %vm59, 0.0
  $region41: #{triplet_forward.1} parent=0 // pred_fallthru
    _
  %v64 = vld [vmem:[%s1] sm:$0xf]
  %v65 = vld [vmem:[%s1 + $0x4] sm:$0xf]
  %v66 = vld [vmem:[%s1 + $0x8] sm:$0xf]
  %v67 = vld [vmem:[%s1 + $0xc] sm:$0xf]
  %v68 = vld [vmem:[%s51] sm:$0xff]
  %v69 = vld [vmem:[%s51 + $0x8] sm:$0xff]
  %v70 = vld [vmem:[%s51 + $0x10] sm:$0xff]
  %v71 = vld [vmem:[%s51 + $0x18] sm:$0xff]
  %v72 = vld [vmem:[%s51 + $0x20] sm:$0xff]
  %v73 = vld [vmem:[%s51 + $0x28] sm:$0xff]
  %v74 = vld [vmem:[%s51 + $0x30] sm:$0xff]
  %v75 = vld [vmem:[%s51 + $0x38] sm:$0xff]
  %v76 = vld [vmem:[%s51 + $0x40] sm:$0xff]
  %v77 = vld [vmem:[%s51 + $0x48] sm:$0xff]
  %v78 = vld [vmem:[%s51 + $0x50] sm:$0xff]
  %v79 = vld [vmem:[%s51 + $0x58] sm:$0xff]
  %v80 = vld [vmem:[%s51 + $0x60] sm:$0xff]
  %v81 = vld [vmem:[%s51 + $0x68] sm:$0xff]
  %v82 = vld [vmem:[%s51 + $0x70] sm:$0xff]
  %v83 = vld [vmem:[%s51 + $0x78] sm:$0xff]
  %v84 = vld [vmem:[%s51 + $0x80] sm:$0xff]
  %v85 = vld [vmem:[%s51 + $0x88] sm:$0xff]
  %v86 = vld [vmem:[%s51 + $0x90] sm:$0xff]
  %v87 = vld [vmem:[%s51 + $0x98] sm:$0xff]
  %v88 = vld [vmem:[%s51 + $0xa0] sm:$0xff]
  %v89 = vld [vmem:[%s51 + $0xa8] sm:$0xff]
  %v90 = vld [vmem:[%s51 + $0xb0] sm:$0xff]
  %v91 = vld [vmem:[%s51 + $0xb8] sm:$0xff]
  %v92 = vld [vmem:[%s2] sm:$0xff]
  %v93 = vld [vmem:[%s2 + $0x8] sm:$0xff]
  %v94 = vld [vmem:[%s2 + $0x10] sm:$0xff]
  %v95 = vld [vmem:[%s2 + $0x18] sm:$0xff]
  %97 = vset.pattern.permute.xlu0 0
  %98 = vperm.xlu0 %97, %v92
  %v99 = vpop.permute.xlu0 %98
  %102 = vset.pattern.permute.xlu0 0
  %103 = vperm.xlu0 %102, %v93
  %v104 = vpop.permute.xlu0 %103
  %107 = vset.pattern.permute.xlu0 0
  %108 = vperm.xlu0 %107, %v94
  %v109 = vpop.permute.xlu0 %108
  %112 = vset.pattern.permute.xlu0 0
  %113 = vperm.xlu0 %112, %v95
  %v114 = vpop.permute.xlu0 %113
  %v120 = vunpack.c.l.b16 %v64
  %v121 = vunpack.c.l.b16 %v65
  %v122 = vunpack.c.l.b16 %v66
  %v123 = vunpack.c.l.b16 %v67
  %v124 = vpack.c.b16 %v121, %v120
  %v125 = vpack.c.b16 %v123, %v122
  %v150 = vunpack.c.l.b16 %v68
  %v151 = vunpack.c.h.b16 %v68
  %v152 = vunpack.c.l.b16 %v69
  %v153 = vunpack.c.h.b16 %v69
  %v154 = vunpack.c.l.b16 %v70
  %v155 = vunpack.c.h.b16 %v70
  %v156 = vunpack.c.l.b16 %v71
  %v157 = vunpack.c.h.b16 %v71
  %v158 = vunpack.c.l.b16 %v72
  %v159 = vunpack.c.h.b16 %v72
  %v160 = vunpack.c.l.b16 %v73
  %v161 = vunpack.c.h.b16 %v73
  %v162 = vunpack.c.l.b16 %v74
  %v163 = vunpack.c.h.b16 %v74
  %v164 = vunpack.c.l.b16 %v75
  %v165 = vunpack.c.h.b16 %v75
  %v166 = vunpack.c.l.b16 %v76
  %v167 = vunpack.c.h.b16 %v76
  %v168 = vunpack.c.l.b16 %v77
  %v169 = vunpack.c.h.b16 %v77
  %v170 = vunpack.c.l.b16 %v78
  %v171 = vunpack.c.h.b16 %v78
  %v172 = vunpack.c.l.b16 %v79
  %v173 = vunpack.c.h.b16 %v79
  %v174 = vunpack.c.l.b16 %v80
  %v175 = vunpack.c.h.b16 %v80
  %v176 = vunpack.c.l.b16 %v81
  %v177 = vunpack.c.h.b16 %v81
  %v178 = vunpack.c.l.b16 %v82
  %v179 = vunpack.c.h.b16 %v82
  %v180 = vunpack.c.l.b16 %v83
  %v181 = vunpack.c.h.b16 %v83
  %v182 = vunpack.c.l.b16 %v84
  %v183 = vunpack.c.h.b16 %v84
  %v184 = vunpack.c.l.b16 %v85
  %v185 = vunpack.c.h.b16 %v85
  %v186 = vunpack.c.l.b16 %v86
  %v187 = vunpack.c.h.b16 %v86
  %v188 = vunpack.c.l.b16 %v87
  %v189 = vunpack.c.h.b16 %v87
  %v190 = vunpack.c.l.b16 %v88
  %v191 = vunpack.c.h.b16 %v88
  %v192 = vunpack.c.l.b16 %v89
  %v193 = vunpack.c.h.b16 %v89
  %v194 = vunpack.c.l.b16 %v90
  %v195 = vunpack.c.h.b16 %v90
  %v196 = vunpack.c.l.b16 %v91
  %v197 = vunpack.c.h.b16 %v91
  %v198 = vpack.c.b16 %v162, %v150
  %v199 = vpack.c.b16 %v163, %v151
  %v200 = vpack.c.b16 %v164, %v152
  %v201 = vpack.c.b16 %v165, %v153
  %v202 = vpack.c.b16 %v166, %v154
  %v203 = vpack.c.b16 %v167, %v155
  %v204 = vpack.c.b16 %v168, %v156
  %v205 = vpack.c.b16 %v169, %v157
  %v206 = vpack.c.b16 %v170, %v158
  %v207 = vpack.c.b16 %v171, %v159
  %v208 = vpack.c.b16 %v172, %v160
  %v209 = vpack.c.b16 %v173, %v161
  %v210 = vpack.c.b16 %v186, %v174
  %v211 = vpack.c.b16 %v187, %v175
  %v212 = vpack.c.b16 %v188, %v176
  %v213 = vpack.c.b16 %v189, %v177
  %v214 = vpack.c.b16 %v190, %v178
  %v215 = vpack.c.b16 %v191, %v179
  %v216 = vpack.c.b16 %v192, %v180
  %v217 = vpack.c.b16 %v193, %v181
  %v218 = vpack.c.b16 %v194, %v182
  %v219 = vpack.c.b16 %v195, %v183
  %v220 = vpack.c.b16 %v196, %v184
  %v221 = vpack.c.b16 %v197, %v185
  %vm246 = vcmask 261120
  %v248 = vsel %vm246, %v124, 0
  %v251 = vsel %vm246, %v125, 0
  %253 = vmatprep.subr.bf16.mxu0 0
  %254 = vmatpush1.bf16.msra.mxu0 0
  %255 = vmatprep.subr.bf16.mxu0 0
  %256 = vmatpush1.bf16.msra.mxu0 0
  %257 = vmatprep.subr.bf16.mxu0 0
  %258 = vmatpush1.bf16.msra.mxu0 0
  %259 = vmatprep.subr.bf16.mxu0 0
  %260 = vmatpush1.bf16.msra.mxu0 0
  %261 = vmatprep.subr.bf16.mxu0 0
  %262 = vmatpush1.bf16.msra.mxu0 0
  %263 = vmatprep.subr.bf16.mxu0 0
  %264 = vmatpush1.bf16.msra.mxu0 0
  %265 = vmatprep.subr.bf16.mxu0 %v211
  %266 = vmatpush1.bf16.msra.mxu0 %v210
  %267 = vmatprep.subr.bf16.mxu0 %v199
  %268 = vmatpush1.bf16.msra.mxu0 %v198
  %269 = vmatprep.subr.bf16.mxu0 0
  %270 = vmatpush2.bf16.msra.mxu0 0
  %271 = vmatprep.subr.bf16.mxu0 0
  %272 = vmatpush2.bf16.msra.mxu0 0
  %273 = vmatprep.subr.bf16.mxu0 0
  %274 = vmatpush2.bf16.msra.mxu0 0
  %275 = vmatprep.subr.bf16.mxu0 0
  %276 = vmatpush2.bf16.msra.mxu0 0
  %277 = vmatprep.subr.bf16.mxu0 0
  %278 = vmatpush2.bf16.msra.mxu0 0
  %279 = vmatprep.subr.bf16.mxu0 0
  %280 = vmatpush2.bf16.msra.mxu0 0
  %281 = vmatprep.subr.bf16.mxu0 0
  %282 = vmatpush2.bf16.msra.mxu0 0
  %283 = vmatprep.subr.bf16.mxu0 0
  %284 = vmatpush2.bf16.msra.mxu0 0
  %285 = vmatprep.mubr.bf16.mxu0 0
  %286 = vmatmul.mubr.bf16.gmra.mxu0 %v248
  %v287 = vpop.f32.mrf.mxu0
  %v288 = vadd.f32 %v99, %v287
  %v289 = vpop.f32.mrf.mxu0
  %v290 = vadd.f32 %v99, %v289
  %v291 = vpop.f32.mrf.mxu0
  %v292 = vadd.f32 %v104, %v291
  %v293 = vpop.f32.mrf.mxu0
  %v294 = vadd.f32 %v104, %v293
  %295 = vmatprep.mubr.bf16.mxu0 0
  %296 = vmatmul.mubr.bf16.gmra.mxu0 %v251
  %v297 = vpop.f32.mrf.mxu0
  %v298 = vadd.f32 %v109, %v297
  %v299 = vpop.f32.mrf.mxu0
  %v300 = vadd.f32 %v109, %v299
  %v301 = vpop.f32.mrf.mxu0
  %v302 = vadd.f32 %v114, %v301
  %v303 = vpop.f32.mrf.mxu0
  %v304 = vadd.f32 %v114, %v303
  %305 = vdwg.mxu0
  %306 = vmatprep.subr.bf16.mxu0 0
  %307 = vmatpush1.bf16.msra.mxu0 0
  %308 = vmatprep.subr.bf16.mxu0 0
  %309 = vmatpush1.bf16.msra.mxu0 0
  %310 = vmatprep.subr.bf16.mxu0 0
  %311 = vmatpush1.bf16.msra.mxu0 0
  %312 = vmatprep.subr.bf16.mxu0 0
  %313 = vmatpush1.bf16.msra.mxu0 0
  %314 = vmatprep.subr.bf16.mxu0 0
  %315 = vmatpush1.bf16.msra.mxu0 0
  %316 = vmatprep.subr.bf16.mxu0 0
  %317 = vmatpush1.bf16.msra.mxu0 0
  %318 = vmatprep.subr.bf16.mxu0 %v213
  %319 = vmatpush1.bf16.msra.mxu0 %v212
  %320 = vmatprep.subr.bf16.mxu0 %v201
  %321 = vmatpush1.bf16.msra.mxu0 %v200
  %322 = vmatprep.subr.bf16.mxu0 0
  %323 = vmatpush2.bf16.msra.mxu0 0
  %324 = vmatprep.subr.bf16.mxu0 0
  %325 = vmatpush2.bf16.msra.mxu0 0
  %326 = vmatprep.subr.bf16.mxu0 0
  %327 = vmatpush2.bf16.msra.mxu0 0
  %328 = vmatprep.subr.bf16.mxu0 0
  %329 = vmatpush2.bf16.msra.mxu0 0
  %330 = vmatprep.subr.bf16.mxu0 0
  %331 = vmatpush2.bf16.msra.mxu0 0
  %332 = vmatprep.subr.bf16.mxu0 0
  %333 = vmatpush2.bf16.msra.mxu0 0
  %334 = vmatprep.subr.bf16.mxu0 0
  %335 = vmatpush2.bf16.msra.mxu0 0
  %336 = vmatprep.subr.bf16.mxu0 0
  %337 = vmatpush2.bf16.msra.mxu0 0
  %338 = vmatprep.mubr.bf16.mxu0 0
  %339 = vmatmul.mubr.bf16.gmra.mxu0 %v248
  %v340 = vpop.f32.mrf.mxu0
  %v341 = vadd.f32 %v99, %v340
  %v342 = vpop.f32.mrf.mxu0
  %v343 = vadd.f32 %v99, %v342
  %v344 = vpop.f32.mrf.mxu0
  %v345 = vadd.f32 %v104, %v344
  %v346 = vpop.f32.mrf.mxu0
  %v347 = vadd.f32 %v104, %v346
  %348 = vmatprep.mubr.bf16.mxu0 0
  %349 = vmatmul.mubr.bf16.gmra.mxu0 %v251
  %v350 = vpop.f32.mrf.mxu0
  %v351 = vadd.f32 %v109, %v350
  %v352 = vpop.f32.mrf.mxu0
  %v353 = vadd.f32 %v109, %v352
  %v354 = vpop.f32.mrf.mxu0
  %v355 = vadd.f32 %v114, %v354
  %v356 = vpop.f32.mrf.mxu0
  %v357 = vadd.f32 %v114, %v356
  %358 = vdwg.mxu0
  %359 = vmatprep.subr.bf16.mxu0 0
  %360 = vmatpush1.bf16.msra.mxu0 0
  %361 = vmatprep.subr.bf16.mxu0 0
  %362 = vmatpush1.bf16.msra.mxu0 0
  %363 = vmatprep.subr.bf16.mxu0 0
  %364 = vmatpush1.bf16.msra.mxu0 0
  %365 = vmatprep.subr.bf16.mxu0 0
  %366 = vmatpush1.bf16.msra.mxu0 0
  %367 = vmatprep.subr.bf16.mxu0 0
  %368 = vmatpush1.bf16.msra.mxu0 0
  %369 = vmatprep.subr.bf16.mxu0 0
  %370 = vmatpush1.bf16.msra.mxu0 0
  %371 = vmatprep.subr.bf16.mxu0 %v215
  %372 = vmatpush1.bf16.msra.mxu0 %v214
  %373 = vmatprep.subr.bf16.mxu0 %v203
  %374 = vmatpush1.bf16.msra.mxu0 %v202
  %375 = vmatprep.subr.bf16.mxu0 0
  %376 = vmatpush2.bf16.msra.mxu0 0
  %377 = vmatprep.subr.bf16.mxu0 0
  %378 = vmatpush2.bf16.msra.mxu0 0
  %379 = vmatprep.subr.bf16.mxu0 0
  %380 = vmatpush2.bf16.msra.mxu0 0
  %381 = vmatprep.subr.bf16.mxu0 0
  %382 = vmatpush2.bf16.msra.mxu0 0
  %383 = vmatprep.subr.bf16.mxu0 0
  %384 = vmatpush2.bf16.msra.mxu0 0
  %385 = vmatprep.subr.bf16.mxu0 0
  %386 = vmatpush2.bf16.msra.mxu0 0
  %387 = vmatprep.subr.bf16.mxu0 0
  %388 = vmatpush2.bf16.msra.mxu0 0
  %389 = vmatprep.subr.bf16.mxu0 0
  %390 = vmatpush2.bf16.msra.mxu0 0
  %391 = vmatprep.mubr.bf16.mxu0 0
  %392 = vmatmul.mubr.bf16.gmra.mxu0 %v248
  %v393 = vpop.f32.mrf.mxu0
  %v394 = vadd.f32 %v99, %v393
  %v395 = vpop.f32.mrf.mxu0
  %v396 = vadd.f32 %v99, %v395
  %v397 = vpop.f32.mrf.mxu0
  %v398 = vadd.f32 %v104, %v397
  %v399 = vpop.f32.mrf.mxu0
  %v400 = vadd.f32 %v104, %v399
  %401 = vmatprep.mubr.bf16.mxu0 0
  %402 = vmatmul.mubr.bf16.gmra.mxu0 %v251
  %v403 = vpop.f32.mrf.mxu0
  %v404 = vadd.f32 %v109, %v403
  %v405 = vpop.f32.mrf.mxu0
  %v406 = vadd.f32 %v109, %v405
  %v407 = vpop.f32.mrf.mxu0
  %v408 = vadd.f32 %v114, %v407
  %v409 = vpop.f32.mrf.mxu0
  %v410 = vadd.f32 %v114, %v409
  %411 = vdwg.mxu0
  %412 = vmatprep.subr.bf16.mxu0 0
  %413 = vmatpush1.bf16.msra.mxu0 0
  %414 = vmatprep.subr.bf16.mxu0 0
  %415 = vmatpush1.bf16.msra.mxu0 0
  %416 = vmatprep.subr.bf16.mxu0 0
  %417 = vmatpush1.bf16.msra.mxu0 0
  %418 = vmatprep.subr.bf16.mxu0 0
  %419 = vmatpush1.bf16.msra.mxu0 0
  %420 = vmatprep.subr.bf16.mxu0 0
  %421 = vmatpush1.bf16.msra.mxu0 0
  %422 = vmatprep.subr.bf16.mxu0 0
  %423 = vmatpush1.bf16.msra.mxu0 0
  %424 = vmatprep.subr.bf16.mxu0 %v217
  %425 = vmatpush1.bf16.msra.mxu0 %v216
  %426 = vmatprep.subr.bf16.mxu0 %v205
  %427 = vmatpush1.bf16.msra.mxu0 %v204
  %428 = vmatprep.subr.bf16.mxu0 0
  %429 = vmatpush2.bf16.msra.mxu0 0
  %430 = vmatprep.subr.bf16.mxu0 0
  %431 = vmatpush2.bf16.msra.mxu0 0
  %432 = vmatprep.subr.bf16.mxu0 0
  %433 = vmatpush2.bf16.msra.mxu0 0
  %434 = vmatprep.subr.bf16.mxu0 0
  %435 = vmatpush2.bf16.msra.mxu0 0
  %436 = vmatprep.subr.bf16.mxu0 0
  %437 = vmatpush2.bf16.msra.mxu0 0
  %438 = vmatprep.subr.bf16.mxu0 0
  %439 = vmatpush2.bf16.msra.mxu0 0
  %440 = vmatprep.subr.bf16.mxu0 0
  %441 = vmatpush2.bf16.msra.mxu0 0
  %442 = vmatprep.subr.bf16.mxu0 0
  %443 = vmatpush2.bf16.msra.mxu0 0
  %444 = vmatprep.mubr.bf16.mxu0 0
  %445 = vmatmul.mubr.bf16.gmra.mxu0 %v248
  %v446 = vpop.f32.mrf.mxu0
  %v447 = vadd.f32 %v99, %v446
  %v448 = vpop.f32.mrf.mxu0
  %v449 = vadd.f32 %v99, %v448
  %v450 = vpop.f32.mrf.mxu0
  %v451 = vadd.f32 %v104, %v450
  %v452 = vpop.f32.mrf.mxu0
  %v453 = vadd.f32 %v104, %v452
  %454 = vmatprep.mubr.bf16.mxu0 0
  %455 = vmatmul.mubr.bf16.gmra.mxu0 %v251
  %v456 = vpop.f32.mrf.mxu0
  %v457 = vadd.f32 %v109, %v456
  %v458 = vpop.f32.mrf.mxu0
  %v459 = vadd.f32 %v109, %v458
  %v460 = vpop.f32.mrf.mxu0
  %v461 = vadd.f32 %v114, %v460
  %v462 = vpop.f32.mrf.mxu0
  %v463 = vadd.f32 %v114, %v462
  %464 = vdwg.mxu0
  %465 = vmatprep.subr.bf16.mxu0 0
  %466 = vmatpush1.bf16.msra.mxu0 0
  %467 = vmatprep.subr.bf16.mxu0 0
  %468 = vmatpush1.bf16.msra.mxu0 0
  %469 = vmatprep.subr.bf16.mxu0 0
  %470 = vmatpush1.bf16.msra.mxu0 0
  %471 = vmatprep.subr.bf16.mxu0 0
  %472 = vmatpush1.bf16.msra.mxu0 0
  %473 = vmatprep.subr.bf16.mxu0 0
  %474 = vmatpush1.bf16.msra.mxu0 0
  %475 = vmatprep.subr.bf16.mxu0 0
  %476 = vmatpush1.bf16.msra.mxu0 0
  %477 = vmatprep.subr.bf16.mxu0 %v219
  %478 = vmatpush1.bf16.msra.mxu0 %v218
  %479 = vmatprep.subr.bf16.mxu0 %v207
  %480 = vmatpush1.bf16.msra.mxu0 %v206
  %481 = vmatprep.subr.bf16.mxu0 0
  %482 = vmatpush2.bf16.msra.mxu0 0
  %483 = vmatprep.subr.bf16.mxu0 0
  %484 = vmatpush2.bf16.msra.mxu0 0
  %485 = vmatprep.subr.bf16.mxu0 0
  %486 = vmatpush2.bf16.msra.mxu0 0
  %487 = vmatprep.subr.bf16.mxu0 0
  %488 = vmatpush2.bf16.msra.mxu0 0
  %489 = vmatprep.subr.bf16.mxu0 0
  %490 = vmatpush2.bf16.msra.mxu0 0
  %491 = vmatprep.subr.bf16.mxu0 0
  %492 = vmatpush2.bf16.msra.mxu0 0
  %493 = vmatprep.subr.bf16.mxu0 0
  %494 = vmatpush2.bf16.msra.mxu0 0
  %495 = vmatprep.subr.bf16.mxu0 0
  %496 = vmatpush2.bf16.msra.mxu0 0
  %497 = vmatprep.mubr.bf16.mxu0 0
  %498 = vmatmul.mubr.bf16.gmra.mxu0 %v248
  %v499 = vpop.f32.mrf.mxu0
  %v500 = vadd.f32 %v99, %v499
  %v501 = vpop.f32.mrf.mxu0
  %v502 = vadd.f32 %v99, %v501
  %v503 = vpop.f32.mrf.mxu0
  %v504 = vadd.f32 %v104, %v503
  %v505 = vpop.f32.mrf.mxu0
  %v506 = vadd.f32 %v104, %v505
  %507 = vmatprep.mubr.bf16.mxu0 0
  %508 = vmatmul.mubr.bf16.gmra.mxu0 %v251
  %v509 = vpop.f32.mrf.mxu0
  %v510 = vadd.f32 %v109, %v509
  %v511 = vpop.f32.mrf.mxu0
  %v512 = vadd.f32 %v109, %v511
  %v513 = vpop.f32.mrf.mxu0
  %v514 = vadd.f32 %v114, %v513
  %v515 = vpop.f32.mrf.mxu0
  %v516 = vadd.f32 %v114, %v515
  %517 = vdwg.mxu0
  %518 = vmatprep.subr.bf16.mxu0 0
  %519 = vmatpush1.bf16.msra.mxu0 0
  %520 = vmatprep.subr.bf16.mxu0 0
  %521 = vmatpush1.bf16.msra.mxu0 0
  %522 = vmatprep.subr.bf16.mxu0 0
  %523 = vmatpush1.bf16.msra.mxu0 0
  %524 = vmatprep.subr.bf16.mxu0 0
  %525 = vmatpush1.bf16.msra.mxu0 0
  %526 = vmatprep.subr.bf16.mxu0 0
  %527 = vmatpush1.bf16.msra.mxu0 0
  %528 = vmatprep.subr.bf16.mxu0 0
  %529 = vmatpush1.bf16.msra.mxu0 0
  %530 = vmatprep.subr.bf16.mxu0 %v221
  %531 = vmatpush1.bf16.msra.mxu0 %v220
  %532 = vmatprep.subr.bf16.mxu0 %v209
  %533 = vmatpush1.bf16.msra.mxu0 %v208
  %534 = vmatprep.subr.bf16.mxu0 0
  %535 = vmatpush2.bf16.msra.mxu0 0
  %536 = vmatprep.subr.bf16.mxu0 0
  %537 = vmatpush2.bf16.msra.mxu0 0
  %538 = vmatprep.subr.bf16.mxu0 0
  %539 = vmatpush2.bf16.msra.mxu0 0
  %540 = vmatprep.subr.bf16.mxu0 0
  %541 = vmatpush2.bf16.msra.mxu0 0
  %542 = vmatprep.subr.bf16.mxu0 0
  %543 = vmatpush2.bf16.msra.mxu0 0
  %544 = vmatprep.subr.bf16.mxu0 0
  %545 = vmatpush2.bf16.msra.mxu0 0
  %546 = vmatprep.subr.bf16.mxu0 0
  %547 = vmatpush2.bf16.msra.mxu0 0
  %548 = vmatprep.subr.bf16.mxu0 0
  %549 = vmatpush2.bf16.msra.mxu0 0
  %550 = vmatprep.mubr.bf16.mxu0 0
  %551 = vmatmul.mubr.bf16.gmra.mxu0 %v248
  %v552 = vpop.f32.mrf.mxu0
  %v553 = vadd.f32 %v99, %v552
  %v554 = vpop.f32.mrf.mxu0
  %v555 = vadd.f32 %v99, %v554
  %v556 = vpop.f32.mrf.mxu0
  %v557 = vadd.f32 %v104, %v556
  %v558 = vpop.f32.mrf.mxu0
  %v559 = vadd.f32 %v104, %v558
  %560 = vmatprep.mubr.bf16.mxu0 0
  %561 = vmatmul.mubr.bf16.gmra.mxu0 %v251
  %v562 = vpop.f32.mrf.mxu0
  %v563 = vadd.f32 %v109, %v562
  %v564 = vpop.f32.mrf.mxu0
  %v565 = vadd.f32 %v109, %v564
  %v566 = vpop.f32.mrf.mxu0
  %v567 = vadd.f32 %v114, %v566
  %v568 = vpop.f32.mrf.mxu0
  %v569 = vadd.f32 %v114, %v568
  %570 = vdwg.mxu0
  %v571 = vxor.u32 %v288, 2147483648
  %v572 = vxor.u32 %v290, 2147483648
  %v573 = vxor.u32 %v341, 2147483648
  %v574 = vxor.u32 %v343, 2147483648
  %v575 = vxor.u32 %v394, 2147483648
  %v576 = vxor.u32 %v396, 2147483648
  %v577 = vxor.u32 %v447, 2147483648
  %v578 = vxor.u32 %v449, 2147483648
  %v579 = vxor.u32 %v500, 2147483648
  %v580 = vxor.u32 %v502, 2147483648
  %v581 = vxor.u32 %v553, 2147483648
  %v582 = vxor.u32 %v555, 2147483648
  %v583 = vxor.u32 %v292, 2147483648
  %v584 = vxor.u32 %v294, 2147483648
  %v585 = vxor.u32 %v345, 2147483648
  %v586 = vxor.u32 %v347, 2147483648
  %v587 = vxor.u32 %v398, 2147483648
  %v588 = vxor.u32 %v400, 2147483648
  %v589 = vxor.u32 %v451, 2147483648
  %v590 = vxor.u32 %v453, 2147483648
  %v591 = vxor.u32 %v504, 2147483648
  %v592 = vxor.u32 %v506, 2147483648
  %v593 = vxor.u32 %v557, 2147483648
  %v594 = vxor.u32 %v559, 2147483648
  %v595 = vxor.u32 %v298, 2147483648
  %v596 = vxor.u32 %v300, 2147483648
  %v597 = vxor.u32 %v351, 2147483648
  %v598 = vxor.u32 %v353, 2147483648
  %v599 = vxor.u32 %v404, 2147483648
  %v600 = vxor.u32 %v406, 2147483648
  %v601 = vxor.u32 %v457, 2147483648
  %v602 = vxor.u32 %v459, 2147483648
  %v603 = vxor.u32 %v510, 2147483648
  %v604 = vxor.u32 %v512, 2147483648
  %v605 = vxor.u32 %v563, 2147483648
  %v606 = vxor.u32 %v565, 2147483648
  %v607 = vxor.u32 %v302, 2147483648
  %v608 = vxor.u32 %v304, 2147483648
  %v609 = vxor.u32 %v355, 2147483648
  %v610 = vxor.u32 %v357, 2147483648
  %v611 = vxor.u32 %v408, 2147483648
  %v612 = vxor.u32 %v410, 2147483648
  %v613 = vxor.u32 %v461, 2147483648
  %v614 = vxor.u32 %v463, 2147483648
  %v615 = vxor.u32 %v514, 2147483648
  %v616 = vxor.u32 %v516, 2147483648
  %v617 = vxor.u32 %v567, 2147483648
  %v618 = vxor.u32 %v569, 2147483648
  %v619 = vmul.f32 %v571, 1.442695
  %v620 = vpow.pop %v619
  %v621 = vmul.f32 %v572, 1.442695
  %v622 = vpow.pop %v621
  %v623 = vmul.f32 %v573, 1.442695
  %v624 = vpow.pop %v623
  %v625 = vmul.f32 %v574, 1.442695
  %v626 = vpow.pop %v625
  %v627 = vmul.f32 %v575, 1.442695
  %v628 = vpow.pop %v627
  %v629 = vmul.f32 %v576, 1.442695
  %v630 = vpow.pop %v629
  %v631 = vmul.f32 %v577, 1.442695
  %v632 = vpow.pop %v631
  %v633 = vmul.f32 %v578, 1.442695
  %v634 = vpow.pop %v633
  %v635 = vmul.f32 %v579, 1.442695
  %v636 = vpow.pop %v635
  %v637 = vmul.f32 %v580, 1.442695
  %v638 = vpow.pop %v637
  %v639 = vmul.f32 %v581, 1.442695
  %v640 = vpow.pop %v639
  %v641 = vmul.f32 %v582, 1.442695
  %v642 = vpow.pop %v641
  %v643 = vmul.f32 %v583, 1.442695
  %v644 = vpow.pop %v643
  %v645 = vmul.f32 %v584, 1.442695
  %v646 = vpow.pop %v645
  %v647 = vmul.f32 %v585, 1.442695
  %v648 = vpow.pop %v647
  %v649 = vmul.f32 %v586, 1.442695
  %v650 = vpow.pop %v649
  %v651 = vmul.f32 %v587, 1.442695
  %v652 = vpow.pop %v651
  %v653 = vmul.f32 %v588, 1.442695
  %v654 = vpow.pop %v653
  %v655 = vmul.f32 %v589, 1.442695
  %v656 = vpow.pop %v655
  %v657 = vmul.f32 %v590, 1.442695
  %v658 = vpow.pop %v657
  %v659 = vmul.f32 %v591, 1.442695
  %v660 = vpow.pop %v659
  %v661 = vmul.f32 %v592, 1.442695
  %v662 = vpow.pop %v661
  %v663 = vmul.f32 %v593, 1.442695
  %v664 = vpow.pop %v663
  %v665 = vmul.f32 %v594, 1.442695
  %v666 = vpow.pop %v665
  %v667 = vmul.f32 %v595, 1.442695
  %v668 = vpow.pop %v667
  %v669 = vmul.f32 %v596, 1.442695
  %v670 = vpow.pop %v669
  %v671 = vmul.f32 %v597, 1.442695
  %v672 = vpow.pop %v671
  %v673 = vmul.f32 %v598, 1.442695
  %v674 = vpow.pop %v673
  %v675 = vmul.f32 %v599, 1.442695
  %v676 = vpow.pop %v675
  %v677 = vmul.f32 %v600, 1.442695
  %v678 = vpow.pop %v677
  %v679 = vmul.f32 %v601, 1.442695
  %v680 = vpow.pop %v679
  %v681 = vmul.f32 %v602, 1.442695
  %v682 = vpow.pop %v681
  %v683 = vmul.f32 %v603, 1.442695
  %v684 = vpow.pop %v683
  %v685 = vmul.f32 %v604, 1.442695
  %v686 = vpow.pop %v685
  %v687 = vmul.f32 %v605, 1.442695
  %v688 = vpow.pop %v687
  %v689 = vmul.f32 %v606, 1.442695
  %v690 = vpow.pop %v689
  %v691 = vmul.f32 %v607, 1.442695
  %v692 = vpow.pop %v691
  %v693 = vmul.f32 %v608, 1.442695
  %v694 = vpow.pop %v693
  %v695 = vmul.f32 %v609, 1.442695
  %v696 = vpow.pop %v695
  %v697 = vmul.f32 %v610, 1.442695
  %v698 = vpow.pop %v697
  %v699 = vmul.f32 %v611, 1.442695
  %v700 = vpow.pop %v699
  %v701 = vmul.f32 %v612, 1.442695
  %v702 = vpow.pop %v701
  %v703 = vmul.f32 %v613, 1.442695
  %v704 = vpow.pop %v703
  %v705 = vmul.f32 %v614, 1.442695
  %v706 = vpow.pop %v705
  %v707 = vmul.f32 %v615, 1.442695
  %v708 = vpow.pop %v707
  %v709 = vmul.f32 %v616, 1.442695
  %v710 = vpow.pop %v709
  %v711 = vmul.f32 %v617, 1.442695
  %v712 = vpow.pop %v711
  %v713 = vmul.f32 %v618, 1.442695
  %v714 = vpow.pop %v713
  %v715 = vadd.f32 %v620, 1.0
  %v716 = vadd.f32 %v622, 1.0
  %v717 = vadd.f32 %v624, 1.0
  %v718 = vadd.f32 %v626, 1.0
  %v719 = vadd.f32 %v628, 1.0
  %v720 = vadd.f32 %v630, 1.0
  %v721 = vadd.f32 %v632, 1.0
  %v722 = vadd.f32 %v634, 1.0
  %v723 = vadd.f32 %v636, 1.0
  %v724 = vadd.f32 %v638, 1.0
  %v725 = vadd.f32 %v640, 1.0
  %v726 = vadd.f32 %v642, 1.0
  %v727 = vadd.f32 %v644, 1.0
  %v728 = vadd.f32 %v646, 1.0
  %v729 = vadd.f32 %v648, 1.0
  %v730 = vadd.f32 %v650, 1.0
  %v731 = vadd.f32 %v652, 1.0
  %v732 = vadd.f32 %v654, 1.0
  %v733 = vadd.f32 %v656, 1.0
  %v734 = vadd.f32 %v658, 1.0
  %v735 = vadd.f32 %v660, 1.0
  %v736 = vadd.f32 %v662, 1.0
  %v737 = vadd.f32 %v664, 1.0
  %v738 = vadd.f32 %v666, 1.0
  %v739 = vadd.f32 %v668, 1.0
  %v740 = vadd.f32 %v670, 1.0
  %v741 = vadd.f32 %v672, 1.0
  %v742 = vadd.f32 %v674, 1.0
  %v743 = vadd.f32 %v676, 1.0
  %v744 = vadd.f32 %v678, 1.0
  %v745 = vadd.f32 %v680, 1.0
  %v746 = vadd.f32 %v682, 1.0
  %v747 = vadd.f32 %v684, 1.0
  %v748 = vadd.f32 %v686, 1.0
  %v749 = vadd.f32 %v688, 1.0
  %v750 = vadd.f32 %v690, 1.0
  %v751 = vadd.f32 %v692, 1.0
  %v752 = vadd.f32 %v694, 1.0
  %v753 = vadd.f32 %v696, 1.0
  %v754 = vadd.f32 %v698, 1.0
  %v755 = vadd.f32 %v700, 1.0
  %v756 = vadd.f32 %v702, 1.0
  %v757 = vadd.f32 %v704, 1.0
  %v758 = vadd.f32 %v706, 1.0
  %v759 = vadd.f32 %v708, 1.0
  %v760 = vadd.f32 %v710, 1.0
  %v761 = vadd.f32 %v712, 1.0
  %v762 = vadd.f32 %v714, 1.0
  %v763 = vrcp.pop %v715
  %v764 = vmul.f32 1.0, %v763
  %v765 = vrcp.pop %v716
  %v766 = vmul.f32 1.0, %v765
  %v767 = vrcp.pop %v717
  %v768 = vmul.f32 1.0, %v767
  %v769 = vrcp.pop %v718
  %v770 = vmul.f32 1.0, %v769
  %v771 = vrcp.pop %v719
  %v772 = vmul.f32 1.0, %v771
  %v773 = vrcp.pop %v720
  %v774 = vmul.f32 1.0, %v773
  %v775 = vrcp.pop %v721
  %v776 = vmul.f32 1.0, %v775
  %v777 = vrcp.pop %v722
  %v778 = vmul.f32 1.0, %v777
  %v779 = vrcp.pop %v723
  %v780 = vmul.f32 1.0, %v779
  %v781 = vrcp.pop %v724
  %v782 = vmul.f32 1.0, %v781
  %v783 = vrcp.pop %v725
  %v784 = vmul.f32 1.0, %v783
  %v785 = vrcp.pop %v726
  %v786 = vmul.f32 1.0, %v785
  %v787 = vrcp.pop %v727
  %v788 = vmul.f32 1.0, %v787
  %v789 = vrcp.pop %v728
  %v790 = vmul.f32 1.0, %v789
  %v791 = vrcp.pop %v729
  %v792 = vmul.f32 1.0, %v791
  %v793 = vrcp.pop %v730
  %v794 = vmul.f32 1.0, %v793
  %v795 = vrcp.pop %v731
  %v796 = vmul.f32 1.0, %v795
  %v797 = vrcp.pop %v732
  %v798 = vmul.f32 1.0, %v797
  %v799 = vrcp.pop %v733
  %v800 = vmul.f32 1.0, %v799
  %v801 = vrcp.pop %v734
  %v802 = vmul.f32 1.0, %v801
  %v803 = vrcp.pop %v735
  %v804 = vmul.f32 1.0, %v803
  %v805 = vrcp.pop %v736
  %v806 = vmul.f32 1.0, %v805
  %v807 = vrcp.pop %v737
  %v808 = vmul.f32 1.0, %v807
  %v809 = vrcp.pop %v738
  %v810 = vmul.f32 1.0, %v809
  %v811 = vrcp.pop %v739
  %v812 = vmul.f32 1.0, %v811
  %v813 = vrcp.pop %v740
  %v814 = vmul.f32 1.0, %v813
  %v815 = vrcp.pop %v741
  %v816 = vmul.f32 1.0, %v815
  %v817 = vrcp.pop %v742
  %v818 = vmul.f32 1.0, %v817
  %v819 = vrcp.pop %v743
  %v820 = vmul.f32 1.0, %v819
  %v821 = vrcp.pop %v744
  %v822 = vmul.f32 1.0, %v821
  %v823 = vrcp.pop %v745
  %v824 = vmul.f32 1.0, %v823
  %v825 = vrcp.pop %v746
  %v826 = vmul.f32 1.0, %v825
  %v827 = vrcp.pop %v747
  %v828 = vmul.f32 1.0, %v827
  %v829 = vrcp.pop %v748
  %v830 = vmul.f32 1.0, %v829
  %v831 = vrcp.pop %v749
  %v832 = vmul.f32 1.0, %v831
  %v833 = vrcp.pop %v750
  %v834 = vmul.f32 1.0, %v833
  %v835 = vrcp.pop %v751
  %v836 = vmul.f32 1.0, %v835
  %v837 = vrcp.pop %v752
  %v838 = vmul.f32 1.0, %v837
  %v839 = vrcp.pop %v753
  %v840 = vmul.f32 1.0, %v839
  %v841 = vrcp.pop %v754
  %v842 = vmul.f32 1.0, %v841
  %v843 = vrcp.pop %v755
  %v844 = vmul.f32 1.0, %v843
  %v845 = vrcp.pop %v756
  %v846 = vmul.f32 1.0, %v845
  %v847 = vrcp.pop %v757
  %v848 = vmul.f32 1.0, %v847
  %v849 = vrcp.pop %v758
  %v850 = vmul.f32 1.0, %v849
  %v851 = vrcp.pop %v759
  %v852 = vmul.f32 1.0, %v851
  %v853 = vrcp.pop %v760
  %v854 = vmul.f32 1.0, %v853
  %v855 = vrcp.pop %v761
  %v856 = vmul.f32 1.0, %v855
  %v857 = vrcp.pop %v762
  %v858 = vmul.f32 1.0, %v857
  %v859 = vmul.f32 %v288, %v764
  %v860 = vmul.f32 %v290, %v766
  %v861 = vmul.f32 %v341, %v768
  %v862 = vmul.f32 %v343, %v770
  %v863 = vmul.f32 %v394, %v772
  %v864 = vmul.f32 %v396, %v774
  %v865 = vmul.f32 %v447, %v776
  %v866 = vmul.f32 %v449, %v778
  %v867 = vmul.f32 %v500, %v780
  %v868 = vmul.f32 %v502, %v782
  %v869 = vmul.f32 %v553, %v784
  %v870 = vmul.f32 %v555, %v786
  %v871 = vmul.f32 %v292, %v788
  %v872 = vmul.f32 %v294, %v790
  %v873 = vmul.f32 %v345, %v792
  %v874 = vmul.f32 %v347, %v794
  %v875 = vmul.f32 %v398, %v796
  %v876 = vmul.f32 %v400, %v798
  %v877 = vmul.f32 %v451, %v800
  %v878 = vmul.f32 %v453, %v802
  %v879 = vmul.f32 %v504, %v804
  %v880 = vmul.f32 %v506, %v806
  %v881 = vmul.f32 %v557, %v808
  %v882 = vmul.f32 %v559, %v810
  %v883 = vmul.f32 %v298, %v812
  %v884 = vmul.f32 %v300, %v814
  %v885 = vmul.f32 %v351, %v816
  %v886 = vmul.f32 %v353, %v818
  %v887 = vmul.f32 %v404, %v820
  %v888 = vmul.f32 %v406, %v822
  %v889 = vmul.f32 %v457, %v824
  %v890 = vmul.f32 %v459, %v826
  %v891 = vmul.f32 %v510, %v828
  %v892 = vmul.f32 %v512, %v830
  %v893 = vmul.f32 %v563, %v832
  %v894 = vmul.f32 %v565, %v834
  %v895 = vmul.f32 %v302, %v836
  %v896 = vmul.f32 %v304, %v838
  %v897 = vmul.f32 %v355, %v840
  %v898 = vmul.f32 %v357, %v842
  %v899 = vmul.f32 %v408, %v844
  %v900 = vmul.f32 %v410, %v846
  %v901 = vmul.f32 %v461, %v848
  %v902 = vmul.f32 %v463, %v850
  %v903 = vmul.f32 %v514, %v852
  %v904 = vmul.f32 %v516, %v854
  %v905 = vmul.f32 %v567, %v856
  %v906 = vmul.f32 %v569, %v858
  %v907 = vpack.c.bf16 %v871, %v859
  %v908 = vpack.c.bf16 %v872, %v860
  %v909 = vpack.c.bf16 %v873, %v861
  %v910 = vpack.c.bf16 %v874, %v862
  %v911 = vpack.c.bf16 %v875, %v863
  %v912 = vpack.c.bf16 %v876, %v864
  %v913 = vpack.c.bf16 %v877, %v865
  %v914 = vpack.c.bf16 %v878, %v866
  %v915 = vpack.c.bf16 %v879, %v867
  %v916 = vpack.c.bf16 %v880, %v868
  %v917 = vpack.c.bf16 %v881, %v869
  %v918 = vpack.c.bf16 %v882, %v870
  %v919 = vpack.c.bf16 %v895, %v883
  %v920 = vpack.c.bf16 %v896, %v884
  %v921 = vpack.c.bf16 %v897, %v885
  %v922 = vpack.c.bf16 %v898, %v886
  %v923 = vpack.c.bf16 %v899, %v887
  %v924 = vpack.c.bf16 %v900, %v888
  %v925 = vpack.c.bf16 %v901, %v889
  %v926 = vpack.c.bf16 %v902, %v890
  %v927 = vpack.c.bf16 %v903, %v891
  %v928 = vpack.c.bf16 %v904, %v892
  %v929 = vpack.c.bf16 %v905, %v893
  %v930 = vpack.c.bf16 %v906, %v894
  %s931 = smul.u32 0, 1536
  %v932 = vlaneseq
  %v933 = vshrl.u32 %v932, 7
  %v934 = vadd.s32 %v933, 8
  %v935 = vadd.s32 %v933, 16
  %v936 = vadd.s32 %v933, 24
  %v937 = vadd.s32 %v933, 32
  %v938 = vadd.s32 %v933, 40
  %v939 = vadd.s32 %v933, 48
  %v940 = vadd.s32 %v933, 56
  %v941 = vadd.s32 %v933, 64
  %v942 = vadd.s32 %v933, 72
  %v943 = vadd.s32 %v933, 80
  %v944 = vadd.s32 %v933, 88
  %v945 = vadd.s32 %v933, 96
  %v946 = vadd.s32 %v933, 104
  %v947 = vadd.s32 %v933, 112
  %v948 = vadd.s32 %v933, 120
  %v949 = vadd.s32 %v933, 128
  %v950 = vadd.s32 %v933, 136
  %v951 = vadd.s32 %v933, 144
  %v952 = vadd.s32 %v933, 152
  %v953 = vadd.s32 %v933, 160
  %v954 = vadd.s32 %v933, 168
  %v955 = vadd.s32 %v933, 176
  %v956 = vadd.s32 %v933, 184
  %v957 = vadd.s32 %v933, 192
  %v958 = vadd.s32 %v933, 200
  %v959 = vadd.s32 %v933, 208
  %v960 = vadd.s32 %v933, 216
  %v961 = vadd.s32 %v933, 224
  %v962 = vadd.s32 %v933, 232
  %v963 = vadd.s32 %v933, 240
  %v964 = vadd.s32 %v933, 248
  %v965 = vadd.s32 %v933, 256
  %v966 = vadd.s32 %v933, 264
  %v967 = vadd.s32 %v933, 272
  %v968 = vadd.s32 %v933, 280
  %v969 = vadd.s32 %v933, 288
  %v970 = vadd.s32 %v933, 296
  %v971 = vadd.s32 %v933, 304
  %v972 = vadd.s32 %v933, 312
  %v973 = vadd.s32 %v933, 320
  %v974 = vadd.s32 %v933, 328
  %v975 = vadd.s32 %v933, 336
  %v976 = vadd.s32 %v933, 344
  %v977 = vadd.s32 %v933, 352
  %v978 = vadd.s32 %v933, 360
  %v979 = vadd.s32 %v933, 368
  %v980 = vadd.s32 %v933, 376
  %v981 = vadd.s32 %v933, 384
  %v982 = vadd.s32 %v933, 392
  %v983 = vadd.s32 %v933, 400
  %v984 = vadd.s32 %v933, 408
  %v985 = vadd.s32 %v933, 416
  %v986 = vadd.s32 %v933, 424
  %v987 = vadd.s32 %v933, 432
  %v988 = vadd.s32 %v933, 440
  %v989 = vadd.s32 %v933, 448
  %v990 = vadd.s32 %v933, 456
  %v991 = vadd.s32 %v933, 464
  %v992 = vadd.s32 %v933, 472
  %v993 = vadd.s32 %v933, 480
  %v994 = vadd.s32 %v933, 488
  %v995 = vadd.s32 %v933, 496
  %v996 = vadd.s32 %v933, 504
  %v997 = vadd.s32 %v933, 512
  %v998 = vadd.s32 %v933, 520
  %v999 = vadd.s32 %v933, 528
  %v1000 = vadd.s32 %v933, 536
  %v1001 = vadd.s32 %v933, 544
  %v1002 = vadd.s32 %v933, 552
  %v1003 = vadd.s32 %v933, 560
  %v1004 = vadd.s32 %v933, 568
  %v1005 = vadd.s32 %v933, 576
  %v1006 = vadd.s32 %v933, 584
  %v1007 = vadd.s32 %v933, 592
  %v1008 = vadd.s32 %v933, 600
  %v1009 = vadd.s32 %v933, 608
  %v1010 = vadd.s32 %v933, 616
  %v1011 = vadd.s32 %v933, 624
  %v1012 = vadd.s32 %v933, 632
  %v1013 = vadd.s32 %v933, 640
  %v1014 = vadd.s32 %v933, 648
  %v1015 = vadd.s32 %v933, 656
  %v1016 = vadd.s32 %v933, 664
  %v1017 = vadd.s32 %v933, 672
  %v1018 = vadd.s32 %v933, 680
  %v1019 = vadd.s32 %v933, 688
  %v1020 = vadd.s32 %v933, 696
  %v1021 = vadd.s32 %v933, 704
  %v1022 = vadd.s32 %v933, 712
  %v1023 = vadd.s32 %v933, 720
  %v1024 = vadd.s32 %v933, 728
  %v1025 = vadd.s32 %v933, 736
  %v1026 = vadd.s32 %v933, 744
  %v1027 = vadd.s32 %v933, 752
  %v1028 = vadd.s32 %v933, 760
  %v1029 = vadd.s32 %v933, 768
  %v1030 = vadd.s32 %v933, 776
  %v1031 = vadd.s32 %v933, 784
  %v1032 = vadd.s32 %v933, 792
  %v1033 = vadd.s32 %v933, 800
  %v1034 = vadd.s32 %v933, 808
  %v1035 = vadd.s32 %v933, 816
  %v1036 = vadd.s32 %v933, 824
  %v1037 = vadd.s32 %v933, 832
  %v1038 = vadd.s32 %v933, 840
  %v1039 = vadd.s32 %v933, 848
  %v1040 = vadd.s32 %v933, 856
  %v1041 = vadd.s32 %v933, 864
  %v1042 = vadd.s32 %v933, 872
  %v1043 = vadd.s32 %v933, 880
  %v1044 = vadd.s32 %v933, 888
  %v1045 = vadd.s32 %v933, 896
  %v1046 = vadd.s32 %v933, 904
  %v1047 = vadd.s32 %v933, 912
  %v1048 = vadd.s32 %v933, 920
  %v1049 = vadd.s32 %v933, 928
  %v1050 = vadd.s32 %v933, 936
  %v1051 = vadd.s32 %v933, 944
  %v1052 = vadd.s32 %v933, 952
  %v1053 = vadd.s32 %v933, 960
  %v1054 = vadd.s32 %v933, 968
  %v1055 = vadd.s32 %v933, 976
  %v1056 = vadd.s32 %v933, 984
  %v1057 = vadd.s32 %v933, 992
  %v1058 = vadd.s32 %v933, 1000
  %v1059 = vadd.s32 %v933, 1008
  %v1060 = vadd.s32 %v933, 1016
  %v1061 = vadd.s32 %v933, 1024
  %v1062 = vadd.s32 %v933, 1032
  %v1063 = vadd.s32 %v933, 1040
  %v1064 = vadd.s32 %v933, 1048
  %v1065 = vadd.s32 %v933, 1056
  %v1066 = vadd.s32 %v933, 1064
  %v1067 = vadd.s32 %v933, 1072
  %v1068 = vadd.s32 %v933, 1080
  %v1069 = vadd.s32 %v933, 1088
  %v1070 = vadd.s32 %v933, 1096
  %v1071 = vadd.s32 %v933, 1104
  %v1072 = vadd.s32 %v933, 1112
  %v1073 = vadd.s32 %v933, 1120
  %v1074 = vadd.s32 %v933, 1128
  %v1075 = vadd.s32 %v933, 1136
  %v1076 = vadd.s32 %v933, 1144
  %v1077 = vadd.s32 %v933, 1152
  %v1078 = vadd.s32 %v933, 1160
  %v1079 = vadd.s32 %v933, 1168
  %v1080 = vadd.s32 %v933, 1176
  %v1081 = vadd.s32 %v933, 1184
  %v1082 = vadd.s32 %v933, 1192
  %v1083 = vadd.s32 %v933, 1200
  %v1084 = vadd.s32 %v933, 1208
  %v1085 = vadd.s32 %v933, 1216
  %v1086 = vadd.s32 %v933, 1224
  %v1087 = vadd.s32 %v933, 1232
  %v1088 = vadd.s32 %v933, 1240
  %v1089 = vadd.s32 %v933, 1248
  %v1090 = vadd.s32 %v933, 1256
  %v1091 = vadd.s32 %v933, 1264
  %v1092 = vadd.s32 %v933, 1272
  %v1093 = vadd.s32 %v933, 1280
  %v1094 = vadd.s32 %v933, 1288
  %v1095 = vadd.s32 %v933, 1296
  %v1096 = vadd.s32 %v933, 1304
  %v1097 = vadd.s32 %v933, 1312
  %v1098 = vadd.s32 %v933, 1320
  %v1099 = vadd.s32 %v933, 1328
  %v1100 = vadd.s32 %v933, 1336
  %v1101 = vadd.s32 %v933, 1344
  %v1102 = vadd.s32 %v933, 1352
  %v1103 = vadd.s32 %v933, 1360
  %v1104 = vadd.s32 %v933, 1368
  %v1105 = vadd.s32 %v933, 1376
  %v1106 = vadd.s32 %v933, 1384
  %v1107 = vadd.s32 %v933, 1392
  %v1108 = vadd.s32 %v933, 1400
  %v1109 = vadd.s32 %v933, 1408
  %v1110 = vadd.s32 %v933, 1416
  %v1111 = vadd.s32 %v933, 1424
  %v1112 = vadd.s32 %v933, 1432
  %v1113 = vadd.s32 %v933, 1440
  %v1114 = vadd.s32 %v933, 1448
  %v1115 = vadd.s32 %v933, 1456
  %v1116 = vadd.s32 %v933, 1464
  %v1117 = vadd.s32 %v933, 1472
  %v1118 = vadd.s32 %v933, 1480
  %v1119 = vadd.s32 %v933, 1488
  %v1120 = vadd.s32 %v933, 1496
  %v1121 = vadd.s32 %v933, 1504
  %v1122 = vadd.s32 %v933, 1512
  %v1123 = vadd.s32 %v933, 1520
  %v1124 = vadd.s32 %v933, 1528
  %v1125 = vstv %s931
  %v1126 = vadd.s32 %v1125, %v933
  %v1127 = vadd.s32 %v1125, %v934
  %v1128 = vadd.s32 %v1125, %v935
  %v1129 = vadd.s32 %v1125, %v936
  %v1130 = vadd.s32 %v1125, %v937
  %v1131 = vadd.s32 %v1125, %v938
  %v1132 = vadd.s32 %v1125, %v939
  %v1133 = vadd.s32 %v1125, %v940
  %v1134 = vadd.s32 %v1125, %v941
  %v1135 = vadd.s32 %v1125, %v942
  %v1136 = vadd.s32 %v1125, %v943
  %v1137 = vadd.s32 %v1125, %v944
  %v1138 = vadd.s32 %v1125, %v945
  %v1139 = vadd.s32 %v1125, %v946
  %v1140 = vadd.s32 %v1125, %v947
  %v1141 = vadd.s32 %v1125, %v948
  %v1142 = vadd.s32 %v1125, %v949
  %v1143 = vadd.s32 %v1125, %v950
  %v1144 = vadd.s32 %v1125, %v951
  %v1145 = vadd.s32 %v1125, %v952
  %v1146 = vadd.s32 %v1125, %v953
  %v1147 = vadd.s32 %v1125, %v954
  %v1148 = vadd.s32 %v1125, %v955
  %v1149 = vadd.s32 %v1125, %v956
  %v1150 = vadd.s32 %v1125, %v957
  %v1151 = vadd.s32 %v1125, %v958
  %v1152 = vadd.s32 %v1125, %v959
  %v1153 = vadd.s32 %v1125, %v960
  %v1154 = vadd.s32 %v1125, %v961
  %v1155 = vadd.s32 %v1125, %v962
  %v1156 = vadd.s32 %v1125, %v963
  %v1157 = vadd.s32 %v1125, %v964
  %v1158 = vadd.s32 %v1125, %v965
  %v1159 = vadd.s32 %v1125, %v966
  %v1160 = vadd.s32 %v1125, %v967
  %v1161 = vadd.s32 %v1125, %v968
  %v1162 = vadd.s32 %v1125, %v969
  %v1163 = vadd.s32 %v1125, %v970
  %v1164 = vadd.s32 %v1125, %v971
  %v1165 = vadd.s32 %v1125, %v972
  %v1166 = vadd.s32 %v1125, %v973
  %v1167 = vadd.s32 %v1125, %v974
  %v1168 = vadd.s32 %v1125, %v975
  %v1169 = vadd.s32 %v1125, %v976
  %v1170 = vadd.s32 %v1125, %v977
  %v1171 = vadd.s32 %v1125, %v978
  %v1172 = vadd.s32 %v1125, %v979
  %v1173 = vadd.s32 %v1125, %v980
  %v1174 = vadd.s32 %v1125, %v981
  %v1175 = vadd.s32 %v1125, %v982
  %v1176 = vadd.s32 %v1125, %v983
  %v1177 = vadd.s32 %v1125, %v984
  %v1178 = vadd.s32 %v1125, %v985
  %v1179 = vadd.s32 %v1125, %v986
  %v1180 = vadd.s32 %v1125, %v987
  %v1181 = vadd.s32 %v1125, %v988
  %v1182 = vadd.s32 %v1125, %v989
  %v1183 = vadd.s32 %v1125, %v990
  %v1184 = vadd.s32 %v1125, %v991
  %v1185 = vadd.s32 %v1125, %v992
  %v1186 = vadd.s32 %v1125, %v993
  %v1187 = vadd.s32 %v1125, %v994
  %v1188 = vadd.s32 %v1125, %v995
  %v1189 = vadd.s32 %v1125, %v996
  %v1190 = vadd.s32 %v1125, %v997
  %v1191 = vadd.s32 %v1125, %v998
  %v1192 = vadd.s32 %v1125, %v999
  %v1193 = vadd.s32 %v1125, %v1000
  %v1194 = vadd.s32 %v1125, %v1001
  %v1195 = vadd.s32 %v1125, %v1002
  %v1196 = vadd.s32 %v1125, %v1003
  %v1197 = vadd.s32 %v1125, %v1004
  %v1198 = vadd.s32 %v1125, %v1005
  %v1199 = vadd.s32 %v1125, %v1006
  %v1200 = vadd.s32 %v1125, %v1007
  %v1201 = vadd.s32 %v1125, %v1008
  %v1202 = vadd.s32 %v1125, %v1009
  %v1203 = vadd.s32 %v1125, %v1010
  %v1204 = vadd.s32 %v1125, %v1011
  %v1205 = vadd.s32 %v1125, %v1012
  %v1206 = vadd.s32 %v1125, %v1013
  %v1207 = vadd.s32 %v1125, %v1014
  %v1208 = vadd.s32 %v1125, %v1015
  %v1209 = vadd.s32 %v1125, %v1016
  %v1210 = vadd.s32 %v1125, %v1017
  %v1211 = vadd.s32 %v1125, %v1018
  %v1212 = vadd.s32 %v1125, %v1019
  %v1213 = vadd.s32 %v1125, %v1020
  %v1214 = vadd.s32 %v1125, %v1021
  %v1215 = vadd.s32 %v1125, %v1022
  %v1216 = vadd.s32 %v1125, %v1023
  %v1217 = vadd.s32 %v1125, %v1024
  %v1218 = vadd.s32 %v1125, %v1025
  %v1219 = vadd.s32 %v1125, %v1026
  %v1220 = vadd.s32 %v1125, %v1027
  %v1221 = vadd.s32 %v1125, %v1028
  %v1222 = vadd.s32 %v1125, %v1029
  %v1223 = vadd.s32 %v1125, %v1030
  %v1224 = vadd.s32 %v1125, %v1031
  %v1225 = vadd.s32 %v1125, %v1032
  %v1226 = vadd.s32 %v1125, %v1033
  %v1227 = vadd.s32 %v1125, %v1034
  %v1228 = vadd.s32 %v1125, %v1035
  %v1229 = vadd.s32 %v1125, %v1036
  %v1230 = vadd.s32 %v1125, %v1037
  %v1231 = vadd.s32 %v1125, %v1038
  %v1232 = vadd.s32 %v1125, %v1039
  %v1233 = vadd.s32 %v1125, %v1040
  %v1234 = vadd.s32 %v1125, %v1041
  %v1235 = vadd.s32 %v1125, %v1042
  %v1236 = vadd.s32 %v1125, %v1043
  %v1237 = vadd.s32 %v1125, %v1044
  %v1238 = vadd.s32 %v1125, %v1045
  %v1239 = vadd.s32 %v1125, %v1046
  %v1240 = vadd.s32 %v1125, %v1047
  %v1241 = vadd.s32 %v1125, %v1048
  %v1242 = vadd.s32 %v1125, %v1049
  %v1243 = vadd.s32 %v1125, %v1050
  %v1244 = vadd.s32 %v1125, %v1051
  %v1245 = vadd.s32 %v1125, %v1052
  %v1246 = vadd.s32 %v1125, %v1053
  %v1247 = vadd.s32 %v1125, %v1054
  %v1248 = vadd.s32 %v1125, %v1055
  %v1249 = vadd.s32 %v1125, %v1056
  %v1250 = vadd.s32 %v1125, %v1057
  %v1251 = vadd.s32 %v1125, %v1058
  %v1252 = vadd.s32 %v1125, %v1059
  %v1253 = vadd.s32 %v1125, %v1060
  %v1254 = vadd.s32 %v1125, %v1061
  %v1255 = vadd.s32 %v1125, %v1062
  %v1256 = vadd.s32 %v1125, %v1063
  %v1257 = vadd.s32 %v1125, %v1064
  %v1258 = vadd.s32 %v1125, %v1065
  %v1259 = vadd.s32 %v1125, %v1066
  %v1260 = vadd.s32 %v1125, %v1067
  %v1261 = vadd.s32 %v1125, %v1068
  %v1262 = vadd.s32 %v1125, %v1069
  %v1263 = vadd.s32 %v1125, %v1070
  %v1264 = vadd.s32 %v1125, %v1071
  %v1265 = vadd.s32 %v1125, %v1072
  %v1266 = vadd.s32 %v1125, %v1073
  %v1267 = vadd.s32 %v1125, %v1074
  %v1268 = vadd.s32 %v1125, %v1075
  %v1269 = vadd.s32 %v1125, %v1076
  %v1270 = vadd.s32 %v1125, %v1077
  %v1271 = vadd.s32 %v1125, %v1078
  %v1272 = vadd.s32 %v1125, %v1079
  %v1273 = vadd.s32 %v1125, %v1080
  %v1274 = vadd.s32 %v1125, %v1081
  %v1275 = vadd.s32 %v1125, %v1082
  %v1276 = vadd.s32 %v1125, %v1083
  %v1277 = vadd.s32 %v1125, %v1084
  %v1278 = vadd.s32 %v1125, %v1085
  %v1279 = vadd.s32 %v1125, %v1086
  %v1280 = vadd.s32 %v1125, %v1087
  %v1281 = vadd.s32 %v1125, %v1088
  %v1282 = vadd.s32 %v1125, %v1089
  %v1283 = vadd.s32 %v1125, %v1090
  %v1284 = vadd.s32 %v1125, %v1091
  %v1285 = vadd.s32 %v1125, %v1092
  %v1286 = vadd.s32 %v1125, %v1093
  %v1287 = vadd.s32 %v1125, %v1094
  %v1288 = vadd.s32 %v1125, %v1095
  %v1289 = vadd.s32 %v1125, %v1096
  %v1290 = vadd.s32 %v1125, %v1097
  %v1291 = vadd.s32 %v1125, %v1098
  %v1292 = vadd.s32 %v1125, %v1099
  %v1293 = vadd.s32 %v1125, %v1100
  %v1294 = vadd.s32 %v1125, %v1101
  %v1295 = vadd.s32 %v1125, %v1102
  %v1296 = vadd.s32 %v1125, %v1103
  %v1297 = vadd.s32 %v1125, %v1104
  %v1298 = vadd.s32 %v1125, %v1105
  %v1299 = vadd.s32 %v1125, %v1106
  %v1300 = vadd.s32 %v1125, %v1107
  %v1301 = vadd.s32 %v1125, %v1108
  %v1302 = vadd.s32 %v1125, %v1109
  %v1303 = vadd.s32 %v1125, %v1110
  %v1304 = vadd.s32 %v1125, %v1111
  %v1305 = vadd.s32 %v1125, %v1112
  %v1306 = vadd.s32 %v1125, %v1113
  %v1307 = vadd.s32 %v1125, %v1114
  %v1308 = vadd.s32 %v1125, %v1115
  %v1309 = vadd.s32 %v1125, %v1116
  %v1310 = vadd.s32 %v1125, %v1117
  %v1311 = vadd.s32 %v1125, %v1118
  %v1312 = vadd.s32 %v1125, %v1119
  %v1313 = vadd.s32 %v1125, %v1120
  %v1314 = vadd.s32 %v1125, %v1121
  %v1315 = vadd.s32 %v1125, %v1122
  %v1316 = vadd.s32 %v1125, %v1123
  %v1317 = vadd.s32 %v1125, %v1124
  %v1318 = vlaneseq
  %v1319 = vand.u32 %v1318, 127
  %v1320 = vmul.u32 %v1319, 256
  %vm1321 = vcmp.ge.s32.totalorder %v1126, %v1320
  %vm1322 = vcmp.ge.s32.totalorder %v1127, %v1320
  %vm1323 = vcmp.ge.s32.totalorder %v1128, %v1320
  %vm1324 = vcmp.ge.s32.totalorder %v1129, %v1320
  %vm1325 = vcmp.ge.s32.totalorder %v1130, %v1320
  %vm1326 = vcmp.ge.s32.totalorder %v1131, %v1320
  %vm1327 = vcmp.ge.s32.totalorder %v1132, %v1320
  %vm1328 = vcmp.ge.s32.totalorder %v1133, %v1320
  %vm1329 = vcmp.ge.s32.totalorder %v1134, %v1320
  %vm1330 = vcmp.ge.s32.totalorder %v1135, %v1320
  %vm1331 = vcmp.ge.s32.totalorder %v1136, %v1320
  %vm1332 = vcmp.ge.s32.totalorder %v1137, %v1320
  %vm1333 = vcmp.ge.s32.totalorder %v1138, %v1320
  %vm1334 = vcmp.ge.s32.totalorder %v1139, %v1320
  %vm1335 = vcmp.ge.s32.totalorder %v1140, %v1320
  %vm1336 = vcmp.ge.s32.totalorder %v1141, %v1320
  %vm1337 = vcmp.ge.s32.totalorder %v1142, %v1320
  %vm1338 = vcmp.ge.s32.totalorder %v1143, %v1320
  %vm1339 = vcmp.ge.s32.totalorder %v1144, %v1320
  %vm1340 = vcmp.ge.s32.totalorder %v1145, %v1320
  %vm1341 = vcmp.ge.s32.totalorder %v1146, %v1320
  %vm1342 = vcmp.ge.s32.totalorder %v1147, %v1320
  %vm1343 = vcmp.ge.s32.totalorder %v1148, %v1320
  %vm1344 = vcmp.ge.s32.totalorder %v1149, %v1320
  %vm1345 = vcmp.ge.s32.totalorder %v1150, %v1320
  %vm1346 = vcmp.ge.s32.totalorder %v1151, %v1320
  %vm1347 = vcmp.ge.s32.totalorder %v1152, %v1320
  %vm1348 = vcmp.ge.s32.totalorder %v1153, %v1320
  %vm1349 = vcmp.ge.s32.totalorder %v1154, %v1320
  %vm1350 = vcmp.ge.s32.totalorder %v1155, %v1320
  %vm1351 = vcmp.ge.s32.totalorder %v1156, %v1320
  %vm1352 = vcmp.ge.s32.totalorder %v1157, %v1320
  %vm1353 = vcmp.ge.s32.totalorder %v1158, %v1320
  %vm1354 = vcmp.ge.s32.totalorder %v1159, %v1320
  %vm1355 = vcmp.ge.s32.totalorder %v1160, %v1320
  %vm1356 = vcmp.ge.s32.totalorder %v1161, %v1320
  %vm1357 = vcmp.ge.s32.totalorder %v1162, %v1320
  %vm1358 = vcmp.ge.s32.totalorder %v1163, %v1320
  %vm1359 = vcmp.ge.s32.totalorder %v1164, %v1320
  %vm1360 = vcmp.ge.s32.totalorder %v1165, %v1320
  %vm1361 = vcmp.ge.s32.totalorder %v1166, %v1320
  %vm1362 = vcmp.ge.s32.totalorder %v1167, %v1320
  %vm1363 = vcmp.ge.s32.totalorder %v1168, %v1320
  %vm1364 = vcmp.ge.s32.totalorder %v1169, %v1320
  %vm1365 = vcmp.ge.s32.totalorder %v1170, %v1320
  %vm1366 = vcmp.ge.s32.totalorder %v1171, %v1320
  %vm1367 = vcmp.ge.s32.totalorder %v1172, %v1320
  %vm1368 = vcmp.ge.s32.totalorder %v1173, %v1320
  %vm1369 = vcmp.ge.s32.totalorder %v1174, %v1320
  %vm1370 = vcmp.ge.s32.totalorder %v1175, %v1320
  %vm1371 = vcmp.ge.s32.totalorder %v1176, %v1320
  %vm1372 = vcmp.ge.s32.totalorder %v1177, %v1320
  %vm1373 = vcmp.ge.s32.totalorder %v1178, %v1320
  %vm1374 = vcmp.ge.s32.totalorder %v1179, %v1320
  %vm1375 = vcmp.ge.s32.totalorder %v1180, %v1320
  %vm1376 = vcmp.ge.s32.totalorder %v1181, %v1320
  %vm1377 = vcmp.ge.s32.totalorder %v1182, %v1320
  %vm1378 = vcmp.ge.s32.totalorder %v1183, %v1320
  %vm1379 = vcmp.ge.s32.totalorder %v1184, %v1320
  %vm1380 = vcmp.ge.s32.totalorder %v1185, %v1320
  %vm1381 = vcmp.ge.s32.totalorder %v1186, %v1320
  %vm1382 = vcmp.ge.s32.totalorder %v1187, %v1320
  %vm1383 = vcmp.ge.s32.totalorder %v1188, %v1320
  %vm1384 = vcmp.ge.s32.totalorder %v1189, %v1320
  %vm1385 = vcmp.ge.s32.totalorder %v1190, %v1320
  %vm1386 = vcmp.ge.s32.totalorder %v1191, %v1320
  %vm1387 = vcmp.ge.s32.totalorder %v1192, %v1320
  %vm1388 = vcmp.ge.s32.totalorder %v1193, %v1320
  %vm1389 = vcmp.ge.s32.totalorder %v1194, %v1320
  %vm1390 = vcmp.ge.s32.totalorder %v1195, %v1320
  %vm1391 = vcmp.ge.s32.totalorder %v1196, %v1320
  %vm1392 = vcmp.ge.s32.totalorder %v1197, %v1320
  %vm1393 = vcmp.ge.s32.totalorder %v1198, %v1320
  %vm1394 = vcmp.ge.s32.totalorder %v1199, %v1320
  %vm1395 = vcmp.ge.s32.totalorder %v1200, %v1320
  %vm1396 = vcmp.ge.s32.totalorder %v1201, %v1320
  %vm1397 = vcmp.ge.s32.totalorder %v1202, %v1320
  %vm1398 = vcmp.ge.s32.totalorder %v1203, %v1320
  %vm1399 = vcmp.ge.s32.totalorder %v1204, %v1320
  %vm1400 = vcmp.ge.s32.totalorder %v1205, %v1320
  %vm1401 = vcmp.ge.s32.totalorder %v1206, %v1320
  %vm1402 = vcmp.ge.s32.totalorder %v1207, %v1320
  %vm1403 = vcmp.ge.s32.totalorder %v1208, %v1320
  %vm1404 = vcmp.ge.s32.totalorder %v1209, %v1320
  %vm1405 = vcmp.ge.s32.totalorder %v1210, %v1320
  %vm1406 = vcmp.ge.s32.totalorder %v1211, %v1320
  %vm1407 = vcmp.ge.s32.totalorder %v1212, %v1320
  %vm1408 = vcmp.ge.s32.totalorder %v1213, %v1320
  %vm1409 = vcmp.ge.s32.totalorder %v1214, %v1320
  %vm1410 = vcmp.ge.s32.totalorder %v1215, %v1320
  %vm1411 = vcmp.ge.s32.totalorder %v1216, %v1320
  %vm1412 = vcmp.ge.s32.totalorder %v1217, %v1320
  %vm1413 = vcmp.ge.s32.totalorder %v1218, %v1320
  %vm1414 = vcmp.ge.s32.totalorder %v1219, %v1320
  %vm1415 = vcmp.ge.s32.totalorder %v1220, %v1320
  %vm1416 = vcmp.ge.s32.totalorder %v1221, %v1320
  %vm1417 = vcmp.ge.s32.totalorder %v1222, %v1320
  %vm1418 = vcmp.ge.s32.totalorder %v1223, %v1320
  %vm1419 = vcmp.ge.s32.totalorder %v1224, %v1320
  %vm1420 = vcmp.ge.s32.totalorder %v1225, %v1320
  %vm1421 = vcmp.ge.s32.totalorder %v1226, %v1320
  %vm1422 = vcmp.ge.s32.totalorder %v1227, %v1320
  %vm1423 = vcmp.ge.s32.totalorder %v1228, %v1320
  %vm1424 = vcmp.ge.s32.totalorder %v1229, %v1320
  %vm1425 = vcmp.ge.s32.totalorder %v1230, %v1320
  %vm1426 = vcmp.ge.s32.totalorder %v1231, %v1320
  %vm1427 = vcmp.ge.s32.totalorder %v1232, %v1320
  %vm1428 = vcmp.ge.s32.totalorder %v1233, %v1320
  %vm1429 = vcmp.ge.s32.totalorder %v1234, %v1320
  %vm1430 = vcmp.ge.s32.totalorder %v1235, %v1320
  %vm1431 = vcmp.ge.s32.totalorder %v1236, %v1320
  %vm1432 = vcmp.ge.s32.totalorder %v1237, %v1320
  %vm1433 = vcmp.ge.s32.totalorder %v1238, %v1320
  %vm1434 = vcmp.ge.s32.totalorder %v1239, %v1320
  %vm1435 = vcmp.ge.s32.totalorder %v1240, %v1320
  %vm1436 = vcmp.ge.s32.totalorder %v1241, %v1320
  %vm1437 = vcmp.ge.s32.totalorder %v1242, %v1320
  %vm1438 = vcmp.ge.s32.totalorder %v1243, %v1320
  %vm1439 = vcmp.ge.s32.totalorder %v1244, %v1320
  %vm1440 = vcmp.ge.s32.totalorder %v1245, %v1320
  %vm1441 = vcmp.ge.s32.totalorder %v1246, %v1320
  %vm1442 = vcmp.ge.s32.totalorder %v1247, %v1320
  %vm1443 = vcmp.ge.s32.totalorder %v1248, %v1320
  %vm1444 = vcmp.ge.s32.totalorder %v1249, %v1320
  %vm1445 = vcmp.ge.s32.totalorder %v1250, %v1320
  %vm1446 = vcmp.ge.s32.totalorder %v1251, %v1320
  %vm1447 = vcmp.ge.s32.totalorder %v1252, %v1320
  %vm1448 = vcmp.ge.s32.totalorder %v1253, %v1320
  %vm1449 = vcmp.ge.s32.totalorder %v1254, %v1320
  %vm1450 = vcmp.ge.s32.totalorder %v1255, %v1320
  %vm1451 = vcmp.ge.s32.totalorder %v1256, %v1320
  %vm1452 = vcmp.ge.s32.totalorder %v1257, %v1320
  %vm1453 = vcmp.ge.s32.totalorder %v1258, %v1320
  %vm1454 = vcmp.ge.s32.totalorder %v1259, %v1320
  %vm1455 = vcmp.ge.s32.totalorder %v1260, %v1320
  %vm1456 = vcmp.ge.s32.totalorder %v1261, %v1320
  %vm1457 = vcmp.ge.s32.totalorder %v1262, %v1320
  %vm1458 = vcmp.ge.s32.totalorder %v1263, %v1320
  %vm1459 = vcmp.ge.s32.totalorder %v1264, %v1320
  %vm1460 = vcmp.ge.s32.totalorder %v1265, %v1320
  %vm1461 = vcmp.ge.s32.totalorder %v1266, %v1320
  %vm1462 = vcmp.ge.s32.totalorder %v1267, %v1320
  %vm1463 = vcmp.ge.s32.totalorder %v1268, %v1320
  %vm1464 = vcmp.ge.s32.totalorder %v1269, %v1320
  %vm1465 = vcmp.ge.s32.totalorder %v1270, %v1320
  %vm1466 = vcmp.ge.s32.totalorder %v1271, %v1320
  %vm1467 = vcmp.ge.s32.totalorder %v1272, %v1320
  %vm1468 = vcmp.ge.s32.totalorder %v1273, %v1320
  %vm1469 = vcmp.ge.s32.totalorder %v1274, %v1320
  %vm1470 = vcmp.ge.s32.totalorder %v1275, %v1320
  %vm1471 = vcmp.ge.s32.totalorder %v1276, %v1320
  %vm1472 = vcmp.ge.s32.totalorder %v1277, %v1320
  %vm1473 = vcmp.ge.s32.totalorder %v1278, %v1320
  %vm1474 = vcmp.ge.s32.totalorder %v1279, %v1320
  %vm1475 = vcmp.ge.s32.totalorder %v1280, %v1320
  %vm1476 = vcmp.ge.s32.totalorder %v1281, %v1320
  %vm1477 = vcmp.ge.s32.totalorder %v1282, %v1320
  %vm1478 = vcmp.ge.s32.totalorder %v1283, %v1320
  %vm1479 = vcmp.ge.s32.totalorder %v1284, %v1320
  %vm1480 = vcmp.ge.s32.totalorder %v1285, %v1320
  %vm1481 = vcmp.ge.s32.totalorder %v1286, %v1320
  %vm1482 = vcmp.ge.s32.totalorder %v1287, %v1320
  %vm1483 = vcmp.ge.s32.totalorder %v1288, %v1320
  %vm1484 = vcmp.ge.s32.totalorder %v1289, %v1320
  %vm1485 = vcmp.ge.s32.totalorder %v1290, %v1320
  %vm1486 = vcmp.ge.s32.totalorder %v1291, %v1320
  %vm1487 = vcmp.ge.s32.totalorder %v1292, %v1320
  %vm1488 = vcmp.ge.s32.totalorder %v1293, %v1320
  %vm1489 = vcmp.ge.s32.totalorder %v1294, %v1320
  %vm1490 = vcmp.ge.s32.totalorder %v1295, %v1320
  %vm1491 = vcmp.ge.s32.totalorder %v1296, %v1320
  %vm1492 = vcmp.ge.s32.totalorder %v1297, %v1320
  %vm1493 = vcmp.ge.s32.totalorder %v1298, %v1320
  %vm1494 = vcmp.ge.s32.totalorder %v1299, %v1320
  %vm1495 = vcmp.ge.s32.totalorder %v1300, %v1320
  %vm1496 = vcmp.ge.s32.totalorder %v1301, %v1320
  %vm1497 = vcmp.ge.s32.totalorder %v1302, %v1320
  %vm1498 = vcmp.ge.s32.totalorder %v1303, %v1320
  %vm1499 = vcmp.ge.s32.totalorder %v1304, %v1320
  %vm1500 = vcmp.ge.s32.totalorder %v1305, %v1320
  %vm1501 = vcmp.ge.s32.totalorder %v1306, %v1320
  %vm1502 = vcmp.ge.s32.totalorder %v1307, %v1320
  %vm1503 = vcmp.ge.s32.totalorder %v1308, %v1320
  %vm1504 = vcmp.ge.s32.totalorder %v1309, %v1320
  %vm1505 = vcmp.ge.s32.totalorder %v1310, %v1320
  %vm1506 = vcmp.ge.s32.totalorder %v1311, %v1320
  %vm1507 = vcmp.ge.s32.totalorder %v1312, %v1320
  %vm1508 = vcmp.ge.s32.totalorder %v1313, %v1320
  %vm1509 = vcmp.ge.s32.totalorder %v1314, %v1320
  %vm1510 = vcmp.ge.s32.totalorder %v1315, %v1320
  %vm1511 = vcmp.ge.s32.totalorder %v1316, %v1320
  %vm1512 = vcmp.ge.s32.totalorder %v1317, %v1320
  %v1513 = vadd.s32 %v1320, 256
  %vm1514 = vcmp.lt.s32.totalorder %v1126, %v1513
  %vm1515 = vcmp.lt.s32.totalorder %v1127, %v1513
  %vm1516 = vcmp.lt.s32.totalorder %v1128, %v1513
  %vm1517 = vcmp.lt.s32.totalorder %v1129, %v1513
  %vm1518 = vcmp.lt.s32.totalorder %v1130, %v1513
  %vm1519 = vcmp.lt.s32.totalorder %v1131, %v1513
  %vm1520 = vcmp.lt.s32.totalorder %v1132, %v1513
  %vm1521 = vcmp.lt.s32.totalorder %v1133, %v1513
  %vm1522 = vcmp.lt.s32.totalorder %v1134, %v1513
  %vm1523 = vcmp.lt.s32.totalorder %v1135, %v1513
  %vm1524 = vcmp.lt.s32.totalorder %v1136, %v1513
  %vm1525 = vcmp.lt.s32.totalorder %v1137, %v1513
  %vm1526 = vcmp.lt.s32.totalorder %v1138, %v1513
  %vm1527 = vcmp.lt.s32.totalorder %v1139, %v1513
  %vm1528 = vcmp.lt.s32.totalorder %v1140, %v1513
  %vm1529 = vcmp.lt.s32.totalorder %v1141, %v1513
  %vm1530 = vcmp.lt.s32.totalorder %v1142, %v1513
  %vm1531 = vcmp.lt.s32.totalorder %v1143, %v1513
  %vm1532 = vcmp.lt.s32.totalorder %v1144, %v1513
  %vm1533 = vcmp.lt.s32.totalorder %v1145, %v1513
  %vm1534 = vcmp.lt.s32.totalorder %v1146, %v1513
  %vm1535 = vcmp.lt.s32.totalorder %v1147, %v1513
  %vm1536 = vcmp.lt.s32.totalorder %v1148, %v1513
  %vm1537 = vcmp.lt.s32.totalorder %v1149, %v1513
  %vm1538 = vcmp.lt.s32.totalorder %v1150, %v1513
  %vm1539 = vcmp.lt.s32.totalorder %v1151, %v1513
  %vm1540 = vcmp.lt.s32.totalorder %v1152, %v1513
  %vm1541 = vcmp.lt.s32.totalorder %v1153, %v1513
  %vm1542 = vcmp.lt.s32.totalorder %v1154, %v1513
  %vm1543 = vcmp.lt.s32.totalorder %v1155, %v1513
  %vm1544 = vcmp.lt.s32.totalorder %v1156, %v1513
  %vm1545 = vcmp.lt.s32.totalorder %v1157, %v1513
  %vm1546 = vcmp.lt.s32.totalorder %v1158, %v1513
  %vm1547 = vcmp.lt.s32.totalorder %v1159, %v1513
  %vm1548 = vcmp.lt.s32.totalorder %v1160, %v1513
  %vm1549 = vcmp.lt.s32.totalorder %v1161, %v1513
  %vm1550 = vcmp.lt.s32.totalorder %v1162, %v1513
  %vm1551 = vcmp.lt.s32.totalorder %v1163, %v1513
  %vm1552 = vcmp.lt.s32.totalorder %v1164, %v1513
  %vm1553 = vcmp.lt.s32.totalorder %v1165, %v1513
  %vm1554 = vcmp.lt.s32.totalorder %v1166, %v1513
  %vm1555 = vcmp.lt.s32.totalorder %v1167, %v1513
  %vm1556 = vcmp.lt.s32.totalorder %v1168, %v1513
  %vm1557 = vcmp.lt.s32.totalorder %v1169, %v1513
  %vm1558 = vcmp.lt.s32.totalorder %v1170, %v1513
  %vm1559 = vcmp.lt.s32.totalorder %v1171, %v1513
  %vm1560 = vcmp.lt.s32.totalorder %v1172, %v1513
  %vm1561 = vcmp.lt.s32.totalorder %v1173, %v1513
  %vm1562 = vcmp.lt.s32.totalorder %v1174, %v1513
  %vm1563 = vcmp.lt.s32.totalorder %v1175, %v1513
  %vm1564 = vcmp.lt.s32.totalorder %v1176, %v1513
  %vm1565 = vcmp.lt.s32.totalorder %v1177, %v1513
  %vm1566 = vcmp.lt.s32.totalorder %v1178, %v1513
  %vm1567 = vcmp.lt.s32.totalorder %v1179, %v1513
  %vm1568 = vcmp.lt.s32.totalorder %v1180, %v1513
  %vm1569 = vcmp.lt.s32.totalorder %v1181, %v1513
  %vm1570 = vcmp.lt.s32.totalorder %v1182, %v1513
  %vm1571 = vcmp.lt.s32.totalorder %v1183, %v1513
  %vm1572 = vcmp.lt.s32.totalorder %v1184, %v1513
  %vm1573 = vcmp.lt.s32.totalorder %v1185, %v1513
  %vm1574 = vcmp.lt.s32.totalorder %v1186, %v1513
  %vm1575 = vcmp.lt.s32.totalorder %v1187, %v1513
  %vm1576 = vcmp.lt.s32.totalorder %v1188, %v1513
  %vm1577 = vcmp.lt.s32.totalorder %v1189, %v1513
  %vm1578 = vcmp.lt.s32.totalorder %v1190, %v1513
  %vm1579 = vcmp.lt.s32.totalorder %v1191, %v1513
  %vm1580 = vcmp.lt.s32.totalorder %v1192, %v1513
  %vm1581 = vcmp.lt.s32.totalorder %v1193, %v1513
  %vm1582 = vcmp.lt.s32.totalorder %v1194, %v1513
  %vm1583 = vcmp.lt.s32.totalorder %v1195, %v1513
  %vm1584 = vcmp.lt.s32.totalorder %v1196, %v1513
  %vm1585 = vcmp.lt.s32.totalorder %v1197, %v1513
  %vm1586 = vcmp.lt.s32.totalorder %v1198, %v1513
  %vm1587 = vcmp.lt.s32.totalorder %v1199, %v1513
  %vm1588 = vcmp.lt.s32.totalorder %v1200, %v1513
  %vm1589 = vcmp.lt.s32.totalorder %v1201, %v1513
  %vm1590 = vcmp.lt.s32.totalorder %v1202, %v1513
  %vm1591 = vcmp.lt.s32.totalorder %v1203, %v1513
  %vm1592 = vcmp.lt.s32.totalorder %v1204, %v1513
  %vm1593 = vcmp.lt.s32.totalorder %v1205, %v1513
  %vm1594 = vcmp.lt.s32.totalorder %v1206, %v1513
  %vm1595 = vcmp.lt.s32.totalorder %v1207, %v1513
  %vm1596 = vcmp.lt.s32.totalorder %v1208, %v1513
  %vm1597 = vcmp.lt.s32.totalorder %v1209, %v1513
  %vm1598 = vcmp.lt.s32.totalorder %v1210, %v1513
  %vm1599 = vcmp.lt.s32.totalorder %v1211, %v1513
  %vm1600 = vcmp.lt.s32.totalorder %v1212, %v1513
  %vm1601 = vcmp.lt.s32.totalorder %v1213, %v1513
  %vm1602 = vcmp.lt.s32.totalorder %v1214, %v1513
  %vm1603 = vcmp.lt.s32.totalorder %v1215, %v1513
  %vm1604 = vcmp.lt.s32.totalorder %v1216, %v1513
  %vm1605 = vcmp.lt.s32.totalorder %v1217, %v1513
  %vm1606 = vcmp.lt.s32.totalorder %v1218, %v1513
  %vm1607 = vcmp.lt.s32.totalorder %v1219, %v1513
  %vm1608 = vcmp.lt.s32.totalorder %v1220, %v1513
  %vm1609 = vcmp.lt.s32.totalorder %v1221, %v1513
  %vm1610 = vcmp.lt.s32.totalorder %v1222, %v1513
  %vm1611 = vcmp.lt.s32.totalorder %v1223, %v1513
  %vm1612 = vcmp.lt.s32.totalorder %v1224, %v1513
  %vm1613 = vcmp.lt.s32.totalorder %v1225, %v1513
  %vm1614 = vcmp.lt.s32.totalorder %v1226, %v1513
  %vm1615 = vcmp.lt.s32.totalorder %v1227, %v1513
  %vm1616 = vcmp.lt.s32.totalorder %v1228, %v1513
  %vm1617 = vcmp.lt.s32.totalorder %v1229, %v1513
  %vm1618 = vcmp.lt.s32.totalorder %v1230, %v1513
  %vm1619 = vcmp.lt.s32.totalorder %v1231, %v1513
  %vm1620 = vcmp.lt.s32.totalorder %v1232, %v1513
  %vm1621 = vcmp.lt.s32.totalorder %v1233, %v1513
  %vm1622 = vcmp.lt.s32.totalorder %v1234, %v1513
  %vm1623 = vcmp.lt.s32.totalorder %v1235, %v1513
  %vm1624 = vcmp.lt.s32.totalorder %v1236, %v1513
  %vm1625 = vcmp.lt.s32.totalorder %v1237, %v1513
  %vm1626 = vcmp.lt.s32.totalorder %v1238, %v1513
  %vm1627 = vcmp.lt.s32.totalorder %v1239, %v1513
  %vm1628 = vcmp.lt.s32.totalorder %v1240, %v1513
  %vm1629 = vcmp.lt.s32.totalorder %v1241, %v1513
  %vm1630 = vcmp.lt.s32.totalorder %v1242, %v1513
  %vm1631 = vcmp.lt.s32.totalorder %v1243, %v1513
  %vm1632 = vcmp.lt.s32.totalorder %v1244, %v1513
  %vm1633 = vcmp.lt.s32.totalorder %v1245, %v1513
  %vm1634 = vcmp.lt.s32.totalorder %v1246, %v1513
  %vm1635 = vcmp.lt.s32.totalorder %v1247, %v1513
  %vm1636 = vcmp.lt.s32.totalorder %v1248, %v1513
  %vm1637 = vcmp.lt.s32.totalorder %v1249, %v1513
  %vm1638 = vcmp.lt.s32.totalorder %v1250, %v1513
  %vm1639 = vcmp.lt.s32.totalorder %v1251, %v1513
  %vm1640 = vcmp.lt.s32.totalorder %v1252, %v1513
  %vm1641 = vcmp.lt.s32.totalorder %v1253, %v1513
  %vm1642 = vcmp.lt.s32.totalorder %v1254, %v1513
  %vm1643 = vcmp.lt.s32.totalorder %v1255, %v1513
  %vm1644 = vcmp.lt.s32.totalorder %v1256, %v1513
  %vm1645 = vcmp.lt.s32.totalorder %v1257, %v1513
  %vm1646 = vcmp.lt.s32.totalorder %v1258, %v1513
  %vm1647 = vcmp.lt.s32.totalorder %v1259, %v1513
  %vm1648 = vcmp.lt.s32.totalorder %v1260, %v1513
  %vm1649 = vcmp.lt.s32.totalorder %v1261, %v1513
  %vm1650 = vcmp.lt.s32.totalorder %v1262, %v1513
  %vm1651 = vcmp.lt.s32.totalorder %v1263, %v1513
  %vm1652 = vcmp.lt.s32.totalorder %v1264, %v1513
  %vm1653 = vcmp.lt.s32.totalorder %v1265, %v1513
  %vm1654 = vcmp.lt.s32.totalorder %v1266, %v1513
  %vm1655 = vcmp.lt.s32.totalorder %v1267, %v1513
  %vm1656 = vcmp.lt.s32.totalorder %v1268, %v1513
  %vm1657 = vcmp.lt.s32.totalorder %v1269, %v1513
  %vm1658 = vcmp.lt.s32.totalorder %v1270, %v1513
  %vm1659 = vcmp.lt.s32.totalorder %v1271, %v1513
  %vm1660 = vcmp.lt.s32.totalorder %v1272, %v1513
  %vm1661 = vcmp.lt.s32.totalorder %v1273, %v1513
  %vm1662 = vcmp.lt.s32.totalorder %v1274, %v1513
  %vm1663 = vcmp.lt.s32.totalorder %v1275, %v1513
  %vm1664 = vcmp.lt.s32.totalorder %v1276, %v1513
  %vm1665 = vcmp.lt.s32.totalorder %v1277, %v1513
  %vm1666 = vcmp.lt.s32.totalorder %v1278, %v1513
  %vm1667 = vcmp.lt.s32.totalorder %v1279, %v1513
  %vm1668 = vcmp.lt.s32.totalorder %v1280, %v1513
  %vm1669 = vcmp.lt.s32.totalorder %v1281, %v1513
  %vm1670 = vcmp.lt.s32.totalorder %v1282, %v1513
  %vm1671 = vcmp.lt.s32.totalorder %v1283, %v1513
  %vm1672 = vcmp.lt.s32.totalorder %v1284, %v1513
  %vm1673 = vcmp.lt.s32.totalorder %v1285, %v1513
  %vm1674 = vcmp.lt.s32.totalorder %v1286, %v1513
  %vm1675 = vcmp.lt.s32.totalorder %v1287, %v1513
  %vm1676 = vcmp.lt.s32.totalorder %v1288, %v1513
  %vm1677 = vcmp.lt.s32.totalorder %v1289, %v1513
  %vm1678 = vcmp.lt.s32.totalorder %v1290, %v1513
  %vm1679 = vcmp.lt.s32.totalorder %v1291, %v1513
  %vm1680 = vcmp.lt.s32.totalorder %v1292, %v1513
  %vm1681 = vcmp.lt.s32.totalorder %v1293, %v1513
  %vm1682 = vcmp.lt.s32.totalorder %v1294, %v1513
  %vm1683 = vcmp.lt.s32.totalorder %v1295, %v1513
  %vm1684 = vcmp.lt.s32.totalorder %v1296, %v1513
  %vm1685 = vcmp.lt.s32.totalorder %v1297, %v1513
  %vm1686 = vcmp.lt.s32.totalorder %v1298, %v1513
  %vm1687 = vcmp.lt.s32.totalorder %v1299, %v1513
  %vm1688 = vcmp.lt.s32.totalorder %v1300, %v1513
  %vm1689 = vcmp.lt.s32.totalorder %v1301, %v1513
  %vm1690 = vcmp.lt.s32.totalorder %v1302, %v1513
  %vm1691 = vcmp.lt.s32.totalorder %v1303, %v1513
  %vm1692 = vcmp.lt.s32.totalorder %v1304, %v1513
  %vm1693 = vcmp.lt.s32.totalorder %v1305, %v1513
  %vm1694 = vcmp.lt.s32.totalorder %v1306, %v1513
  %vm1695 = vcmp.lt.s32.totalorder %v1307, %v1513
  %vm1696 = vcmp.lt.s32.totalorder %v1308, %v1513
  %vm1697 = vcmp.lt.s32.totalorder %v1309, %v1513
  %vm1698 = vcmp.lt.s32.totalorder %v1310, %v1513
  %vm1699 = vcmp.lt.s32.totalorder %v1311, %v1513
  %vm1700 = vcmp.lt.s32.totalorder %v1312, %v1513
  %vm1701 = vcmp.lt.s32.totalorder %v1313, %v1513
  %vm1702 = vcmp.lt.s32.totalorder %v1314, %v1513
  %vm1703 = vcmp.lt.s32.totalorder %v1315, %v1513
  %vm1704 = vcmp.lt.s32.totalorder %v1316, %v1513
  %vm1705 = vcmp.lt.s32.totalorder %v1317, %v1513
  %vm1706 = vmand %vm1321, %vm1514
  %vm1707 = vmand %vm1322, %vm1515
  %vm1708 = vmand %vm1323, %vm1516
  %vm1709 = vmand %vm1324, %vm1517
  %vm1710 = vmand %vm1325, %vm1518
  %vm1711 = vmand %vm1326, %vm1519
  %vm1712 = vmand %vm1327, %vm1520
  %vm1713 = vmand %vm1328, %vm1521
  %vm1714 = vmand %vm1329, %vm1522
  %vm1715 = vmand %vm1330, %vm1523
  %vm1716 = vmand %vm1331, %vm1524
  %vm1717 = vmand %vm1332, %vm1525
  %vm1718 = vmand %vm1333, %vm1526
  %vm1719 = vmand %vm1334, %vm1527
  %vm1720 = vmand %vm1335, %vm1528
  %vm1721 = vmand %vm1336, %vm1529
  %vm1722 = vmand %vm1337, %vm1530
  %vm1723 = vmand %vm1338, %vm1531
  %vm1724 = vmand %vm1339, %vm1532
  %vm1725 = vmand %vm1340, %vm1533
  %vm1726 = vmand %vm1341, %vm1534
  %vm1727 = vmand %vm1342, %vm1535
  %vm1728 = vmand %vm1343, %vm1536
  %vm1729 = vmand %vm1344, %vm1537
  %vm1730 = vmand %vm1345, %vm1538
  %vm1731 = vmand %vm1346, %vm1539
  %vm1732 = vmand %vm1347, %vm1540
  %vm1733 = vmand %vm1348, %vm1541
  %vm1734 = vmand %vm1349, %vm1542
  %vm1735 = vmand %vm1350, %vm1543
  %vm1736 = vmand %vm1351, %vm1544
  %vm1737 = vmand %vm1352, %vm1545
  %vm1738 = vmand %vm1353, %vm1546
  %vm1739 = vmand %vm1354, %vm1547
  %vm1740 = vmand %vm1355, %vm1548
  %vm1741 = vmand %vm1356, %vm1549
  %vm1742 = vmand %vm1357, %vm1550
  %vm1743 = vmand %vm1358, %vm1551
  %vm1744 = vmand %vm1359, %vm1552
  %vm1745 = vmand %vm1360, %vm1553
  %vm1746 = vmand %vm1361, %vm1554
  %vm1747 = vmand %vm1362, %vm1555
  %vm1748 = vmand %vm1363, %vm1556
  %vm1749 = vmand %vm1364, %vm1557
  %vm1750 = vmand %vm1365, %vm1558
  %vm1751 = vmand %vm1366, %vm1559
  %vm1752 = vmand %vm1367, %vm1560
  %vm1753 = vmand %vm1368, %vm1561
  %vm1754 = vmand %vm1369, %vm1562
  %vm1755 = vmand %vm1370, %vm1563
  %vm1756 = vmand %vm1371, %vm1564
  %vm1757 = vmand %vm1372, %vm1565
  %vm1758 = vmand %vm1373, %vm1566
  %vm1759 = vmand %vm1374, %vm1567
  %vm1760 = vmand %vm1375, %vm1568
  %vm1761 = vmand %vm1376, %vm1569
  %vm1762 = vmand %vm1377, %vm1570
  %vm1763 = vmand %vm1378, %vm1571
  %vm1764 = vmand %vm1379, %vm1572
  %vm1765 = vmand %vm1380, %vm1573
  %vm1766 = vmand %vm1381, %vm1574
  %vm1767 = vmand %vm1382, %vm1575
  %vm1768 = vmand %vm1383, %vm1576
  %vm1769 = vmand %vm1384, %vm1577
  %vm1770 = vmand %vm1385, %vm1578
  %vm1771 = vmand %vm1386, %vm1579
  %vm1772 = vmand %vm1387, %vm1580
  %vm1773 = vmand %vm1388, %vm1581
  %vm1774 = vmand %vm1389, %vm1582
  %vm1775 = vmand %vm1390, %vm1583
  %vm1776 = vmand %vm1391, %vm1584
  %vm1777 = vmand %vm1392, %vm1585
  %vm1778 = vmand %vm1393, %vm1586
  %vm1779 = vmand %vm1394, %vm1587
  %vm1780 = vmand %vm1395, %vm1588
  %vm1781 = vmand %vm1396, %vm1589
  %vm1782 = vmand %vm1397, %vm1590
  %vm1783 = vmand %vm1398, %vm1591
  %vm1784 = vmand %vm1399, %vm1592
  %vm1785 = vmand %vm1400, %vm1593
  %vm1786 = vmand %vm1401, %vm1594
  %vm1787 = vmand %vm1402, %vm1595
  %vm1788 = vmand %vm1403, %vm1596
  %vm1789 = vmand %vm1404, %vm1597
  %vm1790 = vmand %vm1405, %vm1598
  %vm1791 = vmand %vm1406, %vm1599
  %vm1792 = vmand %vm1407, %vm1600
  %vm1793 = vmand %vm1408, %vm1601
  %vm1794 = vmand %vm1409, %vm1602
  %vm1795 = vmand %vm1410, %vm1603
  %vm1796 = vmand %vm1411, %vm1604
  %vm1797 = vmand %vm1412, %vm1605
  %vm1798 = vmand %vm1413, %vm1606
  %vm1799 = vmand %vm1414, %vm1607
  %vm1800 = vmand %vm1415, %vm1608
  %vm1801 = vmand %vm1416, %vm1609
  %vm1802 = vmand %vm1417, %vm1610
  %vm1803 = vmand %vm1418, %vm1611
  %vm1804 = vmand %vm1419, %vm1612
  %vm1805 = vmand %vm1420, %vm1613
  %vm1806 = vmand %vm1421, %vm1614
  %vm1807 = vmand %vm1422, %vm1615
  %vm1808 = vmand %vm1423, %vm1616
  %vm1809 = vmand %vm1424, %vm1617
  %vm1810 = vmand %vm1425, %vm1618
  %vm1811 = vmand %vm1426, %vm1619
  %vm1812 = vmand %vm1427, %vm1620
  %vm1813 = vmand %vm1428, %vm1621
  %vm1814 = vmand %vm1429, %vm1622
  %vm1815 = vmand %vm1430, %vm1623
  %vm1816 = vmand %vm1431, %vm1624
  %vm1817 = vmand %vm1432, %vm1625
  %vm1818 = vmand %vm1433, %vm1626
  %vm1819 = vmand %vm1434, %vm1627
  %vm1820 = vmand %vm1435, %vm1628
  %vm1821 = vmand %vm1436, %vm1629
  %vm1822 = vmand %vm1437, %vm1630
  %vm1823 = vmand %vm1438, %vm1631
  %vm1824 = vmand %vm1439, %vm1632
  %vm1825 = vmand %vm1440, %vm1633
  %vm1826 = vmand %vm1441, %vm1634
  %vm1827 = vmand %vm1442, %vm1635
  %vm1828 = vmand %vm1443, %vm1636
  %vm1829 = vmand %vm1444, %vm1637
  %vm1830 = vmand %vm1445, %vm1638
  %vm1831 = vmand %vm1446, %vm1639
  %vm1832 = vmand %vm1447, %vm1640
  %vm1833 = vmand %vm1448, %vm1641
  %vm1834 = vmand %vm1449, %vm1642
  %vm1835 = vmand %vm1450, %vm1643
  %vm1836 = vmand %vm1451, %vm1644
  %vm1837 = vmand %vm1452, %vm1645
  %vm1838 = vmand %vm1453, %vm1646
  %vm1839 = vmand %vm1454, %vm1647
  %vm1840 = vmand %vm1455, %vm1648
  %vm1841 = vmand %vm1456, %vm1649
  %vm1842 = vmand %vm1457, %vm1650
  %vm1843 = vmand %vm1458, %vm1651
  %vm1844 = vmand %vm1459, %vm1652
  %vm1845 = vmand %vm1460, %vm1653
  %vm1846 = vmand %vm1461, %vm1654
  %vm1847 = vmand %vm1462, %vm1655
  %vm1848 = vmand %vm1463, %vm1656
  %vm1849 = vmand %vm1464, %vm1657
  %vm1850 = vmand %vm1465, %vm1658
  %vm1851 = vmand %vm1466, %vm1659
  %vm1852 = vmand %vm1467, %vm1660
  %vm1853 = vmand %vm1468, %vm1661
  %vm1854 = vmand %vm1469, %vm1662
  %vm1855 = vmand %vm1470, %vm1663
  %vm1856 = vmand %vm1471, %vm1664
  %vm1857 = vmand %vm1472, %vm1665
  %vm1858 = vmand %vm1473, %vm1666
  %vm1859 = vmand %vm1474, %vm1667
  %vm1860 = vmand %vm1475, %vm1668
  %vm1861 = vmand %vm1476, %vm1669
  %vm1862 = vmand %vm1477, %vm1670
  %vm1863 = vmand %vm1478, %vm1671
  %vm1864 = vmand %vm1479, %vm1672
  %vm1865 = vmand %vm1480, %vm1673
  %vm1866 = vmand %vm1481, %vm1674
  %vm1867 = vmand %vm1482, %vm1675
  %vm1868 = vmand %vm1483, %vm1676
  %vm1869 = vmand %vm1484, %vm1677
  %vm1870 = vmand %vm1485, %vm1678
  %vm1871 = vmand %vm1486, %vm1679
  %vm1872 = vmand %vm1487, %vm1680
  %vm1873 = vmand %vm1488, %vm1681
  %vm1874 = vmand %vm1489, %vm1682
  %vm1875 = vmand %vm1490, %vm1683
  %vm1876 = vmand %vm1491, %vm1684
  %vm1877 = vmand %vm1492, %vm1685
  %vm1878 = vmand %vm1493, %vm1686
  %vm1879 = vmand %vm1494, %vm1687
  %vm1880 = vmand %vm1495, %vm1688
  %vm1881 = vmand %vm1496, %vm1689
  %vm1882 = vmand %vm1497, %vm1690
  %vm1883 = vmand %vm1498, %vm1691
  %vm1884 = vmand %vm1499, %vm1692
  %vm1885 = vmand %vm1500, %vm1693
  %vm1886 = vmand %vm1501, %vm1694
  %vm1887 = vmand %vm1502, %vm1695
  %vm1888 = vmand %vm1503, %vm1696
  %vm1889 = vmand %vm1504, %vm1697
  %vm1890 = vmand %vm1505, %vm1698
  %vm1891 = vmand %vm1506, %vm1699
  %vm1892 = vmand %vm1507, %vm1700
  %vm1893 = vmand %vm1508, %vm1701
  %vm1894 = vmand %vm1509, %vm1702
  %vm1895 = vmand %vm1510, %vm1703
  %vm1896 = vmand %vm1511, %vm1704
  %vm1897 = vmand %vm1512, %vm1705
  %v1898 = vsel %vm1706, 1.0, 0.0
  %v1899 = vsel %vm1707, 1.0, 0.0
  %v1900 = vsel %vm1708, 1.0, 0.0
  %v1901 = vsel %vm1709, 1.0, 0.0
  %v1902 = vsel %vm1710, 1.0, 0.0
  %v1903 = vsel %vm1711, 1.0, 0.0
  %v1904 = vsel %vm1712, 1.0, 0.0
  %v1905 = vsel %vm1713, 1.0, 0.0
  %v1906 = vsel %vm1714, 1.0, 0.0
  %v1907 = vsel %vm1715, 1.0, 0.0
  %v1908 = vsel %vm1716, 1.0, 0.0
  %v1909 = vsel %vm1717, 1.0, 0.0
  %v1910 = vsel %vm1718, 1.0, 0.0
  %v1911 = vsel %vm1719, 1.0, 0.0
  %v1912 = vsel %vm1720, 1.0, 0.0
  %v1913 = vsel %vm1721, 1.0, 0.0
  %v1914 = vsel %vm1722, 1.0, 0.0
  %v1915 = vsel %vm1723, 1.0, 0.0
  %v1916 = vsel %vm1724, 1.0, 0.0
  %v1917 = vsel %vm1725, 1.0, 0.0
  %v1918 = vsel %vm1726, 1.0, 0.0
  %v1919 = vsel %vm1727, 1.0, 0.0
  %v1920 = vsel %vm1728, 1.0, 0.0
  %v1921 = vsel %vm1729, 1.0, 0.0
  %v1922 = vsel %vm1730, 1.0, 0.0
  %v1923 = vsel %vm1731, 1.0, 0.0
  %v1924 = vsel %vm1732, 1.0, 0.0
  %v1925 = vsel %vm1733, 1.0, 0.0
  %v1926 = vsel %vm1734, 1.0, 0.0
  %v1927 = vsel %vm1735, 1.0, 0.0
  %v1928 = vsel %vm1736, 1.0, 0.0
  %v1929 = vsel %vm1737, 1.0, 0.0
  %v1930 = vsel %vm1738, 1.0, 0.0
  %v1931 = vsel %vm1739, 1.0, 0.0
  %v1932 = vsel %vm1740, 1.0, 0.0
  %v1933 = vsel %vm1741, 1.0, 0.0
  %v1934 = vsel %vm1742, 1.0, 0.0
  %v1935 = vsel %vm1743, 1.0, 0.0
  %v1936 = vsel %vm1744, 1.0, 0.0
  %v1937 = vsel %vm1745, 1.0, 0.0
  %v1938 = vsel %vm1746, 1.0, 0.0
  %v1939 = vsel %vm1747, 1.0, 0.0
  %v1940 = vsel %vm1748, 1.0, 0.0
  %v1941 = vsel %vm1749, 1.0, 0.0
  %v1942 = vsel %vm1750, 1.0, 0.0
  %v1943 = vsel %vm1751, 1.0, 0.0
  %v1944 = vsel %vm1752, 1.0, 0.0
  %v1945 = vsel %vm1753, 1.0, 0.0
  %v1946 = vsel %vm1754, 1.0, 0.0
  %v1947 = vsel %vm1755, 1.0, 0.0
  %v1948 = vsel %vm1756, 1.0, 0.0
  %v1949 = vsel %vm1757, 1.0, 0.0
  %v1950 = vsel %vm1758, 1.0, 0.0
  %v1951 = vsel %vm1759, 1.0, 0.0
  %v1952 = vsel %vm1760, 1.0, 0.0
  %v1953 = vsel %vm1761, 1.0, 0.0
  %v1954 = vsel %vm1762, 1.0, 0.0
  %v1955 = vsel %vm1763, 1.0, 0.0
  %v1956 = vsel %vm1764, 1.0, 0.0
  %v1957 = vsel %vm1765, 1.0, 0.0
  %v1958 = vsel %vm1766, 1.0, 0.0
  %v1959 = vsel %vm1767, 1.0, 0.0
  %v1960 = vsel %vm1768, 1.0, 0.0
  %v1961 = vsel %vm1769, 1.0, 0.0
  %v1962 = vsel %vm1770, 1.0, 0.0
  %v1963 = vsel %vm1771, 1.0, 0.0
  %v1964 = vsel %vm1772, 1.0, 0.0
  %v1965 = vsel %vm1773, 1.0, 0.0
  %v1966 = vsel %vm1774, 1.0, 0.0
  %v1967 = vsel %vm1775, 1.0, 0.0
  %v1968 = vsel %vm1776, 1.0, 0.0
  %v1969 = vsel %vm1777, 1.0, 0.0
  %v1970 = vsel %vm1778, 1.0, 0.0
  %v1971 = vsel %vm1779, 1.0, 0.0
  %v1972 = vsel %vm1780, 1.0, 0.0
  %v1973 = vsel %vm1781, 1.0, 0.0
  %v1974 = vsel %vm1782, 1.0, 0.0
  %v1975 = vsel %vm1783, 1.0, 0.0
  %v1976 = vsel %vm1784, 1.0, 0.0
  %v1977 = vsel %vm1785, 1.0, 0.0
  %v1978 = vsel %vm1786, 1.0, 0.0
  %v1979 = vsel %vm1787, 1.0, 0.0
  %v1980 = vsel %vm1788, 1.0, 0.0
  %v1981 = vsel %vm1789, 1.0, 0.0
  %v1982 = vsel %vm1790, 1.0, 0.0
  %v1983 = vsel %vm1791, 1.0, 0.0
  %v1984 = vsel %vm1792, 1.0, 0.0
  %v1985 = vsel %vm1793, 1.0, 0.0
  %v1986 = vsel %vm1794, 1.0, 0.0
  %v1987 = vsel %vm1795, 1.0, 0.0
  %v1988 = vsel %vm1796, 1.0, 0.0
  %v1989 = vsel %vm1797, 1.0, 0.0
  %v1990 = vsel %vm1798, 1.0, 0.0
  %v1991 = vsel %vm1799, 1.0, 0.0
  %v1992 = vsel %vm1800, 1.0, 0.0
  %v1993 = vsel %vm1801, 1.0, 0.0
  %v1994 = vsel %vm1802, 1.0, 0.0
  %v1995 = vsel %vm1803, 1.0, 0.0
  %v1996 = vsel %vm1804, 1.0, 0.0
  %v1997 = vsel %vm1805, 1.0, 0.0
  %v1998 = vsel %vm1806, 1.0, 0.0
  %v1999 = vsel %vm1807, 1.0, 0.0
  %v2000 = vsel %vm1808, 1.0, 0.0
  %v2001 = vsel %vm1809, 1.0, 0.0
  %v2002 = vsel %vm1810, 1.0, 0.0
  %v2003 = vsel %vm1811, 1.0, 0.0
  %v2004 = vsel %vm1812, 1.0, 0.0
  %v2005 = vsel %vm1813, 1.0, 0.0
  %v2006 = vsel %vm1814, 1.0, 0.0
  %v2007 = vsel %vm1815, 1.0, 0.0
  %v2008 = vsel %vm1816, 1.0, 0.0
  %v2009 = vsel %vm1817, 1.0, 0.0
  %v2010 = vsel %vm1818, 1.0, 0.0
  %v2011 = vsel %vm1819, 1.0, 0.0
  %v2012 = vsel %vm1820, 1.0, 0.0
  %v2013 = vsel %vm1821, 1.0, 0.0
  %v2014 = vsel %vm1822, 1.0, 0.0
  %v2015 = vsel %vm1823, 1.0, 0.0
  %v2016 = vsel %vm1824, 1.0, 0.0
  %v2017 = vsel %vm1825, 1.0, 0.0
  %v2018 = vsel %vm1826, 1.0, 0.0
  %v2019 = vsel %vm1827, 1.0, 0.0
  %v2020 = vsel %vm1828, 1.0, 0.0
  %v2021 = vsel %vm1829, 1.0, 0.0
  %v2022 = vsel %vm1830, 1.0, 0.0
  %v2023 = vsel %vm1831, 1.0, 0.0
  %v2024 = vsel %vm1832, 1.0, 0.0
  %v2025 = vsel %vm1833, 1.0, 0.0
  %v2026 = vsel %vm1834, 1.0, 0.0
  %v2027 = vsel %vm1835, 1.0, 0.0
  %v2028 = vsel %vm1836, 1.0, 0.0
  %v2029 = vsel %vm1837, 1.0, 0.0
  %v2030 = vsel %vm1838, 1.0, 0.0
  %v2031 = vsel %vm1839, 1.0, 0.0
  %v2032 = vsel %vm1840, 1.0, 0.0
  %v2033 = vsel %vm1841, 1.0, 0.0
  %v2034 = vsel %vm1842, 1.0, 0.0
  %v2035 = vsel %vm1843, 1.0, 0.0
  %v2036 = vsel %vm1844, 1.0, 0.0
  %v2037 = vsel %vm1845, 1.0, 0.0
  %v2038 = vsel %vm1846, 1.0, 0.0
  %v2039 = vsel %vm1847, 1.0, 0.0
  %v2040 = vsel %vm1848, 1.0, 0.0
  %v2041 = vsel %vm1849, 1.0, 0.0
  %v2042 = vsel %vm1850, 1.0, 0.0
  %v2043 = vsel %vm1851, 1.0, 0.0
  %v2044 = vsel %vm1852, 1.0, 0.0
  %v2045 = vsel %vm1853, 1.0, 0.0
  %v2046 = vsel %vm1854, 1.0, 0.0
  %v2047 = vsel %vm1855, 1.0, 0.0
  %v2048 = vsel %vm1856, 1.0, 0.0
  %v2049 = vsel %vm1857, 1.0, 0.0
  %v2050 = vsel %vm1858, 1.0, 0.0
  %v2051 = vsel %vm1859, 1.0, 0.0
  %v2052 = vsel %vm1860, 1.0, 0.0
  %v2053 = vsel %vm1861, 1.0, 0.0
  %v2054 = vsel %vm1862, 1.0, 0.0
  %v2055 = vsel %vm1863, 1.0, 0.0
  %v2056 = vsel %vm1864, 1.0, 0.0
  %v2057 = vsel %vm1865, 1.0, 0.0
  %v2058 = vsel %vm1866, 1.0, 0.0
  %v2059 = vsel %vm1867, 1.0, 0.0
  %v2060 = vsel %vm1868, 1.0, 0.0
  %v2061 = vsel %vm1869, 1.0, 0.0
  %v2062 = vsel %vm1870, 1.0, 0.0
  %v2063 = vsel %vm1871, 1.0, 0.0
  %v2064 = vsel %vm1872, 1.0, 0.0
  %v2065 = vsel %vm1873, 1.0, 0.0
  %v2066 = vsel %vm1874, 1.0, 0.0
  %v2067 = vsel %vm1875, 1.0, 0.0
  %v2068 = vsel %vm1876, 1.0, 0.0
  %v2069 = vsel %vm1877, 1.0, 0.0
  %v2070 = vsel %vm1878, 1.0, 0.0
  %v2071 = vsel %vm1879, 1.0, 0.0
  %v2072 = vsel %vm1880, 1.0, 0.0
  %v2073 = vsel %vm1881, 1.0, 0.0
  %v2074 = vsel %vm1882, 1.0, 0.0
  %v2075 = vsel %vm1883, 1.0, 0.0
  %v2076 = vsel %vm1884, 1.0, 0.0
  %v2077 = vsel %vm1885, 1.0, 0.0
  %v2078 = vsel %vm1886, 1.0, 0.0
  %v2079 = vsel %vm1887, 1.0, 0.0
  %v2080 = vsel %vm1888, 1.0, 0.0
  %v2081 = vsel %vm1889, 1.0, 0.0
  %v2082 = vsel %vm1890, 1.0, 0.0
  %v2083 = vsel %vm1891, 1.0, 0.0
  %v2084 = vsel %vm1892, 1.0, 0.0
  %v2085 = vsel %vm1893, 1.0, 0.0
  %v2086 = vsel %vm1894, 1.0, 0.0
  %v2087 = vsel %vm1895, 1.0, 0.0
  %v2088 = vsel %vm1896, 1.0, 0.0
  %v2089 = vsel %vm1897, 1.0, 0.0
  %v2090 = vpack.c.bf16 %v1899, %v1898
  %v2091 = vpack.c.bf16 %v1901, %v1900
  %v2092 = vpack.c.bf16 %v1903, %v1902
  %v2093 = vpack.c.bf16 %v1905, %v1904
  %v2094 = vpack.c.bf16 %v1907, %v1906
  %v2095 = vpack.c.bf16 %v1909, %v1908
  %v2096 = vpack.c.bf16 %v1911, %v1910
  %v2097 = vpack.c.bf16 %v1913, %v1912
  %v2098 = vpack.c.bf16 %v1915, %v1914
  %v2099 = vpack.c.bf16 %v1917, %v1916
  %v2100 = vpack.c.bf16 %v1919, %v1918
  %v2101 = vpack.c.bf16 %v1921, %v1920
  %v2102 = vpack.c.bf16 %v1923, %v1922
  %v2103 = vpack.c.bf16 %v1925, %v1924
  %v2104 = vpack.c.bf16 %v1927, %v1926
  %v2105 = vpack.c.bf16 %v1929, %v1928
  %v2106 = vpack.c.bf16 %v1931, %v1930
  %v2107 = vpack.c.bf16 %v1933, %v1932
  %v2108 = vpack.c.bf16 %v1935, %v1934
  %v2109 = vpack.c.bf16 %v1937, %v1936
  %v2110 = vpack.c.bf16 %v1939, %v1938
  %v2111 = vpack.c.bf16 %v1941, %v1940
  %v2112 = vpack.c.bf16 %v1943, %v1942
  %v2113 = vpack.c.bf16 %v1945, %v1944
  %v2114 = vpack.c.bf16 %v1947, %v1946
  %v2115 = vpack.c.bf16 %v1949, %v1948
  %v2116 = vpack.c.bf16 %v1951, %v1950
  %v2117 = vpack.c.bf16 %v1953, %v1952
  %v2118 = vpack.c.bf16 %v1955, %v1954
  %v2119 = vpack.c.bf16 %v1957, %v1956
  %v2120 = vpack.c.bf16 %v1959, %v1958
  %v2121 = vpack.c.bf16 %v1961, %v1960
  %v2122 = vpack.c.bf16 %v1963, %v1962
  %v2123 = vpack.c.bf16 %v1965, %v1964
  %v2124 = vpack.c.bf16 %v1967, %v1966
  %v2125 = vpack.c.bf16 %v1969, %v1968
  %v2126 = vpack.c.bf16 %v1971, %v1970
  %v2127 = vpack.c.bf16 %v1973, %v1972
  %v2128 = vpack.c.bf16 %v1975, %v1974
  %v2129 = vpack.c.bf16 %v1977, %v1976
  %v2130 = vpack.c.bf16 %v1979, %v1978
  %v2131 = vpack.c.bf16 %v1981, %v1980
  %v2132 = vpack.c.bf16 %v1983, %v1982
  %v2133 = vpack.c.bf16 %v1985, %v1984
  %v2134 = vpack.c.bf16 %v1987, %v1986
  %v2135 = vpack.c.bf16 %v1989, %v1988
  %v2136 = vpack.c.bf16 %v1991, %v1990
  %v2137 = vpack.c.bf16 %v1993, %v1992
  %v2138 = vpack.c.bf16 %v1995, %v1994
  %v2139 = vpack.c.bf16 %v1997, %v1996
  %v2140 = vpack.c.bf16 %v1999, %v1998
  %v2141 = vpack.c.bf16 %v2001, %v2000
  %v2142 = vpack.c.bf16 %v2003, %v2002
  %v2143 = vpack.c.bf16 %v2005, %v2004
  %v2144 = vpack.c.bf16 %v2007, %v2006
  %v2145 = vpack.c.bf16 %v2009, %v2008
  %v2146 = vpack.c.bf16 %v2011, %v2010
  %v2147 = vpack.c.bf16 %v2013, %v2012
  %v2148 = vpack.c.bf16 %v2015, %v2014
  %v2149 = vpack.c.bf16 %v2017, %v2016
  %v2150 = vpack.c.bf16 %v2019, %v2018
  %v2151 = vpack.c.bf16 %v2021, %v2020
  %v2152 = vpack.c.bf16 %v2023, %v2022
  %v2153 = vpack.c.bf16 %v2025, %v2024
  %v2154 = vpack.c.bf16 %v2027, %v2026
  %v2155 = vpack.c.bf16 %v2029, %v2028
  %v2156 = vpack.c.bf16 %v2031, %v2030
  %v2157 = vpack.c.bf16 %v2033, %v2032
  %v2158 = vpack.c.bf16 %v2035, %v2034
  %v2159 = vpack.c.bf16 %v2037, %v2036
  %v2160 = vpack.c.bf16 %v2039, %v2038
  %v2161 = vpack.c.bf16 %v2041, %v2040
  %v2162 = vpack.c.bf16 %v2043, %v2042
  %v2163 = vpack.c.bf16 %v2045, %v2044
  %v2164 = vpack.c.bf16 %v2047, %v2046
  %v2165 = vpack.c.bf16 %v2049, %v2048
  %v2166 = vpack.c.bf16 %v2051, %v2050
  %v2167 = vpack.c.bf16 %v2053, %v2052
  %v2168 = vpack.c.bf16 %v2055, %v2054
  %v2169 = vpack.c.bf16 %v2057, %v2056
  %v2170 = vpack.c.bf16 %v2059, %v2058
  %v2171 = vpack.c.bf16 %v2061, %v2060
  %v2172 = vpack.c.bf16 %v2063, %v2062
  %v2173 = vpack.c.bf16 %v2065, %v2064
  %v2174 = vpack.c.bf16 %v2067, %v2066
  %v2175 = vpack.c.bf16 %v2069, %v2068
  %v2176 = vpack.c.bf16 %v2071, %v2070
  %v2177 = vpack.c.bf16 %v2073, %v2072
  %v2178 = vpack.c.bf16 %v2075, %v2074
  %v2179 = vpack.c.bf16 %v2077, %v2076
  %v2180 = vpack.c.bf16 %v2079, %v2078
  %v2181 = vpack.c.bf16 %v2081, %v2080
  %v2182 = vpack.c.bf16 %v2083, %v2082
  %v2183 = vpack.c.bf16 %v2085, %v2084
  %v2184 = vpack.c.bf16 %v2087, %v2086
  %v2185 = vpack.c.bf16 %v2089, %v2088
  %v2186 = vld [vmem:[#allocation2] sm:$0xff]
  %v2187 = vld [vmem:[#allocation2 + $0x8] sm:$0xff]
  %v2188 = vld [vmem:[#allocation2 + $0x10] sm:$0xff]
  %v2189 = vld [vmem:[#allocation2 + $0x18] sm:$0xff]
  %2190 = vmatprep.subr.bf16.mxu0 0
  %2191 = vmatpush1.bf16.msra.mxu0 %v2097
  %2192 = vmatprep.subr.bf16.mxu0 0
  %2193 = vmatpush1.bf16.msra.mxu0 %v2096
  %2194 = vmatprep.subr.bf16.mxu0 0
  %2195 = vmatpush1.bf16.msra.mxu0 %v2095
  %2196 = vmatprep.subr.bf16.mxu0 0
  %2197 = vmatpush1.bf16.msra.mxu0 %v2094
  %2198 = vmatprep.subr.bf16.mxu0 0
  %2199 = vmatpush1.bf16.msra.mxu0 %v2093
  %2200 = vmatprep.subr.bf16.mxu0 0
  %2201 = vmatpush1.bf16.msra.mxu0 %v2092
  %2202 = vmatprep.subr.bf16.mxu0 0
  %2203 = vmatpush1.bf16.msra.mxu0 %v2091
  %2204 = vmatprep.subr.bf16.mxu0 0
  %2205 = vmatpush1.bf16.msra.mxu0 %v2090
  %2206 = vmatprep.subr.bf16.mxu0 0
  %2207 = vmatpush2.bf16.msra.mxu0 %v2105
  %2208 = vmatprep.subr.bf16.mxu0 0
  %2209 = vmatpush2.bf16.msra.mxu0 %v2104
  %2210 = vmatprep.subr.bf16.mxu0 0
  %2211 = vmatpush2.bf16.msra.mxu0 %v2103
  %2212 = vmatprep.subr.bf16.mxu0 0
  %2213 = vmatpush2.bf16.msra.mxu0 %v2102
  %2214 = vmatprep.subr.bf16.mxu0 0
  %2215 = vmatpush2.bf16.msra.mxu0 %v2101
  %2216 = vmatprep.subr.bf16.mxu0 0
  %2217 = vmatpush2.bf16.msra.mxu0 %v2100
  %2218 = vmatprep.subr.bf16.mxu0 0
  %2219 = vmatpush2.bf16.msra.mxu0 %v2099
  %2220 = vmatprep.subr.bf16.mxu0 0
  %2221 = vmatpush2.bf16.msra.mxu0 %v2098
  %2222 = vmatprep.mubr.bf16.mxu0 %v908
  %2223 = vmatmul.mubr.bf16.gmra.mxu0 %v907
  %v2224 = vpop.f32.mrf.mxu0
  %v2225 = vadd.f32 0.0, %v2224
  %v2226 = vpop.f32.mrf.mxu0
  %v2227 = vpop.f32.mrf.mxu0
  %v2228 = vadd.f32 0.0, %v2227
  %v2229 = vpop.f32.mrf.mxu0
  %2230 = vmatprep.mubr.bf16.mxu0 %v920
  %2231 = vmatmul.mubr.bf16.gmra.mxu0 %v919
  %v2232 = vpop.f32.mrf.mxu0
  %v2233 = vadd.f32 0.0, %v2232
  %v2234 = vpop.f32.mrf.mxu0
  %v2235 = vpop.f32.mrf.mxu0
  %v2236 = vadd.f32 0.0, %v2235
  %v2237 = vpop.f32.mrf.mxu0
  %2238 = vdwg.mxu0
  %2239 = vmatprep.subr.bf16.mxu0 0
  %2240 = vmatpush1.bf16.msra.mxu0 %v2113
  %2241 = vmatprep.subr.bf16.mxu0 0
  %2242 = vmatpush1.bf16.msra.mxu0 %v2112
  %2243 = vmatprep.subr.bf16.mxu0 0
  %2244 = vmatpush1.bf16.msra.mxu0 %v2111
  %2245 = vmatprep.subr.bf16.mxu0 0
  %2246 = vmatpush1.bf16.msra.mxu0 %v2110
  %2247 = vmatprep.subr.bf16.mxu0 0
  %2248 = vmatpush1.bf16.msra.mxu0 %v2109
  %2249 = vmatprep.subr.bf16.mxu0 0
  %2250 = vmatpush1.bf16.msra.mxu0 %v2108
  %2251 = vmatprep.subr.bf16.mxu0 0
  %2252 = vmatpush1.bf16.msra.mxu0 %v2107
  %2253 = vmatprep.subr.bf16.mxu0 0
  %2254 = vmatpush1.bf16.msra.mxu0 %v2106
  %2255 = vmatprep.subr.bf16.mxu0 0
  %2256 = vmatpush2.bf16.msra.mxu0 %v2121
  %2257 = vmatprep.subr.bf16.mxu0 0
  %2258 = vmatpush2.bf16.msra.mxu0 %v2120
  %2259 = vmatprep.subr.bf16.mxu0 0
  %2260 = vmatpush2.bf16.msra.mxu0 %v2119
  %2261 = vmatprep.subr.bf16.mxu0 0
  %2262 = vmatpush2.bf16.msra.mxu0 %v2118
  %2263 = vmatprep.subr.bf16.mxu0 0
  %2264 = vmatpush2.bf16.msra.mxu0 %v2117
  %2265 = vmatprep.subr.bf16.mxu0 0
  %2266 = vmatpush2.bf16.msra.mxu0 %v2116
  %2267 = vmatprep.subr.bf16.mxu0 0
  %2268 = vmatpush2.bf16.msra.mxu0 %v2115
  %2269 = vmatprep.subr.bf16.mxu0 0
  %2270 = vmatpush2.bf16.msra.mxu0 %v2114
  %2271 = vmatprep.mubr.bf16.mxu0 %v910
  %2272 = vmatmul.mubr.bf16.gmra.mxu0 %v909
  %v2273 = vpop.f32.mrf.mxu0
  %v2274 = vadd.f32 %v2225, %v2273
  %v2275 = vpop.f32.mrf.mxu0
  %v2276 = vpop.f32.mrf.mxu0
  %v2277 = vadd.f32 %v2228, %v2276
  %v2278 = vpop.f32.mrf.mxu0
  %2279 = vmatprep.mubr.bf16.mxu0 %v922
  %2280 = vmatmul.mubr.bf16.gmra.mxu0 %v921
  %v2281 = vpop.f32.mrf.mxu0
  %v2282 = vadd.f32 %v2233, %v2281
  %v2283 = vpop.f32.mrf.mxu0
  %v2284 = vpop.f32.mrf.mxu0
  %v2285 = vadd.f32 %v2236, %v2284
  %v2286 = vpop.f32.mrf.mxu0
  %2287 = vdwg.mxu0
  %2288 = vmatprep.subr.bf16.mxu0 0
  %2289 = vmatpush1.bf16.msra.mxu0 %v2129
  %2290 = vmatprep.subr.bf16.mxu0 0
  %2291 = vmatpush1.bf16.msra.mxu0 %v2128
  %2292 = vmatprep.subr.bf16.mxu0 0
  %2293 = vmatpush1.bf16.msra.mxu0 %v2127
  %2294 = vmatprep.subr.bf16.mxu0 0
  %2295 = vmatpush1.bf16.msra.mxu0 %v2126
  %2296 = vmatprep.subr.bf16.mxu0 0
  %2297 = vmatpush1.bf16.msra.mxu0 %v2125
  %2298 = vmatprep.subr.bf16.mxu0 0
  %2299 = vmatpush1.bf16.msra.mxu0 %v2124
  %2300 = vmatprep.subr.bf16.mxu0 0
  %2301 = vmatpush1.bf16.msra.mxu0 %v2123
  %2302 = vmatprep.subr.bf16.mxu0 0
  %2303 = vmatpush1.bf16.msra.mxu0 %v2122
  %2304 = vmatprep.subr.bf16.mxu0 0
  %2305 = vmatpush2.bf16.msra.mxu0 %v2137
  %2306 = vmatprep.subr.bf16.mxu0 0
  %2307 = vmatpush2.bf16.msra.mxu0 %v2136
  %2308 = vmatprep.subr.bf16.mxu0 0
  %2309 = vmatpush2.bf16.msra.mxu0 %v2135
  %2310 = vmatprep.subr.bf16.mxu0 0
  %2311 = vmatpush2.bf16.msra.mxu0 %v2134
  %2312 = vmatprep.subr.bf16.mxu0 0
  %2313 = vmatpush2.bf16.msra.mxu0 %v2133
  %2314 = vmatprep.subr.bf16.mxu0 0
  %2315 = vmatpush2.bf16.msra.mxu0 %v2132
  %2316 = vmatprep.subr.bf16.mxu0 0
  %2317 = vmatpush2.bf16.msra.mxu0 %v2131
  %2318 = vmatprep.subr.bf16.mxu0 0
  %2319 = vmatpush2.bf16.msra.mxu0 %v2130
  %2320 = vmatprep.mubr.bf16.mxu0 %v912
  %2321 = vmatmul.mubr.bf16.gmra.mxu0 %v911
  %v2322 = vpop.f32.mrf.mxu0
  %v2323 = vadd.f32 %v2274, %v2322
  %v2324 = vpop.f32.mrf.mxu0
  %v2325 = vpop.f32.mrf.mxu0
  %v2326 = vadd.f32 %v2277, %v2325
  %v2327 = vpop.f32.mrf.mxu0
  %2328 = vmatprep.mubr.bf16.mxu0 %v924
  %2329 = vmatmul.mubr.bf16.gmra.mxu0 %v923
  %v2330 = vpop.f32.mrf.mxu0
  %v2331 = vadd.f32 %v2282, %v2330
  %v2332 = vpop.f32.mrf.mxu0
  %v2333 = vpop.f32.mrf.mxu0
  %v2334 = vadd.f32 %v2285, %v2333
  %v2335 = vpop.f32.mrf.mxu0
  %2336 = vdwg.mxu0
  %2337 = vmatprep.subr.bf16.mxu0 0
  %2338 = vmatpush1.bf16.msra.mxu0 %v2145
  %2339 = vmatprep.subr.bf16.mxu0 0
  %2340 = vmatpush1.bf16.msra.mxu0 %v2144
  %2341 = vmatprep.subr.bf16.mxu0 0
  %2342 = vmatpush1.bf16.msra.mxu0 %v2143
  %2343 = vmatprep.subr.bf16.mxu0 0
  %2344 = vmatpush1.bf16.msra.mxu0 %v2142
  %2345 = vmatprep.subr.bf16.mxu0 0
  %2346 = vmatpush1.bf16.msra.mxu0 %v2141
  %2347 = vmatprep.subr.bf16.mxu0 0
  %2348 = vmatpush1.bf16.msra.mxu0 %v2140
  %2349 = vmatprep.subr.bf16.mxu0 0
  %2350 = vmatpush1.bf16.msra.mxu0 %v2139
  %2351 = vmatprep.subr.bf16.mxu0 0
  %2352 = vmatpush1.bf16.msra.mxu0 %v2138
  %2353 = vmatprep.subr.bf16.mxu0 0
  %2354 = vmatpush2.bf16.msra.mxu0 %v2153
  %2355 = vmatprep.subr.bf16.mxu0 0
  %2356 = vmatpush2.bf16.msra.mxu0 %v2152
  %2357 = vmatprep.subr.bf16.mxu0 0
  %2358 = vmatpush2.bf16.msra.mxu0 %v2151
  %2359 = vmatprep.subr.bf16.mxu0 0
  %2360 = vmatpush2.bf16.msra.mxu0 %v2150
  %2361 = vmatprep.subr.bf16.mxu0 0
  %2362 = vmatpush2.bf16.msra.mxu0 %v2149
  %2363 = vmatprep.subr.bf16.mxu0 0
  %2364 = vmatpush2.bf16.msra.mxu0 %v2148
  %2365 = vmatprep.subr.bf16.mxu0 0
  %2366 = vmatpush2.bf16.msra.mxu0 %v2147
  %2367 = vmatprep.subr.bf16.mxu0 0
  %2368 = vmatpush2.bf16.msra.mxu0 %v2146
  %2369 = vmatprep.mubr.bf16.mxu0 %v914
  %2370 = vmatmul.mubr.bf16.gmra.mxu0 %v913
  %v2371 = vpop.f32.mrf.mxu0
  %v2372 = vadd.f32 %v2323, %v2371
  %v2373 = vpop.f32.mrf.mxu0
  %v2374 = vpop.f32.mrf.mxu0
  %v2375 = vadd.f32 %v2326, %v2374
  %v2376 = vpop.f32.mrf.mxu0
  %2377 = vmatprep.mubr.bf16.mxu0 %v926
  %2378 = vmatmul.mubr.bf16.gmra.mxu0 %v925
  %v2379 = vpop.f32.mrf.mxu0
  %v2380 = vadd.f32 %v2331, %v2379
  %v2381 = vpop.f32.mrf.mxu0
  %v2382 = vpop.f32.mrf.mxu0
  %v2383 = vadd.f32 %v2334, %v2382
  %v2384 = vpop.f32.mrf.mxu0
  %2385 = vdwg.mxu0
  %2386 = vmatprep.subr.bf16.mxu0 0
  %2387 = vmatpush1.bf16.msra.mxu0 %v2161
  %2388 = vmatprep.subr.bf16.mxu0 0
  %2389 = vmatpush1.bf16.msra.mxu0 %v2160
  %2390 = vmatprep.subr.bf16.mxu0 0
  %2391 = vmatpush1.bf16.msra.mxu0 %v2159
  %2392 = vmatprep.subr.bf16.mxu0 0
  %2393 = vmatpush1.bf16.msra.mxu0 %v2158
  %2394 = vmatprep.subr.bf16.mxu0 0
  %2395 = vmatpush1.bf16.msra.mxu0 %v2157
  %2396 = vmatprep.subr.bf16.mxu0 0
  %2397 = vmatpush1.bf16.msra.mxu0 %v2156
  %2398 = vmatprep.subr.bf16.mxu0 0
  %2399 = vmatpush1.bf16.msra.mxu0 %v2155
  %2400 = vmatprep.subr.bf16.mxu0 0
  %2401 = vmatpush1.bf16.msra.mxu0 %v2154
  %2402 = vmatprep.subr.bf16.mxu0 0
  %2403 = vmatpush2.bf16.msra.mxu0 %v2169
  %2404 = vmatprep.subr.bf16.mxu0 0
  %2405 = vmatpush2.bf16.msra.mxu0 %v2168
  %2406 = vmatprep.subr.bf16.mxu0 0
  %2407 = vmatpush2.bf16.msra.mxu0 %v2167
  %2408 = vmatprep.subr.bf16.mxu0 0
  %2409 = vmatpush2.bf16.msra.mxu0 %v2166
  %2410 = vmatprep.subr.bf16.mxu0 0
  %2411 = vmatpush2.bf16.msra.mxu0 %v2165
  %2412 = vmatprep.subr.bf16.mxu0 0
  %2413 = vmatpush2.bf16.msra.mxu0 %v2164
  %2414 = vmatprep.subr.bf16.mxu0 0
  %2415 = vmatpush2.bf16.msra.mxu0 %v2163
  %2416 = vmatprep.subr.bf16.mxu0 0
  %2417 = vmatpush2.bf16.msra.mxu0 %v2162
  %2418 = vmatprep.mubr.bf16.mxu0 %v916
  %2419 = vmatmul.mubr.bf16.gmra.mxu0 %v915
  %v2420 = vpop.f32.mrf.mxu0
  %v2421 = vadd.f32 %v2372, %v2420
  %v2422 = vpop.f32.mrf.mxu0
  %v2423 = vpop.f32.mrf.mxu0
  %v2424 = vadd.f32 %v2375, %v2423
  %v2425 = vpop.f32.mrf.mxu0
  %2426 = vmatprep.mubr.bf16.mxu0 %v928
  %2427 = vmatmul.mubr.bf16.gmra.mxu0 %v927
  %v2428 = vpop.f32.mrf.mxu0
  %v2429 = vadd.f32 %v2380, %v2428
  %v2430 = vpop.f32.mrf.mxu0
  %v2431 = vpop.f32.mrf.mxu0
  %v2432 = vadd.f32 %v2383, %v2431
  %v2433 = vpop.f32.mrf.mxu0
  %2434 = vdwg.mxu0
  %2435 = vmatprep.subr.bf16.mxu0 0
  %2436 = vmatpush1.bf16.msra.mxu0 %v2177
  %2437 = vmatprep.subr.bf16.mxu0 0
  %2438 = vmatpush1.bf16.msra.mxu0 %v2176
  %2439 = vmatprep.subr.bf16.mxu0 0
  %2440 = vmatpush1.bf16.msra.mxu0 %v2175
  %2441 = vmatprep.subr.bf16.mxu0 0
  %2442 = vmatpush1.bf16.msra.mxu0 %v2174
  %2443 = vmatprep.subr.bf16.mxu0 0
  %2444 = vmatpush1.bf16.msra.mxu0 %v2173
  %2445 = vmatprep.subr.bf16.mxu0 0
  %2446 = vmatpush1.bf16.msra.mxu0 %v2172
  %2447 = vmatprep.subr.bf16.mxu0 0
  %2448 = vmatpush1.bf16.msra.mxu0 %v2171
  %2449 = vmatprep.subr.bf16.mxu0 0
  %2450 = vmatpush1.bf16.msra.mxu0 %v2170
  %2451 = vmatprep.subr.bf16.mxu0 0
  %2452 = vmatpush2.bf16.msra.mxu0 %v2185
  %2453 = vmatprep.subr.bf16.mxu0 0
  %2454 = vmatpush2.bf16.msra.mxu0 %v2184
  %2455 = vmatprep.subr.bf16.mxu0 0
  %2456 = vmatpush2.bf16.msra.mxu0 %v2183
  %2457 = vmatprep.subr.bf16.mxu0 0
  %2458 = vmatpush2.bf16.msra.mxu0 %v2182
  %2459 = vmatprep.subr.bf16.mxu0 0
  %2460 = vmatpush2.bf16.msra.mxu0 %v2181
  %2461 = vmatprep.subr.bf16.mxu0 0
  %2462 = vmatpush2.bf16.msra.mxu0 %v2180
  %2463 = vmatprep.subr.bf16.mxu0 0
  %2464 = vmatpush2.bf16.msra.mxu0 %v2179
  %2465 = vmatprep.subr.bf16.mxu0 0
  %2466 = vmatpush2.bf16.msra.mxu0 %v2178
  %2467 = vmatprep.mubr.bf16.mxu0 %v918
  %2468 = vmatmul.mubr.bf16.gmra.mxu0 %v917
  %v2469 = vpop.f32.mrf.mxu0
  %v2470 = vadd.f32 %v2421, %v2469
  %v2471 = vpop.f32.mrf.mxu0
  %v2472 = vpop.f32.mrf.mxu0
  %v2473 = vadd.f32 %v2424, %v2472
  %v2474 = vpop.f32.mrf.mxu0
  %2475 = vmatprep.mubr.bf16.mxu0 %v930
  %2476 = vmatmul.mubr.bf16.gmra.mxu0 %v929
  %v2477 = vpop.f32.mrf.mxu0
  %v2478 = vadd.f32 %v2429, %v2477
  %v2479 = vpop.f32.mrf.mxu0
  %v2480 = vpop.f32.mrf.mxu0
  %v2481 = vadd.f32 %v2432, %v2480
  %v2482 = vpop.f32.mrf.mxu0
  %2483 = vdwg.mxu0
  %v2484 = vadd.f32 %v2186, %v2470
  %v2485 = vadd.f32 %v2187, %v2473
  %v2486 = vadd.f32 %v2188, %v2478
  %v2487 = vadd.f32 %v2189, %v2481
  %vm2488 = vcmask 48128
  %2489 = vst.msk [vmem:[#allocation2] sm:$0xff] %vm2488, %v2484
  %2490 = vst.msk [vmem:[#allocation2 + $0x8] sm:$0xff] %vm2488, %v2485
  %2491 = vst.msk [vmem:[#allocation2 + $0x10] sm:$0xff] %vm2488, %v2486
  %2492 = vst.msk [vmem:[#allocation2 + $0x18] sm:$0xff] %vm2488, %v2487
  // Predicated region
  $region42: #{triplet_forward.1} parent=0 // pred_check
    %p2493 = pneg %p55
  $region43: #{triplet_forward.1} parent=0 // pred_check_branch
    %2495 = sbr.rel (%p2493) target = $region45
  $region44: #{triplet_forward.1} parent=0 // pred_region
    %v2496 = vld [vmem:[#allocation2] sm:$0xff]
    %v2497 = vld [vmem:[#allocation2 + $0x8] sm:$0xff]
    %v2498 = vld [vmem:[#allocation2 + $0x10] sm:$0xff]
    %v2499 = vld [vmem:[#allocation2 + $0x18] sm:$0xff]
    %2500 = vxpose.xlu0.b32.start [1/16] %v2496, 128
    %2501 = vxpose.xlu0.b32.cont [2/16] %v2497, 128
    %2502 = vxpose.xlu0.b32.cont [3/16] %v2498, 128
    %2503 = vxpose.xlu0.b32.cont [4/16] %v2499, 128
    %2504 = vxpose.xlu0.b32.cont [5/16] 0.0, 128
    %2505 = vxpose.xlu0.b32.cont [6/16] 0.0, 128
    %2506 = vxpose.xlu0.b32.cont [7/16] 0.0, 128
    %2507 = vxpose.xlu0.b32.cont [8/16] 0.0, 128
    %2508 = vxpose.xlu0.b32.cont [9/16] 0.0, 128
    %2509 = vxpose.xlu0.b32.cont [10/16] 0.0, 128
    %2510 = vxpose.xlu0.b32.cont [11/16] 0.0, 128
    %2511 = vxpose.xlu0.b32.cont [12/16] 0.0, 128
    %2512 = vxpose.xlu0.b32.cont [13/16] 0.0, 128
    %2513 = vxpose.xlu0.b32.cont [14/16] 0.0, 128
    %2514 = vxpose.xlu0.b32.cont [15/16] 0.0, 128
    %2515 = vxpose.xlu0.b32.end [16/16] 0.0, 128
    %v2516 = vpop.trf.xlu0
    %v2517 = vpop.trf.xlu0
    %v2518 = vpop.trf.xlu0
    %v2519 = vpop.trf.xlu0
    %v2520 = vpop.trf.xlu0
    %v2521 = vpop.trf.xlu0
    %v2522 = vpop.trf.xlu0
    %v2523 = vpop.trf.xlu0
    %v2524 = vpop.trf.xlu0
    %v2525 = vpop.trf.xlu0
    %v2526 = vpop.trf.xlu0
    %v2527 = vpop.trf.xlu0
    %v2528 = vpop.trf.xlu0
    %v2529 = vpop.trf.xlu0
    %v2530 = vpop.trf.xlu0
    %v2531 = vpop.trf.xlu0
    %v2532 = vmul.f32 %v2516, 0.00390625
    %v2533 = vpack.c.bf16 %v2532, %v2532
    %v2534 = vld [vmem:[%s3] sm:$0xff]
    %v2535 = vld [vmem:[%s3 + $0x8] sm:$0xff]
    %v2536 = vld [vmem:[%s3 + $0x10] sm:$0xff]
    %v2537 = vld [vmem:[%s3 + $0x18] sm:$0xff]
    %v2538 = vld [vmem:[%s3 + $0x20] sm:$0xff]
    %v2539 = vld [vmem:[%s3 + $0x28] sm:$0xff]
    %v2540 = vld [vmem:[%s3 + $0x30] sm:$0xff]
    %v2541 = vld [vmem:[%s3 + $0x38] sm:$0xff]
    %v2542 = vld [vmem:[%s3 + $0x40] sm:$0xff]
    %v2543 = vld [vmem:[%s3 + $0x48] sm:$0xff]
    %v2544 = vld [vmem:[%s3 + $0x50] sm:$0xff]
    %v2545 = vld [vmem:[%s3 + $0x58] sm:$0xff]
    %v2546 = vld [vmem:[%s3 + $0x60] sm:$0xff]
    %v2547 = vld [vmem:[%s3 + $0x68] sm:$0xff]
    %v2548 = vld [vmem:[%s3 + $0x70] sm:$0xff]
    %v2549 = vld [vmem:[%s3 + $0x78] sm:$0xff]
    %v2550 = vld [vmem:[%s3 + $0x80] sm:$0xff]
    %v2551 = vld [vmem:[%s3 + $0x88] sm:$0xff]
    %v2552 = vld [vmem:[%s3 + $0x90] sm:$0xff]
    %v2553 = vld [vmem:[%s3 + $0x98] sm:$0xff]
    %v2554 = vld [vmem:[%s4] sm:$0xff]
    %v2555 = vld [vmem:[%s4 + $0x8] sm:$0x3]
    %v2558 = vlaneseq
    %v2559 = vshrl.u32 %v2558, 7
    %v2560 = vsub.s32 0, %v2559
    %v2561 = vrot.slane %v2554, %v2560
    %v2562 = vlaneseq
    %v2563 = vshrl.u32 %v2562, 7
    %v2564 = vsub.s32 1, %v2563
    %v2565 = vrot.slane %v2554, %v2564
    %v2566 = vlaneseq
    %v2567 = vshrl.u32 %v2566, 7
    %v2568 = vsub.s32 2, %v2567
    %v2569 = vrot.slane %v2554, %v2568
    %v2570 = vlaneseq
    %v2571 = vshrl.u32 %v2570, 7
    %v2572 = vsub.s32 3, %v2571
    %v2573 = vrot.slane %v2554, %v2572
    %v2574 = vlaneseq
    %v2575 = vshrl.u32 %v2574, 7
    %v2576 = vsub.s32 4, %v2575
    %v2577 = vrot.slane %v2554, %v2576
    %v2578 = vlaneseq
    %v2579 = vshrl.u32 %v2578, 7
    %v2580 = vsub.s32 5, %v2579
    %v2581 = vrot.slane %v2554, %v2580
    %v2582 = vlaneseq
    %v2583 = vshrl.u32 %v2582, 7
    %v2584 = vsub.s32 6, %v2583
    %v2585 = vrot.slane %v2554, %v2584
    %v2586 = vlaneseq
    %v2587 = vshrl.u32 %v2586, 7
    %v2588 = vsub.s32 7, %v2587
    %v2589 = vrot.slane %v2554, %v2588
    %v2590 = vlaneseq
    %v2591 = vshrl.u32 %v2590, 7
    %v2592 = vsub.s32 0, %v2591
    %v2593 = vrot.slane %v2555, %v2592
    %v2594 = vlaneseq
    %v2595 = vshrl.u32 %v2594, 7
    %v2596 = vsub.s32 1, %v2595
    %v2597 = vrot.slane %v2555, %v2596
    %v2628 = vunpack.c.l.b16 %v2534
    %v2629 = vunpack.c.h.b16 %v2534
    %v2630 = vunpack.c.l.b16 %v2535
    %v2631 = vunpack.c.h.b16 %v2535
    %v2632 = vunpack.c.l.b16 %v2536
    %v2633 = vunpack.c.h.b16 %v2536
    %v2634 = vunpack.c.l.b16 %v2537
    %v2635 = vunpack.c.h.b16 %v2537
    %v2636 = vunpack.c.l.b16 %v2538
    %v2637 = vunpack.c.h.b16 %v2538
    %v2638 = vunpack.c.l.b16 %v2539
    %v2639 = vunpack.c.h.b16 %v2539
    %v2640 = vunpack.c.l.b16 %v2540
    %v2641 = vunpack.c.h.b16 %v2540
    %v2642 = vunpack.c.l.b16 %v2541
    %v2643 = vunpack.c.h.b16 %v2541
    %v2644 = vunpack.c.l.b16 %v2542
    %v2645 = vunpack.c.h.b16 %v2542
    %v2646 = vunpack.c.l.b16 %v2543
    %v2647 = vunpack.c.h.b16 %v2543
    %v2648 = vunpack.c.l.b16 %v2544
    %v2649 = vunpack.c.h.b16 %v2544
    %v2650 = vunpack.c.l.b16 %v2545
    %v2651 = vunpack.c.h.b16 %v2545
    %v2652 = vunpack.c.l.b16 %v2546
    %v2653 = vunpack.c.h.b16 %v2546
    %v2654 = vunpack.c.l.b16 %v2547
    %v2655 = vunpack.c.h.b16 %v2547
    %v2656 = vunpack.c.l.b16 %v2548
    %v2657 = vunpack.c.h.b16 %v2548
    %v2658 = vunpack.c.l.b16 %v2549
    %v2659 = vunpack.c.h.b16 %v2549
    %v2660 = vunpack.c.l.b16 %v2550
    %v2661 = vunpack.c.h.b16 %v2550
    %v2662 = vunpack.c.l.b16 %v2551
    %v2663 = vunpack.c.h.b16 %v2551
    %v2664 = vunpack.c.l.b16 %v2552
    %v2665 = vunpack.c.h.b16 %v2552
    %v2666 = vunpack.c.l.b16 %v2553
    %v2667 = vunpack.c.h.b16 %v2553
    %v2668 = vpack.c.b16 %v2638, %v2628
    %v2669 = vpack.c.b16 %v2639, %v2629
    %v2670 = vpack.c.b16 %v2640, %v2630
    %v2671 = vpack.c.b16 %v2641, %v2631
    %v2672 = vpack.c.b16 %v2642, %v2632
    %v2673 = vpack.c.b16 %v2643, %v2633
    %v2674 = vpack.c.b16 %v2644, %v2634
    %v2675 = vpack.c.b16 %v2645, %v2635
    %v2676 = vpack.c.b16 %v2646, %v2636
    %v2677 = vpack.c.b16 %v2647, %v2637
    %v2678 = vpack.c.b16 %v2658, %v2648
    %v2679 = vpack.c.b16 %v2659, %v2649
    %v2680 = vpack.c.b16 %v2660, %v2650
    %v2681 = vpack.c.b16 %v2661, %v2651
    %v2682 = vpack.c.b16 %v2662, %v2652
    %v2683 = vpack.c.b16 %v2663, %v2653
    %v2684 = vpack.c.b16 %v2664, %v2654
    %v2685 = vpack.c.b16 %v2665, %v2655
    %v2686 = vpack.c.b16 %v2666, %v2656
    %v2687 = vpack.c.b16 %v2667, %v2657
    %v2709 = vsel %vm246, %v2533, 0
    %2711 = vmatprep.subr.bf16.mxu0 0
    %2712 = vmatpush1.bf16.msra.mxu0 0
    %2713 = vmatprep.subr.bf16.mxu0 0
    %2714 = vmatpush1.bf16.msra.mxu0 0
    %2715 = vmatprep.subr.bf16.mxu0 0
    %2716 = vmatpush1.bf16.msra.mxu0 0
    %2717 = vmatprep.subr.bf16.mxu0 0
    %2718 = vmatpush1.bf16.msra.mxu0 0
    %2719 = vmatprep.subr.bf16.mxu0 0
    %2720 = vmatpush1.bf16.msra.mxu0 0
    %2721 = vmatprep.subr.bf16.mxu0 0
    %2722 = vmatpush1.bf16.msra.mxu0 0
    %2723 = vmatprep.subr.bf16.mxu0 %v2679
    %2724 = vmatpush1.bf16.msra.mxu0 %v2678
    %2725 = vmatprep.subr.bf16.mxu0 %v2669
    %2726 = vmatpush1.bf16.msra.mxu0 %v2668
    %2727 = vmatprep.subr.bf16.mxu0 0
    %2728 = vmatpush2.bf16.msra.mxu0 0
    %2729 = vmatprep.subr.bf16.mxu0 0
    %2730 = vmatpush2.bf16.msra.mxu0 0
    %2731 = vmatprep.subr.bf16.mxu0 0
    %2732 = vmatpush2.bf16.msra.mxu0 0
    %2733 = vmatprep.subr.bf16.mxu0 0
    %2734 = vmatpush2.bf16.msra.mxu0 0
    %2735 = vmatprep.subr.bf16.mxu0 0
    %2736 = vmatpush2.bf16.msra.mxu0 0
    %2737 = vmatprep.subr.bf16.mxu0 0
    %2738 = vmatpush2.bf16.msra.mxu0 0
    %2739 = vmatprep.subr.bf16.mxu0 0
    %2740 = vmatpush2.bf16.msra.mxu0 0
    %2741 = vmatprep.subr.bf16.mxu0 0
    %2742 = vmatpush2.bf16.msra.mxu0 0
    %2743 = vmatprep.mubr.bf16.mxu0 0
    %2744 = vmatmul.mubr.bf16.gmra.mxu0 %v2709
    %v2745 = vpop.f32.mrf.mxu0
    %v2746 = vadd.f32 %v2561, %v2745
    %v2747 = vpop.f32.mrf.mxu0
    %v2748 = vadd.f32 %v2565, %v2747
    %v2749 = vpop.f32.mrf.mxu0
    %v2750 = vpop.f32.mrf.mxu0
    %2751 = vdwg.mxu0
    %2752 = vmatprep.subr.bf16.mxu0 0
    %2753 = vmatpush1.bf16.msra.mxu0 0
    %2754 = vmatprep.subr.bf16.mxu0 0
    %2755 = vmatpush1.bf16.msra.mxu0 0
    %2756 = vmatprep.subr.bf16.mxu0 0
    %2757 = vmatpush1.bf16.msra.mxu0 0
    %2758 = vmatprep.subr.bf16.mxu0 0
    %2759 = vmatpush1.bf16.msra.mxu0 0
    %2760 = vmatprep.subr.bf16.mxu0 0
    %2761 = vmatpush1.bf16.msra.mxu0 0
    %2762 = vmatprep.subr.bf16.mxu0 0
    %2763 = vmatpush1.bf16.msra.mxu0 0
    %2764 = vmatprep.subr.bf16.mxu0 %v2681
    %2765 = vmatpush1.bf16.msra.mxu0 %v2680
    %2766 = vmatprep.subr.bf16.mxu0 %v2671
    %2767 = vmatpush1.bf16.msra.mxu0 %v2670
    %2768 = vmatprep.subr.bf16.mxu0 0
    %2769 = vmatpush2.bf16.msra.mxu0 0
    %2770 = vmatprep.subr.bf16.mxu0 0
    %2771 = vmatpush2.bf16.msra.mxu0 0
    %2772 = vmatprep.subr.bf16.mxu0 0
    %2773 = vmatpush2.bf16.msra.mxu0 0
    %2774 = vmatprep.subr.bf16.mxu0 0
    %2775 = vmatpush2.bf16.msra.mxu0 0
    %2776 = vmatprep.subr.bf16.mxu0 0
    %2777 = vmatpush2.bf16.msra.mxu0 0
    %2778 = vmatprep.subr.bf16.mxu0 0
    %2779 = vmatpush2.bf16.msra.mxu0 0
    %2780 = vmatprep.subr.bf16.mxu0 0
    %2781 = vmatpush2.bf16.msra.mxu0 0
    %2782 = vmatprep.subr.bf16.mxu0 0
    %2783 = vmatpush2.bf16.msra.mxu0 0
    %2784 = vmatprep.mubr.bf16.mxu0 0
    %2785 = vmatmul.mubr.bf16.gmra.mxu0 %v2709
    %v2786 = vpop.f32.mrf.mxu0
    %v2787 = vadd.f32 %v2569, %v2786
    %v2788 = vpop.f32.mrf.mxu0
    %v2789 = vadd.f32 %v2573, %v2788
    %v2790 = vpop.f32.mrf.mxu0
    %v2791 = vpop.f32.mrf.mxu0
    %2792 = vdwg.mxu0
    %2793 = vmatprep.subr.bf16.mxu0 0
    %2794 = vmatpush1.bf16.msra.mxu0 0
    %2795 = vmatprep.subr.bf16.mxu0 0
    %2796 = vmatpush1.bf16.msra.mxu0 0
    %2797 = vmatprep.subr.bf16.mxu0 0
    %2798 = vmatpush1.bf16.msra.mxu0 0
    %2799 = vmatprep.subr.bf16.mxu0 0
    %2800 = vmatpush1.bf16.msra.mxu0 0
    %2801 = vmatprep.subr.bf16.mxu0 0
    %2802 = vmatpush1.bf16.msra.mxu0 0
    %2803 = vmatprep.subr.bf16.mxu0 0
    %2804 = vmatpush1.bf16.msra.mxu0 0
    %2805 = vmatprep.subr.bf16.mxu0 %v2683
    %2806 = vmatpush1.bf16.msra.mxu0 %v2682
    %2807 = vmatprep.subr.bf16.mxu0 %v2673
    %2808 = vmatpush1.bf16.msra.mxu0 %v2672
    %2809 = vmatprep.subr.bf16.mxu0 0
    %2810 = vmatpush2.bf16.msra.mxu0 0
    %2811 = vmatprep.subr.bf16.mxu0 0
    %2812 = vmatpush2.bf16.msra.mxu0 0
    %2813 = vmatprep.subr.bf16.mxu0 0
    %2814 = vmatpush2.bf16.msra.mxu0 0
    %2815 = vmatprep.subr.bf16.mxu0 0
    %2816 = vmatpush2.bf16.msra.mxu0 0
    %2817 = vmatprep.subr.bf16.mxu0 0
    %2818 = vmatpush2.bf16.msra.mxu0 0
    %2819 = vmatprep.subr.bf16.mxu0 0
    %2820 = vmatpush2.bf16.msra.mxu0 0
    %2821 = vmatprep.subr.bf16.mxu0 0
    %2822 = vmatpush2.bf16.msra.mxu0 0
    %2823 = vmatprep.subr.bf16.mxu0 0
    %2824 = vmatpush2.bf16.msra.mxu0 0
    %2825 = vmatprep.mubr.bf16.mxu0 0
    %2826 = vmatmul.mubr.bf16.gmra.mxu0 %v2709
    %v2827 = vpop.f32.mrf.mxu0
    %v2828 = vadd.f32 %v2577, %v2827
    %v2829 = vpop.f32.mrf.mxu0
    %v2830 = vadd.f32 %v2581, %v2829
    %v2831 = vpop.f32.mrf.mxu0
    %v2832 = vpop.f32.mrf.mxu0
    %2833 = vdwg.mxu0
    %2834 = vmatprep.subr.bf16.mxu0 0
    %2835 = vmatpush1.bf16.msra.mxu0 0
    %2836 = vmatprep.subr.bf16.mxu0 0
    %2837 = vmatpush1.bf16.msra.mxu0 0
    %2838 = vmatprep.subr.bf16.mxu0 0
    %2839 = vmatpush1.bf16.msra.mxu0 0
    %2840 = vmatprep.subr.bf16.mxu0 0
    %2841 = vmatpush1.bf16.msra.mxu0 0
    %2842 = vmatprep.subr.bf16.mxu0 0
    %2843 = vmatpush1.bf16.msra.mxu0 0
    %2844 = vmatprep.subr.bf16.mxu0 0
    %2845 = vmatpush1.bf16.msra.mxu0 0
    %2846 = vmatprep.subr.bf16.mxu0 %v2685
    %2847 = vmatpush1.bf16.msra.mxu0 %v2684
    %2848 = vmatprep.subr.bf16.mxu0 %v2675
    %2849 = vmatpush1.bf16.msra.mxu0 %v2674
    %2850 = vmatprep.subr.bf16.mxu0 0
    %2851 = vmatpush2.bf16.msra.mxu0 0
    %2852 = vmatprep.subr.bf16.mxu0 0
    %2853 = vmatpush2.bf16.msra.mxu0 0
    %2854 = vmatprep.subr.bf16.mxu0 0
    %2855 = vmatpush2.bf16.msra.mxu0 0
    %2856 = vmatprep.subr.bf16.mxu0 0
    %2857 = vmatpush2.bf16.msra.mxu0 0
    %2858 = vmatprep.subr.bf16.mxu0 0
    %2859 = vmatpush2.bf16.msra.mxu0 0
    %2860 = vmatprep.subr.bf16.mxu0 0
    %2861 = vmatpush2.bf16.msra.mxu0 0
    %2862 = vmatprep.subr.bf16.mxu0 0
    %2863 = vmatpush2.bf16.msra.mxu0 0
    %2864 = vmatprep.subr.bf16.mxu0 0
    %2865 = vmatpush2.bf16.msra.mxu0 0
    %2866 = vmatprep.mubr.bf16.mxu0 0
    %2867 = vmatmul.mubr.bf16.gmra.mxu0 %v2709
    %v2868 = vpop.f32.mrf.mxu0
    %v2869 = vadd.f32 %v2585, %v2868
    %v2870 = vpop.f32.mrf.mxu0
    %v2871 = vadd.f32 %v2589, %v2870
    %v2872 = vpop.f32.mrf.mxu0
    %v2873 = vpop.f32.mrf.mxu0
    %2874 = vdwg.mxu0
    %2875 = vmatprep.subr.bf16.mxu0 0
    %2876 = vmatpush1.bf16.msra.mxu0 0
    %2877 = vmatprep.subr.bf16.mxu0 0
    %2878 = vmatpush1.bf16.msra.mxu0 0
    %2879 = vmatprep.subr.bf16.mxu0 0
    %2880 = vmatpush1.bf16.msra.mxu0 0
    %2881 = vmatprep.subr.bf16.mxu0 0
    %2882 = vmatpush1.bf16.msra.mxu0 0
    %2883 = vmatprep.subr.bf16.mxu0 0
    %2884 = vmatpush1.bf16.msra.mxu0 0
    %2885 = vmatprep.subr.bf16.mxu0 0
    %2886 = vmatpush1.bf16.msra.mxu0 0
    %2887 = vmatprep.subr.bf16.mxu0 %v2687
    %2888 = vmatpush1.bf16.msra.mxu0 %v2686
    %2889 = vmatprep.subr.bf16.mxu0 %v2677
    %2890 = vmatpush1.bf16.msra.mxu0 %v2676
    %2891 = vmatprep.subr.bf16.mxu0 0
    %2892 = vmatpush2.bf16.msra.mxu0 0
    %2893 = vmatprep.subr.bf16.mxu0 0
    %2894 = vmatpush2.bf16.msra.mxu0 0
    %2895 = vmatprep.subr.bf16.mxu0 0
    %2896 = vmatpush2.bf16.msra.mxu0 0
    %2897 = vmatprep.subr.bf16.mxu0 0
    %2898 = vmatpush2.bf16.msra.mxu0 0
    %2899 = vmatprep.subr.bf16.mxu0 0
    %2900 = vmatpush2.bf16.msra.mxu0 0
    %2901 = vmatprep.subr.bf16.mxu0 0
    %2902 = vmatpush2.bf16.msra.mxu0 0
    %2903 = vmatprep.subr.bf16.mxu0 0
    %2904 = vmatpush2.bf16.msra.mxu0 0
    %2905 = vmatprep.subr.bf16.mxu0 0
    %2906 = vmatpush2.bf16.msra.mxu0 0
    %2907 = vmatprep.mubr.bf16.mxu0 0
    %2908 = vmatmul.mubr.bf16.gmra.mxu0 %v2709
    %v2909 = vpop.f32.mrf.mxu0
    %v2910 = vadd.f32 %v2593, %v2909
    %v2911 = vpop.f32.mrf.mxu0
    %v2912 = vadd.f32 %v2597, %v2911
    %v2913 = vpop.f32.mrf.mxu0
    %v2914 = vpop.f32.mrf.mxu0
    %2915 = vdwg.mxu0
    %v2916 = vxor.u32 %v2746, 2147483648
    %v2917 = vxor.u32 %v2748, 2147483648
    %v2918 = vxor.u32 %v2787, 2147483648
    %v2919 = vxor.u32 %v2789, 2147483648
    %v2920 = vxor.u32 %v2828, 2147483648
    %v2921 = vxor.u32 %v2830, 2147483648
    %v2922 = vxor.u32 %v2869, 2147483648
    %v2923 = vxor.u32 %v2871, 2147483648
    %v2924 = vxor.u32 %v2910, 2147483648
    %v2925 = vxor.u32 %v2912, 2147483648
    %v2926 = vmul.f32 %v2916, 1.442695
    %v2927 = vpow.pop %v2926
    %v2928 = vmul.f32 %v2917, 1.442695
    %v2929 = vpow.pop %v2928
    %v2930 = vmul.f32 %v2918, 1.442695
    %v2931 = vpow.pop %v2930
    %v2932 = vmul.f32 %v2919, 1.442695
    %v2933 = vpow.pop %v2932
    %v2934 = vmul.f32 %v2920, 1.442695
    %v2935 = vpow.pop %v2934
    %v2936 = vmul.f32 %v2921, 1.442695
    %v2937 = vpow.pop %v2936
    %v2938 = vmul.f32 %v2922, 1.442695
    %v2939 = vpow.pop %v2938
    %v2940 = vmul.f32 %v2923, 1.442695
    %v2941 = vpow.pop %v2940
    %v2942 = vmul.f32 %v2924, 1.442695
    %v2943 = vpow.pop %v2942
    %v2944 = vmul.f32 %v2925, 1.442695
    %v2945 = vpow.pop %v2944
    %v2946 = vadd.f32 %v2927, 1.0
    %v2947 = vadd.f32 %v2929, 1.0
    %v2948 = vadd.f32 %v2931, 1.0
    %v2949 = vadd.f32 %v2933, 1.0
    %v2950 = vadd.f32 %v2935, 1.0
    %v2951 = vadd.f32 %v2937, 1.0
    %v2952 = vadd.f32 %v2939, 1.0
    %v2953 = vadd.f32 %v2941, 1.0
    %v2954 = vadd.f32 %v2943, 1.0
    %v2955 = vadd.f32 %v2945, 1.0
    %v2956 = vrcp.pop %v2946
    %v2957 = vmul.f32 1.0, %v2956
    %v2958 = vrcp.pop %v2947
    %v2959 = vmul.f32 1.0, %v2958
    %v2960 = vrcp.pop %v2948
    %v2961 = vmul.f32 1.0, %v2960
    %v2962 = vrcp.pop %v2949
    %v2963 = vmul.f32 1.0, %v2962
    %v2964 = vrcp.pop %v2950
    %v2965 = vmul.f32 1.0, %v2964
    %v2966 = vrcp.pop %v2951
    %v2967 = vmul.f32 1.0, %v2966
    %v2968 = vrcp.pop %v2952
    %v2969 = vmul.f32 1.0, %v2968
    %v2970 = vrcp.pop %v2953
    %v2971 = vmul.f32 1.0, %v2970
    %v2972 = vrcp.pop %v2954
    %v2973 = vmul.f32 1.0, %v2972
    %v2974 = vrcp.pop %v2955
    %v2975 = vmul.f32 1.0, %v2974
    %v2976 = vmul.f32 %v2746, %v2957
    %v2977 = vmul.f32 %v2748, %v2959
    %v2978 = vmul.f32 %v2787, %v2961
    %v2979 = vmul.f32 %v2789, %v2963
    %v2980 = vmul.f32 %v2828, %v2965
    %v2981 = vmul.f32 %v2830, %v2967
    %v2982 = vmul.f32 %v2869, %v2969
    %v2983 = vmul.f32 %v2871, %v2971
    %v2984 = vmul.f32 %v2910, %v2973
    %v2985 = vmul.f32 %v2912, %v2975
    %v2986 = vpack.c.bf16 %v2976, %v2976
    %v2987 = vpack.c.bf16 %v2977, %v2977
    %v2988 = vpack.c.bf16 %v2978, %v2978
    %v2989 = vpack.c.bf16 %v2979, %v2979
    %v2990 = vpack.c.bf16 %v2980, %v2980
    %v2991 = vpack.c.bf16 %v2981, %v2981
    %v2992 = vpack.c.bf16 %v2982, %v2982
    %v2993 = vpack.c.bf16 %v2983, %v2983
    %v2994 = vpack.c.bf16 %v2984, %v2984
    %v2995 = vpack.c.bf16 %v2985, %v2985
    %v2996 = vld [vmem:[%s5] sm:$0xff]
    %v2997 = vld [vmem:[%s5 + $0x8] sm:$0xff]
    %v2998 = vld [vmem:[%s5 + $0x10] sm:$0xff]
    %v2999 = vld [vmem:[%s5 + $0x18] sm:$0xff]
    %v3000 = vld [vmem:[%s5 + $0x20] sm:$0xff]
    %v3001 = vld [vmem:[%s5 + $0x28] sm:$0xff]
    %v3002 = vld [vmem:[%s5 + $0x30] sm:$0xff]
    %v3003 = vld [vmem:[%s5 + $0x38] sm:$0xff]
    %v3004 = vld [vmem:[%s5 + $0x40] sm:$0xff]
    %v3005 = vld [vmem:[%s5 + $0x48] sm:$0xff]
    %v3006 = vld [vmem:[%s5 + $0x50] sm:$0xff]
    %v3007 = vld [vmem:[%s5 + $0x58] sm:$0xff]
    %v3008 = vld [vmem:[%s5 + $0x60] sm:$0xff]
    %v3009 = vld [vmem:[%s5 + $0x68] sm:$0xff]
    %v3010 = vld [vmem:[%s5 + $0x70] sm:$0xff]
    %v3011 = vld [vmem:[%s5 + $0x78] sm:$0xff]
    %v3012 = vld [vmem:[%s5 + $0x80] sm:$0xff]
    %v3013 = vld [vmem:[%s5 + $0x88] sm:$0xff]
    %v3014 = vld [vmem:[%s5 + $0x90] sm:$0xff]
    %v3015 = vld [vmem:[%s5 + $0x98] sm:$0xff]
    %v3016 = vld [vmem:[%s5 + $0xa0] sm:$0xff]
    %v3017 = vld [vmem:[%s5 + $0xa8] sm:$0xff]
    %v3018 = vld [vmem:[%s5 + $0xb0] sm:$0xff]
    %v3019 = vld [vmem:[%s5 + $0xb8] sm:$0xff]
    %v3020 = vld [vmem:[%s5 + $0xc0] sm:$0xff]
    %v3021 = vld [vmem:[%s5 + $0xc8] sm:$0xff]
    %v3022 = vld [vmem:[%s5 + $0xd0] sm:$0xff]
    %v3023 = vld [vmem:[%s5 + $0xd8] sm:$0xff]
    %v3024 = vld [vmem:[%s5 + $0xe0] sm:$0xff]
    %v3025 = vld [vmem:[%s5 + $0xe8] sm:$0xff]
    %v3026 = vld [vmem:[%s5 + $0xf0] sm:$0xff]
    %v3027 = vld [vmem:[%s5 + $0xf8] sm:$0xff]
    %v3028 = vld [vmem:[%s5 + $0x100] sm:$0xff]
    %v3029 = vld [vmem:[%s5 + $0x108] sm:$0xff]
    %v3030 = vld [vmem:[%s5 + $0x110] sm:$0xff]
    %v3031 = vld [vmem:[%s5 + $0x118] sm:$0xff]
    %v3032 = vld [vmem:[%s5 + $0x120] sm:$0xff]
    %v3033 = vld [vmem:[%s5 + $0x128] sm:$0xff]
    %v3034 = vld [vmem:[%s5 + $0x130] sm:$0xff]
    %v3035 = vld [vmem:[%s5 + $0x138] sm:$0xff]
    %v3036 = vld [vmem:[%s5 + $0x140] sm:$0xff]
    %v3037 = vld [vmem:[%s5 + $0x148] sm:$0xff]
    %v3038 = vld [vmem:[%s5 + $0x150] sm:$0xff]
    %v3039 = vld [vmem:[%s5 + $0x158] sm:$0xff]
    %v3040 = vld [vmem:[%s5 + $0x160] sm:$0xff]
    %v3041 = vld [vmem:[%s5 + $0x168] sm:$0xff]
    %v3042 = vld [vmem:[%s5 + $0x170] sm:$0xff]
    %v3043 = vld [vmem:[%s5 + $0x178] sm:$0xff]
    %v3044 = vld [vmem:[%s5 + $0x180] sm:$0xff]
    %v3045 = vld [vmem:[%s5 + $0x188] sm:$0xff]
    %v3046 = vld [vmem:[%s5 + $0x190] sm:$0xff]
    %v3047 = vld [vmem:[%s5 + $0x198] sm:$0xff]
    %v3048 = vld [vmem:[%s5 + $0x1a0] sm:$0xff]
    %v3049 = vld [vmem:[%s5 + $0x1a8] sm:$0xff]
    %v3050 = vld [vmem:[%s5 + $0x1b0] sm:$0xff]
    %v3051 = vld [vmem:[%s5 + $0x1b8] sm:$0xff]
    %v3052 = vld [vmem:[%s5 + $0x1c0] sm:$0xff]
    %v3053 = vld [vmem:[%s5 + $0x1c8] sm:$0xff]
    %v3054 = vld [vmem:[%s5 + $0x1d0] sm:$0xff]
    %v3055 = vld [vmem:[%s5 + $0x1d8] sm:$0xff]
    %v3056 = vld [vmem:[%s5 + $0x1e0] sm:$0xff]
    %v3057 = vld [vmem:[%s5 + $0x1e8] sm:$0xff]
    %v3058 = vld [vmem:[%s5 + $0x1f0] sm:$0xff]
    %v3059 = vld [vmem:[%s5 + $0x1f8] sm:$0xff]
    %v3060 = vld [vmem:[%s5 + $0x200] sm:$0xff]
    %v3061 = vld [vmem:[%s5 + $0x208] sm:$0xff]
    %v3062 = vld [vmem:[%s5 + $0x210] sm:$0xff]
    %v3063 = vld [vmem:[%s5 + $0x218] sm:$0xff]
    %v3064 = vld [vmem:[%s5 + $0x220] sm:$0xff]
    %v3065 = vld [vmem:[%s5 + $0x228] sm:$0xff]
    %v3066 = vld [vmem:[%s5 + $0x230] sm:$0xff]
    %v3067 = vld [vmem:[%s5 + $0x238] sm:$0xff]
    %v3068 = vld [vmem:[%s5 + $0x240] sm:$0xff]
    %v3069 = vld [vmem:[%s5 + $0x248] sm:$0xff]
    %v3070 = vld [vmem:[%s5 + $0x250] sm:$0xff]
    %v3071 = vld [vmem:[%s5 + $0x258] sm:$0xff]
    %v3072 = vld [vmem:[%s5 + $0x260] sm:$0xff]
    %v3073 = vld [vmem:[%s5 + $0x268] sm:$0xff]
    %v3074 = vld [vmem:[%s5 + $0x270] sm:$0xff]
    %v3075 = vld [vmem:[%s5 + $0x278] sm:$0xff]
    %v3076 = vld [vmem:[%s5 + $0x280] sm:$0xff]
    %v3077 = vld [vmem:[%s5 + $0x288] sm:$0xff]
    %v3078 = vld [vmem:[%s5 + $0x290] sm:$0xff]
    %v3079 = vld [vmem:[%s5 + $0x298] sm:$0xff]
    %v3080 = vld [vmem:[%s5 + $0x2a0] sm:$0xff]
    %v3081 = vld [vmem:[%s5 + $0x2a8] sm:$0xff]
    %v3082 = vld [vmem:[%s5 + $0x2b0] sm:$0xff]
    %v3083 = vld [vmem:[%s5 + $0x2b8] sm:$0xff]
    %v3084 = vld [vmem:[%s5 + $0x2c0] sm:$0xff]
    %v3085 = vld [vmem:[%s5 + $0x2c8] sm:$0xff]
    %v3086 = vld [vmem:[%s5 + $0x2d0] sm:$0xff]
    %v3087 = vld [vmem:[%s5 + $0x2d8] sm:$0xff]
    %v3088 = vld [vmem:[%s5 + $0x2e0] sm:$0xff]
    %v3089 = vld [vmem:[%s5 + $0x2e8] sm:$0xff]
    %v3090 = vld [vmem:[%s5 + $0x2f0] sm:$0xff]
    %v3091 = vld [vmem:[%s5 + $0x2f8] sm:$0xff]
    %v3092 = vld [vmem:[%s5 + $0x300] sm:$0xff]
    %v3093 = vld [vmem:[%s5 + $0x308] sm:$0xff]
    %v3094 = vld [vmem:[%s5 + $0x310] sm:$0xff]
    %v3095 = vld [vmem:[%s5 + $0x318] sm:$0xff]
    %v3096 = vld [vmem:[%s5 + $0x320] sm:$0xff]
    %v3097 = vld [vmem:[%s5 + $0x328] sm:$0xff]
    %v3098 = vld [vmem:[%s5 + $0x330] sm:$0xff]
    %v3099 = vld [vmem:[%s5 + $0x338] sm:$0xff]
    %v3100 = vld [vmem:[%s5 + $0x340] sm:$0xff]
    %v3101 = vld [vmem:[%s5 + $0x348] sm:$0xff]
    %v3102 = vld [vmem:[%s5 + $0x350] sm:$0xff]
    %v3103 = vld [vmem:[%s5 + $0x358] sm:$0xff]
    %v3104 = vld [vmem:[%s5 + $0x360] sm:$0xff]
    %v3105 = vld [vmem:[%s5 + $0x368] sm:$0xff]
    %v3106 = vld [vmem:[%s5 + $0x370] sm:$0xff]
    %v3107 = vld [vmem:[%s5 + $0x378] sm:$0xff]
    %v3108 = vld [vmem:[%s5 + $0x380] sm:$0xff]
    %v3109 = vld [vmem:[%s5 + $0x388] sm:$0xff]
    %v3110 = vld [vmem:[%s5 + $0x390] sm:$0xff]
    %v3111 = vld [vmem:[%s5 + $0x398] sm:$0xff]
    %v3112 = vld [vmem:[%s5 + $0x3a0] sm:$0xff]
    %v3113 = vld [vmem:[%s5 + $0x3a8] sm:$0xff]
    %v3114 = vld [vmem:[%s5 + $0x3b0] sm:$0xff]
    %v3115 = vld [vmem:[%s5 + $0x3b8] sm:$0xff]
    %v3116 = vld [vmem:[%s5 + $0x3c0] sm:$0xff]
    %v3117 = vld [vmem:[%s5 + $0x3c8] sm:$0xff]
    %v3118 = vld [vmem:[%s5 + $0x3d0] sm:$0xff]
    %v3119 = vld [vmem:[%s5 + $0x3d8] sm:$0xff]
    %v3120 = vld [vmem:[%s5 + $0x3e0] sm:$0xff]
    %v3121 = vld [vmem:[%s5 + $0x3e8] sm:$0xff]
    %v3122 = vld [vmem:[%s5 + $0x3f0] sm:$0xff]
    %v3123 = vld [vmem:[%s5 + $0x3f8] sm:$0xff]
    %v3124 = vld [vmem:[%s5 + $0x400] sm:$0xff]
    %v3125 = vld [vmem:[%s5 + $0x408] sm:$0xff]
    %v3126 = vld [vmem:[%s5 + $0x410] sm:$0xff]
    %v3127 = vld [vmem:[%s5 + $0x418] sm:$0xff]
    %v3128 = vld [vmem:[%s5 + $0x420] sm:$0xff]
    %v3129 = vld [vmem:[%s5 + $0x428] sm:$0xff]
    %v3130 = vld [vmem:[%s5 + $0x430] sm:$0xff]
    %v3131 = vld [vmem:[%s5 + $0x438] sm:$0xff]
    %v3132 = vld [vmem:[%s5 + $0x440] sm:$0xff]
    %v3133 = vld [vmem:[%s5 + $0x448] sm:$0xff]
    %v3134 = vld [vmem:[%s5 + $0x450] sm:$0xff]
    %v3135 = vld [vmem:[%s5 + $0x458] sm:$0xff]
    %v3136 = vld [vmem:[%s5 + $0x460] sm:$0xff]
    %v3137 = vld [vmem:[%s5 + $0x468] sm:$0xff]
    %v3138 = vld [vmem:[%s5 + $0x470] sm:$0xff]
    %v3139 = vld [vmem:[%s5 + $0x478] sm:$0xff]
    %v3140 = vld [vmem:[%s5 + $0x480] sm:$0xff]
    %v3141 = vld [vmem:[%s5 + $0x488] sm:$0xff]
    %v3142 = vld [vmem:[%s5 + $0x490] sm:$0xff]
    %v3143 = vld [vmem:[%s5 + $0x498] sm:$0xff]
    %v3144 = vld [vmem:[%s5 + $0x4a0] sm:$0xff]
    %v3145 = vld [vmem:[%s5 + $0x4a8] sm:$0xff]
    %v3146 = vld [vmem:[%s5 + $0x4b0] sm:$0xff]
    %v3147 = vld [vmem:[%s5 + $0x4b8] sm:$0xff]
    %v3148 = vld [vmem:[%s5 + $0x4c0] sm:$0xff]
    %v3149 = vld [vmem:[%s5 + $0x4c8] sm:$0xff]
    %v3150 = vld [vmem:[%s5 + $0x4d0] sm:$0xff]
    %v3151 = vld [vmem:[%s5 + $0x4d8] sm:$0xff]
    %v3152 = vld [vmem:[%s5 + $0x4e0] sm:$0xff]
    %v3153 = vld [vmem:[%s5 + $0x4e8] sm:$0xff]
    %v3154 = vld [vmem:[%s5 + $0x4f0] sm:$0xff]
    %v3155 = vld [vmem:[%s5 + $0x4f8] sm:$0xff]
    %v3156 = vld [vmem:[%s5 + $0x500] sm:$0xff]
    %v3157 = vld [vmem:[%s5 + $0x508] sm:$0xff]
    %v3158 = vld [vmem:[%s5 + $0x510] sm:$0xff]
    %v3159 = vld [vmem:[%s5 + $0x518] sm:$0xff]
    %v3160 = vld [vmem:[%s5 + $0x520] sm:$0xff]
    %v3161 = vld [vmem:[%s5 + $0x528] sm:$0xff]
    %v3162 = vld [vmem:[%s5 + $0x530] sm:$0xff]
    %v3163 = vld [vmem:[%s5 + $0x538] sm:$0xff]
    %v3164 = vld [vmem:[%s5 + $0x540] sm:$0xff]
    %v3165 = vld [vmem:[%s5 + $0x548] sm:$0xff]
    %v3166 = vld [vmem:[%s5 + $0x550] sm:$0xff]
    %v3167 = vld [vmem:[%s5 + $0x558] sm:$0xff]
    %v3168 = vld [vmem:[%s5 + $0x560] sm:$0xff]
    %v3169 = vld [vmem:[%s5 + $0x568] sm:$0xff]
    %v3170 = vld [vmem:[%s5 + $0x570] sm:$0xff]
    %v3171 = vld [vmem:[%s5 + $0x578] sm:$0xff]
    %v3172 = vld [vmem:[%s5 + $0x580] sm:$0xff]
    %v3173 = vld [vmem:[%s5 + $0x588] sm:$0xff]
    %v3174 = vld [vmem:[%s5 + $0x590] sm:$0xff]
    %v3175 = vld [vmem:[%s5 + $0x598] sm:$0xff]
    %v3176 = vld [vmem:[%s5 + $0x5a0] sm:$0xff]
    %v3177 = vld [vmem:[%s5 + $0x5a8] sm:$0xff]
    %v3178 = vld [vmem:[%s5 + $0x5b0] sm:$0xff]
    %v3179 = vld [vmem:[%s5 + $0x5b8] sm:$0xff]
    %v3180 = vld [vmem:[%s5 + $0x5c0] sm:$0xff]
    %v3181 = vld [vmem:[%s5 + $0x5c8] sm:$0xff]
    %v3182 = vld [vmem:[%s5 + $0x5d0] sm:$0xff]
    %v3183 = vld [vmem:[%s5 + $0x5d8] sm:$0xff]
    %v3184 = vld [vmem:[%s5 + $0x5e0] sm:$0xff]
    %v3185 = vld [vmem:[%s5 + $0x5e8] sm:$0xff]
    %v3186 = vld [vmem:[%s5 + $0x5f0] sm:$0xff]
    %v3187 = vld [vmem:[%s5 + $0x5f8] sm:$0xff]
    %v3188 = vld [vmem:[%s5 + $0x600] sm:$0xff]
    %v3189 = vld [vmem:[%s5 + $0x608] sm:$0xff]
    %v3190 = vld [vmem:[%s5 + $0x610] sm:$0xff]
    %v3191 = vld [vmem:[%s5 + $0x618] sm:$0xff]
    %v3192 = vld [vmem:[%s5 + $0x620] sm:$0xff]
    %v3193 = vld [vmem:[%s5 + $0x628] sm:$0xff]
    %v3194 = vld [vmem:[%s5 + $0x630] sm:$0xff]
    %v3195 = vld [vmem:[%s5 + $0x638] sm:$0xff]
    %v3196 = vld [vmem:[%s5 + $0x640] sm:$0xff]
    %v3197 = vld [vmem:[%s5 + $0x648] sm:$0xff]
    %v3198 = vld [vmem:[%s5 + $0x650] sm:$0xff]
    %v3199 = vld [vmem:[%s5 + $0x658] sm:$0xff]
    %v3200 = vld [vmem:[%s5 + $0x660] sm:$0xff]
    %v3201 = vld [vmem:[%s5 + $0x668] sm:$0xff]
    %v3202 = vld [vmem:[%s5 + $0x670] sm:$0xff]
    %v3203 = vld [vmem:[%s5 + $0x678] sm:$0xff]
    %v3204 = vld [vmem:[%s5 + $0x680] sm:$0xff]
    %v3205 = vld [vmem:[%s5 + $0x688] sm:$0xff]
    %v3206 = vld [vmem:[%s5 + $0x690] sm:$0xff]
    %v3207 = vld [vmem:[%s5 + $0x698] sm:$0xff]
    %v3208 = vld [vmem:[%s5 + $0x6a0] sm:$0xff]
    %v3209 = vld [vmem:[%s5 + $0x6a8] sm:$0xff]
    %v3210 = vld [vmem:[%s5 + $0x6b0] sm:$0xff]
    %v3211 = vld [vmem:[%s5 + $0x6b8] sm:$0xff]
    %v3212 = vld [vmem:[%s5 + $0x6c0] sm:$0xff]
    %v3213 = vld [vmem:[%s5 + $0x6c8] sm:$0xff]
    %v3214 = vld [vmem:[%s5 + $0x6d0] sm:$0xff]
    %v3215 = vld [vmem:[%s5 + $0x6d8] sm:$0xff]
    %v3216 = vld [vmem:[%s5 + $0x6e0] sm:$0xff]
    %v3217 = vld [vmem:[%s5 + $0x6e8] sm:$0xff]
    %v3218 = vld [vmem:[%s5 + $0x6f0] sm:$0xff]
    %v3219 = vld [vmem:[%s5 + $0x6f8] sm:$0xff]
    %v3220 = vld [vmem:[%s5 + $0x700] sm:$0xff]
    %v3221 = vld [vmem:[%s5 + $0x708] sm:$0xff]
    %v3222 = vld [vmem:[%s5 + $0x710] sm:$0xff]
    %v3223 = vld [vmem:[%s5 + $0x718] sm:$0xff]
    %v3224 = vld [vmem:[%s5 + $0x720] sm:$0xff]
    %v3225 = vld [vmem:[%s5 + $0x728] sm:$0xff]
    %v3226 = vld [vmem:[%s5 + $0x730] sm:$0xff]
    %v3227 = vld [vmem:[%s5 + $0x738] sm:$0xff]
    %v3228 = vld [vmem:[%s5 + $0x740] sm:$0xff]
    %v3229 = vld [vmem:[%s5 + $0x748] sm:$0xff]
    %v3230 = vld [vmem:[%s5 + $0x750] sm:$0xff]
    %v3231 = vld [vmem:[%s5 + $0x758] sm:$0xff]
    %v3232 = vld [vmem:[%s5 + $0x760] sm:$0xff]
    %v3233 = vld [vmem:[%s5 + $0x768] sm:$0xff]
    %v3234 = vld [vmem:[%s5 + $0x770] sm:$0xff]
    %v3235 = vld [vmem:[%s5 + $0x778] sm:$0xff]
    %v3236 = vld [vmem:[%s5 + $0x780] sm:$0xff]
    %v3237 = vld [vmem:[%s5 + $0x788] sm:$0xff]
    %v3238 = vld [vmem:[%s5 + $0x790] sm:$0xff]
    %v3239 = vld [vmem:[%s5 + $0x798] sm:$0xff]
    %v3240 = vld [vmem:[%s5 + $0x7a0] sm:$0xff]
    %v3241 = vld [vmem:[%s5 + $0x7a8] sm:$0xff]
    %v3242 = vld [vmem:[%s5 + $0x7b0] sm:$0xff]
    %v3243 = vld [vmem:[%s5 + $0x7b8] sm:$0xff]
    %v3244 = vld [vmem:[%s5 + $0x7c0] sm:$0xff]
    %v3245 = vld [vmem:[%s5 + $0x7c8] sm:$0xff]
    %v3246 = vld [vmem:[%s5 + $0x7d0] sm:$0xff]
    %v3247 = vld [vmem:[%s5 + $0x7d8] sm:$0xff]
    %v3248 = vld [vmem:[%s5 + $0x7e0] sm:$0xff]
    %v3249 = vld [vmem:[%s5 + $0x7e8] sm:$0xff]
    %v3250 = vld [vmem:[%s5 + $0x7f0] sm:$0xff]
    %v3251 = vld [vmem:[%s5 + $0x7f8] sm:$0xff]
    %v3252 = vld [vmem:[%s5 + $0x800] sm:$0xff]
    %v3253 = vld [vmem:[%s5 + $0x808] sm:$0xff]
    %v3254 = vld [vmem:[%s5 + $0x810] sm:$0xff]
    %v3255 = vld [vmem:[%s5 + $0x818] sm:$0xff]
    %v3256 = vld [vmem:[%s5 + $0x820] sm:$0xff]
    %v3257 = vld [vmem:[%s5 + $0x828] sm:$0xff]
    %v3258 = vld [vmem:[%s5 + $0x830] sm:$0xff]
    %v3259 = vld [vmem:[%s5 + $0x838] sm:$0xff]
    %v3260 = vld [vmem:[%s5 + $0x840] sm:$0xff]
    %v3261 = vld [vmem:[%s5 + $0x848] sm:$0xff]
    %v3262 = vld [vmem:[%s5 + $0x850] sm:$0xff]
    %v3263 = vld [vmem:[%s5 + $0x858] sm:$0xff]
    %v3264 = vld [vmem:[%s5 + $0x860] sm:$0xff]
    %v3265 = vld [vmem:[%s5 + $0x868] sm:$0xff]
    %v3266 = vld [vmem:[%s5 + $0x870] sm:$0xff]
    %v3267 = vld [vmem:[%s5 + $0x878] sm:$0xff]
    %v3268 = vld [vmem:[%s5 + $0x880] sm:$0xff]
    %v3269 = vld [vmem:[%s5 + $0x888] sm:$0xff]
    %v3270 = vld [vmem:[%s5 + $0x890] sm:$0xff]
    %v3271 = vld [vmem:[%s5 + $0x898] sm:$0xff]
    %v3272 = vld [vmem:[%s5 + $0x8a0] sm:$0xff]
    %v3273 = vld [vmem:[%s5 + $0x8a8] sm:$0xff]
    %v3274 = vld [vmem:[%s5 + $0x8b0] sm:$0xff]
    %v3275 = vld [vmem:[%s5 + $0x8b8] sm:$0xff]
    %v3276 = vld [vmem:[%s5 + $0x8c0] sm:$0xff]
    %v3277 = vld [vmem:[%s5 + $0x8c8] sm:$0xff]
    %v3278 = vld [vmem:[%s5 + $0x8d0] sm:$0xff]
    %v3279 = vld [vmem:[%s5 + $0x8d8] sm:$0xff]
    %v3280 = vld [vmem:[%s5 + $0x8e0] sm:$0xff]
    %v3281 = vld [vmem:[%s5 + $0x8e8] sm:$0xff]
    %v3282 = vld [vmem:[%s5 + $0x8f0] sm:$0xff]
    %v3283 = vld [vmem:[%s5 + $0x8f8] sm:$0xff]
    %v3284 = vld [vmem:[%s5 + $0x900] sm:$0xff]
    %v3285 = vld [vmem:[%s5 + $0x908] sm:$0xff]
    %v3286 = vld [vmem:[%s5 + $0x910] sm:$0xff]
    %v3287 = vld [vmem:[%s5 + $0x918] sm:$0xff]
    %v3288 = vld [vmem:[%s5 + $0x920] sm:$0xff]
    %v3289 = vld [vmem:[%s5 + $0x928] sm:$0xff]
    %v3290 = vld [vmem:[%s5 + $0x930] sm:$0xff]
    %v3291 = vld [vmem:[%s5 + $0x938] sm:$0xff]
    %v3292 = vld [vmem:[%s5 + $0x940] sm:$0xff]
    %v3293 = vld [vmem:[%s5 + $0x948] sm:$0xff]
    %v3294 = vld [vmem:[%s5 + $0x950] sm:$0xff]
    %v3295 = vld [vmem:[%s5 + $0x958] sm:$0xff]
    %v3296 = vld [vmem:[%s5 + $0x960] sm:$0xff]
    %v3297 = vld [vmem:[%s5 + $0x968] sm:$0xff]
    %v3298 = vld [vmem:[%s5 + $0x970] sm:$0xff]
    %v3299 = vld [vmem:[%s5 + $0x978] sm:$0xff]
    %v3300 = vld [vmem:[%s5 + $0x980] sm:$0xff]
    %v3301 = vld [vmem:[%s5 + $0x988] sm:$0xff]
    %v3302 = vld [vmem:[%s5 + $0x990] sm:$0xff]
    %v3303 = vld [vmem:[%s5 + $0x998] sm:$0xff]
    %v3304 = vld [vmem:[%s5 + $0x9a0] sm:$0xff]
    %v3305 = vld [vmem:[%s5 + $0x9a8] sm:$0xff]
    %v3306 = vld [vmem:[%s5 + $0x9b0] sm:$0xff]
    %v3307 = vld [vmem:[%s5 + $0x9b8] sm:$0xff]
    %v3308 = vld [vmem:[%s5 + $0x9c0] sm:$0xff]
    %v3309 = vld [vmem:[%s5 + $0x9c8] sm:$0xff]
    %v3310 = vld [vmem:[%s5 + $0x9d0] sm:$0xff]
    %v3311 = vld [vmem:[%s5 + $0x9d8] sm:$0xff]
    %v3312 = vld [vmem:[%s5 + $0x9e0] sm:$0xff]
    %v3313 = vld [vmem:[%s5 + $0x9e8] sm:$0xff]
    %v3314 = vld [vmem:[%s5 + $0x9f0] sm:$0xff]
    %v3315 = vld [vmem:[%s5 + $0x9f8] sm:$0xff]
    %v3316 = vld [vmem:[%s6] sm:$0xf]
    %v3318 = vlaneseq
    %v3319 = vshrl.u32 %v3318, 7
    %v3320 = vsub.s32 0, %v3319
    %v3321 = vrot.slane %v3316, %v3320
    %v3322 = vlaneseq
    %v3323 = vshrl.u32 %v3322, 7
    %v3324 = vsub.s32 1, %v3323
    %v3325 = vrot.slane %v3316, %v3324
    %v3326 = vlaneseq
    %v3327 = vshrl.u32 %v3326, 7
    %v3328 = vsub.s32 2, %v3327
    %v3329 = vrot.slane %v3316, %v3328
    %v3330 = vlaneseq
    %v3331 = vshrl.u32 %v3330, 7
    %v3332 = vsub.s32 3, %v3331
    %v3333 = vrot.slane %v3316, %v3332
    %v3658 = vunpack.c.l.b16 %v2996
    %v3659 = vunpack.c.h.b16 %v2996
    %v3660 = vunpack.c.l.b16 %v2997
    %v3661 = vunpack.c.h.b16 %v2997
    %v3662 = vunpack.c.l.b16 %v2998
    %v3663 = vunpack.c.h.b16 %v2998
    %v3664 = vunpack.c.l.b16 %v2999
    %v3665 = vunpack.c.h.b16 %v2999
    %v3666 = vunpack.c.l.b16 %v3000
    %v3667 = vunpack.c.h.b16 %v3000
    %v3668 = vunpack.c.l.b16 %v3001
    %v3669 = vunpack.c.h.b16 %v3001
    %v3670 = vunpack.c.l.b16 %v3002
    %v3671 = vunpack.c.h.b16 %v3002
    %v3672 = vunpack.c.l.b16 %v3003
    %v3673 = vunpack.c.h.b16 %v3003
    %v3674 = vunpack.c.l.b16 %v3004
    %v3675 = vunpack.c.h.b16 %v3004
    %v3676 = vunpack.c.l.b16 %v3005
    %v3677 = vunpack.c.h.b16 %v3005
    %v3678 = vunpack.c.l.b16 %v3006
    %v3679 = vunpack.c.h.b16 %v3006
    %v3680 = vunpack.c.l.b16 %v3007
    %v3681 = vunpack.c.h.b16 %v3007
    %v3682 = vunpack.c.l.b16 %v3008
    %v3683 = vunpack.c.h.b16 %v3008
    %v3684 = vunpack.c.l.b16 %v3009
    %v3685 = vunpack.c.h.b16 %v3009
    %v3686 = vunpack.c.l.b16 %v3010
    %v3687 = vunpack.c.h.b16 %v3010
    %v3688 = vunpack.c.l.b16 %v3011
    %v3689 = vunpack.c.h.b16 %v3011
    %v3690 = vunpack.c.l.b16 %v3012
    %v3691 = vunpack.c.h.b16 %v3012
    %v3692 = vunpack.c.l.b16 %v3013
    %v3693 = vunpack.c.h.b16 %v3013
    %v3694 = vunpack.c.l.b16 %v3014
    %v3695 = vunpack.c.h.b16 %v3014
    %v3696 = vunpack.c.l.b16 %v3015
    %v3697 = vunpack.c.h.b16 %v3015
    %v3698 = vunpack.c.l.b16 %v3016
    %v3699 = vunpack.c.h.b16 %v3016
    %v3700 = vunpack.c.l.b16 %v3017
    %v3701 = vunpack.c.h.b16 %v3017
    %v3702 = vunpack.c.l.b16 %v3018
    %v3703 = vunpack.c.h.b16 %v3018
    %v3704 = vunpack.c.l.b16 %v3019
    %v3705 = vunpack.c.h.b16 %v3019
    %v3706 = vunpack.c.l.b16 %v3020
    %v3707 = vunpack.c.h.b16 %v3020
    %v3708 = vunpack.c.l.b16 %v3021
    %v3709 = vunpack.c.h.b16 %v3021
    %v3710 = vunpack.c.l.b16 %v3022
    %v3711 = vunpack.c.h.b16 %v3022
    %v3712 = vunpack.c.l.b16 %v3023
    %v3713 = vunpack.c.h.b16 %v3023
    %v3714 = vunpack.c.l.b16 %v3024
    %v3715 = vunpack.c.h.b16 %v3024
    %v3716 = vunpack.c.l.b16 %v3025
    %v3717 = vunpack.c.h.b16 %v3025
    %v3718 = vunpack.c.l.b16 %v3026
    %v3719 = vunpack.c.h.b16 %v3026
    %v3720 = vunpack.c.l.b16 %v3027
    %v3721 = vunpack.c.h.b16 %v3027
    %v3722 = vunpack.c.l.b16 %v3028
    %v3723 = vunpack.c.h.b16 %v3028
    %v3724 = vunpack.c.l.b16 %v3029
    %v3725 = vunpack.c.h.b16 %v3029
    %v3726 = vunpack.c.l.b16 %v3030
    %v3727 = vunpack.c.h.b16 %v3030
    %v3728 = vunpack.c.l.b16 %v3031
    %v3729 = vunpack.c.h.b16 %v3031
    %v3730 = vunpack.c.l.b16 %v3032
    %v3731 = vunpack.c.h.b16 %v3032
    %v3732 = vunpack.c.l.b16 %v3033
    %v3733 = vunpack.c.h.b16 %v3033
    %v3734 = vunpack.c.l.b16 %v3034
    %v3735 = vunpack.c.h.b16 %v3034
    %v3736 = vunpack.c.l.b16 %v3035
    %v3737 = vunpack.c.h.b16 %v3035
    %v3738 = vunpack.c.l.b16 %v3036
    %v3739 = vunpack.c.h.b16 %v3036
    %v3740 = vunpack.c.l.b16 %v3037
    %v3741 = vunpack.c.h.b16 %v3037
    %v3742 = vunpack.c.l.b16 %v3038
    %v3743 = vunpack.c.h.b16 %v3038
    %v3744 = vunpack.c.l.b16 %v3039
    %v3745 = vunpack.c.h.b16 %v3039
    %v3746 = vunpack.c.l.b16 %v3040
    %v3747 = vunpack.c.h.b16 %v3040
    %v3748 = vunpack.c.l.b16 %v3041
    %v3749 = vunpack.c.h.b16 %v3041
    %v3750 = vunpack.c.l.b16 %v3042
    %v3751 = vunpack.c.h.b16 %v3042
    %v3752 = vunpack.c.l.b16 %v3043
    %v3753 = vunpack.c.h.b16 %v3043
    %v3754 = vunpack.c.l.b16 %v3044
    %v3755 = vunpack.c.h.b16 %v3044
    %v3756 = vunpack.c.l.b16 %v3045
    %v3757 = vunpack.c.h.b16 %v3045
    %v3758 = vunpack.c.l.b16 %v3046
    %v3759 = vunpack.c.h.b16 %v3046
    %v3760 = vunpack.c.l.b16 %v3047
    %v3761 = vunpack.c.h.b16 %v3047
    %v3762 = vunpack.c.l.b16 %v3048
    %v3763 = vunpack.c.h.b16 %v3048
    %v3764 = vunpack.c.l.b16 %v3049
    %v3765 = vunpack.c.h.b16 %v3049
    %v3766 = vunpack.c.l.b16 %v3050
    %v3767 = vunpack.c.h.b16 %v3050
    %v3768 = vunpack.c.l.b16 %v3051
    %v3769 = vunpack.c.h.b16 %v3051
    %v3770 = vunpack.c.l.b16 %v3052
    %v3771 = vunpack.c.h.b16 %v3052
    %v3772 = vunpack.c.l.b16 %v3053
    %v3773 = vunpack.c.h.b16 %v3053
    %v3774 = vunpack.c.l.b16 %v3054
    %v3775 = vunpack.c.h.b16 %v3054
    %v3776 = vunpack.c.l.b16 %v3055
    %v3777 = vunpack.c.h.b16 %v3055
    %v3778 = vunpack.c.l.b16 %v3056
    %v3779 = vunpack.c.h.b16 %v3056
    %v3780 = vunpack.c.l.b16 %v3057
    %v3781 = vunpack.c.h.b16 %v3057
    %v3782 = vunpack.c.l.b16 %v3058
    %v3783 = vunpack.c.h.b16 %v3058
    %v3784 = vunpack.c.l.b16 %v3059
    %v3785 = vunpack.c.h.b16 %v3059
    %v3786 = vunpack.c.l.b16 %v3060
    %v3787 = vunpack.c.h.b16 %v3060
    %v3788 = vunpack.c.l.b16 %v3061
    %v3789 = vunpack.c.h.b16 %v3061
    %v3790 = vunpack.c.l.b16 %v3062
    %v3791 = vunpack.c.h.b16 %v3062
    %v3792 = vunpack.c.l.b16 %v3063
    %v3793 = vunpack.c.h.b16 %v3063
    %v3794 = vunpack.c.l.b16 %v3064
    %v3795 = vunpack.c.h.b16 %v3064
    %v3796 = vunpack.c.l.b16 %v3065
    %v3797 = vunpack.c.h.b16 %v3065
    %v3798 = vunpack.c.l.b16 %v3066
    %v3799 = vunpack.c.h.b16 %v3066
    %v3800 = vunpack.c.l.b16 %v3067
    %v3801 = vunpack.c.h.b16 %v3067
    %v3802 = vunpack.c.l.b16 %v3068
    %v3803 = vunpack.c.h.b16 %v3068
    %v3804 = vunpack.c.l.b16 %v3069
    %v3805 = vunpack.c.h.b16 %v3069
    %v3806 = vunpack.c.l.b16 %v3070
    %v3807 = vunpack.c.h.b16 %v3070
    %v3808 = vunpack.c.l.b16 %v3071
    %v3809 = vunpack.c.h.b16 %v3071
    %v3810 = vunpack.c.l.b16 %v3072
    %v3811 = vunpack.c.h.b16 %v3072
    %v3812 = vunpack.c.l.b16 %v3073
    %v3813 = vunpack.c.h.b16 %v3073
    %v3814 = vunpack.c.l.b16 %v3074
    %v3815 = vunpack.c.h.b16 %v3074
    %v3816 = vunpack.c.l.b16 %v3075
    %v3817 = vunpack.c.h.b16 %v3075
    %v3818 = vunpack.c.l.b16 %v3076
    %v3819 = vunpack.c.h.b16 %v3076
    %v3820 = vunpack.c.l.b16 %v3077
    %v3821 = vunpack.c.h.b16 %v3077
    %v3822 = vunpack.c.l.b16 %v3078
    %v3823 = vunpack.c.h.b16 %v3078
    %v3824 = vunpack.c.l.b16 %v3079
    %v3825 = vunpack.c.h.b16 %v3079
    %v3826 = vunpack.c.l.b16 %v3080
    %v3827 = vunpack.c.h.b16 %v3080
    %v3828 = vunpack.c.l.b16 %v3081
    %v3829 = vunpack.c.h.b16 %v3081
    %v3830 = vunpack.c.l.b16 %v3082
    %v3831 = vunpack.c.h.b16 %v3082
    %v3832 = vunpack.c.l.b16 %v3083
    %v3833 = vunpack.c.h.b16 %v3083
    %v3834 = vunpack.c.l.b16 %v3084
    %v3835 = vunpack.c.h.b16 %v3084
    %v3836 = vunpack.c.l.b16 %v3085
    %v3837 = vunpack.c.h.b16 %v3085
    %v3838 = vunpack.c.l.b16 %v3086
    %v3839 = vunpack.c.h.b16 %v3086
    %v3840 = vunpack.c.l.b16 %v3087
    %v3841 = vunpack.c.h.b16 %v3087
    %v3842 = vunpack.c.l.b16 %v3088
    %v3843 = vunpack.c.h.b16 %v3088
    %v3844 = vunpack.c.l.b16 %v3089
    %v3845 = vunpack.c.h.b16 %v3089
    %v3846 = vunpack.c.l.b16 %v3090
    %v3847 = vunpack.c.h.b16 %v3090
    %v3848 = vunpack.c.l.b16 %v3091
    %v3849 = vunpack.c.h.b16 %v3091
    %v3850 = vunpack.c.l.b16 %v3092
    %v3851 = vunpack.c.h.b16 %v3092
    %v3852 = vunpack.c.l.b16 %v3093
    %v3853 = vunpack.c.h.b16 %v3093
    %v3854 = vunpack.c.l.b16 %v3094
    %v3855 = vunpack.c.h.b16 %v3094
    %v3856 = vunpack.c.l.b16 %v3095
    %v3857 = vunpack.c.h.b16 %v3095
    %v3858 = vunpack.c.l.b16 %v3096
    %v3859 = vunpack.c.h.b16 %v3096
    %v3860 = vunpack.c.l.b16 %v3097
    %v3861 = vunpack.c.h.b16 %v3097
    %v3862 = vunpack.c.l.b16 %v3098
    %v3863 = vunpack.c.h.b16 %v3098
    %v3864 = vunpack.c.l.b16 %v3099
    %v3865 = vunpack.c.h.b16 %v3099
    %v3866 = vunpack.c.l.b16 %v3100
    %v3867 = vunpack.c.h.b16 %v3100
    %v3868 = vunpack.c.l.b16 %v3101
    %v3869 = vunpack.c.h.b16 %v3101
    %v3870 = vunpack.c.l.b16 %v3102
    %v3871 = vunpack.c.h.b16 %v3102
    %v3872 = vunpack.c.l.b16 %v3103
    %v3873 = vunpack.c.h.b16 %v3103
    %v3874 = vunpack.c.l.b16 %v3104
    %v3875 = vunpack.c.h.b16 %v3104
    %v3876 = vunpack.c.l.b16 %v3105
    %v3877 = vunpack.c.h.b16 %v3105
    %v3878 = vunpack.c.l.b16 %v3106
    %v3879 = vunpack.c.h.b16 %v3106
    %v3880 = vunpack.c.l.b16 %v3107
    %v3881 = vunpack.c.h.b16 %v3107
    %v3882 = vunpack.c.l.b16 %v3108
    %v3883 = vunpack.c.h.b16 %v3108
    %v3884 = vunpack.c.l.b16 %v3109
    %v3885 = vunpack.c.h.b16 %v3109
    %v3886 = vunpack.c.l.b16 %v3110
    %v3887 = vunpack.c.h.b16 %v3110
    %v3888 = vunpack.c.l.b16 %v3111
    %v3889 = vunpack.c.h.b16 %v3111
    %v3890 = vunpack.c.l.b16 %v3112
    %v3891 = vunpack.c.h.b16 %v3112
    %v3892 = vunpack.c.l.b16 %v3113
    %v3893 = vunpack.c.h.b16 %v3113
    %v3894 = vunpack.c.l.b16 %v3114
    %v3895 = vunpack.c.h.b16 %v3114
    %v3896 = vunpack.c.l.b16 %v3115
    %v3897 = vunpack.c.h.b16 %v3115
    %v3898 = vunpack.c.l.b16 %v3116
    %v3899 = vunpack.c.h.b16 %v3116
    %v3900 = vunpack.c.l.b16 %v3117
    %v3901 = vunpack.c.h.b16 %v3117
    %v3902 = vunpack.c.l.b16 %v3118
    %v3903 = vunpack.c.h.b16 %v3118
    %v3904 = vunpack.c.l.b16 %v3119
    %v3905 = vunpack.c.h.b16 %v3119
    %v3906 = vunpack.c.l.b16 %v3120
    %v3907 = vunpack.c.h.b16 %v3120
    %v3908 = vunpack.c.l.b16 %v3121
    %v3909 = vunpack.c.h.b16 %v3121
    %v3910 = vunpack.c.l.b16 %v3122
    %v3911 = vunpack.c.h.b16 %v3122
    %v3912 = vunpack.c.l.b16 %v3123
    %v3913 = vunpack.c.h.b16 %v3123
    %v3914 = vunpack.c.l.b16 %v3124
    %v3915 = vunpack.c.h.b16 %v3124
    %v3916 = vunpack.c.l.b16 %v3125
    %v3917 = vunpack.c.h.b16 %v3125
    %v3918 = vunpack.c.l.b16 %v3126
    %v3919 = vunpack.c.h.b16 %v3126
    %v3920 = vunpack.c.l.b16 %v3127
    %v3921 = vunpack.c.h.b16 %v3127
    %v3922 = vunpack.c.l.b16 %v3128
    %v3923 = vunpack.c.h.b16 %v3128
    %v3924 = vunpack.c.l.b16 %v3129
    %v3925 = vunpack.c.h.b16 %v3129
    %v3926 = vunpack.c.l.b16 %v3130
    %v3927 = vunpack.c.h.b16 %v3130
    %v3928 = vunpack.c.l.b16 %v3131
    %v3929 = vunpack.c.h.b16 %v3131
    %v3930 = vunpack.c.l.b16 %v3132
    %v3931 = vunpack.c.h.b16 %v3132
    %v3932 = vunpack.c.l.b16 %v3133
    %v3933 = vunpack.c.h.b16 %v3133
    %v3934 = vunpack.c.l.b16 %v3134
    %v3935 = vunpack.c.h.b16 %v3134
    %v3936 = vunpack.c.l.b16 %v3135
    %v3937 = vunpack.c.h.b16 %v3135
    %v3938 = vunpack.c.l.b16 %v3136
    %v3939 = vunpack.c.h.b16 %v3136
    %v3940 = vunpack.c.l.b16 %v3137
    %v3941 = vunpack.c.h.b16 %v3137
    %v3942 = vunpack.c.l.b16 %v3138
    %v3943 = vunpack.c.h.b16 %v3138
    %v3944 = vunpack.c.l.b16 %v3139
    %v3945 = vunpack.c.h.b16 %v3139
    %v3946 = vunpack.c.l.b16 %v3140
    %v3947 = vunpack.c.h.b16 %v3140
    %v3948 = vunpack.c.l.b16 %v3141
    %v3949 = vunpack.c.h.b16 %v3141
    %v3950 = vunpack.c.l.b16 %v3142
    %v3951 = vunpack.c.h.b16 %v3142
    %v3952 = vunpack.c.l.b16 %v3143
    %v3953 = vunpack.c.h.b16 %v3143
    %v3954 = vunpack.c.l.b16 %v3144
    %v3955 = vunpack.c.h.b16 %v3144
    %v3956 = vunpack.c.l.b16 %v3145
    %v3957 = vunpack.c.h.b16 %v3145
    %v3958 = vunpack.c.l.b16 %v3146
    %v3959 = vunpack.c.h.b16 %v3146
    %v3960 = vunpack.c.l.b16 %v3147
    %v3961 = vunpack.c.h.b16 %v3147
    %v3962 = vunpack.c.l.b16 %v3148
    %v3963 = vunpack.c.h.b16 %v3148
    %v3964 = vunpack.c.l.b16 %v3149
    %v3965 = vunpack.c.h.b16 %v3149
    %v3966 = vunpack.c.l.b16 %v3150
    %v3967 = vunpack.c.h.b16 %v3150
    %v3968 = vunpack.c.l.b16 %v3151
    %v3969 = vunpack.c.h.b16 %v3151
    %v3970 = vunpack.c.l.b16 %v3152
    %v3971 = vunpack.c.h.b16 %v3152
    %v3972 = vunpack.c.l.b16 %v3153
    %v3973 = vunpack.c.h.b16 %v3153
    %v3974 = vunpack.c.l.b16 %v3154
    %v3975 = vunpack.c.h.b16 %v3154
    %v3976 = vunpack.c.l.b16 %v3155
    %v3977 = vunpack.c.h.b16 %v3155
    %v3978 = vunpack.c.l.b16 %v3156
    %v3979 = vunpack.c.h.b16 %v3156
    %v3980 = vunpack.c.l.b16 %v3157
    %v3981 = vunpack.c.h.b16 %v3157
    %v3982 = vunpack.c.l.b16 %v3158
    %v3983 = vunpack.c.h.b16 %v3158
    %v3984 = vunpack.c.l.b16 %v3159
    %v3985 = vunpack.c.h.b16 %v3159
    %v3986 = vunpack.c.l.b16 %v3160
    %v3987 = vunpack.c.h.b16 %v3160
    %v3988 = vunpack.c.l.b16 %v3161
    %v3989 = vunpack.c.h.b16 %v3161
    %v3990 = vunpack.c.l.b16 %v3162
    %v3991 = vunpack.c.h.b16 %v3162
    %v3992 = vunpack.c.l.b16 %v3163
    %v3993 = vunpack.c.h.b16 %v3163
    %v3994 = vunpack.c.l.b16 %v3164
    %v3995 = vunpack.c.h.b16 %v3164
    %v3996 = vunpack.c.l.b16 %v3165
    %v3997 = vunpack.c.h.b16 %v3165
    %v3998 = vunpack.c.l.b16 %v3166
    %v3999 = vunpack.c.h.b16 %v3166
    %v4000 = vunpack.c.l.b16 %v3167
    %v4001 = vunpack.c.h.b16 %v3167
    %v4002 = vunpack.c.l.b16 %v3168
    %v4003 = vunpack.c.h.b16 %v3168
    %v4004 = vunpack.c.l.b16 %v3169
    %v4005 = vunpack.c.h.b16 %v3169
    %v4006 = vunpack.c.l.b16 %v3170
    %v4007 = vunpack.c.h.b16 %v3170
    %v4008 = vunpack.c.l.b16 %v3171
    %v4009 = vunpack.c.h.b16 %v3171
    %v4010 = vunpack.c.l.b16 %v3172
    %v4011 = vunpack.c.h.b16 %v3172
    %v4012 = vunpack.c.l.b16 %v3173
    %v4013 = vunpack.c.h.b16 %v3173
    %v4014 = vunpack.c.l.b16 %v3174
    %v4015 = vunpack.c.h.b16 %v3174
    %v4016 = vunpack.c.l.b16 %v3175
    %v4017 = vunpack.c.h.b16 %v3175
    %v4018 = vunpack.c.l.b16 %v3176
    %v4019 = vunpack.c.h.b16 %v3176
    %v4020 = vunpack.c.l.b16 %v3177
    %v4021 = vunpack.c.h.b16 %v3177
    %v4022 = vunpack.c.l.b16 %v3178
    %v4023 = vunpack.c.h.b16 %v3178
    %v4024 = vunpack.c.l.b16 %v3179
    %v4025 = vunpack.c.h.b16 %v3179
    %v4026 = vunpack.c.l.b16 %v3180
    %v4027 = vunpack.c.h.b16 %v3180
    %v4028 = vunpack.c.l.b16 %v3181
    %v4029 = vunpack.c.h.b16 %v3181
    %v4030 = vunpack.c.l.b16 %v3182
    %v4031 = vunpack.c.h.b16 %v3182
    %v4032 = vunpack.c.l.b16 %v3183
    %v4033 = vunpack.c.h.b16 %v3183
    %v4034 = vunpack.c.l.b16 %v3184
    %v4035 = vunpack.c.h.b16 %v3184
    %v4036 = vunpack.c.l.b16 %v3185
    %v4037 = vunpack.c.h.b16 %v3185
    %v4038 = vunpack.c.l.b16 %v3186
    %v4039 = vunpack.c.h.b16 %v3186
    %v4040 = vunpack.c.l.b16 %v3187
    %v4041 = vunpack.c.h.b16 %v3187
    %v4042 = vunpack.c.l.b16 %v3188
    %v4043 = vunpack.c.h.b16 %v3188
    %v4044 = vunpack.c.l.b16 %v3189
    %v4045 = vunpack.c.h.b16 %v3189
    %v4046 = vunpack.c.l.b16 %v3190
    %v4047 = vunpack.c.h.b16 %v3190
    %v4048 = vunpack.c.l.b16 %v3191
    %v4049 = vunpack.c.h.b16 %v3191
    %v4050 = vunpack.c.l.b16 %v3192
    %v4051 = vunpack.c.h.b16 %v3192
    %v4052 = vunpack.c.l.b16 %v3193
    %v4053 = vunpack.c.h.b16 %v3193
    %v4054 = vunpack.c.l.b16 %v3194
    %v4055 = vunpack.c.h.b16 %v3194
    %v4056 = vunpack.c.l.b16 %v3195
    %v4057 = vunpack.c.h.b16 %v3195
    %v4058 = vunpack.c.l.b16 %v3196
    %v4059 = vunpack.c.h.b16 %v3196
    %v4060 = vunpack.c.l.b16 %v3197
    %v4061 = vunpack.c.h.b16 %v3197
    %v4062 = vunpack.c.l.b16 %v3198
    %v4063 = vunpack.c.h.b16 %v3198
    %v4064 = vunpack.c.l.b16 %v3199
    %v4065 = vunpack.c.h.b16 %v3199
    %v4066 = vunpack.c.l.b16 %v3200
    %v4067 = vunpack.c.h.b16 %v3200
    %v4068 = vunpack.c.l.b16 %v3201
    %v4069 = vunpack.c.h.b16 %v3201
    %v4070 = vunpack.c.l.b16 %v3202
    %v4071 = vunpack.c.h.b16 %v3202
    %v4072 = vunpack.c.l.b16 %v3203
    %v4073 = vunpack.c.h.b16 %v3203
    %v4074 = vunpack.c.l.b16 %v3204
    %v4075 = vunpack.c.h.b16 %v3204
    %v4076 = vunpack.c.l.b16 %v3205
    %v4077 = vunpack.c.h.b16 %v3205
    %v4078 = vunpack.c.l.b16 %v3206
    %v4079 = vunpack.c.h.b16 %v3206
    %v4080 = vunpack.c.l.b16 %v3207
    %v4081 = vunpack.c.h.b16 %v3207
    %v4082 = vunpack.c.l.b16 %v3208
    %v4083 = vunpack.c.h.b16 %v3208
    %v4084 = vunpack.c.l.b16 %v3209
    %v4085 = vunpack.c.h.b16 %v3209
    %v4086 = vunpack.c.l.b16 %v3210
    %v4087 = vunpack.c.h.b16 %v3210
    %v4088 = vunpack.c.l.b16 %v3211
    %v4089 = vunpack.c.h.b16 %v3211
    %v4090 = vunpack.c.l.b16 %v3212
    %v4091 = vunpack.c.h.b16 %v3212
    %v4092 = vunpack.c.l.b16 %v3213
    %v4093 = vunpack.c.h.b16 %v3213
    %v4094 = vunpack.c.l.b16 %v3214
    %v4095 = vunpack.c.h.b16 %v3214
    %v4096 = vunpack.c.l.b16 %v3215
    %v4097 = vunpack.c.h.b16 %v3215
    %v4098 = vunpack.c.l.b16 %v3216
    %v4099 = vunpack.c.h.b16 %v3216
    %v4100 = vunpack.c.l.b16 %v3217
    %v4101 = vunpack.c.h.b16 %v3217
    %v4102 = vunpack.c.l.b16 %v3218
    %v4103 = vunpack.c.h.b16 %v3218
    %v4104 = vunpack.c.l.b16 %v3219
    %v4105 = vunpack.c.h.b16 %v3219
    %v4106 = vunpack.c.l.b16 %v3220
    %v4107 = vunpack.c.h.b16 %v3220
    %v4108 = vunpack.c.l.b16 %v3221
    %v4109 = vunpack.c.h.b16 %v3221
    %v4110 = vunpack.c.l.b16 %v3222
    %v4111 = vunpack.c.h.b16 %v3222
    %v4112 = vunpack.c.l.b16 %v3223
    %v4113 = vunpack.c.h.b16 %v3223
    %v4114 = vunpack.c.l.b16 %v3224
    %v4115 = vunpack.c.h.b16 %v3224
    %v4116 = vunpack.c.l.b16 %v3225
    %v4117 = vunpack.c.h.b16 %v3225
    %v4118 = vunpack.c.l.b16 %v3226
    %v4119 = vunpack.c.h.b16 %v3226
    %v4120 = vunpack.c.l.b16 %v3227
    %v4121 = vunpack.c.h.b16 %v3227
    %v4122 = vunpack.c.l.b16 %v3228
    %v4123 = vunpack.c.h.b16 %v3228
    %v4124 = vunpack.c.l.b16 %v3229
    %v4125 = vunpack.c.h.b16 %v3229
    %v4126 = vunpack.c.l.b16 %v3230
    %v4127 = vunpack.c.h.b16 %v3230
    %v4128 = vunpack.c.l.b16 %v3231
    %v4129 = vunpack.c.h.b16 %v3231
    %v4130 = vunpack.c.l.b16 %v3232
    %v4131 = vunpack.c.h.b16 %v3232
    %v4132 = vunpack.c.l.b16 %v3233
    %v4133 = vunpack.c.h.b16 %v3233
    %v4134 = vunpack.c.l.b16 %v3234
    %v4135 = vunpack.c.h.b16 %v3234
    %v4136 = vunpack.c.l.b16 %v3235
    %v4137 = vunpack.c.h.b16 %v3235
    %v4138 = vunpack.c.l.b16 %v3236
    %v4139 = vunpack.c.h.b16 %v3236
    %v4140 = vunpack.c.l.b16 %v3237
    %v4141 = vunpack.c.h.b16 %v3237
    %v4142 = vunpack.c.l.b16 %v3238
    %v4143 = vunpack.c.h.b16 %v3238
    %v4144 = vunpack.c.l.b16 %v3239
    %v4145 = vunpack.c.h.b16 %v3239
    %v4146 = vunpack.c.l.b16 %v3240
    %v4147 = vunpack.c.h.b16 %v3240
    %v4148 = vunpack.c.l.b16 %v3241
    %v4149 = vunpack.c.h.b16 %v3241
    %v4150 = vunpack.c.l.b16 %v3242
    %v4151 = vunpack.c.h.b16 %v3242
    %v4152 = vunpack.c.l.b16 %v3243
    %v4153 = vunpack.c.h.b16 %v3243
    %v4154 = vunpack.c.l.b16 %v3244
    %v4155 = vunpack.c.h.b16 %v3244
    %v4156 = vunpack.c.l.b16 %v3245
    %v4157 = vunpack.c.h.b16 %v3245
    %v4158 = vunpack.c.l.b16 %v3246
    %v4159 = vunpack.c.h.b16 %v3246
    %v4160 = vunpack.c.l.b16 %v3247
    %v4161 = vunpack.c.h.b16 %v3247
    %v4162 = vunpack.c.l.b16 %v3248
    %v4163 = vunpack.c.h.b16 %v3248
    %v4164 = vunpack.c.l.b16 %v3249
    %v4165 = vunpack.c.h.b16 %v3249
    %v4166 = vunpack.c.l.b16 %v3250
    %v4167 = vunpack.c.h.b16 %v3250
    %v4168 = vunpack.c.l.b16 %v3251
    %v4169 = vunpack.c.h.b16 %v3251
    %v4170 = vunpack.c.l.b16 %v3252
    %v4171 = vunpack.c.h.b16 %v3252
    %v4172 = vunpack.c.l.b16 %v3253
    %v4173 = vunpack.c.h.b16 %v3253
    %v4174 = vunpack.c.l.b16 %v3254
    %v4175 = vunpack.c.h.b16 %v3254
    %v4176 = vunpack.c.l.b16 %v3255
    %v4177 = vunpack.c.h.b16 %v3255
    %v4178 = vunpack.c.l.b16 %v3256
    %v4179 = vunpack.c.h.b16 %v3256
    %v4180 = vunpack.c.l.b16 %v3257
    %v4181 = vunpack.c.h.b16 %v3257
    %v4182 = vunpack.c.l.b16 %v3258
    %v4183 = vunpack.c.h.b16 %v3258
    %v4184 = vunpack.c.l.b16 %v3259
    %v4185 = vunpack.c.h.b16 %v3259
    %v4186 = vunpack.c.l.b16 %v3260
    %v4187 = vunpack.c.h.b16 %v3260
    %v4188 = vunpack.c.l.b16 %v3261
    %v4189 = vunpack.c.h.b16 %v3261
    %v4190 = vunpack.c.l.b16 %v3262
    %v4191 = vunpack.c.h.b16 %v3262
    %v4192 = vunpack.c.l.b16 %v3263
    %v4193 = vunpack.c.h.b16 %v3263
    %v4194 = vunpack.c.l.b16 %v3264
    %v4195 = vunpack.c.h.b16 %v3264
    %v4196 = vunpack.c.l.b16 %v3265
    %v4197 = vunpack.c.h.b16 %v3265
    %v4198 = vunpack.c.l.b16 %v3266
    %v4199 = vunpack.c.h.b16 %v3266
    %v4200 = vunpack.c.l.b16 %v3267
    %v4201 = vunpack.c.h.b16 %v3267
    %v4202 = vunpack.c.l.b16 %v3268
    %v4203 = vunpack.c.h.b16 %v3268
    %v4204 = vunpack.c.l.b16 %v3269
    %v4205 = vunpack.c.h.b16 %v3269
    %v4206 = vunpack.c.l.b16 %v3270
    %v4207 = vunpack.c.h.b16 %v3270
    %v4208 = vunpack.c.l.b16 %v3271
    %v4209 = vunpack.c.h.b16 %v3271
    %v4210 = vunpack.c.l.b16 %v3272
    %v4211 = vunpack.c.h.b16 %v3272
    %v4212 = vunpack.c.l.b16 %v3273
    %v4213 = vunpack.c.h.b16 %v3273
    %v4214 = vunpack.c.l.b16 %v3274
    %v4215 = vunpack.c.h.b16 %v3274
    %v4216 = vunpack.c.l.b16 %v3275
    %v4217 = vunpack.c.h.b16 %v3275
    %v4218 = vunpack.c.l.b16 %v3276
    %v4219 = vunpack.c.h.b16 %v3276
    %v4220 = vunpack.c.l.b16 %v3277
    %v4221 = vunpack.c.h.b16 %v3277
    %v4222 = vunpack.c.l.b16 %v3278
    %v4223 = vunpack.c.h.b16 %v3278
    %v4224 = vunpack.c.l.b16 %v3279
    %v4225 = vunpack.c.h.b16 %v3279
    %v4226 = vunpack.c.l.b16 %v3280
    %v4227 = vunpack.c.h.b16 %v3280
    %v4228 = vunpack.c.l.b16 %v3281
    %v4229 = vunpack.c.h.b16 %v3281
    %v4230 = vunpack.c.l.b16 %v3282
    %v4231 = vunpack.c.h.b16 %v3282
    %v4232 = vunpack.c.l.b16 %v3283
    %v4233 = vunpack.c.h.b16 %v3283
    %v4234 = vunpack.c.l.b16 %v3284
    %v4235 = vunpack.c.h.b16 %v3284
    %v4236 = vunpack.c.l.b16 %v3285
    %v4237 = vunpack.c.h.b16 %v3285
    %v4238 = vunpack.c.l.b16 %v3286
    %v4239 = vunpack.c.h.b16 %v3286
    %v4240 = vunpack.c.l.b16 %v3287
    %v4241 = vunpack.c.h.b16 %v3287
    %v4242 = vunpack.c.l.b16 %v3288
    %v4243 = vunpack.c.h.b16 %v3288
    %v4244 = vunpack.c.l.b16 %v3289
    %v4245 = vunpack.c.h.b16 %v3289
    %v4246 = vunpack.c.l.b16 %v3290
    %v4247 = vunpack.c.h.b16 %v3290
    %v4248 = vunpack.c.l.b16 %v3291
    %v4249 = vunpack.c.h.b16 %v3291
    %v4250 = vunpack.c.l.b16 %v3292
    %v4251 = vunpack.c.h.b16 %v3292
    %v4252 = vunpack.c.l.b16 %v3293
    %v4253 = vunpack.c.h.b16 %v3293
    %v4254 = vunpack.c.l.b16 %v3294
    %v4255 = vunpack.c.h.b16 %v3294
    %v4256 = vunpack.c.l.b16 %v3295
    %v4257 = vunpack.c.h.b16 %v3295
    %v4258 = vunpack.c.l.b16 %v3296
    %v4259 = vunpack.c.h.b16 %v3296
    %v4260 = vunpack.c.l.b16 %v3297
    %v4261 = vunpack.c.h.b16 %v3297
    %v4262 = vunpack.c.l.b16 %v3298
    %v4263 = vunpack.c.h.b16 %v3298
    %v4264 = vunpack.c.l.b16 %v3299
    %v4265 = vunpack.c.h.b16 %v3299
    %v4266 = vunpack.c.l.b16 %v3300
    %v4267 = vunpack.c.h.b16 %v3300
    %v4268 = vunpack.c.l.b16 %v3301
    %v4269 = vunpack.c.h.b16 %v3301
    %v4270 = vunpack.c.l.b16 %v3302
    %v4271 = vunpack.c.h.b16 %v3302
    %v4272 = vunpack.c.l.b16 %v3303
    %v4273 = vunpack.c.h.b16 %v3303
    %v4274 = vunpack.c.l.b16 %v3304
    %v4275 = vunpack.c.h.b16 %v3304
    %v4276 = vunpack.c.l.b16 %v3305
    %v4277 = vunpack.c.h.b16 %v3305
    %v4278 = vunpack.c.l.b16 %v3306
    %v4279 = vunpack.c.h.b16 %v3306
    %v4280 = vunpack.c.l.b16 %v3307
    %v4281 = vunpack.c.h.b16 %v3307
    %v4282 = vunpack.c.l.b16 %v3308
    %v4283 = vunpack.c.h.b16 %v3308
    %v4284 = vunpack.c.l.b16 %v3309
    %v4285 = vunpack.c.h.b16 %v3309
    %v4286 = vunpack.c.l.b16 %v3310
    %v4287 = vunpack.c.h.b16 %v3310
    %v4288 = vunpack.c.l.b16 %v3311
    %v4289 = vunpack.c.h.b16 %v3311
    %v4290 = vunpack.c.l.b16 %v3312
    %v4291 = vunpack.c.h.b16 %v3312
    %v4292 = vunpack.c.l.b16 %v3313
    %v4293 = vunpack.c.h.b16 %v3313
    %v4294 = vunpack.c.l.b16 %v3314
    %v4295 = vunpack.c.h.b16 %v3314
    %v4296 = vunpack.c.l.b16 %v3315
    %v4297 = vunpack.c.h.b16 %v3315
    %v4298 = vpack.c.b16 %v3662, %v3658
    %v4299 = vpack.c.b16 %v3663, %v3659
    %v4300 = vpack.c.b16 %v3664, %v3660
    %v4301 = vpack.c.b16 %v3665, %v3661
    %v4302 = vpack.c.b16 %v3670, %v3666
    %v4303 = vpack.c.b16 %v3671, %v3667
    %v4304 = vpack.c.b16 %v3672, %v3668
    %v4305 = vpack.c.b16 %v3673, %v3669
    %v4306 = vpack.c.b16 %v3678, %v3674
    %v4307 = vpack.c.b16 %v3679, %v3675
    %v4308 = vpack.c.b16 %v3680, %v3676
    %v4309 = vpack.c.b16 %v3681, %v3677
    %v4310 = vpack.c.b16 %v3686, %v3682
    %v4311 = vpack.c.b16 %v3687, %v3683
    %v4312 = vpack.c.b16 %v3688, %v3684
    %v4313 = vpack.c.b16 %v3689, %v3685
    %v4314 = vpack.c.b16 %v3694, %v3690
    %v4315 = vpack.c.b16 %v3695, %v3691
    %v4316 = vpack.c.b16 %v3696, %v3692
    %v4317 = vpack.c.b16 %v3697, %v3693
    %v4318 = vpack.c.b16 %v3702, %v3698
    %v4319 = vpack.c.b16 %v3703, %v3699
    %v4320 = vpack.c.b16 %v3704, %v3700
    %v4321 = vpack.c.b16 %v3705, %v3701
    %v4322 = vpack.c.b16 %v3710, %v3706
    %v4323 = vpack.c.b16 %v3711, %v3707
    %v4324 = vpack.c.b16 %v3712, %v3708
    %v4325 = vpack.c.b16 %v3713, %v3709
    %v4326 = vpack.c.b16 %v3718, %v3714
    %v4327 = vpack.c.b16 %v3719, %v3715
    %v4328 = vpack.c.b16 %v3720, %v3716
    %v4329 = vpack.c.b16 %v3721, %v3717
    %v4330 = vpack.c.b16 %v3726, %v3722
    %v4331 = vpack.c.b16 %v3727, %v3723
    %v4332 = vpack.c.b16 %v3728, %v3724
    %v4333 = vpack.c.b16 %v3729, %v3725
    %v4334 = vpack.c.b16 %v3734, %v3730
    %v4335 = vpack.c.b16 %v3735, %v3731
    %v4336 = vpack.c.b16 %v3736, %v3732
    %v4337 = vpack.c.b16 %v3737, %v3733
    %v4338 = vpack.c.b16 %v3742, %v3738
    %v4339 = vpack.c.b16 %v3743, %v3739
    %v4340 = vpack.c.b16 %v3744, %v3740
    %v4341 = vpack.c.b16 %v3745, %v3741
    %v4342 = vpack.c.b16 %v3750, %v3746
    %v4343 = vpack.c.b16 %v3751, %v3747
    %v4344 = vpack.c.b16 %v3752, %v3748
    %v4345 = vpack.c.b16 %v3753, %v3749
    %v4346 = vpack.c.b16 %v3758, %v3754
    %v4347 = vpack.c.b16 %v3759, %v3755
    %v4348 = vpack.c.b16 %v3760, %v3756
    %v4349 = vpack.c.b16 %v3761, %v3757
    %v4350 = vpack.c.b16 %v3766, %v3762
    %v4351 = vpack.c.b16 %v3767, %v3763
    %v4352 = vpack.c.b16 %v3768, %v3764
    %v4353 = vpack.c.b16 %v3769, %v3765
    %v4354 = vpack.c.b16 %v3774, %v3770
    %v4355 = vpack.c.b16 %v3775, %v3771
    %v4356 = vpack.c.b16 %v3776, %v3772
    %v4357 = vpack.c.b16 %v3777, %v3773
    %v4358 = vpack.c.b16 %v3782, %v3778
    %v4359 = vpack.c.b16 %v3783, %v3779
    %v4360 = vpack.c.b16 %v3784, %v3780
    %v4361 = vpack.c.b16 %v3785, %v3781
    %v4362 = vpack.c.b16 %v3790, %v3786
    %v4363 = vpack.c.b16 %v3791, %v3787
    %v4364 = vpack.c.b16 %v3792, %v3788
    %v4365 = vpack.c.b16 %v3793, %v3789
    %v4366 = vpack.c.b16 %v3798, %v3794
    %v4367 = vpack.c.b16 %v3799, %v3795
    %v4368 = vpack.c.b16 %v3800, %v3796
    %v4369 = vpack.c.b16 %v3801, %v3797
    %v4370 = vpack.c.b16 %v3806, %v3802
    %v4371 = vpack.c.b16 %v3807, %v3803
    %v4372 = vpack.c.b16 %v3808, %v3804
    %v4373 = vpack.c.b16 %v3809, %v3805
    %v4374 = vpack.c.b16 %v3814, %v3810
    %v4375 = vpack.c.b16 %v3815, %v3811
    %v4376 = vpack.c.b16 %v3816, %v3812
    %v4377 = vpack.c.b16 %v3817, %v3813
    %v4378 = vpack.c.b16 %v3822, %v3818
    %v4379 = vpack.c.b16 %v3823, %v3819
    %v4380 = vpack.c.b16 %v3824, %v3820
    %v4381 = vpack.c.b16 %v3825, %v3821
    %v4382 = vpack.c.b16 %v3830, %v3826
    %v4383 = vpack.c.b16 %v3831, %v3827
    %v4384 = vpack.c.b16 %v3832, %v3828
    %v4385 = vpack.c.b16 %v3833, %v3829
    %v4386 = vpack.c.b16 %v3838, %v3834
    %v4387 = vpack.c.b16 %v3839, %v3835
    %v4388 = vpack.c.b16 %v3840, %v3836
    %v4389 = vpack.c.b16 %v3841, %v3837
    %v4390 = vpack.c.b16 %v3846, %v3842
    %v4391 = vpack.c.b16 %v3847, %v3843
    %v4392 = vpack.c.b16 %v3848, %v3844
    %v4393 = vpack.c.b16 %v3849, %v3845
    %v4394 = vpack.c.b16 %v3854, %v3850
    %v4395 = vpack.c.b16 %v3855, %v3851
    %v4396 = vpack.c.b16 %v3856, %v3852
    %v4397 = vpack.c.b16 %v3857, %v3853
    %v4398 = vpack.c.b16 %v3862, %v3858
    %v4399 = vpack.c.b16 %v3863, %v3859
    %v4400 = vpack.c.b16 %v3864, %v3860
    %v4401 = vpack.c.b16 %v3865, %v3861
    %v4402 = vpack.c.b16 %v3870, %v3866
    %v4403 = vpack.c.b16 %v3871, %v3867
    %v4404 = vpack.c.b16 %v3872, %v3868
    %v4405 = vpack.c.b16 %v3873, %v3869
    %v4406 = vpack.c.b16 %v3878, %v3874
    %v4407 = vpack.c.b16 %v3879, %v3875
    %v4408 = vpack.c.b16 %v3880, %v3876
    %v4409 = vpack.c.b16 %v3881, %v3877
    %v4410 = vpack.c.b16 %v3886, %v3882
    %v4411 = vpack.c.b16 %v3887, %v3883
    %v4412 = vpack.c.b16 %v3888, %v3884
    %v4413 = vpack.c.b16 %v3889, %v3885
    %v4414 = vpack.c.b16 %v3894, %v3890
    %v4415 = vpack.c.b16 %v3895, %v3891
    %v4416 = vpack.c.b16 %v3896, %v3892
    %v4417 = vpack.c.b16 %v3897, %v3893
    %v4418 = vpack.c.b16 %v3902, %v3898
    %v4419 = vpack.c.b16 %v3903, %v3899
    %v4420 = vpack.c.b16 %v3904, %v3900
    %v4421 = vpack.c.b16 %v3905, %v3901
    %v4422 = vpack.c.b16 %v3910, %v3906
    %v4423 = vpack.c.b16 %v3911, %v3907
    %v4424 = vpack.c.b16 %v3912, %v3908
    %v4425 = vpack.c.b16 %v3913, %v3909
    %v4426 = vpack.c.b16 %v3918, %v3914
    %v4427 = vpack.c.b16 %v3919, %v3915
    %v4428 = vpack.c.b16 %v3920, %v3916
    %v4429 = vpack.c.b16 %v3921, %v3917
    %v4430 = vpack.c.b16 %v3926, %v3922
    %v4431 = vpack.c.b16 %v3927, %v3923
    %v4432 = vpack.c.b16 %v3928, %v3924
    %v4433 = vpack.c.b16 %v3929, %v3925
    %v4434 = vpack.c.b16 %v3934, %v3930
    %v4435 = vpack.c.b16 %v3935, %v3931
    %v4436 = vpack.c.b16 %v3936, %v3932
    %v4437 = vpack.c.b16 %v3937, %v3933
    %v4438 = vpack.c.b16 %v3942, %v3938
    %v4439 = vpack.c.b16 %v3943, %v3939
    %v4440 = vpack.c.b16 %v3944, %v3940
    %v4441 = vpack.c.b16 %v3945, %v3941
    %v4442 = vpack.c.b16 %v3950, %v3946
    %v4443 = vpack.c.b16 %v3951, %v3947
    %v4444 = vpack.c.b16 %v3952, %v3948
    %v4445 = vpack.c.b16 %v3953, %v3949
    %v4446 = vpack.c.b16 %v3958, %v3954
    %v4447 = vpack.c.b16 %v3959, %v3955
    %v4448 = vpack.c.b16 %v3960, %v3956
    %v4449 = vpack.c.b16 %v3961, %v3957
    %v4450 = vpack.c.b16 %v3966, %v3962
    %v4451 = vpack.c.b16 %v3967, %v3963
    %v4452 = vpack.c.b16 %v3968, %v3964
    %v4453 = vpack.c.b16 %v3969, %v3965
    %v4454 = vpack.c.b16 %v3974, %v3970
    %v4455 = vpack.c.b16 %v3975, %v3971
    %v4456 = vpack.c.b16 %v3976, %v3972
    %v4457 = vpack.c.b16 %v3977, %v3973
    %v4458 = vpack.c.b16 %v3982, %v3978
    %v4459 = vpack.c.b16 %v3983, %v3979
    %v4460 = vpack.c.b16 %v3984, %v3980
    %v4461 = vpack.c.b16 %v3985, %v3981
    %v4462 = vpack.c.b16 %v3990, %v3986
    %v4463 = vpack.c.b16 %v3991, %v3987
    %v4464 = vpack.c.b16 %v3992, %v3988
    %v4465 = vpack.c.b16 %v3993, %v3989
    %v4466 = vpack.c.b16 %v3998, %v3994
    %v4467 = vpack.c.b16 %v3999, %v3995
    %v4468 = vpack.c.b16 %v4000, %v3996
    %v4469 = vpack.c.b16 %v4001, %v3997
    %v4470 = vpack.c.b16 %v4006, %v4002
    %v4471 = vpack.c.b16 %v4007, %v4003
    %v4472 = vpack.c.b16 %v4008, %v4004
    %v4473 = vpack.c.b16 %v4009, %v4005
    %v4474 = vpack.c.b16 %v4014, %v4010
    %v4475 = vpack.c.b16 %v4015, %v4011
    %v4476 = vpack.c.b16 %v4016, %v4012
    %v4477 = vpack.c.b16 %v4017, %v4013
    %v4478 = vpack.c.b16 %v4022, %v4018
    %v4479 = vpack.c.b16 %v4023, %v4019
    %v4480 = vpack.c.b16 %v4024, %v4020
    %v4481 = vpack.c.b16 %v4025, %v4021
    %v4482 = vpack.c.b16 %v4030, %v4026
    %v4483 = vpack.c.b16 %v4031, %v4027
    %v4484 = vpack.c.b16 %v4032, %v4028
    %v4485 = vpack.c.b16 %v4033, %v4029
    %v4486 = vpack.c.b16 %v4038, %v4034
    %v4487 = vpack.c.b16 %v4039, %v4035
    %v4488 = vpack.c.b16 %v4040, %v4036
    %v4489 = vpack.c.b16 %v4041, %v4037
    %v4490 = vpack.c.b16 %v4046, %v4042
    %v4491 = vpack.c.b16 %v4047, %v4043
    %v4492 = vpack.c.b16 %v4048, %v4044
    %v4493 = vpack.c.b16 %v4049, %v4045
    %v4494 = vpack.c.b16 %v4054, %v4050
    %v4495 = vpack.c.b16 %v4055, %v4051
    %v4496 = vpack.c.b16 %v4056, %v4052
    %v4497 = vpack.c.b16 %v4057, %v4053
    %v4498 = vpack.c.b16 %v4062, %v4058
    %v4499 = vpack.c.b16 %v4063, %v4059
    %v4500 = vpack.c.b16 %v4064, %v4060
    %v4501 = vpack.c.b16 %v4065, %v4061
    %v4502 = vpack.c.b16 %v4070, %v4066
    %v4503 = vpack.c.b16 %v4071, %v4067
    %v4504 = vpack.c.b16 %v4072, %v4068
    %v4505 = vpack.c.b16 %v4073, %v4069
    %v4506 = vpack.c.b16 %v4078, %v4074
    %v4507 = vpack.c.b16 %v4079, %v4075
    %v4508 = vpack.c.b16 %v4080, %v4076
    %v4509 = vpack.c.b16 %v4081, %v4077
    %v4510 = vpack.c.b16 %v4086, %v4082
    %v4511 = vpack.c.b16 %v4087, %v4083
    %v4512 = vpack.c.b16 %v4088, %v4084
    %v4513 = vpack.c.b16 %v4089, %v4085
    %v4514 = vpack.c.b16 %v4094, %v4090
    %v4515 = vpack.c.b16 %v4095, %v4091
    %v4516 = vpack.c.b16 %v4096, %v4092
    %v4517 = vpack.c.b16 %v4097, %v4093
    %v4518 = vpack.c.b16 %v4102, %v4098
    %v4519 = vpack.c.b16 %v4103, %v4099
    %v4520 = vpack.c.b16 %v4104, %v4100
    %v4521 = vpack.c.b16 %v4105, %v4101
    %v4522 = vpack.c.b16 %v4110, %v4106
    %v4523 = vpack.c.b16 %v4111, %v4107
    %v4524 = vpack.c.b16 %v4112, %v4108
    %v4525 = vpack.c.b16 %v4113, %v4109
    %v4526 = vpack.c.b16 %v4118, %v4114
    %v4527 = vpack.c.b16 %v4119, %v4115
    %v4528 = vpack.c.b16 %v4120, %v4116
    %v4529 = vpack.c.b16 %v4121, %v4117
    %v4530 = vpack.c.b16 %v4126, %v4122
    %v4531 = vpack.c.b16 %v4127, %v4123
    %v4532 = vpack.c.b16 %v4128, %v4124
    %v4533 = vpack.c.b16 %v4129, %v4125
    %v4534 = vpack.c.b16 %v4134, %v4130
    %v4535 = vpack.c.b16 %v4135, %v4131
    %v4536 = vpack.c.b16 %v4136, %v4132
    %v4537 = vpack.c.b16 %v4137, %v4133
    %v4538 = vpack.c.b16 %v4142, %v4138
    %v4539 = vpack.c.b16 %v4143, %v4139
    %v4540 = vpack.c.b16 %v4144, %v4140
    %v4541 = vpack.c.b16 %v4145, %v4141
    %v4542 = vpack.c.b16 %v4150, %v4146
    %v4543 = vpack.c.b16 %v4151, %v4147
    %v4544 = vpack.c.b16 %v4152, %v4148
    %v4545 = vpack.c.b16 %v4153, %v4149
    %v4546 = vpack.c.b16 %v4158, %v4154
    %v4547 = vpack.c.b16 %v4159, %v4155
    %v4548 = vpack.c.b16 %v4160, %v4156
    %v4549 = vpack.c.b16 %v4161, %v4157
    %v4550 = vpack.c.b16 %v4166, %v4162
    %v4551 = vpack.c.b16 %v4167, %v4163
    %v4552 = vpack.c.b16 %v4168, %v4164
    %v4553 = vpack.c.b16 %v4169, %v4165
    %v4554 = vpack.c.b16 %v4174, %v4170
    %v4555 = vpack.c.b16 %v4175, %v4171
    %v4556 = vpack.c.b16 %v4176, %v4172
    %v4557 = vpack.c.b16 %v4177, %v4173
    %v4558 = vpack.c.b16 %v4182, %v4178
    %v4559 = vpack.c.b16 %v4183, %v4179
    %v4560 = vpack.c.b16 %v4184, %v4180
    %v4561 = vpack.c.b16 %v4185, %v4181
    %v4562 = vpack.c.b16 %v4190, %v4186
    %v4563 = vpack.c.b16 %v4191, %v4187
    %v4564 = vpack.c.b16 %v4192, %v4188
    %v4565 = vpack.c.b16 %v4193, %v4189
    %v4566 = vpack.c.b16 %v4198, %v4194
    %v4567 = vpack.c.b16 %v4199, %v4195
    %v4568 = vpack.c.b16 %v4200, %v4196
    %v4569 = vpack.c.b16 %v4201, %v4197
    %v4570 = vpack.c.b16 %v4206, %v4202
    %v4571 = vpack.c.b16 %v4207, %v4203
    %v4572 = vpack.c.b16 %v4208, %v4204
    %v4573 = vpack.c.b16 %v4209, %v4205
    %v4574 = vpack.c.b16 %v4214, %v4210
    %v4575 = vpack.c.b16 %v4215, %v4211
    %v4576 = vpack.c.b16 %v4216, %v4212
    %v4577 = vpack.c.b16 %v4217, %v4213
    %v4578 = vpack.c.b16 %v4222, %v4218
    %v4579 = vpack.c.b16 %v4223, %v4219
    %v4580 = vpack.c.b16 %v4224, %v4220
    %v4581 = vpack.c.b16 %v4225, %v4221
    %v4582 = vpack.c.b16 %v4230, %v4226
    %v4583 = vpack.c.b16 %v4231, %v4227
    %v4584 = vpack.c.b16 %v4232, %v4228
    %v4585 = vpack.c.b16 %v4233, %v4229
    %v4586 = vpack.c.b16 %v4238, %v4234
    %v4587 = vpack.c.b16 %v4239, %v4235
    %v4588 = vpack.c.b16 %v4240, %v4236
    %v4589 = vpack.c.b16 %v4241, %v4237
    %v4590 = vpack.c.b16 %v4246, %v4242
    %v4591 = vpack.c.b16 %v4247, %v4243
    %v4592 = vpack.c.b16 %v4248, %v4244
    %v4593 = vpack.c.b16 %v4249, %v4245
    %v4594 = vpack.c.b16 %v4254, %v4250
    %v4595 = vpack.c.b16 %v4255, %v4251
    %v4596 = vpack.c.b16 %v4256, %v4252
    %v4597 = vpack.c.b16 %v4257, %v4253
    %v4598 = vpack.c.b16 %v4262, %v4258
    %v4599 = vpack.c.b16 %v4263, %v4259
    %v4600 = vpack.c.b16 %v4264, %v4260
    %v4601 = vpack.c.b16 %v4265, %v4261
    %v4602 = vpack.c.b16 %v4270, %v4266
    %v4603 = vpack.c.b16 %v4271, %v4267
    %v4604 = vpack.c.b16 %v4272, %v4268
    %v4605 = vpack.c.b16 %v4273, %v4269
    %v4606 = vpack.c.b16 %v4278, %v4274
    %v4607 = vpack.c.b16 %v4279, %v4275
    %v4608 = vpack.c.b16 %v4280, %v4276
    %v4609 = vpack.c.b16 %v4281, %v4277
    %v4610 = vpack.c.b16 %v4286, %v4282
    %v4611 = vpack.c.b16 %v4287, %v4283
    %v4612 = vpack.c.b16 %v4288, %v4284
    %v4613 = vpack.c.b16 %v4289, %v4285
    %v4614 = vpack.c.b16 %v4294, %v4290
    %v4615 = vpack.c.b16 %v4295, %v4291
    %v4616 = vpack.c.b16 %v4296, %v4292
    %v4617 = vpack.c.b16 %v4297, %v4293
    %4938 = vmatprep.subr.bf16.mxu0 %v4327
    %4939 = vmatpush1.bf16.msra.mxu0 %v4326
    %4940 = vmatprep.subr.bf16.mxu0 %v4323
    %4941 = vmatpush1.bf16.msra.mxu0 %v4322
    %4942 = vmatprep.subr.bf16.mxu0 %v4319
    %4943 = vmatpush1.bf16.msra.mxu0 %v4318
    %4944 = vmatprep.subr.bf16.mxu0 %v4315
    %4945 = vmatpush1.bf16.msra.mxu0 %v4314
    %4946 = vmatprep.subr.bf16.mxu0 %v4311
    %4947 = vmatpush1.bf16.msra.mxu0 %v4310
    %4948 = vmatprep.subr.bf16.mxu0 %v4307
    %4949 = vmatpush1.bf16.msra.mxu0 %v4306
    %4950 = vmatprep.subr.bf16.mxu0 %v4303
    %4951 = vmatpush1.bf16.msra.mxu0 %v4302
    %4952 = vmatprep.subr.bf16.mxu0 %v4299
    %4953 = vmatpush1.bf16.msra.mxu0 %v4298
    %4954 = vmatprep.subr.bf16.mxu0 %v4359
    %4955 = vmatpush2.bf16.msra.mxu0 %v4358
    %4956 = vmatprep.subr.bf16.mxu0 %v4355
    %4957 = vmatpush2.bf16.msra.mxu0 %v4354
    %4958 = vmatprep.subr.bf16.mxu0 %v4351
    %4959 = vmatpush2.bf16.msra.mxu0 %v4350
    %4960 = vmatprep.subr.bf16.mxu0 %v4347
    %4961 = vmatpush2.bf16.msra.mxu0 %v4346
    %4962 = vmatprep.subr.bf16.mxu0 %v4343
    %4963 = vmatpush2.bf16.msra.mxu0 %v4342
    %4964 = vmatprep.subr.bf16.mxu0 %v4339
    %4965 = vmatpush2.bf16.msra.mxu0 %v4338
    %4966 = vmatprep.subr.bf16.mxu0 %v4335
    %4967 = vmatpush2.bf16.msra.mxu0 %v4334
    %4968 = vmatprep.subr.bf16.mxu0 %v4331
    %4969 = vmatpush2.bf16.msra.mxu0 %v4330
    %4970 = vmatprep.mubr.bf16.mxu0 %v2987
    %4971 = vmatmul.mubr.bf16.gmra.mxu0 %v2986
    %v4972 = vpop.f32.mrf.mxu0
    %v4973 = vadd.f32 %v3321, %v4972
    %v4974 = vpop.f32.mrf.mxu0
    %v4975 = vadd.f32 %v3325, %v4974
    %v4976 = vpop.f32.mrf.mxu0
    %v4977 = vpop.f32.mrf.mxu0
    %4978 = vdwg.mxu0
    %4979 = vmatprep.subr.bf16.mxu0 %v4391
    %4980 = vmatpush1.bf16.msra.mxu0 %v4390
    %4981 = vmatprep.subr.bf16.mxu0 %v4387
    %4982 = vmatpush1.bf16.msra.mxu0 %v4386
    %4983 = vmatprep.subr.bf16.mxu0 %v4383
    %4984 = vmatpush1.bf16.msra.mxu0 %v4382
    %4985 = vmatprep.subr.bf16.mxu0 %v4379
    %4986 = vmatpush1.bf16.msra.mxu0 %v4378
    %4987 = vmatprep.subr.bf16.mxu0 %v4375
    %4988 = vmatpush1.bf16.msra.mxu0 %v4374
    %4989 = vmatprep.subr.bf16.mxu0 %v4371
    %4990 = vmatpush1.bf16.msra.mxu0 %v4370
    %4991 = vmatprep.subr.bf16.mxu0 %v4367
    %4992 = vmatpush1.bf16.msra.mxu0 %v4366
    %4993 = vmatprep.subr.bf16.mxu0 %v4363
    %4994 = vmatpush1.bf16.msra.mxu0 %v4362
    %4995 = vmatprep.subr.bf16.mxu0 %v4423
    %4996 = vmatpush2.bf16.msra.mxu0 %v4422
    %4997 = vmatprep.subr.bf16.mxu0 %v4419
    %4998 = vmatpush2.bf16.msra.mxu0 %v4418
    %4999 = vmatprep.subr.bf16.mxu0 %v4415
    %5000 = vmatpush2.bf16.msra.mxu0 %v4414
    %5001 = vmatprep.subr.bf16.mxu0 %v4411
    %5002 = vmatpush2.bf16.msra.mxu0 %v4410
    %5003 = vmatprep.subr.bf16.mxu0 %v4407
    %5004 = vmatpush2.bf16.msra.mxu0 %v4406
    %5005 = vmatprep.subr.bf16.mxu0 %v4403
    %5006 = vmatpush2.bf16.msra.mxu0 %v4402
    %5007 = vmatprep.subr.bf16.mxu0 %v4399
    %5008 = vmatpush2.bf16.msra.mxu0 %v4398
    %5009 = vmatprep.subr.bf16.mxu0 %v4395
    %5010 = vmatpush2.bf16.msra.mxu0 %v4394
    %5011 = vmatprep.mubr.bf16.mxu0 %v2989
    %5012 = vmatmul.mubr.bf16.gmra.mxu0 %v2988
    %v5013 = vpop.f32.mrf.mxu0
    %v5014 = vadd.f32 %v4973, %v5013
    %v5015 = vpop.f32.mrf.mxu0
    %v5016 = vadd.f32 %v4975, %v5015
    %v5017 = vpop.f32.mrf.mxu0
    %v5018 = vpop.f32.mrf.mxu0
    %5019 = vdwg.mxu0
    %5020 = vmatprep.subr.bf16.mxu0 %v4455
    %5021 = vmatpush1.bf16.msra.mxu0 %v4454
    %5022 = vmatprep.subr.bf16.mxu0 %v4451
    %5023 = vmatpush1.bf16.msra.mxu0 %v4450
    %5024 = vmatprep.subr.bf16.mxu0 %v4447
    %5025 = vmatpush1.bf16.msra.mxu0 %v4446
    %5026 = vmatprep.subr.bf16.mxu0 %v4443
    %5027 = vmatpush1.bf16.msra.mxu0 %v4442
    %5028 = vmatprep.subr.bf16.mxu0 %v4439
    %5029 = vmatpush1.bf16.msra.mxu0 %v4438
    %5030 = vmatprep.subr.bf16.mxu0 %v4435
    %5031 = vmatpush1.bf16.msra.mxu0 %v4434
    %5032 = vmatprep.subr.bf16.mxu0 %v4431
    %5033 = vmatpush1.bf16.msra.mxu0 %v4430
    %5034 = vmatprep.subr.bf16.mxu0 %v4427
    %5035 = vmatpush1.bf16.msra.mxu0 %v4426
    %5036 = vmatprep.subr.bf16.mxu0 %v4487
    %5037 = vmatpush2.bf16.msra.mxu0 %v4486
    %5038 = vmatprep.subr.bf16.mxu0 %v4483
    %5039 = vmatpush2.bf16.msra.mxu0 %v4482
    %5040 = vmatprep.subr.bf16.mxu0 %v4479
    %5041 = vmatpush2.bf16.msra.mxu0 %v4478
    %5042 = vmatprep.subr.bf16.mxu0 %v4475
    %5043 = vmatpush2.bf16.msra.mxu0 %v4474
    %5044 = vmatprep.subr.bf16.mxu0 %v4471
    %5045 = vmatpush2.bf16.msra.mxu0 %v4470
    %5046 = vmatprep.subr.bf16.mxu0 %v4467
    %5047 = vmatpush2.bf16.msra.mxu0 %v4466
    %5048 = vmatprep.subr.bf16.mxu0 %v4463
    %5049 = vmatpush2.bf16.msra.mxu0 %v4462
    %5050 = vmatprep.subr.bf16.mxu0 %v4459
    %5051 = vmatpush2.bf16.msra.mxu0 %v4458
    %5052 = vmatprep.mubr.bf16.mxu0 %v2991
    %5053 = vmatmul.mubr.bf16.gmra.mxu0 %v2990
    %v5054 = vpop.f32.mrf.mxu0
    %v5055 = vadd.f32 %v5014, %v5054
    %v5056 = vpop.f32.mrf.mxu0
    %v5057 = vadd.f32 %v5016, %v5056
    %v5058 = vpop.f32.mrf.mxu0
    %v5059 = vpop.f32.mrf.mxu0
    %5060 = vdwg.mxu0
    %5061 = vmatprep.subr.bf16.mxu0 %v4519
    %5062 = vmatpush1.bf16.msra.mxu0 %v4518
    %5063 = vmatprep.subr.bf16.mxu0 %v4515
    %5064 = vmatpush1.bf16.msra.mxu0 %v4514
    %5065 = vmatprep.subr.bf16.mxu0 %v4511
    %5066 = vmatpush1.bf16.msra.mxu0 %v4510
    %5067 = vmatprep.subr.bf16.mxu0 %v4507
    %5068 = vmatpush1.bf16.msra.mxu0 %v4506
    %5069 = vmatprep.subr.bf16.mxu0 %v4503
    %5070 = vmatpush1.bf16.msra.mxu0 %v4502
    %5071 = vmatprep.subr.bf16.mxu0 %v4499
    %5072 = vmatpush1.bf16.msra.mxu0 %v4498
    %5073 = vmatprep.subr.bf16.mxu0 %v4495
    %5074 = vmatpush1.bf16.msra.mxu0 %v4494
    %5075 = vmatprep.subr.bf16.mxu0 %v4491
    %5076 = vmatpush1.bf16.msra.mxu0 %v4490
    %5077 = vmatprep.subr.bf16.mxu0 %v4551
    %5078 = vmatpush2.bf16.msra.mxu0 %v4550
    %5079 = vmatprep.subr.bf16.mxu0 %v4547
    %5080 = vmatpush2.bf16.msra.mxu0 %v4546
    %5081 = vmatprep.subr.bf16.mxu0 %v4543
    %5082 = vmatpush2.bf16.msra.mxu0 %v4542
    %5083 = vmatprep.subr.bf16.mxu0 %v4539
    %5084 = vmatpush2.bf16.msra.mxu0 %v4538
    %5085 = vmatprep.subr.bf16.mxu0 %v4535
    %5086 = vmatpush2.bf16.msra.mxu0 %v4534
    %5087 = vmatprep.subr.bf16.mxu0 %v4531
    %5088 = vmatpush2.bf16.msra.mxu0 %v4530
    %5089 = vmatprep.subr.bf16.mxu0 %v4527
    %5090 = vmatpush2.bf16.msra.mxu0 %v4526
    %5091 = vmatprep.subr.bf16.mxu0 %v4523
    %5092 = vmatpush2.bf16.msra.mxu0 %v4522
    %5093 = vmatprep.mubr.bf16.mxu0 %v2993
    %5094 = vmatmul.mubr.bf16.gmra.mxu0 %v2992
    %v5095 = vpop.f32.mrf.mxu0
    %v5096 = vadd.f32 %v5055, %v5095
    %v5097 = vpop.f32.mrf.mxu0
    %v5098 = vadd.f32 %v5057, %v5097
    %v5099 = vpop.f32.mrf.mxu0
    %v5100 = vpop.f32.mrf.mxu0
    %5101 = vdwg.mxu0
    %5102 = vmatprep.subr.bf16.mxu0 %v4583
    %5103 = vmatpush1.bf16.msra.mxu0 %v4582
    %5104 = vmatprep.subr.bf16.mxu0 %v4579
    %5105 = vmatpush1.bf16.msra.mxu0 %v4578
    %5106 = vmatprep.subr.bf16.mxu0 %v4575
    %5107 = vmatpush1.bf16.msra.mxu0 %v4574
    %5108 = vmatprep.subr.bf16.mxu0 %v4571
    %5109 = vmatpush1.bf16.msra.mxu0 %v4570
    %5110 = vmatprep.subr.bf16.mxu0 %v4567
    %5111 = vmatpush1.bf16.msra.mxu0 %v4566
    %5112 = vmatprep.subr.bf16.mxu0 %v4563
    %5113 = vmatpush1.bf16.msra.mxu0 %v4562
    %5114 = vmatprep.subr.bf16.mxu0 %v4559
    %5115 = vmatpush1.bf16.msra.mxu0 %v4558
    %5116 = vmatprep.subr.bf16.mxu0 %v4555
    %5117 = vmatpush1.bf16.msra.mxu0 %v4554
    %5118 = vmatprep.subr.bf16.mxu0 %v4615
    %5119 = vmatpush2.bf16.msra.mxu0 %v4614
    %5120 = vmatprep.subr.bf16.mxu0 %v4611
    %5121 = vmatpush2.bf16.msra.mxu0 %v4610
    %5122 = vmatprep.subr.bf16.mxu0 %v4607
    %5123 = vmatpush2.bf16.msra.mxu0 %v4606
    %5124 = vmatprep.subr.bf16.mxu0 %v4603
    %5125 = vmatpush2.bf16.msra.mxu0 %v4602
    %5126 = vmatprep.subr.bf16.mxu0 %v4599
    %5127 = vmatpush2.bf16.msra.mxu0 %v4598
    %5128 = vmatprep.subr.bf16.mxu0 %v4595
    %5129 = vmatpush2.bf16.msra.mxu0 %v4594
    %5130 = vmatprep.subr.bf16.mxu0 %v4591
    %5131 = vmatpush2.bf16.msra.mxu0 %v4590
    %5132 = vmatprep.subr.bf16.mxu0 %v4587
    %5133 = vmatpush2.bf16.msra.mxu0 %v4586
    %5134 = vmatprep.mubr.bf16.mxu0 %v2995
    %5135 = vmatmul.mubr.bf16.gmra.mxu0 %v2994
    %v5136 = vpop.f32.mrf.mxu0
    %v5137 = vadd.f32 %v5096, %v5136
    %v5138 = vpop.f32.mrf.mxu0
    %v5139 = vadd.f32 %v5098, %v5138
    %v5140 = vpop.f32.mrf.mxu0
    %v5141 = vpop.f32.mrf.mxu0
    %5142 = vdwg.mxu0
    %5143 = vmatprep.subr.bf16.mxu0 %v4329
    %5144 = vmatpush1.bf16.msra.mxu0 %v4328
    %5145 = vmatprep.subr.bf16.mxu0 %v4325
    %5146 = vmatpush1.bf16.msra.mxu0 %v4324
    %5147 = vmatprep.subr.bf16.mxu0 %v4321
    %5148 = vmatpush1.bf16.msra.mxu0 %v4320
    %5149 = vmatprep.subr.bf16.mxu0 %v4317
    %5150 = vmatpush1.bf16.msra.mxu0 %v4316
    %5151 = vmatprep.subr.bf16.mxu0 %v4313
    %5152 = vmatpush1.bf16.msra.mxu0 %v4312
    %5153 = vmatprep.subr.bf16.mxu0 %v4309
    %5154 = vmatpush1.bf16.msra.mxu0 %v4308
    %5155 = vmatprep.subr.bf16.mxu0 %v4305
    %5156 = vmatpush1.bf16.msra.mxu0 %v4304
    %5157 = vmatprep.subr.bf16.mxu0 %v4301
    %5158 = vmatpush1.bf16.msra.mxu0 %v4300
    %5159 = vmatprep.subr.bf16.mxu0 %v4361
    %5160 = vmatpush2.bf16.msra.mxu0 %v4360
    %5161 = vmatprep.subr.bf16.mxu0 %v4357
    %5162 = vmatpush2.bf16.msra.mxu0 %v4356
    %5163 = vmatprep.subr.bf16.mxu0 %v4353
    %5164 = vmatpush2.bf16.msra.mxu0 %v4352
    %5165 = vmatprep.subr.bf16.mxu0 %v4349
    %5166 = vmatpush2.bf16.msra.mxu0 %v4348
    %5167 = vmatprep.subr.bf16.mxu0 %v4345
    %5168 = vmatpush2.bf16.msra.mxu0 %v4344
    %5169 = vmatprep.subr.bf16.mxu0 %v4341
    %5170 = vmatpush2.bf16.msra.mxu0 %v4340
    %5171 = vmatprep.subr.bf16.mxu0 %v4337
    %5172 = vmatpush2.bf16.msra.mxu0 %v4336
    %5173 = vmatprep.subr.bf16.mxu0 %v4333
    %5174 = vmatpush2.bf16.msra.mxu0 %v4332
    %5175 = vmatprep.mubr.bf16.mxu0 %v2987
    %5176 = vmatmul.mubr.bf16.gmra.mxu0 %v2986
    %v5177 = vpop.f32.mrf.mxu0
    %v5178 = vadd.f32 %v3329, %v5177
    %v5179 = vpop.f32.mrf.mxu0
    %v5180 = vadd.f32 %v3333, %v5179
    %v5181 = vpop.f32.mrf.mxu0
    %v5182 = vpop.f32.mrf.mxu0
    %5183 = vdwg.mxu0
    %5184 = vmatprep.subr.bf16.mxu0 %v4393
    %5185 = vmatpush1.bf16.msra.mxu0 %v4392
    %5186 = vmatprep.subr.bf16.mxu0 %v4389
    %5187 = vmatpush1.bf16.msra.mxu0 %v4388
    %5188 = vmatprep.subr.bf16.mxu0 %v4385
    %5189 = vmatpush1.bf16.msra.mxu0 %v4384
    %5190 = vmatprep.subr.bf16.mxu0 %v4381
    %5191 = vmatpush1.bf16.msra.mxu0 %v4380
    %5192 = vmatprep.subr.bf16.mxu0 %v4377
    %5193 = vmatpush1.bf16.msra.mxu0 %v4376
    %5194 = vmatprep.subr.bf16.mxu0 %v4373
    %5195 = vmatpush1.bf16.msra.mxu0 %v4372
    %5196 = vmatprep.subr.bf16.mxu0 %v4369
    %5197 = vmatpush1.bf16.msra.mxu0 %v4368
    %5198 = vmatprep.subr.bf16.mxu0 %v4365
    %5199 = vmatpush1.bf16.msra.mxu0 %v4364
    %5200 = vmatprep.subr.bf16.mxu0 %v4425
    %5201 = vmatpush2.bf16.msra.mxu0 %v4424
    %5202 = vmatprep.subr.bf16.mxu0 %v4421
    %5203 = vmatpush2.bf16.msra.mxu0 %v4420
    %5204 = vmatprep.subr.bf16.mxu0 %v4417
    %5205 = vmatpush2.bf16.msra.mxu0 %v4416
    %5206 = vmatprep.subr.bf16.mxu0 %v4413
    %5207 = vmatpush2.bf16.msra.mxu0 %v4412
    %5208 = vmatprep.subr.bf16.mxu0 %v4409
    %5209 = vmatpush2.bf16.msra.mxu0 %v4408
    %5210 = vmatprep.subr.bf16.mxu0 %v4405
    %5211 = vmatpush2.bf16.msra.mxu0 %v4404
    %5212 = vmatprep.subr.bf16.mxu0 %v4401
    %5213 = vmatpush2.bf16.msra.mxu0 %v4400
    %5214 = vmatprep.subr.bf16.mxu0 %v4397
    %5215 = vmatpush2.bf16.msra.mxu0 %v4396
    %5216 = vmatprep.mubr.bf16.mxu0 %v2989
    %5217 = vmatmul.mubr.bf16.gmra.mxu0 %v2988
    %v5218 = vpop.f32.mrf.mxu0
    %v5219 = vadd.f32 %v5178, %v5218
    %v5220 = vpop.f32.mrf.mxu0
    %v5221 = vadd.f32 %v5180, %v5220
    %v5222 = vpop.f32.mrf.mxu0
    %v5223 = vpop.f32.mrf.mxu0
    %5224 = vdwg.mxu0
    %5225 = vmatprep.subr.bf16.mxu0 %v4457
    %5226 = vmatpush1.bf16.msra.mxu0 %v4456
    %5227 = vmatprep.subr.bf16.mxu0 %v4453
    %5228 = vmatpush1.bf16.msra.mxu0 %v4452
    %5229 = vmatprep.subr.bf16.mxu0 %v4449
    %5230 = vmatpush1.bf16.msra.mxu0 %v4448
    %5231 = vmatprep.subr.bf16.mxu0 %v4445
    %5232 = vmatpush1.bf16.msra.mxu0 %v4444
    %5233 = vmatprep.subr.bf16.mxu0 %v4441
    %5234 = vmatpush1.bf16.msra.mxu0 %v4440
    %5235 = vmatprep.subr.bf16.mxu0 %v4437
    %5236 = vmatpush1.bf16.msra.mxu0 %v4436
    %5237 = vmatprep.subr.bf16.mxu0 %v4433
    %5238 = vmatpush1.bf16.msra.mxu0 %v4432
    %5239 = vmatprep.subr.bf16.mxu0 %v4429
    %5240 = vmatpush1.bf16.msra.mxu0 %v4428
    %5241 = vmatprep.subr.bf16.mxu0 %v4489
    %5242 = vmatpush2.bf16.msra.mxu0 %v4488
    %5243 = vmatprep.subr.bf16.mxu0 %v4485
    %5244 = vmatpush2.bf16.msra.mxu0 %v4484
    %5245 = vmatprep.subr.bf16.mxu0 %v4481
    %5246 = vmatpush2.bf16.msra.mxu0 %v4480
    %5247 = vmatprep.subr.bf16.mxu0 %v4477
    %5248 = vmatpush2.bf16.msra.mxu0 %v4476
    %5249 = vmatprep.subr.bf16.mxu0 %v4473
    %5250 = vmatpush2.bf16.msra.mxu0 %v4472
    %5251 = vmatprep.subr.bf16.mxu0 %v4469
    %5252 = vmatpush2.bf16.msra.mxu0 %v4468
    %5253 = vmatprep.subr.bf16.mxu0 %v4465
    %5254 = vmatpush2.bf16.msra.mxu0 %v4464
    %5255 = vmatprep.subr.bf16.mxu0 %v4461
    %5256 = vmatpush2.bf16.msra.mxu0 %v4460
    %5257 = vmatprep.mubr.bf16.mxu0 %v2991
    %5258 = vmatmul.mubr.bf16.gmra.mxu0 %v2990
    %v5259 = vpop.f32.mrf.mxu0
    %v5260 = vadd.f32 %v5219, %v5259
    %v5261 = vpop.f32.mrf.mxu0
    %v5262 = vadd.f32 %v5221, %v5261
    %v5263 = vpop.f32.mrf.mxu0
    %v5264 = vpop.f32.mrf.mxu0
    %5265 = vdwg.mxu0
    %5266 = vmatprep.subr.bf16.mxu0 %v4521
    %5267 = vmatpush1.bf16.msra.mxu0 %v4520
    %5268 = vmatprep.subr.bf16.mxu0 %v4517
    %5269 = vmatpush1.bf16.msra.mxu0 %v4516
    %5270 = vmatprep.subr.bf16.mxu0 %v4513
    %5271 = vmatpush1.bf16.msra.mxu0 %v4512
    %5272 = vmatprep.subr.bf16.mxu0 %v4509
    %5273 = vmatpush1.bf16.msra.mxu0 %v4508
    %5274 = vmatprep.subr.bf16.mxu0 %v4505
    %5275 = vmatpush1.bf16.msra.mxu0 %v4504
    %5276 = vmatprep.subr.bf16.mxu0 %v4501
    %5277 = vmatpush1.bf16.msra.mxu0 %v4500
    %5278 = vmatprep.subr.bf16.mxu0 %v4497
    %5279 = vmatpush1.bf16.msra.mxu0 %v4496
    %5280 = vmatprep.subr.bf16.mxu0 %v4493
    %5281 = vmatpush1.bf16.msra.mxu0 %v4492
    %5282 = vmatprep.subr.bf16.mxu0 %v4553
    %5283 = vmatpush2.bf16.msra.mxu0 %v4552
    %5284 = vmatprep.subr.bf16.mxu0 %v4549
    %5285 = vmatpush2.bf16.msra.mxu0 %v4548
    %5286 = vmatprep.subr.bf16.mxu0 %v4545
    %5287 = vmatpush2.bf16.msra.mxu0 %v4544
    %5288 = vmatprep.subr.bf16.mxu0 %v4541
    %5289 = vmatpush2.bf16.msra.mxu0 %v4540
    %5290 = vmatprep.subr.bf16.mxu0 %v4537
    %5291 = vmatpush2.bf16.msra.mxu0 %v4536
    %5292 = vmatprep.subr.bf16.mxu0 %v4533
    %5293 = vmatpush2.bf16.msra.mxu0 %v4532
    %5294 = vmatprep.subr.bf16.mxu0 %v4529
    %5295 = vmatpush2.bf16.msra.mxu0 %v4528
    %5296 = vmatprep.subr.bf16.mxu0 %v4525
    %5297 = vmatpush2.bf16.msra.mxu0 %v4524
    %5298 = vmatprep.mubr.bf16.mxu0 %v2993
    %5299 = vmatmul.mubr.bf16.gmra.mxu0 %v2992
    %v5300 = vpop.f32.mrf.mxu0
    %v5301 = vadd.f32 %v5260, %v5300
    %v5302 = vpop.f32.mrf.mxu0
    %v5303 = vadd.f32 %v5262, %v5302
    %v5304 = vpop.f32.mrf.mxu0
    %v5305 = vpop.f32.mrf.mxu0
    %5306 = vdwg.mxu0
    %5307 = vmatprep.subr.bf16.mxu0 %v4585
    %5308 = vmatpush1.bf16.msra.mxu0 %v4584
    %5309 = vmatprep.subr.bf16.mxu0 %v4581
    %5310 = vmatpush1.bf16.msra.mxu0 %v4580
    %5311 = vmatprep.subr.bf16.mxu0 %v4577
    %5312 = vmatpush1.bf16.msra.mxu0 %v4576
    %5313 = vmatprep.subr.bf16.mxu0 %v4573
    %5314 = vmatpush1.bf16.msra.mxu0 %v4572
    %5315 = vmatprep.subr.bf16.mxu0 %v4569
    %5316 = vmatpush1.bf16.msra.mxu0 %v4568
    %5317 = vmatprep.subr.bf16.mxu0 %v4565
    %5318 = vmatpush1.bf16.msra.mxu0 %v4564
    %5319 = vmatprep.subr.bf16.mxu0 %v4561
    %5320 = vmatpush1.bf16.msra.mxu0 %v4560
    %5321 = vmatprep.subr.bf16.mxu0 %v4557
    %5322 = vmatpush1.bf16.msra.mxu0 %v4556
    %5323 = vmatprep.subr.bf16.mxu0 %v4617
    %5324 = vmatpush2.bf16.msra.mxu0 %v4616
    %5325 = vmatprep.subr.bf16.mxu0 %v4613
    %5326 = vmatpush2.bf16.msra.mxu0 %v4612
    %5327 = vmatprep.subr.bf16.mxu0 %v4609
    %5328 = vmatpush2.bf16.msra.mxu0 %v4608
    %5329 = vmatprep.subr.bf16.mxu0 %v4605
    %5330 = vmatpush2.bf16.msra.mxu0 %v4604
    %5331 = vmatprep.subr.bf16.mxu0 %v4601
    %5332 = vmatpush2.bf16.msra.mxu0 %v4600
    %5333 = vmatprep.subr.bf16.mxu0 %v4597
    %5334 = vmatpush2.bf16.msra.mxu0 %v4596
    %5335 = vmatprep.subr.bf16.mxu0 %v4593
    %5336 = vmatpush2.bf16.msra.mxu0 %v4592
    %5337 = vmatprep.subr.bf16.mxu0 %v4589
    %5338 = vmatpush2.bf16.msra.mxu0 %v4588
    %5339 = vmatprep.mubr.bf16.mxu0 %v2995
    %5340 = vmatmul.mubr.bf16.gmra.mxu0 %v2994
    %v5341 = vpop.f32.mrf.mxu0
    %v5342 = vadd.f32 %v5301, %v5341
    %v5343 = vpop.f32.mrf.mxu0
    %v5344 = vadd.f32 %v5303, %v5343
    %v5345 = vpop.f32.mrf.mxu0
    %v5346 = vpop.f32.mrf.mxu0
    %5347 = vdwg.mxu0
    %v5348 = vmax.f32 %v5137, 0.0
    %v5349 = vmax.f32 %v5139, 0.0
    %v5350 = vmax.f32 %v5342, 0.0
    %v5351 = vmax.f32 %v5344, 0.0
    %v5352 = vpack.c.bf16 %v5348, %v5348
    %v5353 = vpack.c.bf16 %v5349, %v5349
    %v5354 = vpack.c.bf16 %v5350, %v5350
    %v5355 = vpack.c.bf16 %v5351, %v5351
    %v5356 = vld [vmem:[%s7] sm:$0xf]
    %v5357 = vld [vmem:[%s7 + $0x4] sm:$0xf]
    %v5358 = vld [vmem:[%s7 + $0x8] sm:$0xf]
    %v5359 = vld [vmem:[%s7 + $0xc] sm:$0xf]
    %v5360 = vld [vmem:[%s7 + $0x10] sm:$0xf]
    %v5361 = vld [vmem:[%s7 + $0x14] sm:$0xf]
    %v5362 = vld [vmem:[%s7 + $0x18] sm:$0xf]
    %v5363 = vld [vmem:[%s7 + $0x1c] sm:$0xf]
    %v5364 = vld [vmem:[%s7 + $0x20] sm:$0xf]
    %v5365 = vld [vmem:[%s7 + $0x24] sm:$0xf]
    %v5366 = vld [vmem:[%s7 + $0x28] sm:$0xf]
    %v5367 = vld [vmem:[%s7 + $0x2c] sm:$0xf]
    %v5368 = vld [vmem:[%s7 + $0x30] sm:$0xf]
    %v5369 = vld [vmem:[%s7 + $0x34] sm:$0xf]
    %v5370 = vld [vmem:[%s7 + $0x38] sm:$0xf]
    %v5371 = vld [vmem:[%s7 + $0x3c] sm:$0xf]
    %v5372 = vld [vmem:[%s7 + $0x40] sm:$0xf]
    %v5373 = vld [vmem:[%s7 + $0x44] sm:$0xf]
    %v5374 = vld [vmem:[%s7 + $0x48] sm:$0xf]
    %v5375 = vld [vmem:[%s7 + $0x4c] sm:$0xf]
    %v5376 = vld [vmem:[%s7 + $0x50] sm:$0xf]
    %v5377 = vld [vmem:[%s7 + $0x54] sm:$0xf]
    %v5378 = vld [vmem:[%s7 + $0x58] sm:$0xf]
    %v5379 = vld [vmem:[%s7 + $0x5c] sm:$0xf]
    %v5380 = vld [vmem:[%s7 + $0x60] sm:$0xf]
    %v5381 = vld [vmem:[%s7 + $0x64] sm:$0xf]
    %v5382 = vld [vmem:[%s7 + $0x68] sm:$0xf]
    %v5383 = vld [vmem:[%s7 + $0x6c] sm:$0xf]
    %v5384 = vld [vmem:[%s7 + $0x70] sm:$0xf]
    %v5385 = vld [vmem:[%s7 + $0x74] sm:$0xf]
    %v5386 = vld [vmem:[%s7 + $0x78] sm:$0xf]
    %v5387 = vld [vmem:[%s7 + $0x7c] sm:$0xf]
    %v5388 = vld [vmem:[%s7 + $0x80] sm:$0xf]
    %v5389 = vld [vmem:[%s7 + $0x84] sm:$0xf]
    %v5390 = vld [vmem:[%s7 + $0x88] sm:$0xf]
    %v5391 = vld [vmem:[%s7 + $0x8c] sm:$0xf]
    %v5392 = vld [vmem:[%s7 + $0x90] sm:$0xf]
    %v5393 = vld [vmem:[%s7 + $0x94] sm:$0xf]
    %v5394 = vld [vmem:[%s7 + $0x98] sm:$0xf]
    %v5395 = vld [vmem:[%s7 + $0x9c] sm:$0xf]
    %v5396 = vld [vmem:[%s7 + $0xa0] sm:$0xf]
    %v5397 = vld [vmem:[%s7 + $0xa4] sm:$0xf]
    %v5398 = vld [vmem:[%s7 + $0xa8] sm:$0xf]
    %v5399 = vld [vmem:[%s7 + $0xac] sm:$0xf]
    %v5400 = vld [vmem:[%s7 + $0xb0] sm:$0xf]
    %v5401 = vld [vmem:[%s7 + $0xb4] sm:$0xf]
    %v5402 = vld [vmem:[%s7 + $0xb8] sm:$0xf]
    %v5403 = vld [vmem:[%s7 + $0xbc] sm:$0xf]
    %v5404 = vld [vmem:[%s7 + $0xc0] sm:$0xf]
    %v5405 = vld [vmem:[%s7 + $0xc4] sm:$0xf]
    %v5406 = vld [vmem:[%s7 + $0xc8] sm:$0xf]
    %v5407 = vld [vmem:[%s7 + $0xcc] sm:$0xf]
    %v5408 = vld [vmem:[%s7 + $0xd0] sm:$0xf]
    %v5409 = vld [vmem:[%s7 + $0xd4] sm:$0xf]
    %v5410 = vld [vmem:[%s7 + $0xd8] sm:$0xf]
    %v5411 = vld [vmem:[%s7 + $0xdc] sm:$0xf]
    %v5412 = vld [vmem:[%s7 + $0xe0] sm:$0xf]
    %v5413 = vld [vmem:[%s7 + $0xe4] sm:$0xf]
    %v5414 = vld [vmem:[%s7 + $0xe8] sm:$0xf]
    %v5415 = vld [vmem:[%s7 + $0xec] sm:$0xf]
    %v5416 = vld [vmem:[%s7 + $0xf0] sm:$0xf]
    %v5417 = vld [vmem:[%s7 + $0xf4] sm:$0xf]
    %v5418 = vld [vmem:[%s7 + $0xf8] sm:$0xf]
    %v5419 = vld [vmem:[%s7 + $0xfc] sm:$0xf]
    %v5420 = vld [vmem:[%s8] sm:$0x1]
    %v5422 = vlaneseq
    %v5423 = vshrl.u32 %v5422, 7
    %v5424 = vsub.s32 0, %v5423
    %v5425 = vrot.slane %v5420, %v5424
    %v5491 = vunpack.c.l.b16 %v5356
    %v5492 = vunpack.c.l.b16 %v5357
    %v5493 = vunpack.c.l.b16 %v5358
    %v5494 = vunpack.c.l.b16 %v5359
    %v5495 = vunpack.c.l.b16 %v5360
    %v5496 = vunpack.c.l.b16 %v5361
    %v5497 = vunpack.c.l.b16 %v5362
    %v5498 = vunpack.c.l.b16 %v5363
    %v5499 = vunpack.c.l.b16 %v5364
    %v5500 = vunpack.c.l.b16 %v5365
    %v5501 = vunpack.c.l.b16 %v5366
    %v5502 = vunpack.c.l.b16 %v5367
    %v5503 = vunpack.c.l.b16 %v5368
    %v5504 = vunpack.c.l.b16 %v5369
    %v5505 = vunpack.c.l.b16 %v5370
    %v5506 = vunpack.c.l.b16 %v5371
    %v5507 = vunpack.c.l.b16 %v5372
    %v5508 = vunpack.c.l.b16 %v5373
    %v5509 = vunpack.c.l.b16 %v5374
    %v5510 = vunpack.c.l.b16 %v5375
    %v5511 = vunpack.c.l.b16 %v5376
    %v5512 = vunpack.c.l.b16 %v5377
    %v5513 = vunpack.c.l.b16 %v5378
    %v5514 = vunpack.c.l.b16 %v5379
    %v5515 = vunpack.c.l.b16 %v5380
    %v5516 = vunpack.c.l.b16 %v5381
    %v5517 = vunpack.c.l.b16 %v5382
    %v5518 = vunpack.c.l.b16 %v5383
    %v5519 = vunpack.c.l.b16 %v5384
    %v5520 = vunpack.c.l.b16 %v5385
    %v5521 = vunpack.c.l.b16 %v5386
    %v5522 = vunpack.c.l.b16 %v5387
    %v5523 = vunpack.c.l.b16 %v5388
    %v5524 = vunpack.c.l.b16 %v5389
    %v5525 = vunpack.c.l.b16 %v5390
    %v5526 = vunpack.c.l.b16 %v5391
    %v5527 = vunpack.c.l.b16 %v5392
    %v5528 = vunpack.c.l.b16 %v5393
    %v5529 = vunpack.c.l.b16 %v5394
    %v5530 = vunpack.c.l.b16 %v5395
    %v5531 = vunpack.c.l.b16 %v5396
    %v5532 = vunpack.c.l.b16 %v5397
    %v5533 = vunpack.c.l.b16 %v5398
    %v5534 = vunpack.c.l.b16 %v5399
    %v5535 = vunpack.c.l.b16 %v5400
    %v5536 = vunpack.c.l.b16 %v5401
    %v5537 = vunpack.c.l.b16 %v5402
    %v5538 = vunpack.c.l.b16 %v5403
    %v5539 = vunpack.c.l.b16 %v5404
    %v5540 = vunpack.c.l.b16 %v5405
    %v5541 = vunpack.c.l.b16 %v5406
    %v5542 = vunpack.c.l.b16 %v5407
    %v5543 = vunpack.c.l.b16 %v5408
    %v5544 = vunpack.c.l.b16 %v5409
    %v5545 = vunpack.c.l.b16 %v5410
    %v5546 = vunpack.c.l.b16 %v5411
    %v5547 = vunpack.c.l.b16 %v5412
    %v5548 = vunpack.c.l.b16 %v5413
    %v5549 = vunpack.c.l.b16 %v5414
    %v5550 = vunpack.c.l.b16 %v5415
    %v5551 = vunpack.c.l.b16 %v5416
    %v5552 = vunpack.c.l.b16 %v5417
    %v5553 = vunpack.c.l.b16 %v5418
    %v5554 = vunpack.c.l.b16 %v5419
    %v5555 = vpack.c.b16 %v5492, %v5491
    %v5556 = vpack.c.b16 %v5494, %v5493
    %v5557 = vpack.c.b16 %v5496, %v5495
    %v5558 = vpack.c.b16 %v5498, %v5497
    %v5559 = vpack.c.b16 %v5500, %v5499
    %v5560 = vpack.c.b16 %v5502, %v5501
    %v5561 = vpack.c.b16 %v5504, %v5503
    %v5562 = vpack.c.b16 %v5506, %v5505
    %v5563 = vpack.c.b16 %v5508, %v5507
    %v5564 = vpack.c.b16 %v5510, %v5509
    %v5565 = vpack.c.b16 %v5512, %v5511
    %v5566 = vpack.c.b16 %v5514, %v5513
    %v5567 = vpack.c.b16 %v5516, %v5515
    %v5568 = vpack.c.b16 %v5518, %v5517
    %v5569 = vpack.c.b16 %v5520, %v5519
    %v5570 = vpack.c.b16 %v5522, %v5521
    %v5571 = vpack.c.b16 %v5524, %v5523
    %v5572 = vpack.c.b16 %v5526, %v5525
    %v5573 = vpack.c.b16 %v5528, %v5527
    %v5574 = vpack.c.b16 %v5530, %v5529
    %v5575 = vpack.c.b16 %v5532, %v5531
    %v5576 = vpack.c.b16 %v5534, %v5533
    %v5577 = vpack.c.b16 %v5536, %v5535
    %v5578 = vpack.c.b16 %v5538, %v5537
    %v5579 = vpack.c.b16 %v5540, %v5539
    %v5580 = vpack.c.b16 %v5542, %v5541
    %v5581 = vpack.c.b16 %v5544, %v5543
    %v5582 = vpack.c.b16 %v5546, %v5545
    %v5583 = vpack.c.b16 %v5548, %v5547
    %v5584 = vpack.c.b16 %v5550, %v5549
    %v5585 = vpack.c.b16 %v5552, %v5551
    %v5586 = vpack.c.b16 %v5554, %v5553
    %5619 = vmatprep.subr.bf16.mxu0 0
    %5620 = vmatpush1.bf16.msra.mxu0 %v5562
    %5621 = vmatprep.subr.bf16.mxu0 0
    %5622 = vmatpush1.bf16.msra.mxu0 %v5561
    %5623 = vmatprep.subr.bf16.mxu0 0
    %5624 = vmatpush1.bf16.msra.mxu0 %v5560
    %5625 = vmatprep.subr.bf16.mxu0 0
    %5626 = vmatpush1.bf16.msra.mxu0 %v5559
    %5627 = vmatprep.subr.bf16.mxu0 0
    %5628 = vmatpush1.bf16.msra.mxu0 %v5558
    %5629 = vmatprep.subr.bf16.mxu0 0
    %5630 = vmatpush1.bf16.msra.mxu0 %v5557
    %5631 = vmatprep.subr.bf16.mxu0 0
    %5632 = vmatpush1.bf16.msra.mxu0 %v5556
    %5633 = vmatprep.subr.bf16.mxu0 0
    %5634 = vmatpush1.bf16.msra.mxu0 %v5555
    %5635 = vmatprep.subr.bf16.mxu0 0
    %5636 = vmatpush2.bf16.msra.mxu0 %v5570
    %5637 = vmatprep.subr.bf16.mxu0 0
    %5638 = vmatpush2.bf16.msra.mxu0 %v5569
    %5639 = vmatprep.subr.bf16.mxu0 0
    %5640 = vmatpush2.bf16.msra.mxu0 %v5568
    %5641 = vmatprep.subr.bf16.mxu0 0
    %5642 = vmatpush2.bf16.msra.mxu0 %v5567
    %5643 = vmatprep.subr.bf16.mxu0 0
    %5644 = vmatpush2.bf16.msra.mxu0 %v5566
    %5645 = vmatprep.subr.bf16.mxu0 0
    %5646 = vmatpush2.bf16.msra.mxu0 %v5565
    %5647 = vmatprep.subr.bf16.mxu0 0
    %5648 = vmatpush2.bf16.msra.mxu0 %v5564
    %5649 = vmatprep.subr.bf16.mxu0 0
    %5650 = vmatpush2.bf16.msra.mxu0 %v5563
    %5651 = vmatprep.mubr.bf16.mxu0 %v5353
    %5652 = vmatmul.mubr.bf16.gmra.mxu0 %v5352
    %v5653 = vpop.f32.mrf.mxu0
    %v5654 = vadd.f32 %v5425, %v5653
    %v5655 = vpop.f32.mrf.mxu0
    %v5656 = vpop.f32.mrf.mxu0
    %v5657 = vpop.f32.mrf.mxu0
    %5658 = vdwg.mxu0
    %5659 = vmatprep.subr.bf16.mxu0 0
    %5660 = vmatpush1.bf16.msra.mxu0 %v5578
    %5661 = vmatprep.subr.bf16.mxu0 0
    %5662 = vmatpush1.bf16.msra.mxu0 %v5577
    %5663 = vmatprep.subr.bf16.mxu0 0
    %5664 = vmatpush1.bf16.msra.mxu0 %v5576
    %5665 = vmatprep.subr.bf16.mxu0 0
    %5666 = vmatpush1.bf16.msra.mxu0 %v5575
    %5667 = vmatprep.subr.bf16.mxu0 0
    %5668 = vmatpush1.bf16.msra.mxu0 %v5574
    %5669 = vmatprep.subr.bf16.mxu0 0
    %5670 = vmatpush1.bf16.msra.mxu0 %v5573
    %5671 = vmatprep.subr.bf16.mxu0 0
    %5672 = vmatpush1.bf16.msra.mxu0 %v5572
    %5673 = vmatprep.subr.bf16.mxu0 0
    %5674 = vmatpush1.bf16.msra.mxu0 %v5571
    %5675 = vmatprep.subr.bf16.mxu0 0
    %5676 = vmatpush2.bf16.msra.mxu0 %v5586
    %5677 = vmatprep.subr.bf16.mxu0 0
    %5678 = vmatpush2.bf16.msra.mxu0 %v5585
    %5679 = vmatprep.subr.bf16.mxu0 0
    %5680 = vmatpush2.bf16.msra.mxu0 %v5584
    %5681 = vmatprep.subr.bf16.mxu0 0
    %5682 = vmatpush2.bf16.msra.mxu0 %v5583
    %5683 = vmatprep.subr.bf16.mxu0 0
    %5684 = vmatpush2.bf16.msra.mxu0 %v5582
    %5685 = vmatprep.subr.bf16.mxu0 0
    %5686 = vmatpush2.bf16.msra.mxu0 %v5581
    %5687 = vmatprep.subr.bf16.mxu0 0
    %5688 = vmatpush2.bf16.msra.mxu0 %v5580
    %5689 = vmatprep.subr.bf16.mxu0 0
    %5690 = vmatpush2.bf16.msra.mxu0 %v5579
    %5691 = vmatprep.mubr.bf16.mxu0 %v5355
    %5692 = vmatmul.mubr.bf16.gmra.mxu0 %v5354
    %v5693 = vpop.f32.mrf.mxu0
    %v5694 = vadd.f32 %v5654, %v5693
    %v5695 = vpop.f32.mrf.mxu0
    %v5696 = vpop.f32.mrf.mxu0
    %v5697 = vpop.f32.mrf.mxu0
    %5698 = vdwg.mxu0
    %vm5699 = vcmask 78848
    %5700 = vst.msk [vmem:[%s9] sm:$0x3f] %vm5699, %v5694
  $region45: #{triplet_forward.1} parent=0 // pred_fallthru
    _
  // Predicated region
  $region46: #{triplet_forward.1} parent=0 // pred_check
    _
  $region47: #{triplet_forward.1} parent=0 // pred_check_branch
    %5702 = sbr.rel (0) target = $region49
  $region48: #{triplet_forward.1} parent=0 // pred_region
    _
  $region49: #{triplet_forward.1} parent=0 // pred_fallthru
    _
  // Predicated region
  $region50: #{triplet_forward.1} parent=0 // pred_check
    _
  $region51: #{triplet_forward.1} parent=0 // pred_check_branch
    %5704 = sbr.rel (0) target = $region53
  $region52: #{triplet_forward.1} parent=0 // pred_region
    _
  $region53: #{triplet_forward.1} parent=0 // pred_fallthru
    _

</llo_original>
